<compile_context>
chip_gen: v7x
topology: tpu7x:2x2x1
jax: 0.10.0
libtpu: 0.0.40
codegen_flags: <defaults>
</compile_context>

<pallas_src>
import math
import functools

import jax
import jax.numpy as jnp
from jax import lax
from jax.experimental import pallas as pl
from jax.experimental.pallas import tpu as pltpu


# -----------------------------------------------------------------------------
# Pallas kernel
# -----------------------------------------------------------------------------

def _layernorm(x, g, b, eps=1e-5):
    mu = jnp.mean(x, axis=-1, keepdims=True)
    var = jnp.mean((x - mu) ** 2, axis=-1, keepdims=True)
    return (x - mu) * lax.rsqrt(var + eps) * g + b


def _fused_encoder_kernel(x_ref, mask_ref, pool_ref,
                          wqkv_ref, bqkv_ref, wo_ref, bo_ref,
                          g1_ref, be1_ref, w1_ref, b1_ref,
                          w2_ref, b2_ref, g2_ref, be2_ref,
                          wfc_ref, bfc_ref,
                          out_ref, feats_ref, *, n_head, num_layers):
    """All transformer layers + 'mean' aggregation + fc, whole batch folded."""
    D = x_ref.shape[1]
    hd = D // n_head
    scale = 1.0 / math.sqrt(hd)

    x = x_ref[...].astype(jnp.float32)      # (BS, D), f32 carry
    mask_add = mask_ref[...]                # (BS, BS) additive 0 / -1e30, hoisted

    for l in range(num_layers):
        xb = x.astype(jnp.bfloat16)

        # --- fused QKV projection: one (BS, D) @ (D, 3D) bf16 MXU push -------
        qkv = jnp.dot(xb, wqkv_ref[l],
                      preferred_element_type=jnp.float32) + bqkv_ref[l]   # (BS, 3D)

        # --- per-head attention (static lane slices; block-diag + pad mask) --
        heads = []
        for h in range(n_head):
            qh = qkv[:, h * hd:(h + 1) * hd]                               # (BS, hd)
            kh = qkv[:, D + h * hd:D + (h + 1) * hd]
            vh = qkv[:, 2 * D + h * hd:2 * D + (h + 1) * hd]
            sc = jnp.dot(qh, kh.T,
                         preferred_element_type=jnp.float32) * scale + mask_add
            sc = sc - jnp.max(sc, axis=-1, keepdims=True)
            p = jnp.exp(sc)
            p = p / jnp.sum(p, axis=-1, keepdims=True)     # exact divide (parity)
            heads.append(jnp.dot(p, vh, preferred_element_type=jnp.float32))

        # --- single output projection on the lane-concat of all heads --------
        o_cat = jnp.concatenate(heads, axis=-1)                            # (BS, D)
        attn = jnp.dot(o_cat.astype(jnp.bfloat16), wo_ref[l],
                       preferred_element_type=jnp.float32) + bo_ref[l]

        # residual + LayerNorm 1 (dropout = identity in eval)
        x = _layernorm(x + attn, g1_ref[l], be1_ref[l])

        # --- feed-forward (relu) ---------------------------------------------
        ff = jnp.maximum(
            jnp.dot(x.astype(jnp.bfloat16), w1_ref[l],
                    preferred_element_type=jnp.float32) + b1_ref[l], 0.0)   # (BS, F)
        y = jnp.dot(ff.astype(jnp.bfloat16), w2_ref[l],
                    preferred_element_type=jnp.float32) + b2_ref[l]         # (BS, D)

        # residual + LayerNorm 2
        x = _layernorm(x + y, g2_ref[l], be2_ref[l])

    feats_ref[...] = x.astype(feats_ref.dtype)

    # 'mean' aggregation over all S positions per batch row (matches PyTorch
    # torch.mean over dim 0, which includes padding positions) + fc.
    m = jnp.dot(pool_ref[...], x, preferred_element_type=jnp.float32)       # (B, D)
    out_ref[...] = (jnp.dot(m.astype(jnp.bfloat16), wfc_ref[...],
                            preferred_element_type=jnp.float32)
                    + bfc_ref[...]).astype(out_ref.dtype)


# -----------------------------------------------------------------------------
# Wrapper
# -----------------------------------------------------------------------------

def _full_spec(arr):
    """Whole-array VMEM block (single-step grid)."""
    return pl.BlockSpec(arr.shape, lambda i, _nd=arr.ndim: (0,) * _nd)


@functools.partial(jax.jit, static_argnames=("n_head",))
def image_encoder_forward(visual_feats, visual_feats_len, layer_params, fc_params,
                          n_head):
    """Fused Pallas forward: visual_feats (B,S,D) -> (out (B,E), feats (B,S,D))."""
    B, S, D = visual_feats.shape
    L = len(layer_params)
    H = n_head
    F = layer_params[0]["w1"].shape[1]
    E = fc_params["w"].shape[1]
    BS = B * S

    def stack(name):
        return jnp.stack([p[name] for p in layer_params], axis=0)

    # --- host-side weight restructuring (outside kernel; overlaps via cost est.)
    wqkv = stack("wqkv").astype(jnp.bfloat16)   # (L, D, 3D) - fused, no per-head split
    bqkv = stack("bqkv")                        # (L, 1, 3D) f32
    wo = stack("wo").astype(jnp.bfloat16)       # (L, D, D)  - fused output projection
    bo = stack("bo")                            # (L, 1, D)
    g1, be1 = stack("g1"), stack("be1")         # (L, 1, D)
    g2, be2 = stack("g2"), stack("be2")
    w1 = stack("w1").astype(jnp.bfloat16)       # (L, D, F)
    b1 = stack("b1")                            # (L, 1, F)
    w2 = stack("w2").astype(jnp.bfloat16)       # (L, F, D)
    b2 = stack("b2")                            # (L, 1, D)
    wfc = fc_params["w"].astype(jnp.bfloat16)   # (D, E)
    bfc = fc_params["b"]                        # (1, E)

    # Fold batch into the sequence axis (free metadata reshape in XLA).
    x_flat = visual_feats.reshape(BS, D)

    # Hoisted additive attention mask: block-diagonal over batches AND
    # src_key_padding_mask over key positions >= length.
    lens = visual_feats_len.astype(jnp.int32)
    batch_ids = jnp.repeat(jnp.arange(B, dtype=jnp.int32), S)                 # (BS,)
    key_ok = (jnp.arange(S, dtype=jnp.int32)[None, :] < lens[:, None]).reshape(-1)
    allowed = (batch_ids[:, None] == batch_ids[None, :]) & key_ok[None, :]    # (BS, BS)
    mask_add = jnp.where(allowed, 0.0, -1e30).astype(jnp.float32)
    # NOTE: a zero-length sequence would have all keys masked -> uniform
    # attention here, whereas PyTorch would produce NaN.  Not hit in practice.

    # Per-batch mean-pooling matrix (averages ALL S positions, incl. padding,
    # matching torch.mean(dim=0)).
    pool = jnp.where(batch_ids[None, :] == jnp.arange(B, dtype=jnp.int32)[:, None],
                     jnp.float32(1.0 / S), jnp.float32(0.0)).astype(jnp.float32)

    weights = (wqkv, bqkv, wo, bo, g1, be1, w1, b1, w2, b2, g2, be2, wfc, bfc)
    inputs = (x_flat, mask_add, pool) + weights

    # Advisory cost estimate (FLOPs dominated by the FFN matmuls).
    flops = (L * (2 * BS * D * 3 * D          # qkv projection
                  + 4 * BS * BS * D           # scores + p @ v (all heads)
                  + 2 * BS * D * D            # output projection
                  + 4 * BS * D * F)           # feed-forward
             + 2 * B * BS * D + 2 * B * D * E)
    transcendentals = L * H * BS * BS + L * 4 * BS
    bytes_accessed = int(sum(int(a.size) * a.dtype.itemsize for a in inputs)
                         + BS * D * 4 + B * E * 4)

    kernel = functools.partial(_fused_encoder_kernel, n_head=H, num_layers=L)

    out, feats = pl.pallas_call(
        kernel,
        out_shape=(jax.ShapeDtypeStruct((B, E), jnp.float32),
                   jax.ShapeDtypeStruct((BS, D), jnp.float32)),
        grid=(1,),
        in_specs=[_full_spec(a) for a in inputs],
        out_specs=(pl.BlockSpec((B, E), lambda i: (0, 0)),
                   pl.BlockSpec((BS, D), lambda i: (0, 0))),
        compiler_params=pltpu.CompilerParams(
            dimension_semantics=("arbitrary",)),
        cost_estimate=pl.CostEstimate(flops=int(flops),
                                      transcendentals=int(transcendentals),
                                      bytes_accessed=bytes_accessed),
    )(*inputs)

    return out, feats.reshape(B, S, D)


# -----------------------------------------------------------------------------
# Pure-JAX reference (for correctness check)
# -----------------------------------------------------------------------------

def ref_forward(x, lens, layer_params, fc_params, n_head):
    B, S, D = x.shape
    hd = D // n_head
    key_valid = jnp.arange(S)[None, :] < lens[:, None]          # (B, S)
    h = x
    for p in layer_params:
        qkv = h @ p["wqkv"] + p["bqkv"]
        q, k, v = jnp.split(qkv, 3, axis=-1)
        qh = q.reshape(B, S, n_head, hd)
        kh = k.reshape(B, S, n_head, hd)
        vh = v.reshape(B, S, n_head, hd)
        sc = jnp.einsum("bqhd,bkhd->bhqk", qh, kh) / math.sqrt(hd)
        sc = jnp.where(key_valid[:, None, None, :], sc, -1e30)
        pattn = jax.nn.softmax(sc, axis=-1)
        o = jnp.einsum("bhqk,bkhd->bqhd", pattn, vh).reshape(B, S, D)
        o = o @ p["wo"] + p["bo"]
        h = _layernorm(h + o, p["g1"], p["be1"])
        f = jnp.maximum(h @ p["w1"] + p["b1"], 0.0) @ p["w2"] + p["b2"]
        h = _layernorm(h + f, p["g2"], p["be2"])
    out = jnp.mean(h, axis=1) @ fc_params["w"] + fc_params["b"]
    return out, h


# -----------------------------------------------------------------------------
# Deterministic parameter init (synthetic; (in, out) weight convention)
# -----------------------------------------------------------------------------

def init_params(key, num_layers, D, E, F):
    def rnd(k, shape, scale=0.05):
        return scale * jax.random.normal(k, shape, jnp.float32)

    layers = []
    for _ in range(num_layers):
        key, *ks = jax.random.split(key, 13)
        layers.append(dict(
            wqkv=rnd(ks[0], (D, 3 * D)),
            bqkv=rnd(ks[1], (1, 3 * D)),
            wo=rnd(ks[2], (D, D)),
            bo=rnd(ks[3], (1, D)),
            g1=jnp.ones((1, D), jnp.float32) + 0.01 * jax.random.normal(ks[4], (1, D)),
            be1=rnd(ks[5], (1, D)),
            w1=rnd(ks[6], (D, F)),
            b1=rnd(ks[7], (1, F)),
            w2=rnd(ks[8], (F, D)),
            b2=rnd(ks[9], (1, D)),
            g2=jnp.ones((1, D), jnp.float32) + 0.01 * jax.random.normal(ks[10], (1, D)),
            be2=rnd(ks[11], (1, D)),
        ))
    key, k1, k2 = jax.random.split(key, 3)
    fc = dict(w=rnd(k1, (D, E)), b=rnd(k2, (1, E)))
    return layers, fc


# -----------------------------------------------------------------------------
# Main
# -----------------------------------------------------------------------------

if __name__ == "__main__":
    # num_transformer_layers=2, feat_dim=32, embed_size=16, n_head=4,
    # dim_feedforward=2048 (hardcoded in the PyTorch module)
    B, S, D, E, F = 2, 8, 32, 16, 2048
    N_HEAD, N_LAYERS = 4, 2

    key = jax.random.PRNGKey(0)
    key, kx = jax.random.split(key)
    visual_feats = jax.random.normal(kx, (B, S, D), jnp.float32)   # (batch, seq, feat_dim)
    visual_feats_len = jnp.array([S, 5], dtype=jnp.int32)          # variable lengths

    layer_params, fc_params = init_params(key, N_LAYERS, D, E, F)

    out, feats = image_encoder_forward(visual_feats, visual_feats_len,
                                       layer_params, fc_params, n_head=N_HEAD)
    out = jax.block_until_ready(out)
    feats = jax.block_until_ready(feats)

    # correctness check against a pure-JAX f32 reference
    ref_out, ref_feats = ref_forward(visual_feats, visual_feats_len,
                                     layer_params, fc_params, N_HEAD)
    assert out.shape == (B, E) and feats.shape == (B, S, D)
    assert jnp.allclose(out, ref_out, atol=2e-2, rtol=2e-2)
    assert jnp.allclose(feats, ref_feats, atol=2e-2, rtol=2e-2)

    # TODO(synk): aggr='gated', order_embeddings=True and PositionalEncodingImageBoxes
    # branches are not exercised by the default config and are not implemented.
    print("KERNEL_OK")
</pallas_src>

<mosaic_0001>
module attributes {stable_mosaic.version = 11 : i64} {
  func.func @_fused_encoder_kernel(%arg0: i32, %arg1: memref<16x32xf32, #tpu.memory_space<vmem>>, %arg2: memref<16x16xf32, #tpu.memory_space<vmem>>, %arg3: memref<2x16xf32, #tpu.memory_space<vmem>>, %arg4: memref<2x32x96xbf16, #tpu.memory_space<vmem>>, %arg5: memref<2x1x96xf32, #tpu.memory_space<vmem>>, %arg6: memref<2x32x32xbf16, #tpu.memory_space<vmem>>, %arg7: memref<2x1x32xf32, #tpu.memory_space<vmem>>, %arg8: memref<2x1x32xf32, #tpu.memory_space<vmem>>, %arg9: memref<2x1x32xf32, #tpu.memory_space<vmem>>, %arg10: memref<2x32x2048xbf16, #tpu.memory_space<vmem>>, %arg11: memref<2x1x2048xf32, #tpu.memory_space<vmem>>, %arg12: memref<2x2048x32xbf16, #tpu.memory_space<vmem>>, %arg13: memref<2x1x32xf32, #tpu.memory_space<vmem>>, %arg14: memref<2x1x32xf32, #tpu.memory_space<vmem>>, %arg15: memref<2x1x32xf32, #tpu.memory_space<vmem>>, %arg16: memref<32x16xbf16, #tpu.memory_space<vmem>>, %arg17: memref<1x16xf32, #tpu.memory_space<vmem>>, %arg18: memref<2x16xf32, #tpu.memory_space<vmem>>, %arg19: memref<16x32xf32, #tpu.memory_space<vmem>>) attributes {dimension_semantics = [#tpu.dimension_semantics<arbitrary>], iteration_bounds = array<i64: 1>, scalar_prefetch = 0 : i64, scratch_operands = 0 : i64, tpu.core_type = #tpu.core_type<tc>, window_params = [{pipeline_mode = #tpu.pipeline_mode<synchronous>, transform_indices = @transform_0, window_bounds = array<i64: 16, 32>}, {pipeline_mode = #tpu.pipeline_mode<synchronous>, transform_indices = @transform_1, window_bounds = array<i64: 16, 16>}, {pipeline_mode = #tpu.pipeline_mode<synchronous>, transform_indices = @transform_2, window_bounds = array<i64: 2, 16>}, {pipeline_mode = #tpu.pipeline_mode<synchronous>, transform_indices = @transform_3, window_bounds = array<i64: 2, 32, 96>}, {pipeline_mode = #tpu.pipeline_mode<synchronous>, transform_indices = @transform_4, window_bounds = array<i64: 2, 1, 96>}, {pipeline_mode = #tpu.pipeline_mode<synchronous>, transform_indices = @transform_5, window_bounds = array<i64: 2, 32, 32>}, {pipeline_mode = #tpu.pipeline_mode<synchronous>, transform_indices = @transform_6, window_bounds = array<i64: 2, 1, 32>}, {pipeline_mode = #tpu.pipeline_mode<synchronous>, transform_indices = @transform_7, window_bounds = array<i64: 2, 1, 32>}, {pipeline_mode = #tpu.pipeline_mode<synchronous>, transform_indices = @transform_8, window_bounds = array<i64: 2, 1, 32>}, {pipeline_mode = #tpu.pipeline_mode<synchronous>, transform_indices = @transform_9, window_bounds = array<i64: 2, 32, 2048>}, {pipeline_mode = #tpu.pipeline_mode<synchronous>, transform_indices = @transform_10, window_bounds = array<i64: 2, 1, 2048>}, {pipeline_mode = #tpu.pipeline_mode<synchronous>, transform_indices = @transform_11, window_bounds = array<i64: 2, 2048, 32>}, {pipeline_mode = #tpu.pipeline_mode<synchronous>, transform_indices = @transform_12, window_bounds = array<i64: 2, 1, 32>}, {pipeline_mode = #tpu.pipeline_mode<synchronous>, transform_indices = @transform_13, window_bounds = array<i64: 2, 1, 32>}, {pipeline_mode = #tpu.pipeline_mode<synchronous>, transform_indices = @transform_14, window_bounds = array<i64: 2, 1, 32>}, {pipeline_mode = #tpu.pipeline_mode<synchronous>, transform_indices = @transform_15, window_bounds = array<i64: 32, 16>}, {pipeline_mode = #tpu.pipeline_mode<synchronous>, transform_indices = @transform_16, window_bounds = array<i64: 1, 16>}, {pipeline_mode = #tpu.pipeline_mode<synchronous>, transform_indices = @transform_17, window_bounds = array<i64: 2, 16>}, {pipeline_mode = #tpu.pipeline_mode<synchronous>, transform_indices = @transform_18, window_bounds = array<i64: 16, 32>}]} {
    %c0 = arith.constant 0 : index
    %c0_0 = arith.constant 0 : index
    %0 = vector.load %arg1[%c0, %c0_0] : memref<16x32xf32, #tpu.memory_space<vmem>>, vector<16x32xf32>
    %c0_1 = arith.constant 0 : index
    %c0_2 = arith.constant 0 : index
    %1 = vector.load %arg2[%c0_1, %c0_2] : memref<16x16xf32, #tpu.memory_space<vmem>>, vector<16x16xf32>
    %2 = arith.truncf %0 : vector<16x32xf32> to vector<16x32xbf16>
    %c0_3 = arith.constant 0 : index
    %c0_4 = arith.constant 0 : index
    %c0_5 = arith.constant 0 : index
    %3 = vector.load %arg4[%c0_3, %c0_4, %c0_5] : memref<2x32x96xbf16, #tpu.memory_space<vmem>>, vector<1x32x96xbf16>
    %4 = vector.shape_cast %3 : vector<1x32x96xbf16> to vector<32x96xbf16>
    %cst = arith.constant dense<0.000000e+00> : vector<16x96xf32>
    %5 = tpu.matmul %2, %4, %cst {dimension_numbers = #tpu.dot_dimension_numbers<[1], [0], [0], [1], [0, 0, 1, 1], [], []>} : vector<16x32xbf16>, vector<32x96xbf16>, vector<16x96xf32> -> vector<16x96xf32>
    %c0_6 = arith.constant 0 : index
    %c0_7 = arith.constant 0 : index
    %c0_8 = arith.constant 0 : index
    %6 = vector.load %arg5[%c0_6, %c0_7, %c0_8] : memref<2x1x96xf32, #tpu.memory_space<vmem>>, vector<1x1x96xf32>
    %7 = vector.shape_cast %6 : vector<1x1x96xf32> to vector<1x96xf32>
    %8 = vector.broadcast %7 : vector<1x96xf32> to vector<16x96xf32>
    %9 = arith.addf %5, %8 : vector<16x96xf32>
    %10 = vector.extract_strided_slice %9 {offsets = [0, 0], sizes = [16, 8], strides = [1, 1]} : vector<16x96xf32> to vector<16x8xf32>
    %11 = vector.extract_strided_slice %9 {offsets = [0, 32], sizes = [16, 8], strides = [1, 1]} : vector<16x96xf32> to vector<16x8xf32>
    %12 = vector.extract_strided_slice %9 {offsets = [0, 64], sizes = [16, 8], strides = [1, 1]} : vector<16x96xf32> to vector<16x8xf32>
    %13 = tpu.transpose %11, [1, 0] : vector<16x8xf32> -> vector<8x16xf32>
    %cst_9 = arith.constant dense<0.000000e+00> : vector<16x16xf32>
    %14 = tpu.matmul %10, %13, %cst_9 {dimension_numbers = #tpu.dot_dimension_numbers<[1], [0], [0], [1], [0, 0, 1, 1], [], []>} : vector<16x8xf32>, vector<8x16xf32>, vector<16x16xf32> -> vector<16x16xf32>
    %cst_10 = arith.constant 0.353553385 : f32
    %15 = vector.broadcast %cst_10 : f32 to vector<16x16xf32>
    %16 = arith.mulf %14, %15 : vector<16x16xf32>
    %17 = arith.addf %16, %1 : vector<16x16xf32>
    %cst_11 = arith.constant dense<0xFF800000> : vector<16xf32>
    %18 = vector.multi_reduction <maximumf>, %17, %cst_11 [1] : vector<16x16xf32> to vector<16xf32>
    %19 = vector.shape_cast %18 : vector<16xf32> to vector<16x1xf32>
    %20 = vector.broadcast %19 : vector<16x1xf32> to vector<16x16xf32>
    %21 = arith.subf %17, %20 : vector<16x16xf32>
    %22 = math.exp %21 : vector<16x16xf32>
    %cst_12 = arith.constant dense<0.000000e+00> : vector<16xf32>
    %23 = vector.multi_reduction <add>, %22, %cst_12 [1] : vector<16x16xf32> to vector<16xf32>
    %24 = vector.shape_cast %23 : vector<16xf32> to vector<16x1xf32>
    %25 = vector.broadcast %24 : vector<16x1xf32> to vector<16x16xf32>
    %26 = arith.divf %22, %25 : vector<16x16xf32>
    %cst_13 = arith.constant dense<0.000000e+00> : vector<16x8xf32>
    %27 = tpu.matmul %26, %12, %cst_13 {dimension_numbers = #tpu.dot_dimension_numbers<[1], [0], [0], [1], [0, 0, 1, 1], [], []>} : vector<16x16xf32>, vector<16x8xf32>, vector<16x8xf32> -> vector<16x8xf32>
    %28 = vector.extract_strided_slice %9 {offsets = [0, 8], sizes = [16, 8], strides = [1, 1]} : vector<16x96xf32> to vector<16x8xf32>
    %29 = vector.extract_strided_slice %9 {offsets = [0, 40], sizes = [16, 8], strides = [1, 1]} : vector<16x96xf32> to vector<16x8xf32>
    %30 = vector.extract_strided_slice %9 {offsets = [0, 72], sizes = [16, 8], strides = [1, 1]} : vector<16x96xf32> to vector<16x8xf32>
    %31 = tpu.transpose %29, [1, 0] : vector<16x8xf32> -> vector<8x16xf32>
    %cst_14 = arith.constant dense<0.000000e+00> : vector<16x16xf32>
    %32 = tpu.matmul %28, %31, %cst_14 {dimension_numbers = #tpu.dot_dimension_numbers<[1], [0], [0], [1], [0, 0, 1, 1], [], []>} : vector<16x8xf32>, vector<8x16xf32>, vector<16x16xf32> -> vector<16x16xf32>
    %cst_15 = arith.constant 0.353553385 : f32
    %33 = vector.broadcast %cst_15 : f32 to vector<16x16xf32>
    %34 = arith.mulf %32, %33 : vector<16x16xf32>
    %35 = arith.addf %34, %1 : vector<16x16xf32>
    %cst_16 = arith.constant dense<0xFF800000> : vector<16xf32>
    %36 = vector.multi_reduction <maximumf>, %35, %cst_16 [1] : vector<16x16xf32> to vector<16xf32>
    %37 = vector.shape_cast %36 : vector<16xf32> to vector<16x1xf32>
    %38 = vector.broadcast %37 : vector<16x1xf32> to vector<16x16xf32>
    %39 = arith.subf %35, %38 : vector<16x16xf32>
    %40 = math.exp %39 : vector<16x16xf32>
    %cst_17 = arith.constant dense<0.000000e+00> : vector<16xf32>
    %41 = vector.multi_reduction <add>, %40, %cst_17 [1] : vector<16x16xf32> to vector<16xf32>
    %42 = vector.shape_cast %41 : vector<16xf32> to vector<16x1xf32>
    %43 = vector.broadcast %42 : vector<16x1xf32> to vector<16x16xf32>
    %44 = arith.divf %40, %43 : vector<16x16xf32>
    %cst_18 = arith.constant dense<0.000000e+00> : vector<16x8xf32>
    %45 = tpu.matmul %44, %30, %cst_18 {dimension_numbers = #tpu.dot_dimension_numbers<[1], [0], [0], [1], [0, 0, 1, 1], [], []>} : vector<16x16xf32>, vector<16x8xf32>, vector<16x8xf32> -> vector<16x8xf32>
    %46 = vector.extract_strided_slice %9 {offsets = [0, 16], sizes = [16, 8], strides = [1, 1]} : vector<16x96xf32> to vector<16x8xf32>
    %47 = vector.extract_strided_slice %9 {offsets = [0, 48], sizes = [16, 8], strides = [1, 1]} : vector<16x96xf32> to vector<16x8xf32>
    %48 = vector.extract_strided_slice %9 {offsets = [0, 80], sizes = [16, 8], strides = [1, 1]} : vector<16x96xf32> to vector<16x8xf32>
    %49 = tpu.transpose %47, [1, 0] : vector<16x8xf32> -> vector<8x16xf32>
    %cst_19 = arith.constant dense<0.000000e+00> : vector<16x16xf32>
    %50 = tpu.matmul %46, %49, %cst_19 {dimension_numbers = #tpu.dot_dimension_numbers<[1], [0], [0], [1], [0, 0, 1, 1], [], []>} : vector<16x8xf32>, vector<8x16xf32>, vector<16x16xf32> -> vector<16x16xf32>
    %cst_20 = arith.constant 0.353553385 : f32
    %51 = vector.broadcast %cst_20 : f32 to vector<16x16xf32>
    %52 = arith.mulf %50, %51 : vector<16x16xf32>
    %53 = arith.addf %52, %1 : vector<16x16xf32>
    %cst_21 = arith.constant dense<0xFF800000> : vector<16xf32>
    %54 = vector.multi_reduction <maximumf>, %53, %cst_21 [1] : vector<16x16xf32> to vector<16xf32>
    %55 = vector.shape_cast %54 : vector<16xf32> to vector<16x1xf32>
    %56 = vector.broadcast %55 : vector<16x1xf32> to vector<16x16xf32>
    %57 = arith.subf %53, %56 : vector<16x16xf32>
    %58 = math.exp %57 : vector<16x16xf32>
    %cst_22 = arith.constant dense<0.000000e+00> : vector<16xf32>
    %59 = vector.multi_reduction <add>, %58, %cst_22 [1] : vector<16x16xf32> to vector<16xf32>
    %60 = vector.shape_cast %59 : vector<16xf32> to vector<16x1xf32>
    %61 = vector.broadcast %60 : vector<16x1xf32> to vector<16x16xf32>
    %62 = arith.divf %58, %61 : vector<16x16xf32>
    %cst_23 = arith.constant dense<0.000000e+00> : vector<16x8xf32>
    %63 = tpu.matmul %62, %48, %cst_23 {dimension_numbers = #tpu.dot_dimension_numbers<[1], [0], [0], [1], [0, 0, 1, 1], [], []>} : vector<16x16xf32>, vector<16x8xf32>, vector<16x8xf32> -> vector<16x8xf32>
    %64 = vector.extract_strided_slice %9 {offsets = [0, 24], sizes = [16, 8], strides = [1, 1]} : vector<16x96xf32> to vector<16x8xf32>
    %65 = vector.extract_strided_slice %9 {offsets = [0, 56], sizes = [16, 8], strides = [1, 1]} : vector<16x96xf32> to vector<16x8xf32>
    %66 = vector.extract_strided_slice %9 {offsets = [0, 88], sizes = [16, 8], strides = [1, 1]} : vector<16x96xf32> to vector<16x8xf32>
    %67 = tpu.transpose %65, [1, 0] : vector<16x8xf32> -> vector<8x16xf32>
    %cst_24 = arith.constant dense<0.000000e+00> : vector<16x16xf32>
    %68 = tpu.matmul %64, %67, %cst_24 {dimension_numbers = #tpu.dot_dimension_numbers<[1], [0], [0], [1], [0, 0, 1, 1], [], []>} : vector<16x8xf32>, vector<8x16xf32>, vector<16x16xf32> -> vector<16x16xf32>
    %cst_25 = arith.constant 0.353553385 : f32
    %69 = vector.broadcast %cst_25 : f32 to vector<16x16xf32>
    %70 = arith.mulf %68, %69 : vector<16x16xf32>
    %71 = arith.addf %70, %1 : vector<16x16xf32>
    %cst_26 = arith.constant dense<0xFF800000> : vector<16xf32>
    %72 = vector.multi_reduction <maximumf>, %71, %cst_26 [1] : vector<16x16xf32> to vector<16xf32>
    %73 = vector.shape_cast %72 : vector<16xf32> to vector<16x1xf32>
    %74 = vector.broadcast %73 : vector<16x1xf32> to vector<16x16xf32>
    %75 = arith.subf %71, %74 : vector<16x16xf32>
    %76 = math.exp %75 : vector<16x16xf32>
    %cst_27 = arith.constant dense<0.000000e+00> : vector<16xf32>
    %77 = vector.multi_reduction <add>, %76, %cst_27 [1] : vector<16x16xf32> to vector<16xf32>
    %78 = vector.shape_cast %77 : vector<16xf32> to vector<16x1xf32>
    %79 = vector.broadcast %78 : vector<16x1xf32> to vector<16x16xf32>
    %80 = arith.divf %76, %79 : vector<16x16xf32>
    %cst_28 = arith.constant dense<0.000000e+00> : vector<16x8xf32>
    %81 = tpu.matmul %80, %66, %cst_28 {dimension_numbers = #tpu.dot_dimension_numbers<[1], [0], [0], [1], [0, 0, 1, 1], [], []>} : vector<16x16xf32>, vector<16x8xf32>, vector<16x8xf32> -> vector<16x8xf32>
    %82 = tpu.concatenate %27, %45, %63, %81 in 1 : vector<16x8xf32>, vector<16x8xf32>, vector<16x8xf32>, vector<16x8xf32> -> vector<16x32xf32>
    %83 = arith.truncf %82 : vector<16x32xf32> to vector<16x32xbf16>
    %c0_29 = arith.constant 0 : index
    %c0_30 = arith.constant 0 : index
    %c0_31 = arith.constant 0 : index
    %84 = vector.load %arg6[%c0_29, %c0_30, %c0_31] : memref<2x32x32xbf16, #tpu.memory_space<vmem>>, vector<1x32x32xbf16>
    %85 = vector.shape_cast %84 : vector<1x32x32xbf16> to vector<32x32xbf16>
    %cst_32 = arith.constant dense<0.000000e+00> : vector<16x32xf32>
    %86 = tpu.matmul %83, %85, %cst_32 {dimension_numbers = #tpu.dot_dimension_numbers<[1], [0], [0], [1], [0, 0, 1, 1], [], []>} : vector<16x32xbf16>, vector<32x32xbf16>, vector<16x32xf32> -> vector<16x32xf32>
    %c0_33 = arith.constant 0 : index
    %c0_34 = arith.constant 0 : index
    %c0_35 = arith.constant 0 : index
    %87 = vector.load %arg7[%c0_33, %c0_34, %c0_35] : memref<2x1x32xf32, #tpu.memory_space<vmem>>, vector<1x1x32xf32>
    %88 = vector.shape_cast %87 : vector<1x1x32xf32> to vector<1x32xf32>
    %89 = vector.broadcast %88 : vector<1x32xf32> to vector<16x32xf32>
    %90 = arith.addf %86, %89 : vector<16x32xf32>
    %91 = arith.addf %0, %90 : vector<16x32xf32>
    %c0_36 = arith.constant 0 : index
    %c0_37 = arith.constant 0 : index
    %c0_38 = arith.constant 0 : index
    %92 = vector.load %arg8[%c0_36, %c0_37, %c0_38] : memref<2x1x32xf32, #tpu.memory_space<vmem>>, vector<1x1x32xf32>
    %93 = vector.shape_cast %92 : vector<1x1x32xf32> to vector<1x32xf32>
    %c0_39 = arith.constant 0 : index
    %c0_40 = arith.constant 0 : index
    %c0_41 = arith.constant 0 : index
    %94 = vector.load %arg9[%c0_39, %c0_40, %c0_41] : memref<2x1x32xf32, #tpu.memory_space<vmem>>, vector<1x1x32xf32>
    %95 = vector.shape_cast %94 : vector<1x1x32xf32> to vector<1x32xf32>
    %cst_42 = arith.constant dense<0.000000e+00> : vector<16xf32>
    %96 = vector.multi_reduction <add>, %91, %cst_42 [1] : vector<16x32xf32> to vector<16xf32>
    %97 = vector.shape_cast %96 : vector<16xf32> to vector<16x1xf32>
    %cst_43 = arith.constant 3.200000e+01 : f32
    %98 = vector.broadcast %cst_43 : f32 to vector<16x1xf32>
    %99 = arith.divf %97, %98 : vector<16x1xf32>
    %100 = vector.broadcast %99 : vector<16x1xf32> to vector<16x32xf32>
    %101 = arith.subf %91, %100 : vector<16x32xf32>
    %102 = arith.mulf %101, %101 : vector<16x32xf32>
    %cst_44 = arith.constant dense<0.000000e+00> : vector<16xf32>
    %103 = vector.multi_reduction <add>, %102, %cst_44 [1] : vector<16x32xf32> to vector<16xf32>
    %104 = vector.shape_cast %103 : vector<16xf32> to vector<16x1xf32>
    %cst_45 = arith.constant 3.200000e+01 : f32
    %105 = vector.broadcast %cst_45 : f32 to vector<16x1xf32>
    %106 = arith.divf %104, %105 : vector<16x1xf32>
    %107 = vector.broadcast %99 : vector<16x1xf32> to vector<16x32xf32>
    %108 = arith.subf %91, %107 : vector<16x32xf32>
    %cst_46 = arith.constant 9.99999974E-6 : f32
    %109 = vector.broadcast %cst_46 : f32 to vector<16x1xf32>
    %110 = arith.addf %106, %109 : vector<16x1xf32>
    %111 = math.rsqrt %110 : vector<16x1xf32>
    %112 = vector.broadcast %111 : vector<16x1xf32> to vector<16x32xf32>
    %113 = arith.mulf %108, %112 : vector<16x32xf32>
    %114 = vector.broadcast %93 : vector<1x32xf32> to vector<16x32xf32>
    %115 = arith.mulf %113, %114 : vector<16x32xf32>
    %116 = vector.broadcast %95 : vector<1x32xf32> to vector<16x32xf32>
    %117 = arith.addf %115, %116 : vector<16x32xf32>
    %118 = arith.truncf %117 : vector<16x32xf32> to vector<16x32xbf16>
    %c0_47 = arith.constant 0 : index
    %c0_48 = arith.constant 0 : index
    %c0_49 = arith.constant 0 : index
    %119 = vector.load %arg10[%c0_47, %c0_48, %c0_49] : memref<2x32x2048xbf16, #tpu.memory_space<vmem>>, vector<1x32x2048xbf16>
    %120 = vector.shape_cast %119 : vector<1x32x2048xbf16> to vector<32x2048xbf16>
    %cst_50 = arith.constant dense<0.000000e+00> : vector<16x2048xf32>
    %121 = tpu.matmul %118, %120, %cst_50 {dimension_numbers = #tpu.dot_dimension_numbers<[1], [0], [0], [1], [0, 0, 1, 1], [], []>} : vector<16x32xbf16>, vector<32x2048xbf16>, vector<16x2048xf32> -> vector<16x2048xf32>
    %c0_51 = arith.constant 0 : index
    %c0_52 = arith.constant 0 : index
    %c0_53 = arith.constant 0 : index
    %122 = vector.load %arg11[%c0_51, %c0_52, %c0_53] : memref<2x1x2048xf32, #tpu.memory_space<vmem>>, vector<1x1x2048xf32>
    %123 = vector.shape_cast %122 : vector<1x1x2048xf32> to vector<1x2048xf32>
    %124 = vector.broadcast %123 : vector<1x2048xf32> to vector<16x2048xf32>
    %125 = arith.addf %121, %124 : vector<16x2048xf32>
    %cst_54 = arith.constant 0.000000e+00 : f32
    %126 = vector.broadcast %cst_54 : f32 to vector<16x2048xf32>
    %127 = arith.maximumf %125, %126 : vector<16x2048xf32>
    %128 = arith.truncf %127 : vector<16x2048xf32> to vector<16x2048xbf16>
    %c0_55 = arith.constant 0 : index
    %c0_56 = arith.constant 0 : index
    %c0_57 = arith.constant 0 : index
    %129 = vector.load %arg12[%c0_55, %c0_56, %c0_57] : memref<2x2048x32xbf16, #tpu.memory_space<vmem>>, vector<1x2048x32xbf16>
    %130 = vector.shape_cast %129 : vector<1x2048x32xbf16> to vector<2048x32xbf16>
    %cst_58 = arith.constant dense<0.000000e+00> : vector<16x32xf32>
    %131 = tpu.matmul %128, %130, %cst_58 {dimension_numbers = #tpu.dot_dimension_numbers<[1], [0], [0], [1], [0, 0, 1, 1], [], []>} : vector<16x2048xbf16>, vector<2048x32xbf16>, vector<16x32xf32> -> vector<16x32xf32>
    %c0_59 = arith.constant 0 : index
    %c0_60 = arith.constant 0 : index
    %c0_61 = arith.constant 0 : index
    %132 = vector.load %arg13[%c0_59, %c0_60, %c0_61] : memref<2x1x32xf32, #tpu.memory_space<vmem>>, vector<1x1x32xf32>
    %133 = vector.shape_cast %132 : vector<1x1x32xf32> to vector<1x32xf32>
    %134 = vector.broadcast %133 : vector<1x32xf32> to vector<16x32xf32>
    %135 = arith.addf %131, %134 : vector<16x32xf32>
    %136 = arith.addf %117, %135 : vector<16x32xf32>
    %c0_62 = arith.constant 0 : index
    %c0_63 = arith.constant 0 : index
    %c0_64 = arith.constant 0 : index
    %137 = vector.load %arg14[%c0_62, %c0_63, %c0_64] : memref<2x1x32xf32, #tpu.memory_space<vmem>>, vector<1x1x32xf32>
    %138 = vector.shape_cast %137 : vector<1x1x32xf32> to vector<1x32xf32>
    %c0_65 = arith.constant 0 : index
    %c0_66 = arith.constant 0 : index
    %c0_67 = arith.constant 0 : index
    %139 = vector.load %arg15[%c0_65, %c0_66, %c0_67] : memref<2x1x32xf32, #tpu.memory_space<vmem>>, vector<1x1x32xf32>
    %140 = vector.shape_cast %139 : vector<1x1x32xf32> to vector<1x32xf32>
    %cst_68 = arith.constant dense<0.000000e+00> : vector<16xf32>
    %141 = vector.multi_reduction <add>, %136, %cst_68 [1] : vector<16x32xf32> to vector<16xf32>
    %142 = vector.shape_cast %141 : vector<16xf32> to vector<16x1xf32>
    %cst_69 = arith.constant 3.200000e+01 : f32
    %143 = vector.broadcast %cst_69 : f32 to vector<16x1xf32>
    %144 = arith.divf %142, %143 : vector<16x1xf32>
    %145 = vector.broadcast %144 : vector<16x1xf32> to vector<16x32xf32>
    %146 = arith.subf %136, %145 : vector<16x32xf32>
    %147 = arith.mulf %146, %146 : vector<16x32xf32>
    %cst_70 = arith.constant dense<0.000000e+00> : vector<16xf32>
    %148 = vector.multi_reduction <add>, %147, %cst_70 [1] : vector<16x32xf32> to vector<16xf32>
    %149 = vector.shape_cast %148 : vector<16xf32> to vector<16x1xf32>
    %cst_71 = arith.constant 3.200000e+01 : f32
    %150 = vector.broadcast %cst_71 : f32 to vector<16x1xf32>
    %151 = arith.divf %149, %150 : vector<16x1xf32>
    %152 = vector.broadcast %144 : vector<16x1xf32> to vector<16x32xf32>
    %153 = arith.subf %136, %152 : vector<16x32xf32>
    %cst_72 = arith.constant 9.99999974E-6 : f32
    %154 = vector.broadcast %cst_72 : f32 to vector<16x1xf32>
    %155 = arith.addf %151, %154 : vector<16x1xf32>
    %156 = math.rsqrt %155 : vector<16x1xf32>
    %157 = vector.broadcast %156 : vector<16x1xf32> to vector<16x32xf32>
    %158 = arith.mulf %153, %157 : vector<16x32xf32>
    %159 = vector.broadcast %138 : vector<1x32xf32> to vector<16x32xf32>
    %160 = arith.mulf %158, %159 : vector<16x32xf32>
    %161 = vector.broadcast %140 : vector<1x32xf32> to vector<16x32xf32>
    %162 = arith.addf %160, %161 : vector<16x32xf32>
    %163 = arith.truncf %162 : vector<16x32xf32> to vector<16x32xbf16>
    %c1 = arith.constant 1 : index
    %c0_73 = arith.constant 0 : index
    %c0_74 = arith.constant 0 : index
    %164 = vector.load %arg4[%c1, %c0_73, %c0_74] : memref<2x32x96xbf16, #tpu.memory_space<vmem>>, vector<1x32x96xbf16>
    %165 = vector.shape_cast %164 : vector<1x32x96xbf16> to vector<32x96xbf16>
    %cst_75 = arith.constant dense<0.000000e+00> : vector<16x96xf32>
    %166 = tpu.matmul %163, %165, %cst_75 {dimension_numbers = #tpu.dot_dimension_numbers<[1], [0], [0], [1], [0, 0, 1, 1], [], []>} : vector<16x32xbf16>, vector<32x96xbf16>, vector<16x96xf32> -> vector<16x96xf32>
    %c1_76 = arith.constant 1 : index
    %c0_77 = arith.constant 0 : index
    %c0_78 = arith.constant 0 : index
    %167 = vector.load %arg5[%c1_76, %c0_77, %c0_78] : memref<2x1x96xf32, #tpu.memory_space<vmem>>, vector<1x1x96xf32>
    %168 = vector.shape_cast %167 : vector<1x1x96xf32> to vector<1x96xf32>
    %169 = vector.broadcast %168 : vector<1x96xf32> to vector<16x96xf32>
    %170 = arith.addf %166, %169 : vector<16x96xf32>
    %171 = vector.extract_strided_slice %170 {offsets = [0, 0], sizes = [16, 8], strides = [1, 1]} : vector<16x96xf32> to vector<16x8xf32>
    %172 = vector.extract_strided_slice %170 {offsets = [0, 32], sizes = [16, 8], strides = [1, 1]} : vector<16x96xf32> to vector<16x8xf32>
    %173 = vector.extract_strided_slice %170 {offsets = [0, 64], sizes = [16, 8], strides = [1, 1]} : vector<16x96xf32> to vector<16x8xf32>
    %174 = tpu.transpose %172, [1, 0] : vector<16x8xf32> -> vector<8x16xf32>
    %cst_79 = arith.constant dense<0.000000e+00> : vector<16x16xf32>
    %175 = tpu.matmul %171, %174, %cst_79 {dimension_numbers = #tpu.dot_dimension_numbers<[1], [0], [0], [1], [0, 0, 1, 1], [], []>} : vector<16x8xf32>, vector<8x16xf32>, vector<16x16xf32> -> vector<16x16xf32>
    %cst_80 = arith.constant 0.353553385 : f32
    %176 = vector.broadcast %cst_80 : f32 to vector<16x16xf32>
    %177 = arith.mulf %175, %176 : vector<16x16xf32>
    %178 = arith.addf %177, %1 : vector<16x16xf32>
    %cst_81 = arith.constant dense<0xFF800000> : vector<16xf32>
    %179 = vector.multi_reduction <maximumf>, %178, %cst_81 [1] : vector<16x16xf32> to vector<16xf32>
    %180 = vector.shape_cast %179 : vector<16xf32> to vector<16x1xf32>
    %181 = vector.broadcast %180 : vector<16x1xf32> to vector<16x16xf32>
    %182 = arith.subf %178, %181 : vector<16x16xf32>
    %183 = math.exp %182 : vector<16x16xf32>
    %cst_82 = arith.constant dense<0.000000e+00> : vector<16xf32>
    %184 = vector.multi_reduction <add>, %183, %cst_82 [1] : vector<16x16xf32> to vector<16xf32>
    %185 = vector.shape_cast %184 : vector<16xf32> to vector<16x1xf32>
    %186 = vector.broadcast %185 : vector<16x1xf32> to vector<16x16xf32>
    %187 = arith.divf %183, %186 : vector<16x16xf32>
    %cst_83 = arith.constant dense<0.000000e+00> : vector<16x8xf32>
    %188 = tpu.matmul %187, %173, %cst_83 {dimension_numbers = #tpu.dot_dimension_numbers<[1], [0], [0], [1], [0, 0, 1, 1], [], []>} : vector<16x16xf32>, vector<16x8xf32>, vector<16x8xf32> -> vector<16x8xf32>
    %189 = vector.extract_strided_slice %170 {offsets = [0, 8], sizes = [16, 8], strides = [1, 1]} : vector<16x96xf32> to vector<16x8xf32>
    %190 = vector.extract_strided_slice %170 {offsets = [0, 40], sizes = [16, 8], strides = [1, 1]} : vector<16x96xf32> to vector<16x8xf32>
    %191 = vector.extract_strided_slice %170 {offsets = [0, 72], sizes = [16, 8], strides = [1, 1]} : vector<16x96xf32> to vector<16x8xf32>
    %192 = tpu.transpose %190, [1, 0] : vector<16x8xf32> -> vector<8x16xf32>
    %cst_84 = arith.constant dense<0.000000e+00> : vector<16x16xf32>
    %193 = tpu.matmul %189, %192, %cst_84 {dimension_numbers = #tpu.dot_dimension_numbers<[1], [0], [0], [1], [0, 0, 1, 1], [], []>} : vector<16x8xf32>, vector<8x16xf32>, vector<16x16xf32> -> vector<16x16xf32>
    %cst_85 = arith.constant 0.353553385 : f32
    %194 = vector.broadcast %cst_85 : f32 to vector<16x16xf32>
    %195 = arith.mulf %193, %194 : vector<16x16xf32>
    %196 = arith.addf %195, %1 : vector<16x16xf32>
    %cst_86 = arith.constant dense<0xFF800000> : vector<16xf32>
    %197 = vector.multi_reduction <maximumf>, %196, %cst_86 [1] : vector<16x16xf32> to vector<16xf32>
    %198 = vector.shape_cast %197 : vector<16xf32> to vector<16x1xf32>
    %199 = vector.broadcast %198 : vector<16x1xf32> to vector<16x16xf32>
    %200 = arith.subf %196, %199 : vector<16x16xf32>
    %201 = math.exp %200 : vector<16x16xf32>
    %cst_87 = arith.constant dense<0.000000e+00> : vector<16xf32>
    %202 = vector.multi_reduction <add>, %201, %cst_87 [1] : vector<16x16xf32> to vector<16xf32>
    %203 = vector.shape_cast %202 : vector<16xf32> to vector<16x1xf32>
    %204 = vector.broadcast %203 : vector<16x1xf32> to vector<16x16xf32>
    %205 = arith.divf %201, %204 : vector<16x16xf32>
    %cst_88 = arith.constant dense<0.000000e+00> : vector<16x8xf32>
    %206 = tpu.matmul %205, %191, %cst_88 {dimension_numbers = #tpu.dot_dimension_numbers<[1], [0], [0], [1], [0, 0, 1, 1], [], []>} : vector<16x16xf32>, vector<16x8xf32>, vector<16x8xf32> -> vector<16x8xf32>
    %207 = vector.extract_strided_slice %170 {offsets = [0, 16], sizes = [16, 8], strides = [1, 1]} : vector<16x96xf32> to vector<16x8xf32>
    %208 = vector.extract_strided_slice %170 {offsets = [0, 48], sizes = [16, 8], strides = [1, 1]} : vector<16x96xf32> to vector<16x8xf32>
    %209 = vector.extract_strided_slice %170 {offsets = [0, 80], sizes = [16, 8], strides = [1, 1]} : vector<16x96xf32> to vector<16x8xf32>
    %210 = tpu.transpose %208, [1, 0] : vector<16x8xf32> -> vector<8x16xf32>
    %cst_89 = arith.constant dense<0.000000e+00> : vector<16x16xf32>
    %211 = tpu.matmul %207, %210, %cst_89 {dimension_numbers = #tpu.dot_dimension_numbers<[1], [0], [0], [1], [0, 0, 1, 1], [], []>} : vector<16x8xf32>, vector<8x16xf32>, vector<16x16xf32> -> vector<16x16xf32>
    %cst_90 = arith.constant 0.353553385 : f32
    %212 = vector.broadcast %cst_90 : f32 to vector<16x16xf32>
    %213 = arith.mulf %211, %212 : vector<16x16xf32>
    %214 = arith.addf %213, %1 : vector<16x16xf32>
    %cst_91 = arith.constant dense<0xFF800000> : vector<16xf32>
    %215 = vector.multi_reduction <maximumf>, %214, %cst_91 [1] : vector<16x16xf32> to vector<16xf32>
    %216 = vector.shape_cast %215 : vector<16xf32> to vector<16x1xf32>
    %217 = vector.broadcast %216 : vector<16x1xf32> to vector<16x16xf32>
    %218 = arith.subf %214, %217 : vector<16x16xf32>
    %219 = math.exp %218 : vector<16x16xf32>
    %cst_92 = arith.constant dense<0.000000e+00> : vector<16xf32>
    %220 = vector.multi_reduction <add>, %219, %cst_92 [1] : vector<16x16xf32> to vector<16xf32>
    %221 = vector.shape_cast %220 : vector<16xf32> to vector<16x1xf32>
    %222 = vector.broadcast %221 : vector<16x1xf32> to vector<16x16xf32>
    %223 = arith.divf %219, %222 : vector<16x16xf32>
    %cst_93 = arith.constant dense<0.000000e+00> : vector<16x8xf32>
    %224 = tpu.matmul %223, %209, %cst_93 {dimension_numbers = #tpu.dot_dimension_numbers<[1], [0], [0], [1], [0, 0, 1, 1], [], []>} : vector<16x16xf32>, vector<16x8xf32>, vector<16x8xf32> -> vector<16x8xf32>
    %225 = vector.extract_strided_slice %170 {offsets = [0, 24], sizes = [16, 8], strides = [1, 1]} : vector<16x96xf32> to vector<16x8xf32>
    %226 = vector.extract_strided_slice %170 {offsets = [0, 56], sizes = [16, 8], strides = [1, 1]} : vector<16x96xf32> to vector<16x8xf32>
    %227 = vector.extract_strided_slice %170 {offsets = [0, 88], sizes = [16, 8], strides = [1, 1]} : vector<16x96xf32> to vector<16x8xf32>
    %228 = tpu.transpose %226, [1, 0] : vector<16x8xf32> -> vector<8x16xf32>
    %cst_94 = arith.constant dense<0.000000e+00> : vector<16x16xf32>
    %229 = tpu.matmul %225, %228, %cst_94 {dimension_numbers = #tpu.dot_dimension_numbers<[1], [0], [0], [1], [0, 0, 1, 1], [], []>} : vector<16x8xf32>, vector<8x16xf32>, vector<16x16xf32> -> vector<16x16xf32>
    %cst_95 = arith.constant 0.353553385 : f32
    %230 = vector.broadcast %cst_95 : f32 to vector<16x16xf32>
    %231 = arith.mulf %229, %230 : vector<16x16xf32>
    %232 = arith.addf %231, %1 : vector<16x16xf32>
    %cst_96 = arith.constant dense<0xFF800000> : vector<16xf32>
    %233 = vector.multi_reduction <maximumf>, %232, %cst_96 [1] : vector<16x16xf32> to vector<16xf32>
    %234 = vector.shape_cast %233 : vector<16xf32> to vector<16x1xf32>
    %235 = vector.broadcast %234 : vector<16x1xf32> to vector<16x16xf32>
    %236 = arith.subf %232, %235 : vector<16x16xf32>
    %237 = math.exp %236 : vector<16x16xf32>
    %cst_97 = arith.constant dense<0.000000e+00> : vector<16xf32>
    %238 = vector.multi_reduction <add>, %237, %cst_97 [1] : vector<16x16xf32> to vector<16xf32>
    %239 = vector.shape_cast %238 : vector<16xf32> to vector<16x1xf32>
    %240 = vector.broadcast %239 : vector<16x1xf32> to vector<16x16xf32>
    %241 = arith.divf %237, %240 : vector<16x16xf32>
    %cst_98 = arith.constant dense<0.000000e+00> : vector<16x8xf32>
    %242 = tpu.matmul %241, %227, %cst_98 {dimension_numbers = #tpu.dot_dimension_numbers<[1], [0], [0], [1], [0, 0, 1, 1], [], []>} : vector<16x16xf32>, vector<16x8xf32>, vector<16x8xf32> -> vector<16x8xf32>
    %243 = tpu.concatenate %188, %206, %224, %242 in 1 : vector<16x8xf32>, vector<16x8xf32>, vector<16x8xf32>, vector<16x8xf32> -> vector<16x32xf32>
    %244 = arith.truncf %243 : vector<16x32xf32> to vector<16x32xbf16>
    %c1_99 = arith.constant 1 : index
    %c0_100 = arith.constant 0 : index
    %c0_101 = arith.constant 0 : index
    %245 = vector.load %arg6[%c1_99, %c0_100, %c0_101] : memref<2x32x32xbf16, #tpu.memory_space<vmem>>, vector<1x32x32xbf16>
    %246 = vector.shape_cast %245 : vector<1x32x32xbf16> to vector<32x32xbf16>
    %cst_102 = arith.constant dense<0.000000e+00> : vector<16x32xf32>
    %247 = tpu.matmul %244, %246, %cst_102 {dimension_numbers = #tpu.dot_dimension_numbers<[1], [0], [0], [1], [0, 0, 1, 1], [], []>} : vector<16x32xbf16>, vector<32x32xbf16>, vector<16x32xf32> -> vector<16x32xf32>
    %c1_103 = arith.constant 1 : index
    %c0_104 = arith.constant 0 : index
    %c0_105 = arith.constant 0 : index
    %248 = vector.load %arg7[%c1_103, %c0_104, %c0_105] : memref<2x1x32xf32, #tpu.memory_space<vmem>>, vector<1x1x32xf32>
    %249 = vector.shape_cast %248 : vector<1x1x32xf32> to vector<1x32xf32>
    %250 = vector.broadcast %249 : vector<1x32xf32> to vector<16x32xf32>
    %251 = arith.addf %247, %250 : vector<16x32xf32>
    %252 = arith.addf %162, %251 : vector<16x32xf32>
    %c1_106 = arith.constant 1 : index
    %c0_107 = arith.constant 0 : index
    %c0_108 = arith.constant 0 : index
    %253 = vector.load %arg8[%c1_106, %c0_107, %c0_108] : memref<2x1x32xf32, #tpu.memory_space<vmem>>, vector<1x1x32xf32>
    %254 = vector.shape_cast %253 : vector<1x1x32xf32> to vector<1x32xf32>
    %c1_109 = arith.constant 1 : index
    %c0_110 = arith.constant 0 : index
    %c0_111 = arith.constant 0 : index
    %255 = vector.load %arg9[%c1_109, %c0_110, %c0_111] : memref<2x1x32xf32, #tpu.memory_space<vmem>>, vector<1x1x32xf32>
    %256 = vector.shape_cast %255 : vector<1x1x32xf32> to vector<1x32xf32>
    %cst_112 = arith.constant dense<0.000000e+00> : vector<16xf32>
    %257 = vector.multi_reduction <add>, %252, %cst_112 [1] : vector<16x32xf32> to vector<16xf32>
    %258 = vector.shape_cast %257 : vector<16xf32> to vector<16x1xf32>
    %cst_113 = arith.constant 3.200000e+01 : f32
    %259 = vector.broadcast %cst_113 : f32 to vector<16x1xf32>
    %260 = arith.divf %258, %259 : vector<16x1xf32>
    %261 = vector.broadcast %260 : vector<16x1xf32> to vector<16x32xf32>
    %262 = arith.subf %252, %261 : vector<16x32xf32>
    %263 = arith.mulf %262, %262 : vector<16x32xf32>
    %cst_114 = arith.constant dense<0.000000e+00> : vector<16xf32>
    %264 = vector.multi_reduction <add>, %263, %cst_114 [1] : vector<16x32xf32> to vector<16xf32>
    %265 = vector.shape_cast %264 : vector<16xf32> to vector<16x1xf32>
    %cst_115 = arith.constant 3.200000e+01 : f32
    %266 = vector.broadcast %cst_115 : f32 to vector<16x1xf32>
    %267 = arith.divf %265, %266 : vector<16x1xf32>
    %268 = vector.broadcast %260 : vector<16x1xf32> to vector<16x32xf32>
    %269 = arith.subf %252, %268 : vector<16x32xf32>
    %cst_116 = arith.constant 9.99999974E-6 : f32
    %270 = vector.broadcast %cst_116 : f32 to vector<16x1xf32>
    %271 = arith.addf %267, %270 : vector<16x1xf32>
    %272 = math.rsqrt %271 : vector<16x1xf32>
    %273 = vector.broadcast %272 : vector<16x1xf32> to vector<16x32xf32>
    %274 = arith.mulf %269, %273 : vector<16x32xf32>
    %275 = vector.broadcast %254 : vector<1x32xf32> to vector<16x32xf32>
    %276 = arith.mulf %274, %275 : vector<16x32xf32>
    %277 = vector.broadcast %256 : vector<1x32xf32> to vector<16x32xf32>
    %278 = arith.addf %276, %277 : vector<16x32xf32>
    %279 = arith.truncf %278 : vector<16x32xf32> to vector<16x32xbf16>
    %c1_117 = arith.constant 1 : index
    %c0_118 = arith.constant 0 : index
    %c0_119 = arith.constant 0 : index
    %280 = vector.load %arg10[%c1_117, %c0_118, %c0_119] : memref<2x32x2048xbf16, #tpu.memory_space<vmem>>, vector<1x32x2048xbf16>
    %281 = vector.shape_cast %280 : vector<1x32x2048xbf16> to vector<32x2048xbf16>
    %cst_120 = arith.constant dense<0.000000e+00> : vector<16x2048xf32>
    %282 = tpu.matmul %279, %281, %cst_120 {dimension_numbers = #tpu.dot_dimension_numbers<[1], [0], [0], [1], [0, 0, 1, 1], [], []>} : vector<16x32xbf16>, vector<32x2048xbf16>, vector<16x2048xf32> -> vector<16x2048xf32>
    %c1_121 = arith.constant 1 : index
    %c0_122 = arith.constant 0 : index
    %c0_123 = arith.constant 0 : index
    %283 = vector.load %arg11[%c1_121, %c0_122, %c0_123] : memref<2x1x2048xf32, #tpu.memory_space<vmem>>, vector<1x1x2048xf32>
    %284 = vector.shape_cast %283 : vector<1x1x2048xf32> to vector<1x2048xf32>
    %285 = vector.broadcast %284 : vector<1x2048xf32> to vector<16x2048xf32>
    %286 = arith.addf %282, %285 : vector<16x2048xf32>
    %cst_124 = arith.constant 0.000000e+00 : f32
    %287 = vector.broadcast %cst_124 : f32 to vector<16x2048xf32>
    %288 = arith.maximumf %286, %287 : vector<16x2048xf32>
    %289 = arith.truncf %288 : vector<16x2048xf32> to vector<16x2048xbf16>
    %c1_125 = arith.constant 1 : index
    %c0_126 = arith.constant 0 : index
    %c0_127 = arith.constant 0 : index
    %290 = vector.load %arg12[%c1_125, %c0_126, %c0_127] : memref<2x2048x32xbf16, #tpu.memory_space<vmem>>, vector<1x2048x32xbf16>
    %291 = vector.shape_cast %290 : vector<1x2048x32xbf16> to vector<2048x32xbf16>
    %cst_128 = arith.constant dense<0.000000e+00> : vector<16x32xf32>
    %292 = tpu.matmul %289, %291, %cst_128 {dimension_numbers = #tpu.dot_dimension_numbers<[1], [0], [0], [1], [0, 0, 1, 1], [], []>} : vector<16x2048xbf16>, vector<2048x32xbf16>, vector<16x32xf32> -> vector<16x32xf32>
    %c1_129 = arith.constant 1 : index
    %c0_130 = arith.constant 0 : index
    %c0_131 = arith.constant 0 : index
    %293 = vector.load %arg13[%c1_129, %c0_130, %c0_131] : memref<2x1x32xf32, #tpu.memory_space<vmem>>, vector<1x1x32xf32>
    %294 = vector.shape_cast %293 : vector<1x1x32xf32> to vector<1x32xf32>
    %295 = vector.broadcast %294 : vector<1x32xf32> to vector<16x32xf32>
    %296 = arith.addf %292, %295 : vector<16x32xf32>
    %297 = arith.addf %278, %296 : vector<16x32xf32>
    %c1_132 = arith.constant 1 : index
    %c0_133 = arith.constant 0 : index
    %c0_134 = arith.constant 0 : index
    %298 = vector.load %arg14[%c1_132, %c0_133, %c0_134] : memref<2x1x32xf32, #tpu.memory_space<vmem>>, vector<1x1x32xf32>
    %299 = vector.shape_cast %298 : vector<1x1x32xf32> to vector<1x32xf32>
    %c1_135 = arith.constant 1 : index
    %c0_136 = arith.constant 0 : index
    %c0_137 = arith.constant 0 : index
    %300 = vector.load %arg15[%c1_135, %c0_136, %c0_137] : memref<2x1x32xf32, #tpu.memory_space<vmem>>, vector<1x1x32xf32>
    %301 = vector.shape_cast %300 : vector<1x1x32xf32> to vector<1x32xf32>
    %cst_138 = arith.constant dense<0.000000e+00> : vector<16xf32>
    %302 = vector.multi_reduction <add>, %297, %cst_138 [1] : vector<16x32xf32> to vector<16xf32>
    %303 = vector.shape_cast %302 : vector<16xf32> to vector<16x1xf32>
    %cst_139 = arith.constant 3.200000e+01 : f32
    %304 = vector.broadcast %cst_139 : f32 to vector<16x1xf32>
    %305 = arith.divf %303, %304 : vector<16x1xf32>
    %306 = vector.broadcast %305 : vector<16x1xf32> to vector<16x32xf32>
    %307 = arith.subf %297, %306 : vector<16x32xf32>
    %308 = arith.mulf %307, %307 : vector<16x32xf32>
    %cst_140 = arith.constant dense<0.000000e+00> : vector<16xf32>
    %309 = vector.multi_reduction <add>, %308, %cst_140 [1] : vector<16x32xf32> to vector<16xf32>
    %310 = vector.shape_cast %309 : vector<16xf32> to vector<16x1xf32>
    %cst_141 = arith.constant 3.200000e+01 : f32
    %311 = vector.broadcast %cst_141 : f32 to vector<16x1xf32>
    %312 = arith.divf %310, %311 : vector<16x1xf32>
    %313 = vector.broadcast %305 : vector<16x1xf32> to vector<16x32xf32>
    %314 = arith.subf %297, %313 : vector<16x32xf32>
    %cst_142 = arith.constant 9.99999974E-6 : f32
    %315 = vector.broadcast %cst_142 : f32 to vector<16x1xf32>
    %316 = arith.addf %312, %315 : vector<16x1xf32>
    %317 = math.rsqrt %316 : vector<16x1xf32>
    %318 = vector.broadcast %317 : vector<16x1xf32> to vector<16x32xf32>
    %319 = arith.mulf %314, %318 : vector<16x32xf32>
    %320 = vector.broadcast %299 : vector<1x32xf32> to vector<16x32xf32>
    %321 = arith.mulf %319, %320 : vector<16x32xf32>
    %322 = vector.broadcast %301 : vector<1x32xf32> to vector<16x32xf32>
    %323 = arith.addf %321, %322 : vector<16x32xf32>
    %c0_143 = arith.constant 0 : index
    %c0_144 = arith.constant 0 : index
    %324 = vector.load %arg19[%c0_143, %c0_144] : memref<16x32xf32, #tpu.memory_space<vmem>>, vector<16x32xf32>
    tpu.vector_store %arg19[%c0_143, %c0_144], %323 {strides = array<i32>} : memref<16x32xf32, #tpu.memory_space<vmem>>, vector<16x32xf32>,
    %c0_145 = arith.constant 0 : index
    %c0_146 = arith.constant 0 : index
    %325 = vector.load %arg3[%c0_145, %c0_146] : memref<2x16xf32, #tpu.memory_space<vmem>>, vector<2x16xf32>
    %cst_147 = arith.constant dense<0.000000e+00> : vector<2x32xf32>
    %326 = tpu.matmul %325, %323, %cst_147 {dimension_numbers = #tpu.dot_dimension_numbers<[1], [0], [0], [1], [0, 0, 1, 1], [], []>} : vector<2x16xf32>, vector<16x32xf32>, vector<2x32xf32> -> vector<2x32xf32>
    %327 = arith.truncf %326 : vector<2x32xf32> to vector<2x32xbf16>
    %c0_148 = arith.constant 0 : index
    %c0_149 = arith.constant 0 : index
    %328 = vector.load %arg16[%c0_148, %c0_149] : memref<32x16xbf16, #tpu.memory_space<vmem>>, vector<32x16xbf16>
    %cst_150 = arith.constant dense<0.000000e+00> : vector<2x16xf32>
    %329 = tpu.matmul %327, %328, %cst_150 {dimension_numbers = #tpu.dot_dimension_numbers<[1], [0], [0], [1], [0, 0, 1, 1], [], []>} : vector<2x32xbf16>, vector<32x16xbf16>, vector<2x16xf32> -> vector<2x16xf32>
    %c0_151 = arith.constant 0 : index
    %c0_152 = arith.constant 0 : index
    %330 = vector.load %arg17[%c0_151, %c0_152] : memref<1x16xf32, #tpu.memory_space<vmem>>, vector<1x16xf32>
    %331 = vector.broadcast %330 : vector<1x16xf32> to vector<2x16xf32>
    %332 = arith.addf %329, %331 : vector<2x16xf32>
    %c0_153 = arith.constant 0 : index
    %c0_154 = arith.constant 0 : index
    %333 = vector.load %arg18[%c0_153, %c0_154] : memref<2x16xf32, #tpu.memory_space<vmem>>, vector<2x16xf32>
    tpu.vector_store %arg18[%c0_153, %c0_154], %332 {strides = array<i32>} : memref<2x16xf32, #tpu.memory_space<vmem>>, vector<2x16xf32>,
    return
  }
  func.func @transform_0(%arg0: i32) -> (i32, i32) {
    %c0_i32 = arith.constant 0 : i32
    %c0_i32_0 = arith.constant 0 : i32
    %c0_i32_1 = arith.constant 0 : i32
    return %c0_i32, %c0_i32_0 : i32, i32
  }
  func.func @transform_1(%arg0: i32) -> (i32, i32) {
    %c0_i32 = arith.constant 0 : i32
    %c0_i32_0 = arith.constant 0 : i32
    %c0_i32_1 = arith.constant 0 : i32
    return %c0_i32, %c0_i32_0 : i32, i32
  }
  func.func @transform_2(%arg0: i32) -> (i32, i32) {
    %c0_i32 = arith.constant 0 : i32
    %c0_i32_0 = arith.constant 0 : i32
    %c0_i32_1 = arith.constant 0 : i32
    return %c0_i32, %c0_i32_0 : i32, i32
  }
  func.func @transform_3(%arg0: i32) -> (i32, i32, i32) {
    %c0_i32 = arith.constant 0 : i32
    %c0_i32_0 = arith.constant 0 : i32
    %c0_i32_1 = arith.constant 0 : i32
    %c0_i32_2 = arith.constant 0 : i32
    return %c0_i32, %c0_i32_0, %c0_i32_1 : i32, i32, i32
  }
  func.func @transform_4(%arg0: i32) -> (i32, i32, i32) {
    %c0_i32 = arith.constant 0 : i32
    %c0_i32_0 = arith.constant 0 : i32
    %c0_i32_1 = arith.constant 0 : i32
    %c0_i32_2 = arith.constant 0 : i32
    return %c0_i32, %c0_i32_0, %c0_i32_1 : i32, i32, i32
  }
  func.func @transform_5(%arg0: i32) -> (i32, i32, i32) {
    %c0_i32 = arith.constant 0 : i32
    %c0_i32_0 = arith.constant 0 : i32
    %c0_i32_1 = arith.constant 0 : i32
    %c0_i32_2 = arith.constant 0 : i32
    return %c0_i32, %c0_i32_0, %c0_i32_1 : i32, i32, i32
  }
  func.func @transform_6(%arg0: i32) -> (i32, i32, i32) {
    %c0_i32 = arith.constant 0 : i32
    %c0_i32_0 = arith.constant 0 : i32
    %c0_i32_1 = arith.constant 0 : i32
    %c0_i32_2 = arith.constant 0 : i32
    return %c0_i32, %c0_i32_0, %c0_i32_1 : i32, i32, i32
  }
  func.func @transform_7(%arg0: i32) -> (i32, i32, i32) {
    %c0_i32 = arith.constant 0 : i32
    %c0_i32_0 = arith.constant 0 : i32
    %c0_i32_1 = arith.constant 0 : i32
    %c0_i32_2 = arith.constant 0 : i32
    return %c0_i32, %c0_i32_0, %c0_i32_1 : i32, i32, i32
  }
  func.func @transform_8(%arg0: i32) -> (i32, i32, i32) {
    %c0_i32 = arith.constant 0 : i32
    %c0_i32_0 = arith.constant 0 : i32
    %c0_i32_1 = arith.constant 0 : i32
    %c0_i32_2 = arith.constant 0 : i32
    return %c0_i32, %c0_i32_0, %c0_i32_1 : i32, i32, i32
  }
  func.func @transform_9(%arg0: i32) -> (i32, i32, i32) {
    %c0_i32 = arith.constant 0 : i32
    %c0_i32_0 = arith.constant 0 : i32
    %c0_i32_1 = arith.constant 0 : i32
    %c0_i32_2 = arith.constant 0 : i32
    return %c0_i32, %c0_i32_0, %c0_i32_1 : i32, i32, i32
  }
  func.func @transform_10(%arg0: i32) -> (i32, i32, i32) {
    %c0_i32 = arith.constant 0 : i32
    %c0_i32_0 = arith.constant 0 : i32
    %c0_i32_1 = arith.constant 0 : i32
    %c0_i32_2 = arith.constant 0 : i32
    return %c0_i32, %c0_i32_0, %c0_i32_1 : i32, i32, i32
  }
  func.func @transform_11(%arg0: i32) -> (i32, i32, i32) {
    %c0_i32 = arith.constant 0 : i32
    %c0_i32_0 = arith.constant 0 : i32
    %c0_i32_1 = arith.constant 0 : i32
    %c0_i32_2 = arith.constant 0 : i32
    return %c0_i32, %c0_i32_0, %c0_i32_1 : i32, i32, i32
  }
  func.func @transform_12(%arg0: i32) -> (i32, i32, i32) {
    %c0_i32 = arith.constant 0 : i32
    %c0_i32_0 = arith.constant 0 : i32
    %c0_i32_1 = arith.constant 0 : i32
    %c0_i32_2 = arith.constant 0 : i32
    return %c0_i32, %c0_i32_0, %c0_i32_1 : i32, i32, i32
  }
  func.func @transform_13(%arg0: i32) -> (i32, i32, i32) {
    %c0_i32 = arith.constant 0 : i32
    %c0_i32_0 = arith.constant 0 : i32
    %c0_i32_1 = arith.constant 0 : i32
    %c0_i32_2 = arith.constant 0 : i32
    return %c0_i32, %c0_i32_0, %c0_i32_1 : i32, i32, i32
  }
  func.func @transform_14(%arg0: i32) -> (i32, i32, i32) {
    %c0_i32 = arith.constant 0 : i32
    %c0_i32_0 = arith.constant 0 : i32
    %c0_i32_1 = arith.constant 0 : i32
    %c0_i32_2 = arith.constant 0 : i32
    return %c0_i32, %c0_i32_0, %c0_i32_1 : i32, i32, i32
  }
  func.func @transform_15(%arg0: i32) -> (i32, i32) {
    %c0_i32 = arith.constant 0 : i32
    %c0_i32_0 = arith.constant 0 : i32
    %c0_i32_1 = arith.constant 0 : i32
    return %c0_i32, %c0_i32_0 : i32, i32
  }
  func.func @transform_16(%arg0: i32) -> (i32, i32) {
    %c0_i32 = arith.constant 0 : i32
    %c0_i32_0 = arith.constant 0 : i32
    %c0_i32_1 = arith.constant 0 : i32
    return %c0_i32, %c0_i32_0 : i32, i32
  }
  func.func @transform_17(%arg0: i32) -> (i32, i32) {
    %c0_i32 = arith.constant 0 : i32
    %c0_i32_0 = arith.constant 0 : i32
    %c0_i32_1 = arith.constant 0 : i32
    return %c0_i32, %c0_i32_0 : i32, i32
  }
  func.func @transform_18(%arg0: i32) -> (i32, i32) {
    %c0_i32 = arith.constant 0 : i32
    %c0_i32_0 = arith.constant 0 : i32
    %c0_i32_1 = arith.constant 0 : i32
    return %c0_i32, %c0_i32_0 : i32, i32
  }
}

</mosaic_0001>

<llo_original>
// kernel: eq.15
$region0: #{eq.15}
  %s0 = inlined_call_operand.vmem [shape: s32[2,8], index: 0, kind: input, shape index: {}]
  %s1 = inlined_call_operand.vmem [shape: s32[16], index: 1, kind: output, shape index: {}]
  $region1: #{eq.15} parent=0
    #allocation0 [shape = 'u8[4096]{0}', space=vmem, size = 0x1000, scoped, tag = 'scoped mem for output reshape']
    #allocation1 [shape = 'u8[4096]{0}', space=vmem, size = 0x1000, scoped, tag = 'scoped mem for input reshape']
    %s3 = sshllo.u32 0, 2
    %v4 = vld [vmem:[%s0] sm:%s3]
    %5 = vst [vmem:[#allocation1] sm:%s3] %v4
    %v6 = vld [vmem:[#allocation1] sm:$0x1]
    %vm7 = vcmask 64512
    %8 = vst.msk [vmem:[#allocation0] sm:$0x1] %vm7, %v6
    %s9 = scalar_lea.vmem [#allocation1], 1
    %v10 = vld [vmem:[%s9] sm:$0x1]
    %11 = vrot.lane.b32.xlu0 %v10, 8
    %v12 = vpop.permute.xlu0 %11
    %vm13 = vcmask 130112
    %14 = vst.msk [vmem:[#allocation0] sm:$0x1] %vm13, %v12
    %s16 = sshllo.u32 0, 1
    %v18 = vld [vmem:[#allocation0] sm:%s16]
    %s19 = sshllo.u32 0, 1
    %20 = vst [vmem:[%s1] sm:%s19] %v18

// kernel: image_encoder_forward.1
$region0: #{image_encoder_forward.1}
  #allocation0 [shape = 'u32[]', space=smem, size = 0x4, offset = 0x4, fixed_abs, tag = 'smem constant byte address 0x4 - core index']
  #allocation1 [shape = 'u32[144,128]{1,0:T(1,128)}', space=vmem, size = 0x12000, scoped, tag = 'internal scratch']
  %s0 = inlined_call_operand.vmem [shape: f32[16,32], index: 0, kind: input, shape index: {}]
  %s1 = inlined_call_operand.vmem [shape: f32[16,16], index: 1, kind: input, shape index: {}]
  %s2 = inlined_call_operand.vmem [shape: f32[2,16], index: 2, kind: input, shape index: {}]
  %s3 = inlined_call_operand.vmem [shape: bf16[2,32,96], index: 3, kind: input, shape index: {}]
  %s4 = inlined_call_operand.vmem [shape: f32[2,1,96], index: 4, kind: input, shape index: {}]
  %s5 = inlined_call_operand.vmem [shape: bf16[2,32,32], index: 5, kind: input, shape index: {}]
  %s6 = inlined_call_operand.vmem [shape: f32[2,1,32], index: 6, kind: input, shape index: {}]
  %s7 = inlined_call_operand.vmem [shape: f32[2,1,32], index: 7, kind: input, shape index: {}]
  %s8 = inlined_call_operand.vmem [shape: f32[2,1,32], index: 8, kind: input, shape index: {}]
  %s9 = inlined_call_operand.vmem [shape: bf16[2,32,2048], index: 9, kind: input, shape index: {}]
  %s10 = inlined_call_operand.vmem [shape: f32[2,1,2048], index: 10, kind: input, shape index: {}]
  %s11 = inlined_call_operand.vmem [shape: bf16[2,2048,32], index: 11, kind: input, shape index: {}]
  %s12 = inlined_call_operand.vmem [shape: f32[2,1,32], index: 12, kind: input, shape index: {}]
  %s13 = inlined_call_operand.vmem [shape: f32[2,1,32], index: 13, kind: input, shape index: {}]
  %s14 = inlined_call_operand.vmem [shape: f32[2,1,32], index: 14, kind: input, shape index: {}]
  %s15 = inlined_call_operand.vmem [shape: bf16[32,16], index: 15, kind: input, shape index: {}]
  %s16 = inlined_call_operand.vmem [shape: f32[1,16], index: 16, kind: input, shape index: {}]
  %s17 = inlined_call_operand.hbm [shape: f32[2,16], index: 17, kind: output, shape index: {0}]
  %s18 = inlined_call_operand.hbm [shape: f32[16,32], index: 18, kind: output, shape index: {1}]
  %19 = xla_tuple %s17, %s18
  %s20 = sld [smem:[#allocation0]]
  $region86: #{image_encoder_forward.1} parent=0
    _
  %s22 = ssub.s32 1, %s20
  %s23 = scalar_select 0, %s22, %s20
  $region1: #{image_encoder_forward.1} parent=0
    #allocation2 [shape = 'u8[1024]{0}', space=vmem, size = 0x400, scoped, tag = 'output window, operand 0, single buffered']
    #allocation3 [shape = 's32[1]{0}', space=sflag, size = 0x4, scoped, tag = 'scoped memory for image_encoder_forward.1']
    #allocation4 [shape = 'u8[8192]{0}', space=vmem, size = 0x2000, scoped, tag = 'output window, operand 1, single buffered']
    #allocation5 [shape = 's32[1]{0}', space=sflag, size = 0x4, scoped, tag = 'scoped memory for image_encoder_forward.1']
    %24 = vsyncpa [#allocation3], 0
    %25 = vsyncpa [#allocation5], 0
    // Predicated region
    $region2: #{image_encoder_forward.1} parent=1 // pred_check
      _
    $region3: #{image_encoder_forward.1} parent=1 // pred_check_branch
      %27 = sbr.rel (0) target = $region5
    $region4: #{image_encoder_forward.1} parent=1 // pred_region
      _
    $region5: #{image_encoder_forward.1} parent=1 // pred_fallthru
      _
    // Predicated region
    $region6: #{image_encoder_forward.1} parent=1 // pred_check
      _
    $region7: #{image_encoder_forward.1} parent=1 // pred_check_branch
      %29 = sbr.rel (0) target = $region9
    $region8: #{image_encoder_forward.1} parent=1 // pred_region
      _
    $region9: #{image_encoder_forward.1} parent=1 // pred_fallthru
      _
    // Predicated region
    $region10: #{image_encoder_forward.1} parent=1 // pred_check
      _
    $region11: #{image_encoder_forward.1} parent=1 // pred_check_branch
      %31 = sbr.rel (0) target = $region13
    $region12: #{image_encoder_forward.1} parent=1 // pred_region
      _
    $region13: #{image_encoder_forward.1} parent=1 // pred_fallthru
      _
    // Predicated region
    $region14: #{image_encoder_forward.1} parent=1 // pred_check
      _
    $region15: #{image_encoder_forward.1} parent=1 // pred_check_branch
      %33 = sbr.rel (0) target = $region17
    $region16: #{image_encoder_forward.1} parent=1 // pred_region
      _
    $region17: #{image_encoder_forward.1} parent=1 // pred_fallthru
      _
    // Predicated region
    $region18: #{image_encoder_forward.1} parent=1 // pred_check
      _
    $region19: #{image_encoder_forward.1} parent=1 // pred_check_branch
      %35 = sbr.rel (0) target = $region21
    $region20: #{image_encoder_forward.1} parent=1 // pred_region
      _
    $region21: #{image_encoder_forward.1} parent=1 // pred_fallthru
      _
    // Predicated region
    $region22: #{image_encoder_forward.1} parent=1 // pred_check
      _
    $region23: #{image_encoder_forward.1} parent=1 // pred_check_branch
      %37 = sbr.rel (0) target = $region25
    $region24: #{image_encoder_forward.1} parent=1 // pred_region
      _
    $region25: #{image_encoder_forward.1} parent=1 // pred_fallthru
      _
    // Predicated region
    $region26: #{image_encoder_forward.1} parent=1 // pred_check
      _
    $region27: #{image_encoder_forward.1} parent=1 // pred_check_branch
      %39 = sbr.rel (0) target = $region29
    $region28: #{image_encoder_forward.1} parent=1 // pred_region
      _
    $region29: #{image_encoder_forward.1} parent=1 // pred_fallthru
      _
    // Predicated region
    $region30: #{image_encoder_forward.1} parent=1 // pred_check
      _
    $region31: #{image_encoder_forward.1} parent=1 // pred_check_branch
      %41 = sbr.rel (0) target = $region33
    $region32: #{image_encoder_forward.1} parent=1 // pred_region
      _
    $region33: #{image_encoder_forward.1} parent=1 // pred_fallthru
      _
    // Predicated region
    $region34: #{image_encoder_forward.1} parent=1 // pred_check
      _
    $region35: #{image_encoder_forward.1} parent=1 // pred_check_branch
      %43 = sbr.rel (0) target = $region37
    $region36: #{image_encoder_forward.1} parent=1 // pred_region
      _
    $region37: #{image_encoder_forward.1} parent=1 // pred_fallthru
      _
    // Predicated region
    $region38: #{image_encoder_forward.1} parent=1 // pred_check
      _
    $region39: #{image_encoder_forward.1} parent=1 // pred_check_branch
      %45 = sbr.rel (0) target = $region41
    $region40: #{image_encoder_forward.1} parent=1 // pred_region
      _
    $region41: #{image_encoder_forward.1} parent=1 // pred_fallthru
      _
    // Predicated region
    $region42: #{image_encoder_forward.1} parent=1 // pred_check
      _
    $region43: #{image_encoder_forward.1} parent=1 // pred_check_branch
      %47 = sbr.rel (0) target = $region45
    $region44: #{image_encoder_forward.1} parent=1 // pred_region
      _
    $region45: #{image_encoder_forward.1} parent=1 // pred_fallthru
      _
    // Predicated region
    $region46: #{image_encoder_forward.1} parent=1 // pred_check
      _
    $region47: #{image_encoder_forward.1} parent=1 // pred_check_branch
      %49 = sbr.rel (0) target = $region49
    $region48: #{image_encoder_forward.1} parent=1 // pred_region
      _
    $region49: #{image_encoder_forward.1} parent=1 // pred_fallthru
      _
    // Predicated region
    $region50: #{image_encoder_forward.1} parent=1 // pred_check
      _
    $region51: #{image_encoder_forward.1} parent=1 // pred_check_branch
      %51 = sbr.rel (0) target = $region53
    $region52: #{image_encoder_forward.1} parent=1 // pred_region
      _
    $region53: #{image_encoder_forward.1} parent=1 // pred_fallthru
      _
    // Predicated region
    $region54: #{image_encoder_forward.1} parent=1 // pred_check
      _
    $region55: #{image_encoder_forward.1} parent=1 // pred_check_branch
      %53 = sbr.rel (0) target = $region57
    $region56: #{image_encoder_forward.1} parent=1 // pred_region
      _
    $region57: #{image_encoder_forward.1} parent=1 // pred_fallthru
      _
    // Predicated region
    $region58: #{image_encoder_forward.1} parent=1 // pred_check
      _
    $region59: #{image_encoder_forward.1} parent=1 // pred_check_branch
      %55 = sbr.rel (0) target = $region61
    $region60: #{image_encoder_forward.1} parent=1 // pred_region
      _
    $region61: #{image_encoder_forward.1} parent=1 // pred_fallthru
      _
    // Predicated region
    $region62: #{image_encoder_forward.1} parent=1 // pred_check
      _
    $region63: #{image_encoder_forward.1} parent=1 // pred_check_branch
      %57 = sbr.rel (0) target = $region65
    $region64: #{image_encoder_forward.1} parent=1 // pred_region
      _
    $region65: #{image_encoder_forward.1} parent=1 // pred_fallthru
      _
    // Predicated region
    $region66: #{image_encoder_forward.1} parent=1 // pred_check
      _
    $region67: #{image_encoder_forward.1} parent=1 // pred_check_branch
      %59 = sbr.rel (0) target = $region69
    $region68: #{image_encoder_forward.1} parent=1 // pred_region
      _
    $region69: #{image_encoder_forward.1} parent=1 // pred_fallthru
      _
    %v61 = vld [vmem:[%s0] sm:$0xff]
    %v62 = vld [vmem:[%s0 + $0x8] sm:$0xff]
    %v63 = vld [vmem:[%s1] sm:$0xff]
    %v64 = vld [vmem:[%s1 + $0x8] sm:$0xff]
    %v65 = vpack.c.bf16 %v62, %v61
    %v66 = vld [vmem:[%s3] sm:$0xf]
    %v67 = vld [vmem:[%s3 + $0x4] sm:$0xf]
    %v68 = vld [vmem:[%s3 + $0x8] sm:$0xf]
    %v69 = vld [vmem:[%s3 + $0xc] sm:$0xf]
    %v70 = vld [vmem:[%s4] sm:$0x1]
    %v72 = vlaneseq
    %v73 = vshrl.u32 %v72, 7
    %v74 = vsub.s32 0, %v73
    %v75 = vrot.slane %v70, %v74
    %v81 = vunpack.c.l.b16 %v66
    %v82 = vunpack.c.l.b16 %v67
    %v83 = vunpack.c.l.b16 %v68
    %v84 = vunpack.c.l.b16 %v69
    %v85 = vpack.c.b16 %v82, %v81
    %v86 = vpack.c.b16 %v84, %v83
    %vm89 = vcmask 261120
    %v91 = vsel %vm89, %v65, 0
    %93 = vmatprep.subr.bf16.mxu0 0
    %94 = vmatpush1.bf16.msra.mxu0 %v85
    %95 = vmatprep.subr.bf16.mxu0 0
    %96 = vmatpush1.bf16.msra.mxu0 %v86
    %97 = vmatprep.subr.bf16.mxu0 0
    %98 = vmatpush1.bf16.msra.mxu0 0
    %99 = vmatprep.subr.bf16.mxu0 0
    %100 = vmatpush1.bf16.msra.mxu0 0
    %101 = vmatprep.subr.bf16.mxu0 0
    %102 = vmatpush1.bf16.msra.mxu0 0
    %103 = vmatprep.subr.bf16.mxu0 0
    %104 = vmatpush1.bf16.msra.mxu0 0
    %105 = vmatprep.subr.bf16.mxu0 0
    %106 = vmatpush1.bf16.msra.mxu0 0
    %107 = vmatprep.subr.bf16.mxu0 0
    %108 = vmatpush1.bf16.msra.mxu0 0
    %109 = vmatprep.subr.bf16.mxu0 0
    %110 = vmatpush1.bf16.msra.mxu0 0
    %111 = vmatprep.subr.bf16.mxu0 0
    %112 = vmatpush1.bf16.msra.mxu0 0
    %113 = vmatprep.subr.bf16.mxu0 0
    %114 = vmatpush1.bf16.msra.mxu0 0
    %115 = vmatprep.subr.bf16.mxu0 0
    %116 = vmatpush1.bf16.msra.mxu0 0
    %117 = vmatprep.subr.bf16.mxu0 0
    %118 = vmatpush1.bf16.msra.mxu0 0
    %119 = vmatprep.subr.bf16.mxu0 0
    %120 = vmatpush1.bf16.msra.mxu0 0
    %121 = vmatprep.subr.bf16.mxu0 0
    %122 = vmatpush1.bf16.msra.mxu0 0
    %123 = vmatprep.subr.bf16.mxu0 0
    %124 = vmatpush1.bf16.msra.mxu0 0
    %125 = vmatprep.mubr.bf16.mxu0 0
    %126 = vmatmul.mubr.bf16.gmra.mrb[0].mxu0 %v91
    %v127 = vpop.f32.mrb[0].mxu0
    %v128 = vadd.f32 %v75, %v127
    %v129 = vpop.f32.mrb[0].mxu0
    %v130 = vpop.f32.mrb[0].mxu0
    %v131 = vadd.f32 %v75, %v130
    %v132 = vpop.f32.mrb[0].mxu0
    %133 = vdwg.mxu0
    %136 = vrot.lane.b32.xlu0 %v128, 96
    %v137 = vpop.permute.xlu0 %136
    %138 = vrot.lane.b32.xlu0 %v131, 96
    %v139 = vpop.permute.xlu0 %138
    %vm140 = vcmask 64512
    %v141 = vsel %vm140, %v128, 0
    %v143 = vsel %vm140, %v131, 0
    %v145 = vsel %vm140, %v137, 0
    %v147 = vsel %vm140, %v139, 0
    %149 = vmatprep.subr.mxu0 0.0
    %150 = vmatpush1.xpose.msra.mxu0 %v145
    %151 = vmatprep.subr.mxu0 0.0
    %152 = vmatpush1.xpose.msra.mxu0 %v147
    %153 = vmatprep.subr.mxu0 0.0
    %154 = vmatpush1.xpose.msra.mxu0 0.0
    %155 = vmatprep.subr.mxu0 0.0
    %156 = vmatpush1.xpose.msra.mxu0 0.0
    %157 = vmatprep.subr.mxu0 0.0
    %158 = vmatpush1.xpose.msra.mxu0 0.0
    %159 = vmatprep.subr.mxu0 0.0
    %160 = vmatpush1.xpose.msra.mxu0 0.0
    %161 = vmatprep.subr.mxu0 0.0
    %162 = vmatpush1.xpose.msra.mxu0 0.0
    %163 = vmatprep.subr.mxu0 0.0
    %164 = vmatpush1.xpose.msra.mxu0 0.0
    %165 = vmatprep.subr.mxu0 0.0
    %166 = vmatpush1.xpose.msra.mxu0 0.0
    %167 = vmatprep.subr.mxu0 0.0
    %168 = vmatpush1.xpose.msra.mxu0 0.0
    %169 = vmatprep.subr.mxu0 0.0
    %170 = vmatpush1.xpose.msra.mxu0 0.0
    %171 = vmatprep.subr.mxu0 0.0
    %172 = vmatpush1.xpose.msra.mxu0 0.0
    %173 = vmatprep.subr.mxu0 0.0
    %174 = vmatpush1.xpose.msra.mxu0 0.0
    %175 = vmatprep.subr.mxu0 0.0
    %176 = vmatpush1.xpose.msra.mxu0 0.0
    %177 = vmatprep.subr.mxu0 0.0
    %178 = vmatpush1.xpose.msra.mxu0 0.0
    %179 = vmatprep.subr.mxu0 0.0
    %180 = vmatpush1.xpose.msra.mxu0 0.0
    %181 = vmatprep.subr.mxu0 0.0
    %182 = vmatpush1.xpose.msra.mxu0 0.0
    %183 = vmatprep.subr.mxu0 0.0
    %184 = vmatpush1.xpose.msra.mxu0 0.0
    %185 = vmatprep.subr.mxu0 0.0
    %186 = vmatpush1.xpose.msra.mxu0 0.0
    %187 = vmatprep.subr.mxu0 0.0
    %188 = vmatpush1.xpose.msra.mxu0 0.0
    %189 = vmatprep.subr.mxu0 0.0
    %190 = vmatpush1.xpose.msra.mxu0 0.0
    %191 = vmatprep.subr.mxu0 0.0
    %192 = vmatpush1.xpose.msra.mxu0 0.0
    %193 = vmatprep.subr.mxu0 0.0
    %194 = vmatpush1.xpose.msra.mxu0 0.0
    %195 = vmatprep.subr.mxu0 0.0
    %196 = vmatpush1.xpose.msra.mxu0 0.0
    %197 = vmatprep.subr.mxu0 0.0
    %198 = vmatpush1.xpose.msra.mxu0 0.0
    %199 = vmatprep.subr.mxu0 0.0
    %200 = vmatpush1.xpose.msra.mxu0 0.0
    %201 = vmatprep.subr.mxu0 0.0
    %202 = vmatpush1.xpose.msra.mxu0 0.0
    %203 = vmatprep.subr.mxu0 0.0
    %204 = vmatpush1.xpose.msra.mxu0 0.0
    %205 = vmatprep.subr.mxu0 0.0
    %206 = vmatpush1.xpose.msra.mxu0 0.0
    %207 = vmatprep.subr.mxu0 0.0
    %208 = vmatpush1.xpose.msra.mxu0 0.0
    %209 = vmatprep.subr.mxu0 0.0
    %210 = vmatpush1.xpose.msra.mxu0 0.0
    %211 = vmatprep.subr.mxu0 0.0
    %212 = vmatpush1.xpose.msra.mxu0 0.0
    %213 = vmatprep.mubr.f32.mxu0 0.0
    %214 = vmatmul.mubr.f32.gmra.mrb[0].mxu0 %v141
    %v215 = vpop.f32.mrb[0].mxu0
    %v216 = vadd.f32 0.0, %v215
    %v217 = vpop.f32.mrb[0].mxu0
    %218 = vmatprep.mubr.f32.mxu0 0.0
    %219 = vmatmul.mubr.f32.gmra.mrb[0].mxu0 %v143
    %v220 = vpop.f32.mrb[0].mxu0
    %v221 = vadd.f32 0.0, %v220
    %v222 = vpop.f32.mrb[0].mxu0
    %223 = vdwg.mxu0
    %v224 = vmul.f32 %v216, 0.35355338
    %v225 = vmul.f32 %v221, 0.35355338
    %v226 = vadd.f32 %v224, %v63
    %v227 = vadd.f32 %v225, %v64
    %vm228 = vcmask 130048
    %v229 = vsel %vm228, %v226, -inf
    %230 = vmax.xlane.f32.xlu0 %v229
    %v231 = vpop.xlane.xlu0 %230
    %v232 = vsel %vm228, %v227, -inf
    %233 = vmax.xlane.f32.xlu0 %v232
    %v234 = vpop.xlane.xlu0 %233
    %v235 = vsub.f32 %v226, %v231
    %v236 = vsub.f32 %v227, %v234
    %v237 = vmul.f32 %v235, 1.442695
    %v238 = vpow.pop %v237
    %v239 = vmul.f32 %v236, 1.442695
    %v240 = vpow.pop %v239
    %v241 = vsel %vm228, %v238, 0.0
    %242 = vadd.xlane.f32.xlu0 %v241
    %v243 = vpop.xlane.xlu0 %242
    %v244 = vsel %vm228, %v240, 0.0
    %245 = vadd.xlane.f32.xlu0 %v244
    %v246 = vpop.xlane.xlu0 %245
    %v247 = vrcp.pop %v243
    %v248 = vmul.f32 %v238, %v247
    %v249 = vrcp.pop %v246
    %v250 = vmul.f32 %v240, %v249
    %251 = vrot.lane.b32.xlu0 %v128, 64
    %v252 = vpop.permute.xlu0 %251
    %253 = vrot.lane.b32.xlu0 %v131, 64
    %v254 = vpop.permute.xlu0 %253
    %v258 = vsel %vm228, %v248, 0
    %v261 = vsel %vm228, %v250, 0
    %263 = vmatprep.subr.mxu0 0.0
    %264 = vmatpush1.msra.mxu0 %v252
    %265 = vmatprep.subr.mxu0 0.0
    %266 = vmatpush1.msra.mxu0 %v254
    %267 = vmatprep.subr.mxu0 0.0
    %268 = vmatpush1.msra.mxu0 0.0
    %269 = vmatprep.subr.mxu0 0.0
    %270 = vmatpush1.msra.mxu0 0.0
    %271 = vmatprep.subr.mxu0 0.0
    %272 = vmatpush1.msra.mxu0 0.0
    %273 = vmatprep.subr.mxu0 0.0
    %274 = vmatpush1.msra.mxu0 0.0
    %275 = vmatprep.subr.mxu0 0.0
    %276 = vmatpush1.msra.mxu0 0.0
    %277 = vmatprep.subr.mxu0 0.0
    %278 = vmatpush1.msra.mxu0 0.0
    %279 = vmatprep.subr.mxu0 0.0
    %280 = vmatpush1.msra.mxu0 0.0
    %281 = vmatprep.subr.mxu0 0.0
    %282 = vmatpush1.msra.mxu0 0.0
    %283 = vmatprep.subr.mxu0 0.0
    %284 = vmatpush1.msra.mxu0 0.0
    %285 = vmatprep.subr.mxu0 0.0
    %286 = vmatpush1.msra.mxu0 0.0
    %287 = vmatprep.subr.mxu0 0.0
    %288 = vmatpush1.msra.mxu0 0.0
    %289 = vmatprep.subr.mxu0 0.0
    %290 = vmatpush1.msra.mxu0 0.0
    %291 = vmatprep.subr.mxu0 0.0
    %292 = vmatpush1.msra.mxu0 0.0
    %293 = vmatprep.subr.mxu0 0.0
    %294 = vmatpush1.msra.mxu0 0.0
    %295 = vmatprep.subr.mxu0 0.0
    %296 = vmatpush1.msra.mxu0 0.0
    %297 = vmatprep.subr.mxu0 0.0
    %298 = vmatpush1.msra.mxu0 0.0
    %299 = vmatprep.subr.mxu0 0.0
    %300 = vmatpush1.msra.mxu0 0.0
    %301 = vmatprep.subr.mxu0 0.0
    %302 = vmatpush1.msra.mxu0 0.0
    %303 = vmatprep.subr.mxu0 0.0
    %304 = vmatpush1.msra.mxu0 0.0
    %305 = vmatprep.subr.mxu0 0.0
    %306 = vmatpush1.msra.mxu0 0.0
    %307 = vmatprep.subr.mxu0 0.0
    %308 = vmatpush1.msra.mxu0 0.0
    %309 = vmatprep.subr.mxu0 0.0
    %310 = vmatpush1.msra.mxu0 0.0
    %311 = vmatprep.subr.mxu0 0.0
    %312 = vmatpush1.msra.mxu0 0.0
    %313 = vmatprep.subr.mxu0 0.0
    %314 = vmatpush1.msra.mxu0 0.0
    %315 = vmatprep.subr.mxu0 0.0
    %316 = vmatpush1.msra.mxu0 0.0
    %317 = vmatprep.subr.mxu0 0.0
    %318 = vmatpush1.msra.mxu0 0.0
    %319 = vmatprep.subr.mxu0 0.0
    %320 = vmatpush1.msra.mxu0 0.0
    %321 = vmatprep.subr.mxu0 0.0
    %322 = vmatpush1.msra.mxu0 0.0
    %323 = vmatprep.subr.mxu0 0.0
    %324 = vmatpush1.msra.mxu0 0.0
    %325 = vmatprep.subr.mxu0 0.0
    %326 = vmatpush1.msra.mxu0 0.0
    %327 = vmatprep.mubr.f32.mxu0 0.0
    %328 = vmatmul.mubr.f32.gmra.mrb[0].mxu0 %v258
    %v329 = vpop.f32.mrb[0].mxu0
    %v330 = vadd.f32 0.0, %v329
    %v331 = vpop.f32.mrb[0].mxu0
    %332 = vmatprep.mubr.f32.mxu0 0.0
    %333 = vmatmul.mubr.f32.gmra.mrb[0].mxu0 %v261
    %v334 = vpop.f32.mrb[0].mxu0
    %v335 = vadd.f32 0.0, %v334
    %v336 = vpop.f32.mrb[0].mxu0
    %337 = vdwg.mxu0
    %338 = vrot.lane.b32.xlu0 %v128, 120
    %v339 = vpop.permute.xlu0 %338
    %340 = vrot.lane.b32.xlu0 %v131, 120
    %v341 = vpop.permute.xlu0 %340
    %342 = vrot.lane.b32.xlu0 %v128, 88
    %v343 = vpop.permute.xlu0 %342
    %344 = vrot.lane.b32.xlu0 %v131, 88
    %v345 = vpop.permute.xlu0 %344
    %v346 = vsel %vm140, %v339, 0
    %v348 = vsel %vm140, %v341, 0
    %v350 = vsel %vm140, %v343, 0
    %v352 = vsel %vm140, %v345, 0
    %354 = vmatprep.subr.mxu0 0.0
    %355 = vmatpush1.xpose.msra.mxu0 %v350
    %356 = vmatprep.subr.mxu0 0.0
    %357 = vmatpush1.xpose.msra.mxu0 %v352
    %358 = vmatprep.subr.mxu0 0.0
    %359 = vmatpush1.xpose.msra.mxu0 0.0
    %360 = vmatprep.subr.mxu0 0.0
    %361 = vmatpush1.xpose.msra.mxu0 0.0
    %362 = vmatprep.subr.mxu0 0.0
    %363 = vmatpush1.xpose.msra.mxu0 0.0
    %364 = vmatprep.subr.mxu0 0.0
    %365 = vmatpush1.xpose.msra.mxu0 0.0
    %366 = vmatprep.subr.mxu0 0.0
    %367 = vmatpush1.xpose.msra.mxu0 0.0
    %368 = vmatprep.subr.mxu0 0.0
    %369 = vmatpush1.xpose.msra.mxu0 0.0
    %370 = vmatprep.subr.mxu0 0.0
    %371 = vmatpush1.xpose.msra.mxu0 0.0
    %372 = vmatprep.subr.mxu0 0.0
    %373 = vmatpush1.xpose.msra.mxu0 0.0
    %374 = vmatprep.subr.mxu0 0.0
    %375 = vmatpush1.xpose.msra.mxu0 0.0
    %376 = vmatprep.subr.mxu0 0.0
    %377 = vmatpush1.xpose.msra.mxu0 0.0
    %378 = vmatprep.subr.mxu0 0.0
    %379 = vmatpush1.xpose.msra.mxu0 0.0
    %380 = vmatprep.subr.mxu0 0.0
    %381 = vmatpush1.xpose.msra.mxu0 0.0
    %382 = vmatprep.subr.mxu0 0.0
    %383 = vmatpush1.xpose.msra.mxu0 0.0
    %384 = vmatprep.subr.mxu0 0.0
    %385 = vmatpush1.xpose.msra.mxu0 0.0
    %386 = vmatprep.subr.mxu0 0.0
    %387 = vmatpush1.xpose.msra.mxu0 0.0
    %388 = vmatprep.subr.mxu0 0.0
    %389 = vmatpush1.xpose.msra.mxu0 0.0
    %390 = vmatprep.subr.mxu0 0.0
    %391 = vmatpush1.xpose.msra.mxu0 0.0
    %392 = vmatprep.subr.mxu0 0.0
    %393 = vmatpush1.xpose.msra.mxu0 0.0
    %394 = vmatprep.subr.mxu0 0.0
    %395 = vmatpush1.xpose.msra.mxu0 0.0
    %396 = vmatprep.subr.mxu0 0.0
    %397 = vmatpush1.xpose.msra.mxu0 0.0
    %398 = vmatprep.subr.mxu0 0.0
    %399 = vmatpush1.xpose.msra.mxu0 0.0
    %400 = vmatprep.subr.mxu0 0.0
    %401 = vmatpush1.xpose.msra.mxu0 0.0
    %402 = vmatprep.subr.mxu0 0.0
    %403 = vmatpush1.xpose.msra.mxu0 0.0
    %404 = vmatprep.subr.mxu0 0.0
    %405 = vmatpush1.xpose.msra.mxu0 0.0
    %406 = vmatprep.subr.mxu0 0.0
    %407 = vmatpush1.xpose.msra.mxu0 0.0
    %408 = vmatprep.subr.mxu0 0.0
    %409 = vmatpush1.xpose.msra.mxu0 0.0
    %410 = vmatprep.subr.mxu0 0.0
    %411 = vmatpush1.xpose.msra.mxu0 0.0
    %412 = vmatprep.subr.mxu0 0.0
    %413 = vmatpush1.xpose.msra.mxu0 0.0
    %414 = vmatprep.subr.mxu0 0.0
    %415 = vmatpush1.xpose.msra.mxu0 0.0
    %416 = vmatprep.subr.mxu0 0.0
    %417 = vmatpush1.xpose.msra.mxu0 0.0
    %418 = vmatprep.mubr.f32.mxu0 0.0
    %419 = vmatmul.mubr.f32.gmra.mrb[0].mxu0 %v346
    %v420 = vpop.f32.mrb[0].mxu0
    %v421 = vadd.f32 0.0, %v420
    %v422 = vpop.f32.mrb[0].mxu0
    %423 = vmatprep.mubr.f32.mxu0 0.0
    %424 = vmatmul.mubr.f32.gmra.mrb[0].mxu0 %v348
    %v425 = vpop.f32.mrb[0].mxu0
    %v426 = vadd.f32 0.0, %v425
    %v427 = vpop.f32.mrb[0].mxu0
    %428 = vdwg.mxu0
    %v429 = vmul.f32 %v421, 0.35355338
    %v430 = vmul.f32 %v426, 0.35355338
    %v431 = vadd.f32 %v429, %v63
    %v432 = vadd.f32 %v430, %v64
    %v433 = vsel %vm228, %v431, -inf
    %434 = vmax.xlane.f32.xlu0 %v433
    %v435 = vpop.xlane.xlu0 %434
    %v436 = vsel %vm228, %v432, -inf
    %437 = vmax.xlane.f32.xlu0 %v436
    %v438 = vpop.xlane.xlu0 %437
    %v439 = vsub.f32 %v431, %v435
    %v440 = vsub.f32 %v432, %v438
    %v441 = vmul.f32 %v439, 1.442695
    %v442 = vpow.pop %v441
    %v443 = vmul.f32 %v440, 1.442695
    %v444 = vpow.pop %v443
    %v445 = vsel %vm228, %v442, 0.0
    %446 = vadd.xlane.f32.xlu0 %v445
    %v447 = vpop.xlane.xlu0 %446
    %v448 = vsel %vm228, %v444, 0.0
    %449 = vadd.xlane.f32.xlu0 %v448
    %v450 = vpop.xlane.xlu0 %449
    %v451 = vrcp.pop %v447
    %v452 = vmul.f32 %v442, %v451
    %v453 = vrcp.pop %v450
    %v454 = vmul.f32 %v444, %v453
    %455 = vrot.lane.b32.xlu0 %v128, 56
    %v456 = vpop.permute.xlu0 %455
    %457 = vrot.lane.b32.xlu0 %v131, 56
    %v458 = vpop.permute.xlu0 %457
    %v462 = vsel %vm228, %v452, 0
    %v465 = vsel %vm228, %v454, 0
    %467 = vmatprep.subr.mxu0 0.0
    %468 = vmatpush1.msra.mxu0 %v456
    %469 = vmatprep.subr.mxu0 0.0
    %470 = vmatpush1.msra.mxu0 %v458
    %471 = vmatprep.subr.mxu0 0.0
    %472 = vmatpush1.msra.mxu0 0.0
    %473 = vmatprep.subr.mxu0 0.0
    %474 = vmatpush1.msra.mxu0 0.0
    %475 = vmatprep.subr.mxu0 0.0
    %476 = vmatpush1.msra.mxu0 0.0
    %477 = vmatprep.subr.mxu0 0.0
    %478 = vmatpush1.msra.mxu0 0.0
    %479 = vmatprep.subr.mxu0 0.0
    %480 = vmatpush1.msra.mxu0 0.0
    %481 = vmatprep.subr.mxu0 0.0
    %482 = vmatpush1.msra.mxu0 0.0
    %483 = vmatprep.subr.mxu0 0.0
    %484 = vmatpush1.msra.mxu0 0.0
    %485 = vmatprep.subr.mxu0 0.0
    %486 = vmatpush1.msra.mxu0 0.0
    %487 = vmatprep.subr.mxu0 0.0
    %488 = vmatpush1.msra.mxu0 0.0
    %489 = vmatprep.subr.mxu0 0.0
    %490 = vmatpush1.msra.mxu0 0.0
    %491 = vmatprep.subr.mxu0 0.0
    %492 = vmatpush1.msra.mxu0 0.0
    %493 = vmatprep.subr.mxu0 0.0
    %494 = vmatpush1.msra.mxu0 0.0
    %495 = vmatprep.subr.mxu0 0.0
    %496 = vmatpush1.msra.mxu0 0.0
    %497 = vmatprep.subr.mxu0 0.0
    %498 = vmatpush1.msra.mxu0 0.0
    %499 = vmatprep.subr.mxu0 0.0
    %500 = vmatpush1.msra.mxu0 0.0
    %501 = vmatprep.subr.mxu0 0.0
    %502 = vmatpush1.msra.mxu0 0.0
    %503 = vmatprep.subr.mxu0 0.0
    %504 = vmatpush1.msra.mxu0 0.0
    %505 = vmatprep.subr.mxu0 0.0
    %506 = vmatpush1.msra.mxu0 0.0
    %507 = vmatprep.subr.mxu0 0.0
    %508 = vmatpush1.msra.mxu0 0.0
    %509 = vmatprep.subr.mxu0 0.0
    %510 = vmatpush1.msra.mxu0 0.0
    %511 = vmatprep.subr.mxu0 0.0
    %512 = vmatpush1.msra.mxu0 0.0
    %513 = vmatprep.subr.mxu0 0.0
    %514 = vmatpush1.msra.mxu0 0.0
    %515 = vmatprep.subr.mxu0 0.0
    %516 = vmatpush1.msra.mxu0 0.0
    %517 = vmatprep.subr.mxu0 0.0
    %518 = vmatpush1.msra.mxu0 0.0
    %519 = vmatprep.subr.mxu0 0.0
    %520 = vmatpush1.msra.mxu0 0.0
    %521 = vmatprep.subr.mxu0 0.0
    %522 = vmatpush1.msra.mxu0 0.0
    %523 = vmatprep.subr.mxu0 0.0
    %524 = vmatpush1.msra.mxu0 0.0
    %525 = vmatprep.subr.mxu0 0.0
    %526 = vmatpush1.msra.mxu0 0.0
    %527 = vmatprep.subr.mxu0 0.0
    %528 = vmatpush1.msra.mxu0 0.0
    %529 = vmatprep.subr.mxu0 0.0
    %530 = vmatpush1.msra.mxu0 0.0
    %531 = vmatprep.mubr.f32.mxu0 0.0
    %532 = vmatmul.mubr.f32.gmra.mrb[0].mxu0 %v462
    %v533 = vpop.f32.mrb[0].mxu0
    %v534 = vadd.f32 0.0, %v533
    %v535 = vpop.f32.mrb[0].mxu0
    %536 = vmatprep.mubr.f32.mxu0 0.0
    %537 = vmatmul.mubr.f32.gmra.mrb[0].mxu0 %v465
    %v538 = vpop.f32.mrb[0].mxu0
    %v539 = vadd.f32 0.0, %v538
    %v540 = vpop.f32.mrb[0].mxu0
    %541 = vdwg.mxu0
    %542 = vrot.lane.b32.xlu0 %v128, 112
    %v543 = vpop.permute.xlu0 %542
    %544 = vrot.lane.b32.xlu0 %v131, 112
    %v545 = vpop.permute.xlu0 %544
    %546 = vrot.lane.b32.xlu0 %v128, 80
    %v547 = vpop.permute.xlu0 %546
    %548 = vrot.lane.b32.xlu0 %v131, 80
    %v549 = vpop.permute.xlu0 %548
    %v550 = vsel %vm140, %v543, 0
    %v552 = vsel %vm140, %v545, 0
    %v554 = vsel %vm140, %v547, 0
    %v556 = vsel %vm140, %v549, 0
    %558 = vmatprep.subr.mxu0 0.0
    %559 = vmatpush1.xpose.msra.mxu0 %v554
    %560 = vmatprep.subr.mxu0 0.0
    %561 = vmatpush1.xpose.msra.mxu0 %v556
    %562 = vmatprep.subr.mxu0 0.0
    %563 = vmatpush1.xpose.msra.mxu0 0.0
    %564 = vmatprep.subr.mxu0 0.0
    %565 = vmatpush1.xpose.msra.mxu0 0.0
    %566 = vmatprep.subr.mxu0 0.0
    %567 = vmatpush1.xpose.msra.mxu0 0.0
    %568 = vmatprep.subr.mxu0 0.0
    %569 = vmatpush1.xpose.msra.mxu0 0.0
    %570 = vmatprep.subr.mxu0 0.0
    %571 = vmatpush1.xpose.msra.mxu0 0.0
    %572 = vmatprep.subr.mxu0 0.0
    %573 = vmatpush1.xpose.msra.mxu0 0.0
    %574 = vmatprep.subr.mxu0 0.0
    %575 = vmatpush1.xpose.msra.mxu0 0.0
    %576 = vmatprep.subr.mxu0 0.0
    %577 = vmatpush1.xpose.msra.mxu0 0.0
    %578 = vmatprep.subr.mxu0 0.0
    %579 = vmatpush1.xpose.msra.mxu0 0.0
    %580 = vmatprep.subr.mxu0 0.0
    %581 = vmatpush1.xpose.msra.mxu0 0.0
    %582 = vmatprep.subr.mxu0 0.0
    %583 = vmatpush1.xpose.msra.mxu0 0.0
    %584 = vmatprep.subr.mxu0 0.0
    %585 = vmatpush1.xpose.msra.mxu0 0.0
    %586 = vmatprep.subr.mxu0 0.0
    %587 = vmatpush1.xpose.msra.mxu0 0.0
    %588 = vmatprep.subr.mxu0 0.0
    %589 = vmatpush1.xpose.msra.mxu0 0.0
    %590 = vmatprep.subr.mxu0 0.0
    %591 = vmatpush1.xpose.msra.mxu0 0.0
    %592 = vmatprep.subr.mxu0 0.0
    %593 = vmatpush1.xpose.msra.mxu0 0.0
    %594 = vmatprep.subr.mxu0 0.0
    %595 = vmatpush1.xpose.msra.mxu0 0.0
    %596 = vmatprep.subr.mxu0 0.0
    %597 = vmatpush1.xpose.msra.mxu0 0.0
    %598 = vmatprep.subr.mxu0 0.0
    %599 = vmatpush1.xpose.msra.mxu0 0.0
    %600 = vmatprep.subr.mxu0 0.0
    %601 = vmatpush1.xpose.msra.mxu0 0.0
    %602 = vmatprep.subr.mxu0 0.0
    %603 = vmatpush1.xpose.msra.mxu0 0.0
    %604 = vmatprep.subr.mxu0 0.0
    %605 = vmatpush1.xpose.msra.mxu0 0.0
    %606 = vmatprep.subr.mxu0 0.0
    %607 = vmatpush1.xpose.msra.mxu0 0.0
    %608 = vmatprep.subr.mxu0 0.0
    %609 = vmatpush1.xpose.msra.mxu0 0.0
    %610 = vmatprep.subr.mxu0 0.0
    %611 = vmatpush1.xpose.msra.mxu0 0.0
    %612 = vmatprep.subr.mxu0 0.0
    %613 = vmatpush1.xpose.msra.mxu0 0.0
    %614 = vmatprep.subr.mxu0 0.0
    %615 = vmatpush1.xpose.msra.mxu0 0.0
    %616 = vmatprep.subr.mxu0 0.0
    %617 = vmatpush1.xpose.msra.mxu0 0.0
    %618 = vmatprep.subr.mxu0 0.0
    %619 = vmatpush1.xpose.msra.mxu0 0.0
    %620 = vmatprep.subr.mxu0 0.0
    %621 = vmatpush1.xpose.msra.mxu0 0.0
    %622 = vmatprep.mubr.f32.mxu0 0.0
    %623 = vmatmul.mubr.f32.gmra.mrb[0].mxu0 %v550
    %v624 = vpop.f32.mrb[0].mxu0
    %v625 = vadd.f32 0.0, %v624
    %v626 = vpop.f32.mrb[0].mxu0
    %627 = vmatprep.mubr.f32.mxu0 0.0
    %628 = vmatmul.mubr.f32.gmra.mrb[0].mxu0 %v552
    %v629 = vpop.f32.mrb[0].mxu0
    %v630 = vadd.f32 0.0, %v629
    %v631 = vpop.f32.mrb[0].mxu0
    %632 = vdwg.mxu0
    %v633 = vmul.f32 %v625, 0.35355338
    %v634 = vmul.f32 %v630, 0.35355338
    %v635 = vadd.f32 %v633, %v63
    %v636 = vadd.f32 %v634, %v64
    %v637 = vsel %vm228, %v635, -inf
    %638 = vmax.xlane.f32.xlu0 %v637
    %v639 = vpop.xlane.xlu0 %638
    %v640 = vsel %vm228, %v636, -inf
    %641 = vmax.xlane.f32.xlu0 %v640
    %v642 = vpop.xlane.xlu0 %641
    %v643 = vsub.f32 %v635, %v639
    %v644 = vsub.f32 %v636, %v642
    %v645 = vmul.f32 %v643, 1.442695
    %v646 = vpow.pop %v645
    %v647 = vmul.f32 %v644, 1.442695
    %v648 = vpow.pop %v647
    %v649 = vsel %vm228, %v646, 0.0
    %650 = vadd.xlane.f32.xlu0 %v649
    %v651 = vpop.xlane.xlu0 %650
    %v652 = vsel %vm228, %v648, 0.0
    %653 = vadd.xlane.f32.xlu0 %v652
    %v654 = vpop.xlane.xlu0 %653
    %v655 = vrcp.pop %v651
    %v656 = vmul.f32 %v646, %v655
    %v657 = vrcp.pop %v654
    %v658 = vmul.f32 %v648, %v657
    %659 = vrot.lane.b32.xlu0 %v128, 48
    %v660 = vpop.permute.xlu0 %659
    %661 = vrot.lane.b32.xlu0 %v131, 48
    %v662 = vpop.permute.xlu0 %661
    %v666 = vsel %vm228, %v656, 0
    %v669 = vsel %vm228, %v658, 0
    %671 = vmatprep.subr.mxu0 0.0
    %672 = vmatpush1.msra.mxu0 %v660
    %673 = vmatprep.subr.mxu0 0.0
    %674 = vmatpush1.msra.mxu0 %v662
    %675 = vmatprep.subr.mxu0 0.0
    %676 = vmatpush1.msra.mxu0 0.0
    %677 = vmatprep.subr.mxu0 0.0
    %678 = vmatpush1.msra.mxu0 0.0
    %679 = vmatprep.subr.mxu0 0.0
    %680 = vmatpush1.msra.mxu0 0.0
    %681 = vmatprep.subr.mxu0 0.0
    %682 = vmatpush1.msra.mxu0 0.0
    %683 = vmatprep.subr.mxu0 0.0
    %684 = vmatpush1.msra.mxu0 0.0
    %685 = vmatprep.subr.mxu0 0.0
    %686 = vmatpush1.msra.mxu0 0.0
    %687 = vmatprep.subr.mxu0 0.0
    %688 = vmatpush1.msra.mxu0 0.0
    %689 = vmatprep.subr.mxu0 0.0
    %690 = vmatpush1.msra.mxu0 0.0
    %691 = vmatprep.subr.mxu0 0.0
    %692 = vmatpush1.msra.mxu0 0.0
    %693 = vmatprep.subr.mxu0 0.0
    %694 = vmatpush1.msra.mxu0 0.0
    %695 = vmatprep.subr.mxu0 0.0
    %696 = vmatpush1.msra.mxu0 0.0
    %697 = vmatprep.subr.mxu0 0.0
    %698 = vmatpush1.msra.mxu0 0.0
    %699 = vmatprep.subr.mxu0 0.0
    %700 = vmatpush1.msra.mxu0 0.0
    %701 = vmatprep.subr.mxu0 0.0
    %702 = vmatpush1.msra.mxu0 0.0
    %703 = vmatprep.subr.mxu0 0.0
    %704 = vmatpush1.msra.mxu0 0.0
    %705 = vmatprep.subr.mxu0 0.0
    %706 = vmatpush1.msra.mxu0 0.0
    %707 = vmatprep.subr.mxu0 0.0
    %708 = vmatpush1.msra.mxu0 0.0
    %709 = vmatprep.subr.mxu0 0.0
    %710 = vmatpush1.msra.mxu0 0.0
    %711 = vmatprep.subr.mxu0 0.0
    %712 = vmatpush1.msra.mxu0 0.0
    %713 = vmatprep.subr.mxu0 0.0
    %714 = vmatpush1.msra.mxu0 0.0
    %715 = vmatprep.subr.mxu0 0.0
    %716 = vmatpush1.msra.mxu0 0.0
    %717 = vmatprep.subr.mxu0 0.0
    %718 = vmatpush1.msra.mxu0 0.0
    %719 = vmatprep.subr.mxu0 0.0
    %720 = vmatpush1.msra.mxu0 0.0
    %721 = vmatprep.subr.mxu0 0.0
    %722 = vmatpush1.msra.mxu0 0.0
    %723 = vmatprep.subr.mxu0 0.0
    %724 = vmatpush1.msra.mxu0 0.0
    %725 = vmatprep.subr.mxu0 0.0
    %726 = vmatpush1.msra.mxu0 0.0
    %727 = vmatprep.subr.mxu0 0.0
    %728 = vmatpush1.msra.mxu0 0.0
    %729 = vmatprep.subr.mxu0 0.0
    %730 = vmatpush1.msra.mxu0 0.0
    %731 = vmatprep.subr.mxu0 0.0
    %732 = vmatpush1.msra.mxu0 0.0
    %733 = vmatprep.subr.mxu0 0.0
    %734 = vmatpush1.msra.mxu0 0.0
    %735 = vmatprep.mubr.f32.mxu0 0.0
    %736 = vmatmul.mubr.f32.gmra.mrb[0].mxu0 %v666
    %v737 = vpop.f32.mrb[0].mxu0
    %v738 = vadd.f32 0.0, %v737
    %v739 = vpop.f32.mrb[0].mxu0
    %740 = vmatprep.mubr.f32.mxu0 0.0
    %741 = vmatmul.mubr.f32.gmra.mrb[0].mxu0 %v669
    %v742 = vpop.f32.mrb[0].mxu0
    %v743 = vadd.f32 0.0, %v742
    %v744 = vpop.f32.mrb[0].mxu0
    %745 = vdwg.mxu0
    %746 = vrot.lane.b32.xlu0 %v128, 104
    %v747 = vpop.permute.xlu0 %746
    %748 = vrot.lane.b32.xlu0 %v131, 104
    %v749 = vpop.permute.xlu0 %748
    %750 = vrot.lane.b32.xlu0 %v128, 72
    %v751 = vpop.permute.xlu0 %750
    %752 = vrot.lane.b32.xlu0 %v131, 72
    %v753 = vpop.permute.xlu0 %752
    %v754 = vsel %vm140, %v747, 0
    %v756 = vsel %vm140, %v749, 0
    %v758 = vsel %vm140, %v751, 0
    %v760 = vsel %vm140, %v753, 0
    %762 = vmatprep.subr.mxu0 0.0
    %763 = vmatpush1.xpose.msra.mxu0 %v758
    %764 = vmatprep.subr.mxu0 0.0
    %765 = vmatpush1.xpose.msra.mxu0 %v760
    %766 = vmatprep.subr.mxu0 0.0
    %767 = vmatpush1.xpose.msra.mxu0 0.0
    %768 = vmatprep.subr.mxu0 0.0
    %769 = vmatpush1.xpose.msra.mxu0 0.0
    %770 = vmatprep.subr.mxu0 0.0
    %771 = vmatpush1.xpose.msra.mxu0 0.0
    %772 = vmatprep.subr.mxu0 0.0
    %773 = vmatpush1.xpose.msra.mxu0 0.0
    %774 = vmatprep.subr.mxu0 0.0
    %775 = vmatpush1.xpose.msra.mxu0 0.0
    %776 = vmatprep.subr.mxu0 0.0
    %777 = vmatpush1.xpose.msra.mxu0 0.0
    %778 = vmatprep.subr.mxu0 0.0
    %779 = vmatpush1.xpose.msra.mxu0 0.0
    %780 = vmatprep.subr.mxu0 0.0
    %781 = vmatpush1.xpose.msra.mxu0 0.0
    %782 = vmatprep.subr.mxu0 0.0
    %783 = vmatpush1.xpose.msra.mxu0 0.0
    %784 = vmatprep.subr.mxu0 0.0
    %785 = vmatpush1.xpose.msra.mxu0 0.0
    %786 = vmatprep.subr.mxu0 0.0
    %787 = vmatpush1.xpose.msra.mxu0 0.0
    %788 = vmatprep.subr.mxu0 0.0
    %789 = vmatpush1.xpose.msra.mxu0 0.0
    %790 = vmatprep.subr.mxu0 0.0
    %791 = vmatpush1.xpose.msra.mxu0 0.0
    %792 = vmatprep.subr.mxu0 0.0
    %793 = vmatpush1.xpose.msra.mxu0 0.0
    %794 = vmatprep.subr.mxu0 0.0
    %795 = vmatpush1.xpose.msra.mxu0 0.0
    %796 = vmatprep.subr.mxu0 0.0
    %797 = vmatpush1.xpose.msra.mxu0 0.0
    %798 = vmatprep.subr.mxu0 0.0
    %799 = vmatpush1.xpose.msra.mxu0 0.0
    %800 = vmatprep.subr.mxu0 0.0
    %801 = vmatpush1.xpose.msra.mxu0 0.0
    %802 = vmatprep.subr.mxu0 0.0
    %803 = vmatpush1.xpose.msra.mxu0 0.0
    %804 = vmatprep.subr.mxu0 0.0
    %805 = vmatpush1.xpose.msra.mxu0 0.0
    %806 = vmatprep.subr.mxu0 0.0
    %807 = vmatpush1.xpose.msra.mxu0 0.0
    %808 = vmatprep.subr.mxu0 0.0
    %809 = vmatpush1.xpose.msra.mxu0 0.0
    %810 = vmatprep.subr.mxu0 0.0
    %811 = vmatpush1.xpose.msra.mxu0 0.0
    %812 = vmatprep.subr.mxu0 0.0
    %813 = vmatpush1.xpose.msra.mxu0 0.0
    %814 = vmatprep.subr.mxu0 0.0
    %815 = vmatpush1.xpose.msra.mxu0 0.0
    %816 = vmatprep.subr.mxu0 0.0
    %817 = vmatpush1.xpose.msra.mxu0 0.0
    %818 = vmatprep.subr.mxu0 0.0
    %819 = vmatpush1.xpose.msra.mxu0 0.0
    %820 = vmatprep.subr.mxu0 0.0
    %821 = vmatpush1.xpose.msra.mxu0 0.0
    %822 = vmatprep.subr.mxu0 0.0
    %823 = vmatpush1.xpose.msra.mxu0 0.0
    %824 = vmatprep.subr.mxu0 0.0
    %825 = vmatpush1.xpose.msra.mxu0 0.0
    %826 = vmatprep.mubr.f32.mxu0 0.0
    %827 = vmatmul.mubr.f32.gmra.mrb[0].mxu0 %v754
    %v828 = vpop.f32.mrb[0].mxu0
    %v829 = vadd.f32 0.0, %v828
    %v830 = vpop.f32.mrb[0].mxu0
    %831 = vmatprep.mubr.f32.mxu0 0.0
    %832 = vmatmul.mubr.f32.gmra.mrb[0].mxu0 %v756
    %v833 = vpop.f32.mrb[0].mxu0
    %v834 = vadd.f32 0.0, %v833
    %v835 = vpop.f32.mrb[0].mxu0
    %836 = vdwg.mxu0
    %v837 = vmul.f32 %v829, 0.35355338
    %v838 = vmul.f32 %v834, 0.35355338
    %v839 = vadd.f32 %v837, %v63
    %v840 = vadd.f32 %v838, %v64
    %v841 = vsel %vm228, %v839, -inf
    %842 = vmax.xlane.f32.xlu0 %v841
    %v843 = vpop.xlane.xlu0 %842
    %v844 = vsel %vm228, %v840, -inf
    %845 = vmax.xlane.f32.xlu0 %v844
    %v846 = vpop.xlane.xlu0 %845
    %v847 = vsub.f32 %v839, %v843
    %v848 = vsub.f32 %v840, %v846
    %v849 = vmul.f32 %v847, 1.442695
    %v850 = vpow.pop %v849
    %v851 = vmul.f32 %v848, 1.442695
    %v852 = vpow.pop %v851
    %v853 = vsel %vm228, %v850, 0.0
    %854 = vadd.xlane.f32.xlu0 %v853
    %v855 = vpop.xlane.xlu0 %854
    %v856 = vsel %vm228, %v852, 0.0
    %857 = vadd.xlane.f32.xlu0 %v856
    %v858 = vpop.xlane.xlu0 %857
    %v859 = vrcp.pop %v855
    %v860 = vmul.f32 %v850, %v859
    %v861 = vrcp.pop %v858
    %v862 = vmul.f32 %v852, %v861
    %863 = vrot.lane.b32.xlu0 %v128, 40
    %v864 = vpop.permute.xlu0 %863
    %865 = vrot.lane.b32.xlu0 %v131, 40
    %v866 = vpop.permute.xlu0 %865
    %v870 = vsel %vm228, %v860, 0
    %v873 = vsel %vm228, %v862, 0
    %875 = vmatprep.subr.mxu0 0.0
    %876 = vmatpush1.msra.mxu0 %v864
    %877 = vmatprep.subr.mxu0 0.0
    %878 = vmatpush1.msra.mxu0 %v866
    %879 = vmatprep.subr.mxu0 0.0
    %880 = vmatpush1.msra.mxu0 0.0
    %881 = vmatprep.subr.mxu0 0.0
    %882 = vmatpush1.msra.mxu0 0.0
    %883 = vmatprep.subr.mxu0 0.0
    %884 = vmatpush1.msra.mxu0 0.0
    %885 = vmatprep.subr.mxu0 0.0
    %886 = vmatpush1.msra.mxu0 0.0
    %887 = vmatprep.subr.mxu0 0.0
    %888 = vmatpush1.msra.mxu0 0.0
    %889 = vmatprep.subr.mxu0 0.0
    %890 = vmatpush1.msra.mxu0 0.0
    %891 = vmatprep.subr.mxu0 0.0
    %892 = vmatpush1.msra.mxu0 0.0
    %893 = vmatprep.subr.mxu0 0.0
    %894 = vmatpush1.msra.mxu0 0.0
    %895 = vmatprep.subr.mxu0 0.0
    %896 = vmatpush1.msra.mxu0 0.0
    %897 = vmatprep.subr.mxu0 0.0
    %898 = vmatpush1.msra.mxu0 0.0
    %899 = vmatprep.subr.mxu0 0.0
    %900 = vmatpush1.msra.mxu0 0.0
    %901 = vmatprep.subr.mxu0 0.0
    %902 = vmatpush1.msra.mxu0 0.0
    %903 = vmatprep.subr.mxu0 0.0
    %904 = vmatpush1.msra.mxu0 0.0
    %905 = vmatprep.subr.mxu0 0.0
    %906 = vmatpush1.msra.mxu0 0.0
    %907 = vmatprep.subr.mxu0 0.0
    %908 = vmatpush1.msra.mxu0 0.0
    %909 = vmatprep.subr.mxu0 0.0
    %910 = vmatpush1.msra.mxu0 0.0
    %911 = vmatprep.subr.mxu0 0.0
    %912 = vmatpush1.msra.mxu0 0.0
    %913 = vmatprep.subr.mxu0 0.0
    %914 = vmatpush1.msra.mxu0 0.0
    %915 = vmatprep.subr.mxu0 0.0
    %916 = vmatpush1.msra.mxu0 0.0
    %917 = vmatprep.subr.mxu0 0.0
    %918 = vmatpush1.msra.mxu0 0.0
    %919 = vmatprep.subr.mxu0 0.0
    %920 = vmatpush1.msra.mxu0 0.0
    %921 = vmatprep.subr.mxu0 0.0
    %922 = vmatpush1.msra.mxu0 0.0
    %923 = vmatprep.subr.mxu0 0.0
    %924 = vmatpush1.msra.mxu0 0.0
    %925 = vmatprep.subr.mxu0 0.0
    %926 = vmatpush1.msra.mxu0 0.0
    %927 = vmatprep.subr.mxu0 0.0
    %928 = vmatpush1.msra.mxu0 0.0
    %929 = vmatprep.subr.mxu0 0.0
    %930 = vmatpush1.msra.mxu0 0.0
    %931 = vmatprep.subr.mxu0 0.0
    %932 = vmatpush1.msra.mxu0 0.0
    %933 = vmatprep.subr.mxu0 0.0
    %934 = vmatpush1.msra.mxu0 0.0
    %935 = vmatprep.subr.mxu0 0.0
    %936 = vmatpush1.msra.mxu0 0.0
    %937 = vmatprep.subr.mxu0 0.0
    %938 = vmatpush1.msra.mxu0 0.0
    %939 = vmatprep.mubr.f32.mxu0 0.0
    %940 = vmatmul.mubr.f32.gmra.mrb[0].mxu0 %v870
    %v941 = vpop.f32.mrb[0].mxu0
    %v942 = vadd.f32 0.0, %v941
    %v943 = vpop.f32.mrb[0].mxu0
    %944 = vmatprep.mubr.f32.mxu0 0.0
    %945 = vmatmul.mubr.f32.gmra.mrb[0].mxu0 %v873
    %v946 = vpop.f32.mrb[0].mxu0
    %v947 = vadd.f32 0.0, %v946
    %v948 = vpop.f32.mrb[0].mxu0
    %949 = vdwg.mxu0
    %952 = vrot.lane.b32.xlu0 %v534, 8
    %v953 = vpop.permute.xlu0 %952
    %954 = vrot.lane.b32.xlu0 %v539, 8
    %v955 = vpop.permute.xlu0 %954
    %960 = vrot.lane.b32.xlu0 %v738, 16
    %v961 = vpop.permute.xlu0 %960
    %962 = vrot.lane.b32.xlu0 %v743, 16
    %v963 = vpop.permute.xlu0 %962
    %968 = vrot.lane.b32.xlu0 %v942, 24
    %v969 = vpop.permute.xlu0 %968
    %970 = vrot.lane.b32.xlu0 %v947, 24
    %v971 = vpop.permute.xlu0 %970
    %v974 = vsel %vm140, %v330, %v953
    %v975 = vsel %vm140, %v335, %v955
    %v976 = vsel %vm228, %v974, %v961
    %v977 = vsel %vm228, %v975, %v963
    %vm978 = vcmask 195584
    %v979 = vsel %vm978, %v976, %v969
    %v980 = vsel %vm978, %v977, %v971
    %v981 = vpack.c.bf16 %v980, %v979
    %v982 = vld [vmem:[%s5] sm:$0xf]
    %v983 = vld [vmem:[%s5 + $0x4] sm:$0xf]
    %v984 = vld [vmem:[%s5 + $0x8] sm:$0xf]
    %v985 = vld [vmem:[%s5 + $0xc] sm:$0xf]
    %v986 = vld [vmem:[%s6] sm:$0x1]
    %v988 = vlaneseq
    %v989 = vshrl.u32 %v988, 7
    %v990 = vsub.s32 0, %v989
    %v991 = vrot.slane %v986, %v990
    %v997 = vunpack.c.l.b16 %v982
    %v998 = vunpack.c.l.b16 %v983
    %v999 = vunpack.c.l.b16 %v984
    %v1000 = vunpack.c.l.b16 %v985
    %v1001 = vpack.c.b16 %v998, %v997
    %v1002 = vpack.c.b16 %v1000, %v999
    %v1006 = vsel %vm89, %v981, 0
    %1008 = vmatprep.subr.bf16.mxu0 0
    %1009 = vmatpush1.bf16.msra.mxu0 %v1001
    %1010 = vmatprep.subr.bf16.mxu0 0
    %1011 = vmatpush1.bf16.msra.mxu0 %v1002
    %1012 = vmatprep.subr.bf16.mxu0 0
    %1013 = vmatpush1.bf16.msra.mxu0 0
    %1014 = vmatprep.subr.bf16.mxu0 0
    %1015 = vmatpush1.bf16.msra.mxu0 0
    %1016 = vmatprep.subr.bf16.mxu0 0
    %1017 = vmatpush1.bf16.msra.mxu0 0
    %1018 = vmatprep.subr.bf16.mxu0 0
    %1019 = vmatpush1.bf16.msra.mxu0 0
    %1020 = vmatprep.subr.bf16.mxu0 0
    %1021 = vmatpush1.bf16.msra.mxu0 0
    %1022 = vmatprep.subr.bf16.mxu0 0
    %1023 = vmatpush1.bf16.msra.mxu0 0
    %1024 = vmatprep.subr.bf16.mxu0 0
    %1025 = vmatpush1.bf16.msra.mxu0 0
    %1026 = vmatprep.subr.bf16.mxu0 0
    %1027 = vmatpush1.bf16.msra.mxu0 0
    %1028 = vmatprep.subr.bf16.mxu0 0
    %1029 = vmatpush1.bf16.msra.mxu0 0
    %1030 = vmatprep.subr.bf16.mxu0 0
    %1031 = vmatpush1.bf16.msra.mxu0 0
    %1032 = vmatprep.subr.bf16.mxu0 0
    %1033 = vmatpush1.bf16.msra.mxu0 0
    %1034 = vmatprep.subr.bf16.mxu0 0
    %1035 = vmatpush1.bf16.msra.mxu0 0
    %1036 = vmatprep.subr.bf16.mxu0 0
    %1037 = vmatpush1.bf16.msra.mxu0 0
    %1038 = vmatprep.subr.bf16.mxu0 0
    %1039 = vmatpush1.bf16.msra.mxu0 0
    %1040 = vmatprep.mubr.bf16.mxu0 0
    %1041 = vmatmul.mubr.bf16.gmra.mrb[0].mxu0 %v1006
    %v1042 = vpop.f32.mrb[0].mxu0
    %v1043 = vadd.f32 %v991, %v1042
    %v1044 = vpop.f32.mrb[0].mxu0
    %v1045 = vpop.f32.mrb[0].mxu0
    %v1046 = vadd.f32 %v991, %v1045
    %v1047 = vpop.f32.mrb[0].mxu0
    %1048 = vdwg.mxu0
    %v1049 = vadd.f32 %v61, %v1043
    %v1050 = vadd.f32 %v62, %v1046
    %v1051 = vld [vmem:[%s7] sm:$0x1]
    %v1052 = vld [vmem:[%s8] sm:$0x1]
    %v1053 = vsel %vm89, %v1049, 0.0
    %1054 = vadd.xlane.f32.xlu0 %v1053
    %v1055 = vpop.xlane.xlu0 %1054
    %v1056 = vsel %vm89, %v1050, 0.0
    %1057 = vadd.xlane.f32.xlu0 %v1056
    %v1058 = vpop.xlane.xlu0 %1057
    %v1059 = vrcp.pop 32.0
    %v1060 = vmul.f32 %v1055, %v1059
    %v1061 = vmul.f32 %v1058, %v1059
    %v1062 = vsub.f32 %v1049, %v1060
    %v1063 = vsub.f32 %v1050, %v1061
    %v1064 = vmul.f32 %v1062, %v1062
    %v1065 = vmul.f32 %v1063, %v1063
    %v1066 = vsel %vm89, %v1064, 0.0
    %1067 = vadd.xlane.f32.xlu0 %v1066
    %v1068 = vpop.xlane.xlu0 %1067
    %v1069 = vsel %vm89, %v1065, 0.0
    %1070 = vadd.xlane.f32.xlu0 %v1069
    %v1071 = vpop.xlane.xlu0 %1070
    %v1072 = vmul.f32 %v1068, %v1059
    %v1073 = vmul.f32 %v1071, %v1059
    %v1074 = vadd.f32 %v1072, 1e-05
    %v1075 = vadd.f32 %v1073, 1e-05
    %v1076 = vrsqrt.pop %v1074
    %v1077 = vrsqrt.pop %v1075
    %v1078 = vmul.f32 %v1062, %v1076
    %v1079 = vmul.f32 %v1063, %v1077
    %v1081 = vlaneseq
    %v1082 = vshrl.u32 %v1081, 7
    %v1083 = vsub.s32 0, %v1082
    %v1084 = vrot.slane %v1051, %v1083
    %v1086 = vmul.f32 %v1078, %v1084
    %v1087 = vmul.f32 %v1079, %v1084
    %v1089 = vlaneseq
    %v1090 = vshrl.u32 %v1089, 7
    %v1091 = vsub.s32 0, %v1090
    %v1092 = vrot.slane %v1052, %v1091
    %v1094 = vadd.f32 %v1086, %v1092
    %v1095 = vadd.f32 %v1087, %v1092
    %v1096 = vpack.c.bf16 %v1095, %v1094
    %v1097 = vld [vmem:[%s9] sm:$0xff]
    %v1098 = vld [vmem:[%s9 + $0x8] sm:$0xff]
    %v1099 = vld [vmem:[%s9 + $0x10] sm:$0xff]
    %v1100 = vld [vmem:[%s9 + $0x18] sm:$0xff]
    %v1101 = vld [vmem:[%s9 + $0x20] sm:$0xff]
    %v1102 = vld [vmem:[%s9 + $0x28] sm:$0xff]
    %v1103 = vld [vmem:[%s9 + $0x30] sm:$0xff]
    %v1104 = vld [vmem:[%s9 + $0x38] sm:$0xff]
    %v1105 = vld [vmem:[%s9 + $0x40] sm:$0xff]
    %v1106 = vld [vmem:[%s9 + $0x48] sm:$0xff]
    %v1107 = vld [vmem:[%s9 + $0x50] sm:$0xff]
    %v1108 = vld [vmem:[%s9 + $0x58] sm:$0xff]
    %v1109 = vld [vmem:[%s9 + $0x60] sm:$0xff]
    %v1110 = vld [vmem:[%s9 + $0x68] sm:$0xff]
    %v1111 = vld [vmem:[%s9 + $0x70] sm:$0xff]
    %v1112 = vld [vmem:[%s9 + $0x78] sm:$0xff]
    %v1113 = vld [vmem:[%s9 + $0x80] sm:$0xff]
    %v1114 = vld [vmem:[%s9 + $0x88] sm:$0xff]
    %v1115 = vld [vmem:[%s9 + $0x90] sm:$0xff]
    %v1116 = vld [vmem:[%s9 + $0x98] sm:$0xff]
    %v1117 = vld [vmem:[%s9 + $0xa0] sm:$0xff]
    %v1118 = vld [vmem:[%s9 + $0xa8] sm:$0xff]
    %v1119 = vld [vmem:[%s9 + $0xb0] sm:$0xff]
    %v1120 = vld [vmem:[%s9 + $0xb8] sm:$0xff]
    %v1121 = vld [vmem:[%s9 + $0xc0] sm:$0xff]
    %v1122 = vld [vmem:[%s9 + $0xc8] sm:$0xff]
    %v1123 = vld [vmem:[%s9 + $0xd0] sm:$0xff]
    %v1124 = vld [vmem:[%s9 + $0xd8] sm:$0xff]
    %v1125 = vld [vmem:[%s9 + $0xe0] sm:$0xff]
    %v1126 = vld [vmem:[%s9 + $0xe8] sm:$0xff]
    %v1127 = vld [vmem:[%s9 + $0xf0] sm:$0xff]
    %v1128 = vld [vmem:[%s9 + $0xf8] sm:$0xff]
    %v1129 = vld [vmem:[%s10] sm:$0xff]
    %v1130 = vld [vmem:[%s10 + $0x8] sm:$0xff]
    %v1133 = vlaneseq
    %v1134 = vshrl.u32 %v1133, 7
    %v1135 = vsub.s32 0, %v1134
    %v1136 = vrot.slane %v1129, %v1135
    %v1137 = vlaneseq
    %v1138 = vshrl.u32 %v1137, 7
    %v1139 = vsub.s32 1, %v1138
    %v1140 = vrot.slane %v1129, %v1139
    %v1141 = vlaneseq
    %v1142 = vshrl.u32 %v1141, 7
    %v1143 = vsub.s32 2, %v1142
    %v1144 = vrot.slane %v1129, %v1143
    %v1145 = vlaneseq
    %v1146 = vshrl.u32 %v1145, 7
    %v1147 = vsub.s32 3, %v1146
    %v1148 = vrot.slane %v1129, %v1147
    %v1149 = vlaneseq
    %v1150 = vshrl.u32 %v1149, 7
    %v1151 = vsub.s32 4, %v1150
    %v1152 = vrot.slane %v1129, %v1151
    %v1153 = vlaneseq
    %v1154 = vshrl.u32 %v1153, 7
    %v1155 = vsub.s32 5, %v1154
    %v1156 = vrot.slane %v1129, %v1155
    %v1157 = vlaneseq
    %v1158 = vshrl.u32 %v1157, 7
    %v1159 = vsub.s32 6, %v1158
    %v1160 = vrot.slane %v1129, %v1159
    %v1161 = vlaneseq
    %v1162 = vshrl.u32 %v1161, 7
    %v1163 = vsub.s32 7, %v1162
    %v1164 = vrot.slane %v1129, %v1163
    %v1165 = vlaneseq
    %v1166 = vshrl.u32 %v1165, 7
    %v1167 = vsub.s32 0, %v1166
    %v1168 = vrot.slane %v1130, %v1167
    %v1169 = vlaneseq
    %v1170 = vshrl.u32 %v1169, 7
    %v1171 = vsub.s32 1, %v1170
    %v1172 = vrot.slane %v1130, %v1171
    %v1173 = vlaneseq
    %v1174 = vshrl.u32 %v1173, 7
    %v1175 = vsub.s32 2, %v1174
    %v1176 = vrot.slane %v1130, %v1175
    %v1177 = vlaneseq
    %v1178 = vshrl.u32 %v1177, 7
    %v1179 = vsub.s32 3, %v1178
    %v1180 = vrot.slane %v1130, %v1179
    %v1181 = vlaneseq
    %v1182 = vshrl.u32 %v1181, 7
    %v1183 = vsub.s32 4, %v1182
    %v1184 = vrot.slane %v1130, %v1183
    %v1185 = vlaneseq
    %v1186 = vshrl.u32 %v1185, 7
    %v1187 = vsub.s32 5, %v1186
    %v1188 = vrot.slane %v1130, %v1187
    %v1189 = vlaneseq
    %v1190 = vshrl.u32 %v1189, 7
    %v1191 = vsub.s32 6, %v1190
    %v1192 = vrot.slane %v1130, %v1191
    %v1193 = vlaneseq
    %v1194 = vshrl.u32 %v1193, 7
    %v1195 = vsub.s32 7, %v1194
    %v1196 = vrot.slane %v1130, %v1195
    %v1245 = vunpack.c.l.b16 %v1097
    %v1246 = vunpack.c.h.b16 %v1097
    %v1247 = vunpack.c.l.b16 %v1098
    %v1248 = vunpack.c.h.b16 %v1098
    %v1249 = vunpack.c.l.b16 %v1099
    %v1250 = vunpack.c.h.b16 %v1099
    %v1251 = vunpack.c.l.b16 %v1100
    %v1252 = vunpack.c.h.b16 %v1100
    %v1253 = vunpack.c.l.b16 %v1101
    %v1254 = vunpack.c.h.b16 %v1101
    %v1255 = vunpack.c.l.b16 %v1102
    %v1256 = vunpack.c.h.b16 %v1102
    %v1257 = vunpack.c.l.b16 %v1103
    %v1258 = vunpack.c.h.b16 %v1103
    %v1259 = vunpack.c.l.b16 %v1104
    %v1260 = vunpack.c.h.b16 %v1104
    %v1261 = vunpack.c.l.b16 %v1105
    %v1262 = vunpack.c.h.b16 %v1105
    %v1263 = vunpack.c.l.b16 %v1106
    %v1264 = vunpack.c.h.b16 %v1106
    %v1265 = vunpack.c.l.b16 %v1107
    %v1266 = vunpack.c.h.b16 %v1107
    %v1267 = vunpack.c.l.b16 %v1108
    %v1268 = vunpack.c.h.b16 %v1108
    %v1269 = vunpack.c.l.b16 %v1109
    %v1270 = vunpack.c.h.b16 %v1109
    %v1271 = vunpack.c.l.b16 %v1110
    %v1272 = vunpack.c.h.b16 %v1110
    %v1273 = vunpack.c.l.b16 %v1111
    %v1274 = vunpack.c.h.b16 %v1111
    %v1275 = vunpack.c.l.b16 %v1112
    %v1276 = vunpack.c.h.b16 %v1112
    %v1277 = vunpack.c.l.b16 %v1113
    %v1278 = vunpack.c.h.b16 %v1113
    %v1279 = vunpack.c.l.b16 %v1114
    %v1280 = vunpack.c.h.b16 %v1114
    %v1281 = vunpack.c.l.b16 %v1115
    %v1282 = vunpack.c.h.b16 %v1115
    %v1283 = vunpack.c.l.b16 %v1116
    %v1284 = vunpack.c.h.b16 %v1116
    %v1285 = vunpack.c.l.b16 %v1117
    %v1286 = vunpack.c.h.b16 %v1117
    %v1287 = vunpack.c.l.b16 %v1118
    %v1288 = vunpack.c.h.b16 %v1118
    %v1289 = vunpack.c.l.b16 %v1119
    %v1290 = vunpack.c.h.b16 %v1119
    %v1291 = vunpack.c.l.b16 %v1120
    %v1292 = vunpack.c.h.b16 %v1120
    %v1293 = vunpack.c.l.b16 %v1121
    %v1294 = vunpack.c.h.b16 %v1121
    %v1295 = vunpack.c.l.b16 %v1122
    %v1296 = vunpack.c.h.b16 %v1122
    %v1297 = vunpack.c.l.b16 %v1123
    %v1298 = vunpack.c.h.b16 %v1123
    %v1299 = vunpack.c.l.b16 %v1124
    %v1300 = vunpack.c.h.b16 %v1124
    %v1301 = vunpack.c.l.b16 %v1125
    %v1302 = vunpack.c.h.b16 %v1125
    %v1303 = vunpack.c.l.b16 %v1126
    %v1304 = vunpack.c.h.b16 %v1126
    %v1305 = vunpack.c.l.b16 %v1127
    %v1306 = vunpack.c.h.b16 %v1127
    %v1307 = vunpack.c.l.b16 %v1128
    %v1308 = vunpack.c.h.b16 %v1128
    %v1309 = vpack.c.b16 %v1261, %v1245
    %v1310 = vpack.c.b16 %v1262, %v1246
    %v1311 = vpack.c.b16 %v1263, %v1247
    %v1312 = vpack.c.b16 %v1264, %v1248
    %v1313 = vpack.c.b16 %v1265, %v1249
    %v1314 = vpack.c.b16 %v1266, %v1250
    %v1315 = vpack.c.b16 %v1267, %v1251
    %v1316 = vpack.c.b16 %v1268, %v1252
    %v1317 = vpack.c.b16 %v1269, %v1253
    %v1318 = vpack.c.b16 %v1270, %v1254
    %v1319 = vpack.c.b16 %v1271, %v1255
    %v1320 = vpack.c.b16 %v1272, %v1256
    %v1321 = vpack.c.b16 %v1273, %v1257
    %v1322 = vpack.c.b16 %v1274, %v1258
    %v1323 = vpack.c.b16 %v1275, %v1259
    %v1324 = vpack.c.b16 %v1276, %v1260
    %v1325 = vpack.c.b16 %v1293, %v1277
    %v1326 = vpack.c.b16 %v1294, %v1278
    %v1327 = vpack.c.b16 %v1295, %v1279
    %v1328 = vpack.c.b16 %v1296, %v1280
    %v1329 = vpack.c.b16 %v1297, %v1281
    %v1330 = vpack.c.b16 %v1298, %v1282
    %v1331 = vpack.c.b16 %v1299, %v1283
    %v1332 = vpack.c.b16 %v1300, %v1284
    %v1333 = vpack.c.b16 %v1301, %v1285
    %v1334 = vpack.c.b16 %v1302, %v1286
    %v1335 = vpack.c.b16 %v1303, %v1287
    %v1336 = vpack.c.b16 %v1304, %v1288
    %v1337 = vpack.c.b16 %v1305, %v1289
    %v1338 = vpack.c.b16 %v1306, %v1290
    %v1339 = vpack.c.b16 %v1307, %v1291
    %v1340 = vpack.c.b16 %v1308, %v1292
    %v1374 = vsel %vm89, %v1096, 0
    %1376 = vmatprep.subr.bf16.mxu0 %v1310
    %1377 = vmatpush1.bf16.msra.mxu0 %v1309
    %1378 = vmatprep.subr.bf16.mxu0 %v1326
    %1379 = vmatpush1.bf16.msra.mxu0 %v1325
    %1380 = vmatprep.subr.bf16.mxu0 0
    %1381 = vmatpush1.bf16.msra.mxu0 0
    %1382 = vmatprep.subr.bf16.mxu0 0
    %1383 = vmatpush1.bf16.msra.mxu0 0
    %1384 = vmatprep.subr.bf16.mxu0 0
    %1385 = vmatpush1.bf16.msra.mxu0 0
    %1386 = vmatprep.subr.bf16.mxu0 0
    %1387 = vmatpush1.bf16.msra.mxu0 0
    %1388 = vmatprep.subr.bf16.mxu0 0
    %1389 = vmatpush1.bf16.msra.mxu0 0
    %1390 = vmatprep.subr.bf16.mxu0 0
    %1391 = vmatpush1.bf16.msra.mxu0 0
    %1392 = vmatprep.subr.bf16.mxu0 0
    %1393 = vmatpush1.bf16.msra.mxu0 0
    %1394 = vmatprep.subr.bf16.mxu0 0
    %1395 = vmatpush1.bf16.msra.mxu0 0
    %1396 = vmatprep.subr.bf16.mxu0 0
    %1397 = vmatpush1.bf16.msra.mxu0 0
    %1398 = vmatprep.subr.bf16.mxu0 0
    %1399 = vmatpush1.bf16.msra.mxu0 0
    %1400 = vmatprep.subr.bf16.mxu0 0
    %1401 = vmatpush1.bf16.msra.mxu0 0
    %1402 = vmatprep.subr.bf16.mxu0 0
    %1403 = vmatpush1.bf16.msra.mxu0 0
    %1404 = vmatprep.subr.bf16.mxu0 0
    %1405 = vmatpush1.bf16.msra.mxu0 0
    %1406 = vmatprep.subr.bf16.mxu0 0
    %1407 = vmatpush1.bf16.msra.mxu0 0
    %1408 = vmatprep.mubr.bf16.mxu0 0
    %1409 = vmatmul.mubr.bf16.gmra.mrb[0].mxu0 %v1374
    %v1410 = vpop.f32.mrb[0].mxu0
    %v1411 = vadd.f32 %v1136, %v1410
    %v1412 = vpop.f32.mrb[0].mxu0
    %v1413 = vadd.f32 %v1140, %v1412
    %v1414 = vpop.f32.mrb[0].mxu0
    %v1415 = vadd.f32 %v1136, %v1414
    %v1416 = vpop.f32.mrb[0].mxu0
    %v1417 = vadd.f32 %v1140, %v1416
    %1418 = vdwg.mxu0
    %1419 = vmatprep.subr.bf16.mxu0 %v1312
    %1420 = vmatpush1.bf16.msra.mxu0 %v1311
    %1421 = vmatprep.subr.bf16.mxu0 %v1328
    %1422 = vmatpush1.bf16.msra.mxu0 %v1327
    %1423 = vmatprep.subr.bf16.mxu0 0
    %1424 = vmatpush1.bf16.msra.mxu0 0
    %1425 = vmatprep.subr.bf16.mxu0 0
    %1426 = vmatpush1.bf16.msra.mxu0 0
    %1427 = vmatprep.subr.bf16.mxu0 0
    %1428 = vmatpush1.bf16.msra.mxu0 0
    %1429 = vmatprep.subr.bf16.mxu0 0
    %1430 = vmatpush1.bf16.msra.mxu0 0
    %1431 = vmatprep.subr.bf16.mxu0 0
    %1432 = vmatpush1.bf16.msra.mxu0 0
    %1433 = vmatprep.subr.bf16.mxu0 0
    %1434 = vmatpush1.bf16.msra.mxu0 0
    %1435 = vmatprep.subr.bf16.mxu0 0
    %1436 = vmatpush1.bf16.msra.mxu0 0
    %1437 = vmatprep.subr.bf16.mxu0 0
    %1438 = vmatpush1.bf16.msra.mxu0 0
    %1439 = vmatprep.subr.bf16.mxu0 0
    %1440 = vmatpush1.bf16.msra.mxu0 0
    %1441 = vmatprep.subr.bf16.mxu0 0
    %1442 = vmatpush1.bf16.msra.mxu0 0
    %1443 = vmatprep.subr.bf16.mxu0 0
    %1444 = vmatpush1.bf16.msra.mxu0 0
    %1445 = vmatprep.subr.bf16.mxu0 0
    %1446 = vmatpush1.bf16.msra.mxu0 0
    %1447 = vmatprep.subr.bf16.mxu0 0
    %1448 = vmatpush1.bf16.msra.mxu0 0
    %1449 = vmatprep.subr.bf16.mxu0 0
    %1450 = vmatpush1.bf16.msra.mxu0 0
    %1451 = vmatprep.mubr.bf16.mxu0 0
    %1452 = vmatmul.mubr.bf16.gmra.mrb[0].mxu0 %v1374
    %v1453 = vpop.f32.mrb[0].mxu0
    %v1454 = vadd.f32 %v1144, %v1453
    %v1455 = vpop.f32.mrb[0].mxu0
    %v1456 = vadd.f32 %v1148, %v1455
    %v1457 = vpop.f32.mrb[0].mxu0
    %v1458 = vadd.f32 %v1144, %v1457
    %v1459 = vpop.f32.mrb[0].mxu0
    %v1460 = vadd.f32 %v1148, %v1459
    %1461 = vdwg.mxu0
    %1462 = vmatprep.subr.bf16.mxu0 %v1314
    %1463 = vmatpush1.bf16.msra.mxu0 %v1313
    %1464 = vmatprep.subr.bf16.mxu0 %v1330
    %1465 = vmatpush1.bf16.msra.mxu0 %v1329
    %1466 = vmatprep.subr.bf16.mxu0 0
    %1467 = vmatpush1.bf16.msra.mxu0 0
    %1468 = vmatprep.subr.bf16.mxu0 0
    %1469 = vmatpush1.bf16.msra.mxu0 0
    %1470 = vmatprep.subr.bf16.mxu0 0
    %1471 = vmatpush1.bf16.msra.mxu0 0
    %1472 = vmatprep.subr.bf16.mxu0 0
    %1473 = vmatpush1.bf16.msra.mxu0 0
    %1474 = vmatprep.subr.bf16.mxu0 0
    %1475 = vmatpush1.bf16.msra.mxu0 0
    %1476 = vmatprep.subr.bf16.mxu0 0
    %1477 = vmatpush1.bf16.msra.mxu0 0
    %1478 = vmatprep.subr.bf16.mxu0 0
    %1479 = vmatpush1.bf16.msra.mxu0 0
    %1480 = vmatprep.subr.bf16.mxu0 0
    %1481 = vmatpush1.bf16.msra.mxu0 0
    %1482 = vmatprep.subr.bf16.mxu0 0
    %1483 = vmatpush1.bf16.msra.mxu0 0
    %1484 = vmatprep.subr.bf16.mxu0 0
    %1485 = vmatpush1.bf16.msra.mxu0 0
    %1486 = vmatprep.subr.bf16.mxu0 0
    %1487 = vmatpush1.bf16.msra.mxu0 0
    %1488 = vmatprep.subr.bf16.mxu0 0
    %1489 = vmatpush1.bf16.msra.mxu0 0
    %1490 = vmatprep.subr.bf16.mxu0 0
    %1491 = vmatpush1.bf16.msra.mxu0 0
    %1492 = vmatprep.subr.bf16.mxu0 0
    %1493 = vmatpush1.bf16.msra.mxu0 0
    %1494 = vmatprep.mubr.bf16.mxu0 0
    %1495 = vmatmul.mubr.bf16.gmra.mrb[0].mxu0 %v1374
    %v1496 = vpop.f32.mrb[0].mxu0
    %v1497 = vadd.f32 %v1152, %v1496
    %v1498 = vpop.f32.mrb[0].mxu0
    %v1499 = vadd.f32 %v1156, %v1498
    %v1500 = vpop.f32.mrb[0].mxu0
    %v1501 = vadd.f32 %v1152, %v1500
    %v1502 = vpop.f32.mrb[0].mxu0
    %v1503 = vadd.f32 %v1156, %v1502
    %1504 = vdwg.mxu0
    %1505 = vmatprep.subr.bf16.mxu0 %v1316
    %1506 = vmatpush1.bf16.msra.mxu0 %v1315
    %1507 = vmatprep.subr.bf16.mxu0 %v1332
    %1508 = vmatpush1.bf16.msra.mxu0 %v1331
    %1509 = vmatprep.subr.bf16.mxu0 0
    %1510 = vmatpush1.bf16.msra.mxu0 0
    %1511 = vmatprep.subr.bf16.mxu0 0
    %1512 = vmatpush1.bf16.msra.mxu0 0
    %1513 = vmatprep.subr.bf16.mxu0 0
    %1514 = vmatpush1.bf16.msra.mxu0 0
    %1515 = vmatprep.subr.bf16.mxu0 0
    %1516 = vmatpush1.bf16.msra.mxu0 0
    %1517 = vmatprep.subr.bf16.mxu0 0
    %1518 = vmatpush1.bf16.msra.mxu0 0
    %1519 = vmatprep.subr.bf16.mxu0 0
    %1520 = vmatpush1.bf16.msra.mxu0 0
    %1521 = vmatprep.subr.bf16.mxu0 0
    %1522 = vmatpush1.bf16.msra.mxu0 0
    %1523 = vmatprep.subr.bf16.mxu0 0
    %1524 = vmatpush1.bf16.msra.mxu0 0
    %1525 = vmatprep.subr.bf16.mxu0 0
    %1526 = vmatpush1.bf16.msra.mxu0 0
    %1527 = vmatprep.subr.bf16.mxu0 0
    %1528 = vmatpush1.bf16.msra.mxu0 0
    %1529 = vmatprep.subr.bf16.mxu0 0
    %1530 = vmatpush1.bf16.msra.mxu0 0
    %1531 = vmatprep.subr.bf16.mxu0 0
    %1532 = vmatpush1.bf16.msra.mxu0 0
    %1533 = vmatprep.subr.bf16.mxu0 0
    %1534 = vmatpush1.bf16.msra.mxu0 0
    %1535 = vmatprep.subr.bf16.mxu0 0
    %1536 = vmatpush1.bf16.msra.mxu0 0
    %1537 = vmatprep.mubr.bf16.mxu0 0
    %1538 = vmatmul.mubr.bf16.gmra.mrb[0].mxu0 %v1374
    %v1539 = vpop.f32.mrb[0].mxu0
    %v1540 = vadd.f32 %v1160, %v1539
    %v1541 = vpop.f32.mrb[0].mxu0
    %v1542 = vadd.f32 %v1164, %v1541
    %v1543 = vpop.f32.mrb[0].mxu0
    %v1544 = vadd.f32 %v1160, %v1543
    %v1545 = vpop.f32.mrb[0].mxu0
    %v1546 = vadd.f32 %v1164, %v1545
    %1547 = vdwg.mxu0
    %1548 = vmatprep.subr.bf16.mxu0 %v1318
    %1549 = vmatpush1.bf16.msra.mxu0 %v1317
    %1550 = vmatprep.subr.bf16.mxu0 %v1334
    %1551 = vmatpush1.bf16.msra.mxu0 %v1333
    %1552 = vmatprep.subr.bf16.mxu0 0
    %1553 = vmatpush1.bf16.msra.mxu0 0
    %1554 = vmatprep.subr.bf16.mxu0 0
    %1555 = vmatpush1.bf16.msra.mxu0 0
    %1556 = vmatprep.subr.bf16.mxu0 0
    %1557 = vmatpush1.bf16.msra.mxu0 0
    %1558 = vmatprep.subr.bf16.mxu0 0
    %1559 = vmatpush1.bf16.msra.mxu0 0
    %1560 = vmatprep.subr.bf16.mxu0 0
    %1561 = vmatpush1.bf16.msra.mxu0 0
    %1562 = vmatprep.subr.bf16.mxu0 0
    %1563 = vmatpush1.bf16.msra.mxu0 0
    %1564 = vmatprep.subr.bf16.mxu0 0
    %1565 = vmatpush1.bf16.msra.mxu0 0
    %1566 = vmatprep.subr.bf16.mxu0 0
    %1567 = vmatpush1.bf16.msra.mxu0 0
    %1568 = vmatprep.subr.bf16.mxu0 0
    %1569 = vmatpush1.bf16.msra.mxu0 0
    %1570 = vmatprep.subr.bf16.mxu0 0
    %1571 = vmatpush1.bf16.msra.mxu0 0
    %1572 = vmatprep.subr.bf16.mxu0 0
    %1573 = vmatpush1.bf16.msra.mxu0 0
    %1574 = vmatprep.subr.bf16.mxu0 0
    %1575 = vmatpush1.bf16.msra.mxu0 0
    %1576 = vmatprep.subr.bf16.mxu0 0
    %1577 = vmatpush1.bf16.msra.mxu0 0
    %1578 = vmatprep.subr.bf16.mxu0 0
    %1579 = vmatpush1.bf16.msra.mxu0 0
    %1580 = vmatprep.mubr.bf16.mxu0 0
    %1581 = vmatmul.mubr.bf16.gmra.mrb[0].mxu0 %v1374
    %v1582 = vpop.f32.mrb[0].mxu0
    %v1583 = vadd.f32 %v1168, %v1582
    %v1584 = vpop.f32.mrb[0].mxu0
    %v1585 = vadd.f32 %v1172, %v1584
    %v1586 = vpop.f32.mrb[0].mxu0
    %v1587 = vadd.f32 %v1168, %v1586
    %v1588 = vpop.f32.mrb[0].mxu0
    %v1589 = vadd.f32 %v1172, %v1588
    %1590 = vdwg.mxu0
    %1591 = vmatprep.subr.bf16.mxu0 %v1320
    %1592 = vmatpush1.bf16.msra.mxu0 %v1319
    %1593 = vmatprep.subr.bf16.mxu0 %v1336
    %1594 = vmatpush1.bf16.msra.mxu0 %v1335
    %1595 = vmatprep.subr.bf16.mxu0 0
    %1596 = vmatpush1.bf16.msra.mxu0 0
    %1597 = vmatprep.subr.bf16.mxu0 0
    %1598 = vmatpush1.bf16.msra.mxu0 0
    %1599 = vmatprep.subr.bf16.mxu0 0
    %1600 = vmatpush1.bf16.msra.mxu0 0
    %1601 = vmatprep.subr.bf16.mxu0 0
    %1602 = vmatpush1.bf16.msra.mxu0 0
    %1603 = vmatprep.subr.bf16.mxu0 0
    %1604 = vmatpush1.bf16.msra.mxu0 0
    %1605 = vmatprep.subr.bf16.mxu0 0
    %1606 = vmatpush1.bf16.msra.mxu0 0
    %1607 = vmatprep.subr.bf16.mxu0 0
    %1608 = vmatpush1.bf16.msra.mxu0 0
    %1609 = vmatprep.subr.bf16.mxu0 0
    %1610 = vmatpush1.bf16.msra.mxu0 0
    %1611 = vmatprep.subr.bf16.mxu0 0
    %1612 = vmatpush1.bf16.msra.mxu0 0
    %1613 = vmatprep.subr.bf16.mxu0 0
    %1614 = vmatpush1.bf16.msra.mxu0 0
    %1615 = vmatprep.subr.bf16.mxu0 0
    %1616 = vmatpush1.bf16.msra.mxu0 0
    %1617 = vmatprep.subr.bf16.mxu0 0
    %1618 = vmatpush1.bf16.msra.mxu0 0
    %1619 = vmatprep.subr.bf16.mxu0 0
    %1620 = vmatpush1.bf16.msra.mxu0 0
    %1621 = vmatprep.subr.bf16.mxu0 0
    %1622 = vmatpush1.bf16.msra.mxu0 0
    %1623 = vmatprep.mubr.bf16.mxu0 0
    %1624 = vmatmul.mubr.bf16.gmra.mrb[0].mxu0 %v1374
    %v1625 = vpop.f32.mrb[0].mxu0
    %v1626 = vadd.f32 %v1176, %v1625
    %v1627 = vpop.f32.mrb[0].mxu0
    %v1628 = vadd.f32 %v1180, %v1627
    %v1629 = vpop.f32.mrb[0].mxu0
    %v1630 = vadd.f32 %v1176, %v1629
    %v1631 = vpop.f32.mrb[0].mxu0
    %v1632 = vadd.f32 %v1180, %v1631
    %1633 = vdwg.mxu0
    %1634 = vmatprep.subr.bf16.mxu0 %v1322
    %1635 = vmatpush1.bf16.msra.mxu0 %v1321
    %1636 = vmatprep.subr.bf16.mxu0 %v1338
    %1637 = vmatpush1.bf16.msra.mxu0 %v1337
    %1638 = vmatprep.subr.bf16.mxu0 0
    %1639 = vmatpush1.bf16.msra.mxu0 0
    %1640 = vmatprep.subr.bf16.mxu0 0
    %1641 = vmatpush1.bf16.msra.mxu0 0
    %1642 = vmatprep.subr.bf16.mxu0 0
    %1643 = vmatpush1.bf16.msra.mxu0 0
    %1644 = vmatprep.subr.bf16.mxu0 0
    %1645 = vmatpush1.bf16.msra.mxu0 0
    %1646 = vmatprep.subr.bf16.mxu0 0
    %1647 = vmatpush1.bf16.msra.mxu0 0
    %1648 = vmatprep.subr.bf16.mxu0 0
    %1649 = vmatpush1.bf16.msra.mxu0 0
    %1650 = vmatprep.subr.bf16.mxu0 0
    %1651 = vmatpush1.bf16.msra.mxu0 0
    %1652 = vmatprep.subr.bf16.mxu0 0
    %1653 = vmatpush1.bf16.msra.mxu0 0
    %1654 = vmatprep.subr.bf16.mxu0 0
    %1655 = vmatpush1.bf16.msra.mxu0 0
    %1656 = vmatprep.subr.bf16.mxu0 0
    %1657 = vmatpush1.bf16.msra.mxu0 0
    %1658 = vmatprep.subr.bf16.mxu0 0
    %1659 = vmatpush1.bf16.msra.mxu0 0
    %1660 = vmatprep.subr.bf16.mxu0 0
    %1661 = vmatpush1.bf16.msra.mxu0 0
    %1662 = vmatprep.subr.bf16.mxu0 0
    %1663 = vmatpush1.bf16.msra.mxu0 0
    %1664 = vmatprep.subr.bf16.mxu0 0
    %1665 = vmatpush1.bf16.msra.mxu0 0
    %1666 = vmatprep.mubr.bf16.mxu0 0
    %1667 = vmatmul.mubr.bf16.gmra.mrb[0].mxu0 %v1374
    %v1668 = vpop.f32.mrb[0].mxu0
    %v1669 = vadd.f32 %v1184, %v1668
    %v1670 = vpop.f32.mrb[0].mxu0
    %v1671 = vadd.f32 %v1188, %v1670
    %v1672 = vpop.f32.mrb[0].mxu0
    %v1673 = vadd.f32 %v1184, %v1672
    %v1674 = vpop.f32.mrb[0].mxu0
    %v1675 = vadd.f32 %v1188, %v1674
    %1676 = vdwg.mxu0
    %1677 = vmatprep.subr.bf16.mxu0 %v1324
    %1678 = vmatpush1.bf16.msra.mxu0 %v1323
    %1679 = vmatprep.subr.bf16.mxu0 %v1340
    %1680 = vmatpush1.bf16.msra.mxu0 %v1339
    %1681 = vmatprep.subr.bf16.mxu0 0
    %1682 = vmatpush1.bf16.msra.mxu0 0
    %1683 = vmatprep.subr.bf16.mxu0 0
    %1684 = vmatpush1.bf16.msra.mxu0 0
    %1685 = vmatprep.subr.bf16.mxu0 0
    %1686 = vmatpush1.bf16.msra.mxu0 0
    %1687 = vmatprep.subr.bf16.mxu0 0
    %1688 = vmatpush1.bf16.msra.mxu0 0
    %1689 = vmatprep.subr.bf16.mxu0 0
    %1690 = vmatpush1.bf16.msra.mxu0 0
    %1691 = vmatprep.subr.bf16.mxu0 0
    %1692 = vmatpush1.bf16.msra.mxu0 0
    %1693 = vmatprep.subr.bf16.mxu0 0
    %1694 = vmatpush1.bf16.msra.mxu0 0
    %1695 = vmatprep.subr.bf16.mxu0 0
    %1696 = vmatpush1.bf16.msra.mxu0 0
    %1697 = vmatprep.subr.bf16.mxu0 0
    %1698 = vmatpush1.bf16.msra.mxu0 0
    %1699 = vmatprep.subr.bf16.mxu0 0
    %1700 = vmatpush1.bf16.msra.mxu0 0
    %1701 = vmatprep.subr.bf16.mxu0 0
    %1702 = vmatpush1.bf16.msra.mxu0 0
    %1703 = vmatprep.subr.bf16.mxu0 0
    %1704 = vmatpush1.bf16.msra.mxu0 0
    %1705 = vmatprep.subr.bf16.mxu0 0
    %1706 = vmatpush1.bf16.msra.mxu0 0
    %1707 = vmatprep.subr.bf16.mxu0 0
    %1708 = vmatpush1.bf16.msra.mxu0 0
    %1709 = vmatprep.mubr.bf16.mxu0 0
    %1710 = vmatmul.mubr.bf16.gmra.mrb[0].mxu0 %v1374
    %v1711 = vpop.f32.mrb[0].mxu0
    %v1712 = vadd.f32 %v1192, %v1711
    %v1713 = vpop.f32.mrb[0].mxu0
    %v1714 = vadd.f32 %v1196, %v1713
    %v1715 = vpop.f32.mrb[0].mxu0
    %v1716 = vadd.f32 %v1192, %v1715
    %v1717 = vpop.f32.mrb[0].mxu0
    %v1718 = vadd.f32 %v1196, %v1717
    %1719 = vdwg.mxu0
    %v1720 = vmax.f32 %v1411, 0.0
    %v1721 = vmax.f32 %v1413, 0.0
    %v1722 = vmax.f32 %v1454, 0.0
    %v1723 = vmax.f32 %v1456, 0.0
    %v1724 = vmax.f32 %v1497, 0.0
    %v1725 = vmax.f32 %v1499, 0.0
    %v1726 = vmax.f32 %v1540, 0.0
    %v1727 = vmax.f32 %v1542, 0.0
    %v1728 = vmax.f32 %v1583, 0.0
    %v1729 = vmax.f32 %v1585, 0.0
    %v1730 = vmax.f32 %v1626, 0.0
    %v1731 = vmax.f32 %v1628, 0.0
    %v1732 = vmax.f32 %v1669, 0.0
    %v1733 = vmax.f32 %v1671, 0.0
    %v1734 = vmax.f32 %v1712, 0.0
    %v1735 = vmax.f32 %v1714, 0.0
    %v1736 = vmax.f32 %v1415, 0.0
    %v1737 = vmax.f32 %v1417, 0.0
    %v1738 = vmax.f32 %v1458, 0.0
    %v1739 = vmax.f32 %v1460, 0.0
    %v1740 = vmax.f32 %v1501, 0.0
    %v1741 = vmax.f32 %v1503, 0.0
    %v1742 = vmax.f32 %v1544, 0.0
    %v1743 = vmax.f32 %v1546, 0.0
    %v1744 = vmax.f32 %v1587, 0.0
    %v1745 = vmax.f32 %v1589, 0.0
    %v1746 = vmax.f32 %v1630, 0.0
    %v1747 = vmax.f32 %v1632, 0.0
    %v1748 = vmax.f32 %v1673, 0.0
    %v1749 = vmax.f32 %v1675, 0.0
    %v1750 = vmax.f32 %v1716, 0.0
    %v1751 = vmax.f32 %v1718, 0.0
    %v1752 = vpack.c.bf16 %v1736, %v1720
    %v1753 = vpack.c.bf16 %v1737, %v1721
    %v1754 = vpack.c.bf16 %v1738, %v1722
    %v1755 = vpack.c.bf16 %v1739, %v1723
    %v1756 = vpack.c.bf16 %v1740, %v1724
    %v1757 = vpack.c.bf16 %v1741, %v1725
    %v1758 = vpack.c.bf16 %v1742, %v1726
    %v1759 = vpack.c.bf16 %v1743, %v1727
    %v1760 = vpack.c.bf16 %v1744, %v1728
    %v1761 = vpack.c.bf16 %v1745, %v1729
    %v1762 = vpack.c.bf16 %v1746, %v1730
    %v1763 = vpack.c.bf16 %v1747, %v1731
    %v1764 = vpack.c.bf16 %v1748, %v1732
    %v1765 = vpack.c.bf16 %v1749, %v1733
    %v1766 = vpack.c.bf16 %v1750, %v1734
    %v1767 = vpack.c.bf16 %v1751, %v1735
    %v1768 = vld [vmem:[%s11] sm:$0xf]
    %v1769 = vld [vmem:[%s11 + $0x4] sm:$0xf]
    %v1770 = vld [vmem:[%s11 + $0x8] sm:$0xf]
    %v1771 = vld [vmem:[%s11 + $0xc] sm:$0xf]
    %v1772 = vld [vmem:[%s11 + $0x10] sm:$0xf]
    %v1773 = vld [vmem:[%s11 + $0x14] sm:$0xf]
    %v1774 = vld [vmem:[%s11 + $0x18] sm:$0xf]
    %v1775 = vld [vmem:[%s11 + $0x1c] sm:$0xf]
    %v1776 = vld [vmem:[%s11 + $0x20] sm:$0xf]
    %v1777 = vld [vmem:[%s11 + $0x24] sm:$0xf]
    %v1778 = vld [vmem:[%s11 + $0x28] sm:$0xf]
    %v1779 = vld [vmem:[%s11 + $0x2c] sm:$0xf]
    %v1780 = vld [vmem:[%s11 + $0x30] sm:$0xf]
    %v1781 = vld [vmem:[%s11 + $0x34] sm:$0xf]
    %v1782 = vld [vmem:[%s11 + $0x38] sm:$0xf]
    %v1783 = vld [vmem:[%s11 + $0x3c] sm:$0xf]
    %v1784 = vld [vmem:[%s11 + $0x40] sm:$0xf]
    %v1785 = vld [vmem:[%s11 + $0x44] sm:$0xf]
    %v1786 = vld [vmem:[%s11 + $0x48] sm:$0xf]
    %v1787 = vld [vmem:[%s11 + $0x4c] sm:$0xf]
    %v1788 = vld [vmem:[%s11 + $0x50] sm:$0xf]
    %v1789 = vld [vmem:[%s11 + $0x54] sm:$0xf]
    %v1790 = vld [vmem:[%s11 + $0x58] sm:$0xf]
    %v1791 = vld [vmem:[%s11 + $0x5c] sm:$0xf]
    %v1792 = vld [vmem:[%s11 + $0x60] sm:$0xf]
    %v1793 = vld [vmem:[%s11 + $0x64] sm:$0xf]
    %v1794 = vld [vmem:[%s11 + $0x68] sm:$0xf]
    %v1795 = vld [vmem:[%s11 + $0x6c] sm:$0xf]
    %v1796 = vld [vmem:[%s11 + $0x70] sm:$0xf]
    %v1797 = vld [vmem:[%s11 + $0x74] sm:$0xf]
    %v1798 = vld [vmem:[%s11 + $0x78] sm:$0xf]
    %v1799 = vld [vmem:[%s11 + $0x7c] sm:$0xf]
    %v1800 = vld [vmem:[%s11 + $0x80] sm:$0xf]
    %v1801 = vld [vmem:[%s11 + $0x84] sm:$0xf]
    %v1802 = vld [vmem:[%s11 + $0x88] sm:$0xf]
    %v1803 = vld [vmem:[%s11 + $0x8c] sm:$0xf]
    %v1804 = vld [vmem:[%s11 + $0x90] sm:$0xf]
    %v1805 = vld [vmem:[%s11 + $0x94] sm:$0xf]
    %v1806 = vld [vmem:[%s11 + $0x98] sm:$0xf]
    %v1807 = vld [vmem:[%s11 + $0x9c] sm:$0xf]
    %v1808 = vld [vmem:[%s11 + $0xa0] sm:$0xf]
    %v1809 = vld [vmem:[%s11 + $0xa4] sm:$0xf]
    %v1810 = vld [vmem:[%s11 + $0xa8] sm:$0xf]
    %v1811 = vld [vmem:[%s11 + $0xac] sm:$0xf]
    %v1812 = vld [vmem:[%s11 + $0xb0] sm:$0xf]
    %v1813 = vld [vmem:[%s11 + $0xb4] sm:$0xf]
    %v1814 = vld [vmem:[%s11 + $0xb8] sm:$0xf]
    %v1815 = vld [vmem:[%s11 + $0xbc] sm:$0xf]
    %v1816 = vld [vmem:[%s11 + $0xc0] sm:$0xf]
    %v1817 = vld [vmem:[%s11 + $0xc4] sm:$0xf]
    %v1818 = vld [vmem:[%s11 + $0xc8] sm:$0xf]
    %v1819 = vld [vmem:[%s11 + $0xcc] sm:$0xf]
    %v1820 = vld [vmem:[%s11 + $0xd0] sm:$0xf]
    %v1821 = vld [vmem:[%s11 + $0xd4] sm:$0xf]
    %v1822 = vld [vmem:[%s11 + $0xd8] sm:$0xf]
    %v1823 = vld [vmem:[%s11 + $0xdc] sm:$0xf]
    %v1824 = vld [vmem:[%s11 + $0xe0] sm:$0xf]
    %v1825 = vld [vmem:[%s11 + $0xe4] sm:$0xf]
    %v1826 = vld [vmem:[%s11 + $0xe8] sm:$0xf]
    %v1827 = vld [vmem:[%s11 + $0xec] sm:$0xf]
    %v1828 = vld [vmem:[%s11 + $0xf0] sm:$0xf]
    %v1829 = vld [vmem:[%s11 + $0xf4] sm:$0xf]
    %v1830 = vld [vmem:[%s11 + $0xf8] sm:$0xf]
    %v1831 = vld [vmem:[%s11 + $0xfc] sm:$0xf]
    %v1832 = vld [vmem:[%s11 + $0x100] sm:$0xf]
    %v1833 = vld [vmem:[%s11 + $0x104] sm:$0xf]
    %v1834 = vld [vmem:[%s11 + $0x108] sm:$0xf]
    %v1835 = vld [vmem:[%s11 + $0x10c] sm:$0xf]
    %v1836 = vld [vmem:[%s11 + $0x110] sm:$0xf]
    %v1837 = vld [vmem:[%s11 + $0x114] sm:$0xf]
    %v1838 = vld [vmem:[%s11 + $0x118] sm:$0xf]
    %v1839 = vld [vmem:[%s11 + $0x11c] sm:$0xf]
    %v1840 = vld [vmem:[%s11 + $0x120] sm:$0xf]
    %v1841 = vld [vmem:[%s11 + $0x124] sm:$0xf]
    %v1842 = vld [vmem:[%s11 + $0x128] sm:$0xf]
    %v1843 = vld [vmem:[%s11 + $0x12c] sm:$0xf]
    %v1844 = vld [vmem:[%s11 + $0x130] sm:$0xf]
    %v1845 = vld [vmem:[%s11 + $0x134] sm:$0xf]
    %v1846 = vld [vmem:[%s11 + $0x138] sm:$0xf]
    %v1847 = vld [vmem:[%s11 + $0x13c] sm:$0xf]
    %v1848 = vld [vmem:[%s11 + $0x140] sm:$0xf]
    %v1849 = vld [vmem:[%s11 + $0x144] sm:$0xf]
    %v1850 = vld [vmem:[%s11 + $0x148] sm:$0xf]
    %v1851 = vld [vmem:[%s11 + $0x14c] sm:$0xf]
    %v1852 = vld [vmem:[%s11 + $0x150] sm:$0xf]
    %v1853 = vld [vmem:[%s11 + $0x154] sm:$0xf]
    %v1854 = vld [vmem:[%s11 + $0x158] sm:$0xf]
    %v1855 = vld [vmem:[%s11 + $0x15c] sm:$0xf]
    %v1856 = vld [vmem:[%s11 + $0x160] sm:$0xf]
    %v1857 = vld [vmem:[%s11 + $0x164] sm:$0xf]
    %v1858 = vld [vmem:[%s11 + $0x168] sm:$0xf]
    %v1859 = vld [vmem:[%s11 + $0x16c] sm:$0xf]
    %v1860 = vld [vmem:[%s11 + $0x170] sm:$0xf]
    %v1861 = vld [vmem:[%s11 + $0x174] sm:$0xf]
    %v1862 = vld [vmem:[%s11 + $0x178] sm:$0xf]
    %v1863 = vld [vmem:[%s11 + $0x17c] sm:$0xf]
    %v1864 = vld [vmem:[%s11 + $0x180] sm:$0xf]
    %v1865 = vld [vmem:[%s11 + $0x184] sm:$0xf]
    %v1866 = vld [vmem:[%s11 + $0x188] sm:$0xf]
    %v1867 = vld [vmem:[%s11 + $0x18c] sm:$0xf]
    %v1868 = vld [vmem:[%s11 + $0x190] sm:$0xf]
    %v1869 = vld [vmem:[%s11 + $0x194] sm:$0xf]
    %v1870 = vld [vmem:[%s11 + $0x198] sm:$0xf]
    %v1871 = vld [vmem:[%s11 + $0x19c] sm:$0xf]
    %v1872 = vld [vmem:[%s11 + $0x1a0] sm:$0xf]
    %v1873 = vld [vmem:[%s11 + $0x1a4] sm:$0xf]
    %v1874 = vld [vmem:[%s11 + $0x1a8] sm:$0xf]
    %v1875 = vld [vmem:[%s11 + $0x1ac] sm:$0xf]
    %v1876 = vld [vmem:[%s11 + $0x1b0] sm:$0xf]
    %v1877 = vld [vmem:[%s11 + $0x1b4] sm:$0xf]
    %v1878 = vld [vmem:[%s11 + $0x1b8] sm:$0xf]
    %v1879 = vld [vmem:[%s11 + $0x1bc] sm:$0xf]
    %v1880 = vld [vmem:[%s11 + $0x1c0] sm:$0xf]
    %v1881 = vld [vmem:[%s11 + $0x1c4] sm:$0xf]
    %v1882 = vld [vmem:[%s11 + $0x1c8] sm:$0xf]
    %v1883 = vld [vmem:[%s11 + $0x1cc] sm:$0xf]
    %v1884 = vld [vmem:[%s11 + $0x1d0] sm:$0xf]
    %v1885 = vld [vmem:[%s11 + $0x1d4] sm:$0xf]
    %v1886 = vld [vmem:[%s11 + $0x1d8] sm:$0xf]
    %v1887 = vld [vmem:[%s11 + $0x1dc] sm:$0xf]
    %v1888 = vld [vmem:[%s11 + $0x1e0] sm:$0xf]
    %v1889 = vld [vmem:[%s11 + $0x1e4] sm:$0xf]
    %v1890 = vld [vmem:[%s11 + $0x1e8] sm:$0xf]
    %v1891 = vld [vmem:[%s11 + $0x1ec] sm:$0xf]
    %v1892 = vld [vmem:[%s11 + $0x1f0] sm:$0xf]
    %v1893 = vld [vmem:[%s11 + $0x1f4] sm:$0xf]
    %v1894 = vld [vmem:[%s11 + $0x1f8] sm:$0xf]
    %v1895 = vld [vmem:[%s11 + $0x1fc] sm:$0xf]
    %v1896 = vld [vmem:[%s11 + $0x200] sm:$0xf]
    %v1897 = vld [vmem:[%s11 + $0x204] sm:$0xf]
    %v1898 = vld [vmem:[%s11 + $0x208] sm:$0xf]
    %v1899 = vld [vmem:[%s11 + $0x20c] sm:$0xf]
    %v1900 = vld [vmem:[%s11 + $0x210] sm:$0xf]
    %v1901 = vld [vmem:[%s11 + $0x214] sm:$0xf]
    %v1902 = vld [vmem:[%s11 + $0x218] sm:$0xf]
    %v1903 = vld [vmem:[%s11 + $0x21c] sm:$0xf]
    %v1904 = vld [vmem:[%s11 + $0x220] sm:$0xf]
    %v1905 = vld [vmem:[%s11 + $0x224] sm:$0xf]
    %v1906 = vld [vmem:[%s11 + $0x228] sm:$0xf]
    %v1907 = vld [vmem:[%s11 + $0x22c] sm:$0xf]
    %v1908 = vld [vmem:[%s11 + $0x230] sm:$0xf]
    %v1909 = vld [vmem:[%s11 + $0x234] sm:$0xf]
    %v1910 = vld [vmem:[%s11 + $0x238] sm:$0xf]
    %v1911 = vld [vmem:[%s11 + $0x23c] sm:$0xf]
    %v1912 = vld [vmem:[%s11 + $0x240] sm:$0xf]
    %v1913 = vld [vmem:[%s11 + $0x244] sm:$0xf]
    %v1914 = vld [vmem:[%s11 + $0x248] sm:$0xf]
    %v1915 = vld [vmem:[%s11 + $0x24c] sm:$0xf]
    %v1916 = vld [vmem:[%s11 + $0x250] sm:$0xf]
    %v1917 = vld [vmem:[%s11 + $0x254] sm:$0xf]
    %v1918 = vld [vmem:[%s11 + $0x258] sm:$0xf]
    %v1919 = vld [vmem:[%s11 + $0x25c] sm:$0xf]
    %v1920 = vld [vmem:[%s11 + $0x260] sm:$0xf]
    %v1921 = vld [vmem:[%s11 + $0x264] sm:$0xf]
    %v1922 = vld [vmem:[%s11 + $0x268] sm:$0xf]
    %v1923 = vld [vmem:[%s11 + $0x26c] sm:$0xf]
    %v1924 = vld [vmem:[%s11 + $0x270] sm:$0xf]
    %v1925 = vld [vmem:[%s11 + $0x274] sm:$0xf]
    %v1926 = vld [vmem:[%s11 + $0x278] sm:$0xf]
    %v1927 = vld [vmem:[%s11 + $0x27c] sm:$0xf]
    %v1928 = vld [vmem:[%s11 + $0x280] sm:$0xf]
    %v1929 = vld [vmem:[%s11 + $0x284] sm:$0xf]
    %v1930 = vld [vmem:[%s11 + $0x288] sm:$0xf]
    %v1931 = vld [vmem:[%s11 + $0x28c] sm:$0xf]
    %v1932 = vld [vmem:[%s11 + $0x290] sm:$0xf]
    %v1933 = vld [vmem:[%s11 + $0x294] sm:$0xf]
    %v1934 = vld [vmem:[%s11 + $0x298] sm:$0xf]
    %v1935 = vld [vmem:[%s11 + $0x29c] sm:$0xf]
    %v1936 = vld [vmem:[%s11 + $0x2a0] sm:$0xf]
    %v1937 = vld [vmem:[%s11 + $0x2a4] sm:$0xf]
    %v1938 = vld [vmem:[%s11 + $0x2a8] sm:$0xf]
    %v1939 = vld [vmem:[%s11 + $0x2ac] sm:$0xf]
    %v1940 = vld [vmem:[%s11 + $0x2b0] sm:$0xf]
    %v1941 = vld [vmem:[%s11 + $0x2b4] sm:$0xf]
    %v1942 = vld [vmem:[%s11 + $0x2b8] sm:$0xf]
    %v1943 = vld [vmem:[%s11 + $0x2bc] sm:$0xf]
    %v1944 = vld [vmem:[%s11 + $0x2c0] sm:$0xf]
    %v1945 = vld [vmem:[%s11 + $0x2c4] sm:$0xf]
    %v1946 = vld [vmem:[%s11 + $0x2c8] sm:$0xf]
    %v1947 = vld [vmem:[%s11 + $0x2cc] sm:$0xf]
    %v1948 = vld [vmem:[%s11 + $0x2d0] sm:$0xf]
    %v1949 = vld [vmem:[%s11 + $0x2d4] sm:$0xf]
    %v1950 = vld [vmem:[%s11 + $0x2d8] sm:$0xf]
    %v1951 = vld [vmem:[%s11 + $0x2dc] sm:$0xf]
    %v1952 = vld [vmem:[%s11 + $0x2e0] sm:$0xf]
    %v1953 = vld [vmem:[%s11 + $0x2e4] sm:$0xf]
    %v1954 = vld [vmem:[%s11 + $0x2e8] sm:$0xf]
    %v1955 = vld [vmem:[%s11 + $0x2ec] sm:$0xf]
    %v1956 = vld [vmem:[%s11 + $0x2f0] sm:$0xf]
    %v1957 = vld [vmem:[%s11 + $0x2f4] sm:$0xf]
    %v1958 = vld [vmem:[%s11 + $0x2f8] sm:$0xf]
    %v1959 = vld [vmem:[%s11 + $0x2fc] sm:$0xf]
    %v1960 = vld [vmem:[%s11 + $0x300] sm:$0xf]
    %v1961 = vld [vmem:[%s11 + $0x304] sm:$0xf]
    %v1962 = vld [vmem:[%s11 + $0x308] sm:$0xf]
    %v1963 = vld [vmem:[%s11 + $0x30c] sm:$0xf]
    %v1964 = vld [vmem:[%s11 + $0x310] sm:$0xf]
    %v1965 = vld [vmem:[%s11 + $0x314] sm:$0xf]
    %v1966 = vld [vmem:[%s11 + $0x318] sm:$0xf]
    %v1967 = vld [vmem:[%s11 + $0x31c] sm:$0xf]
    %v1968 = vld [vmem:[%s11 + $0x320] sm:$0xf]
    %v1969 = vld [vmem:[%s11 + $0x324] sm:$0xf]
    %v1970 = vld [vmem:[%s11 + $0x328] sm:$0xf]
    %v1971 = vld [vmem:[%s11 + $0x32c] sm:$0xf]
    %v1972 = vld [vmem:[%s11 + $0x330] sm:$0xf]
    %v1973 = vld [vmem:[%s11 + $0x334] sm:$0xf]
    %v1974 = vld [vmem:[%s11 + $0x338] sm:$0xf]
    %v1975 = vld [vmem:[%s11 + $0x33c] sm:$0xf]
    %v1976 = vld [vmem:[%s11 + $0x340] sm:$0xf]
    %v1977 = vld [vmem:[%s11 + $0x344] sm:$0xf]
    %v1978 = vld [vmem:[%s11 + $0x348] sm:$0xf]
    %v1979 = vld [vmem:[%s11 + $0x34c] sm:$0xf]
    %v1980 = vld [vmem:[%s11 + $0x350] sm:$0xf]
    %v1981 = vld [vmem:[%s11 + $0x354] sm:$0xf]
    %v1982 = vld [vmem:[%s11 + $0x358] sm:$0xf]
    %v1983 = vld [vmem:[%s11 + $0x35c] sm:$0xf]
    %v1984 = vld [vmem:[%s11 + $0x360] sm:$0xf]
    %v1985 = vld [vmem:[%s11 + $0x364] sm:$0xf]
    %v1986 = vld [vmem:[%s11 + $0x368] sm:$0xf]
    %v1987 = vld [vmem:[%s11 + $0x36c] sm:$0xf]
    %v1988 = vld [vmem:[%s11 + $0x370] sm:$0xf]
    %v1989 = vld [vmem:[%s11 + $0x374] sm:$0xf]
    %v1990 = vld [vmem:[%s11 + $0x378] sm:$0xf]
    %v1991 = vld [vmem:[%s11 + $0x37c] sm:$0xf]
    %v1992 = vld [vmem:[%s11 + $0x380] sm:$0xf]
    %v1993 = vld [vmem:[%s11 + $0x384] sm:$0xf]
    %v1994 = vld [vmem:[%s11 + $0x388] sm:$0xf]
    %v1995 = vld [vmem:[%s11 + $0x38c] sm:$0xf]
    %v1996 = vld [vmem:[%s11 + $0x390] sm:$0xf]
    %v1997 = vld [vmem:[%s11 + $0x394] sm:$0xf]
    %v1998 = vld [vmem:[%s11 + $0x398] sm:$0xf]
    %v1999 = vld [vmem:[%s11 + $0x39c] sm:$0xf]
    %v2000 = vld [vmem:[%s11 + $0x3a0] sm:$0xf]
    %v2001 = vld [vmem:[%s11 + $0x3a4] sm:$0xf]
    %v2002 = vld [vmem:[%s11 + $0x3a8] sm:$0xf]
    %v2003 = vld [vmem:[%s11 + $0x3ac] sm:$0xf]
    %v2004 = vld [vmem:[%s11 + $0x3b0] sm:$0xf]
    %v2005 = vld [vmem:[%s11 + $0x3b4] sm:$0xf]
    %v2006 = vld [vmem:[%s11 + $0x3b8] sm:$0xf]
    %v2007 = vld [vmem:[%s11 + $0x3bc] sm:$0xf]
    %v2008 = vld [vmem:[%s11 + $0x3c0] sm:$0xf]
    %v2009 = vld [vmem:[%s11 + $0x3c4] sm:$0xf]
    %v2010 = vld [vmem:[%s11 + $0x3c8] sm:$0xf]
    %v2011 = vld [vmem:[%s11 + $0x3cc] sm:$0xf]
    %v2012 = vld [vmem:[%s11 + $0x3d0] sm:$0xf]
    %v2013 = vld [vmem:[%s11 + $0x3d4] sm:$0xf]
    %v2014 = vld [vmem:[%s11 + $0x3d8] sm:$0xf]
    %v2015 = vld [vmem:[%s11 + $0x3dc] sm:$0xf]
    %v2016 = vld [vmem:[%s11 + $0x3e0] sm:$0xf]
    %v2017 = vld [vmem:[%s11 + $0x3e4] sm:$0xf]
    %v2018 = vld [vmem:[%s11 + $0x3e8] sm:$0xf]
    %v2019 = vld [vmem:[%s11 + $0x3ec] sm:$0xf]
    %v2020 = vld [vmem:[%s11 + $0x3f0] sm:$0xf]
    %v2021 = vld [vmem:[%s11 + $0x3f4] sm:$0xf]
    %v2022 = vld [vmem:[%s11 + $0x3f8] sm:$0xf]
    %v2023 = vld [vmem:[%s11 + $0x3fc] sm:$0xf]
    %v2024 = vld [vmem:[%s12] sm:$0x1]
    %v2026 = vlaneseq
    %v2027 = vshrl.u32 %v2026, 7
    %v2028 = vsub.s32 0, %v2027
    %v2029 = vrot.slane %v2024, %v2028
    %v2287 = vunpack.c.l.b16 %v1768
    %v2288 = vunpack.c.l.b16 %v1769
    %v2289 = vunpack.c.l.b16 %v1770
    %v2290 = vunpack.c.l.b16 %v1771
    %v2291 = vunpack.c.l.b16 %v1772
    %v2292 = vunpack.c.l.b16 %v1773
    %v2293 = vunpack.c.l.b16 %v1774
    %v2294 = vunpack.c.l.b16 %v1775
    %v2295 = vunpack.c.l.b16 %v1776
    %v2296 = vunpack.c.l.b16 %v1777
    %v2297 = vunpack.c.l.b16 %v1778
    %v2298 = vunpack.c.l.b16 %v1779
    %v2299 = vunpack.c.l.b16 %v1780
    %v2300 = vunpack.c.l.b16 %v1781
    %v2301 = vunpack.c.l.b16 %v1782
    %v2302 = vunpack.c.l.b16 %v1783
    %v2303 = vunpack.c.l.b16 %v1784
    %v2304 = vunpack.c.l.b16 %v1785
    %v2305 = vunpack.c.l.b16 %v1786
    %v2306 = vunpack.c.l.b16 %v1787
    %v2307 = vunpack.c.l.b16 %v1788
    %v2308 = vunpack.c.l.b16 %v1789
    %v2309 = vunpack.c.l.b16 %v1790
    %v2310 = vunpack.c.l.b16 %v1791
    %v2311 = vunpack.c.l.b16 %v1792
    %v2312 = vunpack.c.l.b16 %v1793
    %v2313 = vunpack.c.l.b16 %v1794
    %v2314 = vunpack.c.l.b16 %v1795
    %v2315 = vunpack.c.l.b16 %v1796
    %v2316 = vunpack.c.l.b16 %v1797
    %v2317 = vunpack.c.l.b16 %v1798
    %v2318 = vunpack.c.l.b16 %v1799
    %v2319 = vunpack.c.l.b16 %v1800
    %v2320 = vunpack.c.l.b16 %v1801
    %v2321 = vunpack.c.l.b16 %v1802
    %v2322 = vunpack.c.l.b16 %v1803
    %v2323 = vunpack.c.l.b16 %v1804
    %v2324 = vunpack.c.l.b16 %v1805
    %v2325 = vunpack.c.l.b16 %v1806
    %v2326 = vunpack.c.l.b16 %v1807
    %v2327 = vunpack.c.l.b16 %v1808
    %v2328 = vunpack.c.l.b16 %v1809
    %v2329 = vunpack.c.l.b16 %v1810
    %v2330 = vunpack.c.l.b16 %v1811
    %v2331 = vunpack.c.l.b16 %v1812
    %v2332 = vunpack.c.l.b16 %v1813
    %v2333 = vunpack.c.l.b16 %v1814
    %v2334 = vunpack.c.l.b16 %v1815
    %v2335 = vunpack.c.l.b16 %v1816
    %v2336 = vunpack.c.l.b16 %v1817
    %v2337 = vunpack.c.l.b16 %v1818
    %v2338 = vunpack.c.l.b16 %v1819
    %v2339 = vunpack.c.l.b16 %v1820
    %v2340 = vunpack.c.l.b16 %v1821
    %v2341 = vunpack.c.l.b16 %v1822
    %v2342 = vunpack.c.l.b16 %v1823
    %v2343 = vunpack.c.l.b16 %v1824
    %v2344 = vunpack.c.l.b16 %v1825
    %v2345 = vunpack.c.l.b16 %v1826
    %v2346 = vunpack.c.l.b16 %v1827
    %v2347 = vunpack.c.l.b16 %v1828
    %v2348 = vunpack.c.l.b16 %v1829
    %v2349 = vunpack.c.l.b16 %v1830
    %v2350 = vunpack.c.l.b16 %v1831
    %v2351 = vunpack.c.l.b16 %v1832
    %v2352 = vunpack.c.l.b16 %v1833
    %v2353 = vunpack.c.l.b16 %v1834
    %v2354 = vunpack.c.l.b16 %v1835
    %v2355 = vunpack.c.l.b16 %v1836
    %v2356 = vunpack.c.l.b16 %v1837
    %v2357 = vunpack.c.l.b16 %v1838
    %v2358 = vunpack.c.l.b16 %v1839
    %v2359 = vunpack.c.l.b16 %v1840
    %v2360 = vunpack.c.l.b16 %v1841
    %v2361 = vunpack.c.l.b16 %v1842
    %v2362 = vunpack.c.l.b16 %v1843
    %v2363 = vunpack.c.l.b16 %v1844
    %v2364 = vunpack.c.l.b16 %v1845
    %v2365 = vunpack.c.l.b16 %v1846
    %v2366 = vunpack.c.l.b16 %v1847
    %v2367 = vunpack.c.l.b16 %v1848
    %v2368 = vunpack.c.l.b16 %v1849
    %v2369 = vunpack.c.l.b16 %v1850
    %v2370 = vunpack.c.l.b16 %v1851
    %v2371 = vunpack.c.l.b16 %v1852
    %v2372 = vunpack.c.l.b16 %v1853
    %v2373 = vunpack.c.l.b16 %v1854
    %v2374 = vunpack.c.l.b16 %v1855
    %v2375 = vunpack.c.l.b16 %v1856
    %v2376 = vunpack.c.l.b16 %v1857
    %v2377 = vunpack.c.l.b16 %v1858
    %v2378 = vunpack.c.l.b16 %v1859
    %v2379 = vunpack.c.l.b16 %v1860
    %v2380 = vunpack.c.l.b16 %v1861
    %v2381 = vunpack.c.l.b16 %v1862
    %v2382 = vunpack.c.l.b16 %v1863
    %v2383 = vunpack.c.l.b16 %v1864
    %v2384 = vunpack.c.l.b16 %v1865
    %v2385 = vunpack.c.l.b16 %v1866
    %v2386 = vunpack.c.l.b16 %v1867
    %v2387 = vunpack.c.l.b16 %v1868
    %v2388 = vunpack.c.l.b16 %v1869
    %v2389 = vunpack.c.l.b16 %v1870
    %v2390 = vunpack.c.l.b16 %v1871
    %v2391 = vunpack.c.l.b16 %v1872
    %v2392 = vunpack.c.l.b16 %v1873
    %v2393 = vunpack.c.l.b16 %v1874
    %v2394 = vunpack.c.l.b16 %v1875
    %v2395 = vunpack.c.l.b16 %v1876
    %v2396 = vunpack.c.l.b16 %v1877
    %v2397 = vunpack.c.l.b16 %v1878
    %v2398 = vunpack.c.l.b16 %v1879
    %v2399 = vunpack.c.l.b16 %v1880
    %v2400 = vunpack.c.l.b16 %v1881
    %v2401 = vunpack.c.l.b16 %v1882
    %v2402 = vunpack.c.l.b16 %v1883
    %v2403 = vunpack.c.l.b16 %v1884
    %v2404 = vunpack.c.l.b16 %v1885
    %v2405 = vunpack.c.l.b16 %v1886
    %v2406 = vunpack.c.l.b16 %v1887
    %v2407 = vunpack.c.l.b16 %v1888
    %v2408 = vunpack.c.l.b16 %v1889
    %v2409 = vunpack.c.l.b16 %v1890
    %v2410 = vunpack.c.l.b16 %v1891
    %v2411 = vunpack.c.l.b16 %v1892
    %v2412 = vunpack.c.l.b16 %v1893
    %v2413 = vunpack.c.l.b16 %v1894
    %v2414 = vunpack.c.l.b16 %v1895
    %v2415 = vunpack.c.l.b16 %v1896
    %v2416 = vunpack.c.l.b16 %v1897
    %v2417 = vunpack.c.l.b16 %v1898
    %v2418 = vunpack.c.l.b16 %v1899
    %v2419 = vunpack.c.l.b16 %v1900
    %v2420 = vunpack.c.l.b16 %v1901
    %v2421 = vunpack.c.l.b16 %v1902
    %v2422 = vunpack.c.l.b16 %v1903
    %v2423 = vunpack.c.l.b16 %v1904
    %v2424 = vunpack.c.l.b16 %v1905
    %v2425 = vunpack.c.l.b16 %v1906
    %v2426 = vunpack.c.l.b16 %v1907
    %v2427 = vunpack.c.l.b16 %v1908
    %v2428 = vunpack.c.l.b16 %v1909
    %v2429 = vunpack.c.l.b16 %v1910
    %v2430 = vunpack.c.l.b16 %v1911
    %v2431 = vunpack.c.l.b16 %v1912
    %v2432 = vunpack.c.l.b16 %v1913
    %v2433 = vunpack.c.l.b16 %v1914
    %v2434 = vunpack.c.l.b16 %v1915
    %v2435 = vunpack.c.l.b16 %v1916
    %v2436 = vunpack.c.l.b16 %v1917
    %v2437 = vunpack.c.l.b16 %v1918
    %v2438 = vunpack.c.l.b16 %v1919
    %v2439 = vunpack.c.l.b16 %v1920
    %v2440 = vunpack.c.l.b16 %v1921
    %v2441 = vunpack.c.l.b16 %v1922
    %v2442 = vunpack.c.l.b16 %v1923
    %v2443 = vunpack.c.l.b16 %v1924
    %v2444 = vunpack.c.l.b16 %v1925
    %v2445 = vunpack.c.l.b16 %v1926
    %v2446 = vunpack.c.l.b16 %v1927
    %v2447 = vunpack.c.l.b16 %v1928
    %v2448 = vunpack.c.l.b16 %v1929
    %v2449 = vunpack.c.l.b16 %v1930
    %v2450 = vunpack.c.l.b16 %v1931
    %v2451 = vunpack.c.l.b16 %v1932
    %v2452 = vunpack.c.l.b16 %v1933
    %v2453 = vunpack.c.l.b16 %v1934
    %v2454 = vunpack.c.l.b16 %v1935
    %v2455 = vunpack.c.l.b16 %v1936
    %v2456 = vunpack.c.l.b16 %v1937
    %v2457 = vunpack.c.l.b16 %v1938
    %v2458 = vunpack.c.l.b16 %v1939
    %v2459 = vunpack.c.l.b16 %v1940
    %v2460 = vunpack.c.l.b16 %v1941
    %v2461 = vunpack.c.l.b16 %v1942
    %v2462 = vunpack.c.l.b16 %v1943
    %v2463 = vunpack.c.l.b16 %v1944
    %v2464 = vunpack.c.l.b16 %v1945
    %v2465 = vunpack.c.l.b16 %v1946
    %v2466 = vunpack.c.l.b16 %v1947
    %v2467 = vunpack.c.l.b16 %v1948
    %v2468 = vunpack.c.l.b16 %v1949
    %v2469 = vunpack.c.l.b16 %v1950
    %v2470 = vunpack.c.l.b16 %v1951
    %v2471 = vunpack.c.l.b16 %v1952
    %v2472 = vunpack.c.l.b16 %v1953
    %v2473 = vunpack.c.l.b16 %v1954
    %v2474 = vunpack.c.l.b16 %v1955
    %v2475 = vunpack.c.l.b16 %v1956
    %v2476 = vunpack.c.l.b16 %v1957
    %v2477 = vunpack.c.l.b16 %v1958
    %v2478 = vunpack.c.l.b16 %v1959
    %v2479 = vunpack.c.l.b16 %v1960
    %v2480 = vunpack.c.l.b16 %v1961
    %v2481 = vunpack.c.l.b16 %v1962
    %v2482 = vunpack.c.l.b16 %v1963
    %v2483 = vunpack.c.l.b16 %v1964
    %v2484 = vunpack.c.l.b16 %v1965
    %v2485 = vunpack.c.l.b16 %v1966
    %v2486 = vunpack.c.l.b16 %v1967
    %v2487 = vunpack.c.l.b16 %v1968
    %v2488 = vunpack.c.l.b16 %v1969
    %v2489 = vunpack.c.l.b16 %v1970
    %v2490 = vunpack.c.l.b16 %v1971
    %v2491 = vunpack.c.l.b16 %v1972
    %v2492 = vunpack.c.l.b16 %v1973
    %v2493 = vunpack.c.l.b16 %v1974
    %v2494 = vunpack.c.l.b16 %v1975
    %v2495 = vunpack.c.l.b16 %v1976
    %v2496 = vunpack.c.l.b16 %v1977
    %v2497 = vunpack.c.l.b16 %v1978
    %v2498 = vunpack.c.l.b16 %v1979
    %v2499 = vunpack.c.l.b16 %v1980
    %v2500 = vunpack.c.l.b16 %v1981
    %v2501 = vunpack.c.l.b16 %v1982
    %v2502 = vunpack.c.l.b16 %v1983
    %v2503 = vunpack.c.l.b16 %v1984
    %v2504 = vunpack.c.l.b16 %v1985
    %v2505 = vunpack.c.l.b16 %v1986
    %v2506 = vunpack.c.l.b16 %v1987
    %v2507 = vunpack.c.l.b16 %v1988
    %v2508 = vunpack.c.l.b16 %v1989
    %v2509 = vunpack.c.l.b16 %v1990
    %v2510 = vunpack.c.l.b16 %v1991
    %v2511 = vunpack.c.l.b16 %v1992
    %v2512 = vunpack.c.l.b16 %v1993
    %v2513 = vunpack.c.l.b16 %v1994
    %v2514 = vunpack.c.l.b16 %v1995
    %v2515 = vunpack.c.l.b16 %v1996
    %v2516 = vunpack.c.l.b16 %v1997
    %v2517 = vunpack.c.l.b16 %v1998
    %v2518 = vunpack.c.l.b16 %v1999
    %v2519 = vunpack.c.l.b16 %v2000
    %v2520 = vunpack.c.l.b16 %v2001
    %v2521 = vunpack.c.l.b16 %v2002
    %v2522 = vunpack.c.l.b16 %v2003
    %v2523 = vunpack.c.l.b16 %v2004
    %v2524 = vunpack.c.l.b16 %v2005
    %v2525 = vunpack.c.l.b16 %v2006
    %v2526 = vunpack.c.l.b16 %v2007
    %v2527 = vunpack.c.l.b16 %v2008
    %v2528 = vunpack.c.l.b16 %v2009
    %v2529 = vunpack.c.l.b16 %v2010
    %v2530 = vunpack.c.l.b16 %v2011
    %v2531 = vunpack.c.l.b16 %v2012
    %v2532 = vunpack.c.l.b16 %v2013
    %v2533 = vunpack.c.l.b16 %v2014
    %v2534 = vunpack.c.l.b16 %v2015
    %v2535 = vunpack.c.l.b16 %v2016
    %v2536 = vunpack.c.l.b16 %v2017
    %v2537 = vunpack.c.l.b16 %v2018
    %v2538 = vunpack.c.l.b16 %v2019
    %v2539 = vunpack.c.l.b16 %v2020
    %v2540 = vunpack.c.l.b16 %v2021
    %v2541 = vunpack.c.l.b16 %v2022
    %v2542 = vunpack.c.l.b16 %v2023
    %v2543 = vpack.c.b16 %v2288, %v2287
    %v2544 = vpack.c.b16 %v2290, %v2289
    %v2545 = vpack.c.b16 %v2292, %v2291
    %v2546 = vpack.c.b16 %v2294, %v2293
    %v2547 = vpack.c.b16 %v2296, %v2295
    %v2548 = vpack.c.b16 %v2298, %v2297
    %v2549 = vpack.c.b16 %v2300, %v2299
    %v2550 = vpack.c.b16 %v2302, %v2301
    %v2551 = vpack.c.b16 %v2304, %v2303
    %v2552 = vpack.c.b16 %v2306, %v2305
    %v2553 = vpack.c.b16 %v2308, %v2307
    %v2554 = vpack.c.b16 %v2310, %v2309
    %v2555 = vpack.c.b16 %v2312, %v2311
    %v2556 = vpack.c.b16 %v2314, %v2313
    %v2557 = vpack.c.b16 %v2316, %v2315
    %v2558 = vpack.c.b16 %v2318, %v2317
    %v2559 = vpack.c.b16 %v2320, %v2319
    %v2560 = vpack.c.b16 %v2322, %v2321
    %v2561 = vpack.c.b16 %v2324, %v2323
    %v2562 = vpack.c.b16 %v2326, %v2325
    %v2563 = vpack.c.b16 %v2328, %v2327
    %v2564 = vpack.c.b16 %v2330, %v2329
    %v2565 = vpack.c.b16 %v2332, %v2331
    %v2566 = vpack.c.b16 %v2334, %v2333
    %v2567 = vpack.c.b16 %v2336, %v2335
    %v2568 = vpack.c.b16 %v2338, %v2337
    %v2569 = vpack.c.b16 %v2340, %v2339
    %v2570 = vpack.c.b16 %v2342, %v2341
    %v2571 = vpack.c.b16 %v2344, %v2343
    %v2572 = vpack.c.b16 %v2346, %v2345
    %v2573 = vpack.c.b16 %v2348, %v2347
    %v2574 = vpack.c.b16 %v2350, %v2349
    %v2575 = vpack.c.b16 %v2352, %v2351
    %v2576 = vpack.c.b16 %v2354, %v2353
    %v2577 = vpack.c.b16 %v2356, %v2355
    %v2578 = vpack.c.b16 %v2358, %v2357
    %v2579 = vpack.c.b16 %v2360, %v2359
    %v2580 = vpack.c.b16 %v2362, %v2361
    %v2581 = vpack.c.b16 %v2364, %v2363
    %v2582 = vpack.c.b16 %v2366, %v2365
    %v2583 = vpack.c.b16 %v2368, %v2367
    %v2584 = vpack.c.b16 %v2370, %v2369
    %v2585 = vpack.c.b16 %v2372, %v2371
    %v2586 = vpack.c.b16 %v2374, %v2373
    %v2587 = vpack.c.b16 %v2376, %v2375
    %v2588 = vpack.c.b16 %v2378, %v2377
    %v2589 = vpack.c.b16 %v2380, %v2379
    %v2590 = vpack.c.b16 %v2382, %v2381
    %v2591 = vpack.c.b16 %v2384, %v2383
    %v2592 = vpack.c.b16 %v2386, %v2385
    %v2593 = vpack.c.b16 %v2388, %v2387
    %v2594 = vpack.c.b16 %v2390, %v2389
    %v2595 = vpack.c.b16 %v2392, %v2391
    %v2596 = vpack.c.b16 %v2394, %v2393
    %v2597 = vpack.c.b16 %v2396, %v2395
    %v2598 = vpack.c.b16 %v2398, %v2397
    %v2599 = vpack.c.b16 %v2400, %v2399
    %v2600 = vpack.c.b16 %v2402, %v2401
    %v2601 = vpack.c.b16 %v2404, %v2403
    %v2602 = vpack.c.b16 %v2406, %v2405
    %v2603 = vpack.c.b16 %v2408, %v2407
    %v2604 = vpack.c.b16 %v2410, %v2409
    %v2605 = vpack.c.b16 %v2412, %v2411
    %v2606 = vpack.c.b16 %v2414, %v2413
    %v2607 = vpack.c.b16 %v2416, %v2415
    %v2608 = vpack.c.b16 %v2418, %v2417
    %v2609 = vpack.c.b16 %v2420, %v2419
    %v2610 = vpack.c.b16 %v2422, %v2421
    %v2611 = vpack.c.b16 %v2424, %v2423
    %v2612 = vpack.c.b16 %v2426, %v2425
    %v2613 = vpack.c.b16 %v2428, %v2427
    %v2614 = vpack.c.b16 %v2430, %v2429
    %v2615 = vpack.c.b16 %v2432, %v2431
    %v2616 = vpack.c.b16 %v2434, %v2433
    %v2617 = vpack.c.b16 %v2436, %v2435
    %v2618 = vpack.c.b16 %v2438, %v2437
    %v2619 = vpack.c.b16 %v2440, %v2439
    %v2620 = vpack.c.b16 %v2442, %v2441
    %v2621 = vpack.c.b16 %v2444, %v2443
    %v2622 = vpack.c.b16 %v2446, %v2445
    %v2623 = vpack.c.b16 %v2448, %v2447
    %v2624 = vpack.c.b16 %v2450, %v2449
    %v2625 = vpack.c.b16 %v2452, %v2451
    %v2626 = vpack.c.b16 %v2454, %v2453
    %v2627 = vpack.c.b16 %v2456, %v2455
    %v2628 = vpack.c.b16 %v2458, %v2457
    %v2629 = vpack.c.b16 %v2460, %v2459
    %v2630 = vpack.c.b16 %v2462, %v2461
    %v2631 = vpack.c.b16 %v2464, %v2463
    %v2632 = vpack.c.b16 %v2466, %v2465
    %v2633 = vpack.c.b16 %v2468, %v2467
    %v2634 = vpack.c.b16 %v2470, %v2469
    %v2635 = vpack.c.b16 %v2472, %v2471
    %v2636 = vpack.c.b16 %v2474, %v2473
    %v2637 = vpack.c.b16 %v2476, %v2475
    %v2638 = vpack.c.b16 %v2478, %v2477
    %v2639 = vpack.c.b16 %v2480, %v2479
    %v2640 = vpack.c.b16 %v2482, %v2481
    %v2641 = vpack.c.b16 %v2484, %v2483
    %v2642 = vpack.c.b16 %v2486, %v2485
    %v2643 = vpack.c.b16 %v2488, %v2487
    %v2644 = vpack.c.b16 %v2490, %v2489
    %v2645 = vpack.c.b16 %v2492, %v2491
    %v2646 = vpack.c.b16 %v2494, %v2493
    %v2647 = vpack.c.b16 %v2496, %v2495
    %v2648 = vpack.c.b16 %v2498, %v2497
    %v2649 = vpack.c.b16 %v2500, %v2499
    %v2650 = vpack.c.b16 %v2502, %v2501
    %v2651 = vpack.c.b16 %v2504, %v2503
    %v2652 = vpack.c.b16 %v2506, %v2505
    %v2653 = vpack.c.b16 %v2508, %v2507
    %v2654 = vpack.c.b16 %v2510, %v2509
    %v2655 = vpack.c.b16 %v2512, %v2511
    %v2656 = vpack.c.b16 %v2514, %v2513
    %v2657 = vpack.c.b16 %v2516, %v2515
    %v2658 = vpack.c.b16 %v2518, %v2517
    %v2659 = vpack.c.b16 %v2520, %v2519
    %v2660 = vpack.c.b16 %v2522, %v2521
    %v2661 = vpack.c.b16 %v2524, %v2523
    %v2662 = vpack.c.b16 %v2526, %v2525
    %v2663 = vpack.c.b16 %v2528, %v2527
    %v2664 = vpack.c.b16 %v2530, %v2529
    %v2665 = vpack.c.b16 %v2532, %v2531
    %v2666 = vpack.c.b16 %v2534, %v2533
    %v2667 = vpack.c.b16 %v2536, %v2535
    %v2668 = vpack.c.b16 %v2538, %v2537
    %v2669 = vpack.c.b16 %v2540, %v2539
    %v2670 = vpack.c.b16 %v2542, %v2541
    %2799 = vmatprep.subr.bf16.mxu0 0
    %2800 = vmatpush1.bf16.msra.mxu0 %v2543
    %2801 = vmatprep.subr.bf16.mxu0 0
    %2802 = vmatpush1.bf16.msra.mxu0 %v2544
    %2803 = vmatprep.subr.bf16.mxu0 0
    %2804 = vmatpush1.bf16.msra.mxu0 %v2545
    %2805 = vmatprep.subr.bf16.mxu0 0
    %2806 = vmatpush1.bf16.msra.mxu0 %v2546
    %2807 = vmatprep.subr.bf16.mxu0 0
    %2808 = vmatpush1.bf16.msra.mxu0 %v2547
    %2809 = vmatprep.subr.bf16.mxu0 0
    %2810 = vmatpush1.bf16.msra.mxu0 %v2548
    %2811 = vmatprep.subr.bf16.mxu0 0
    %2812 = vmatpush1.bf16.msra.mxu0 %v2549
    %2813 = vmatprep.subr.bf16.mxu0 0
    %2814 = vmatpush1.bf16.msra.mxu0 %v2550
    %2815 = vmatprep.subr.bf16.mxu0 0
    %2816 = vmatpush1.bf16.msra.mxu0 %v2551
    %2817 = vmatprep.subr.bf16.mxu0 0
    %2818 = vmatpush1.bf16.msra.mxu0 %v2552
    %2819 = vmatprep.subr.bf16.mxu0 0
    %2820 = vmatpush1.bf16.msra.mxu0 %v2553
    %2821 = vmatprep.subr.bf16.mxu0 0
    %2822 = vmatpush1.bf16.msra.mxu0 %v2554
    %2823 = vmatprep.subr.bf16.mxu0 0
    %2824 = vmatpush1.bf16.msra.mxu0 %v2555
    %2825 = vmatprep.subr.bf16.mxu0 0
    %2826 = vmatpush1.bf16.msra.mxu0 %v2556
    %2827 = vmatprep.subr.bf16.mxu0 0
    %2828 = vmatpush1.bf16.msra.mxu0 %v2557
    %2829 = vmatprep.subr.bf16.mxu0 0
    %2830 = vmatpush1.bf16.msra.mxu0 %v2558
    %2831 = vmatprep.mubr.bf16.mxu0 %v1753
    %2832 = vmatmul.mubr.bf16.gmra.mrb[0].mxu0 %v1752
    %v2833 = vpop.f32.mrb[0].mxu0
    %v2834 = vadd.f32 %v2029, %v2833
    %v2835 = vpop.f32.mrb[0].mxu0
    %v2836 = vpop.f32.mrb[0].mxu0
    %v2837 = vadd.f32 %v2029, %v2836
    %v2838 = vpop.f32.mrb[0].mxu0
    %2839 = vdwg.mxu0
    %2840 = vmatprep.subr.bf16.mxu0 0
    %2841 = vmatpush1.bf16.msra.mxu0 %v2559
    %2842 = vmatprep.subr.bf16.mxu0 0
    %2843 = vmatpush1.bf16.msra.mxu0 %v2560
    %2844 = vmatprep.subr.bf16.mxu0 0
    %2845 = vmatpush1.bf16.msra.mxu0 %v2561
    %2846 = vmatprep.subr.bf16.mxu0 0
    %2847 = vmatpush1.bf16.msra.mxu0 %v2562
    %2848 = vmatprep.subr.bf16.mxu0 0
    %2849 = vmatpush1.bf16.msra.mxu0 %v2563
    %2850 = vmatprep.subr.bf16.mxu0 0
    %2851 = vmatpush1.bf16.msra.mxu0 %v2564
    %2852 = vmatprep.subr.bf16.mxu0 0
    %2853 = vmatpush1.bf16.msra.mxu0 %v2565
    %2854 = vmatprep.subr.bf16.mxu0 0
    %2855 = vmatpush1.bf16.msra.mxu0 %v2566
    %2856 = vmatprep.subr.bf16.mxu0 0
    %2857 = vmatpush1.bf16.msra.mxu0 %v2567
    %2858 = vmatprep.subr.bf16.mxu0 0
    %2859 = vmatpush1.bf16.msra.mxu0 %v2568
    %2860 = vmatprep.subr.bf16.mxu0 0
    %2861 = vmatpush1.bf16.msra.mxu0 %v2569
    %2862 = vmatprep.subr.bf16.mxu0 0
    %2863 = vmatpush1.bf16.msra.mxu0 %v2570
    %2864 = vmatprep.subr.bf16.mxu0 0
    %2865 = vmatpush1.bf16.msra.mxu0 %v2571
    %2866 = vmatprep.subr.bf16.mxu0 0
    %2867 = vmatpush1.bf16.msra.mxu0 %v2572
    %2868 = vmatprep.subr.bf16.mxu0 0
    %2869 = vmatpush1.bf16.msra.mxu0 %v2573
    %2870 = vmatprep.subr.bf16.mxu0 0
    %2871 = vmatpush1.bf16.msra.mxu0 %v2574
    %2872 = vmatprep.mubr.bf16.mxu0 %v1755
    %2873 = vmatmul.mubr.bf16.gmra.mrb[0].mxu0 %v1754
    %v2874 = vpop.f32.mrb[0].mxu0
    %v2875 = vadd.f32 %v2834, %v2874
    %v2876 = vpop.f32.mrb[0].mxu0
    %v2877 = vpop.f32.mrb[0].mxu0
    %v2878 = vadd.f32 %v2837, %v2877
    %v2879 = vpop.f32.mrb[0].mxu0
    %2880 = vdwg.mxu0
    %2881 = vmatprep.subr.bf16.mxu0 0
    %2882 = vmatpush1.bf16.msra.mxu0 %v2575
    %2883 = vmatprep.subr.bf16.mxu0 0
    %2884 = vmatpush1.bf16.msra.mxu0 %v2576
    %2885 = vmatprep.subr.bf16.mxu0 0
    %2886 = vmatpush1.bf16.msra.mxu0 %v2577
    %2887 = vmatprep.subr.bf16.mxu0 0
    %2888 = vmatpush1.bf16.msra.mxu0 %v2578
    %2889 = vmatprep.subr.bf16.mxu0 0
    %2890 = vmatpush1.bf16.msra.mxu0 %v2579
    %2891 = vmatprep.subr.bf16.mxu0 0
    %2892 = vmatpush1.bf16.msra.mxu0 %v2580
    %2893 = vmatprep.subr.bf16.mxu0 0
    %2894 = vmatpush1.bf16.msra.mxu0 %v2581
    %2895 = vmatprep.subr.bf16.mxu0 0
    %2896 = vmatpush1.bf16.msra.mxu0 %v2582
    %2897 = vmatprep.subr.bf16.mxu0 0
    %2898 = vmatpush1.bf16.msra.mxu0 %v2583
    %2899 = vmatprep.subr.bf16.mxu0 0
    %2900 = vmatpush1.bf16.msra.mxu0 %v2584
    %2901 = vmatprep.subr.bf16.mxu0 0
    %2902 = vmatpush1.bf16.msra.mxu0 %v2585
    %2903 = vmatprep.subr.bf16.mxu0 0
    %2904 = vmatpush1.bf16.msra.mxu0 %v2586
    %2905 = vmatprep.subr.bf16.mxu0 0
    %2906 = vmatpush1.bf16.msra.mxu0 %v2587
    %2907 = vmatprep.subr.bf16.mxu0 0
    %2908 = vmatpush1.bf16.msra.mxu0 %v2588
    %2909 = vmatprep.subr.bf16.mxu0 0
    %2910 = vmatpush1.bf16.msra.mxu0 %v2589
    %2911 = vmatprep.subr.bf16.mxu0 0
    %2912 = vmatpush1.bf16.msra.mxu0 %v2590
    %2913 = vmatprep.mubr.bf16.mxu0 %v1757
    %2914 = vmatmul.mubr.bf16.gmra.mrb[0].mxu0 %v1756
    %v2915 = vpop.f32.mrb[0].mxu0
    %v2916 = vadd.f32 %v2875, %v2915
    %v2917 = vpop.f32.mrb[0].mxu0
    %v2918 = vpop.f32.mrb[0].mxu0
    %v2919 = vadd.f32 %v2878, %v2918
    %v2920 = vpop.f32.mrb[0].mxu0
    %2921 = vdwg.mxu0
    %2922 = vmatprep.subr.bf16.mxu0 0
    %2923 = vmatpush1.bf16.msra.mxu0 %v2591
    %2924 = vmatprep.subr.bf16.mxu0 0
    %2925 = vmatpush1.bf16.msra.mxu0 %v2592
    %2926 = vmatprep.subr.bf16.mxu0 0
    %2927 = vmatpush1.bf16.msra.mxu0 %v2593
    %2928 = vmatprep.subr.bf16.mxu0 0
    %2929 = vmatpush1.bf16.msra.mxu0 %v2594
    %2930 = vmatprep.subr.bf16.mxu0 0
    %2931 = vmatpush1.bf16.msra.mxu0 %v2595
    %2932 = vmatprep.subr.bf16.mxu0 0
    %2933 = vmatpush1.bf16.msra.mxu0 %v2596
    %2934 = vmatprep.subr.bf16.mxu0 0
    %2935 = vmatpush1.bf16.msra.mxu0 %v2597
    %2936 = vmatprep.subr.bf16.mxu0 0
    %2937 = vmatpush1.bf16.msra.mxu0 %v2598
    %2938 = vmatprep.subr.bf16.mxu0 0
    %2939 = vmatpush1.bf16.msra.mxu0 %v2599
    %2940 = vmatprep.subr.bf16.mxu0 0
    %2941 = vmatpush1.bf16.msra.mxu0 %v2600
    %2942 = vmatprep.subr.bf16.mxu0 0
    %2943 = vmatpush1.bf16.msra.mxu0 %v2601
    %2944 = vmatprep.subr.bf16.mxu0 0
    %2945 = vmatpush1.bf16.msra.mxu0 %v2602
    %2946 = vmatprep.subr.bf16.mxu0 0
    %2947 = vmatpush1.bf16.msra.mxu0 %v2603
    %2948 = vmatprep.subr.bf16.mxu0 0
    %2949 = vmatpush1.bf16.msra.mxu0 %v2604
    %2950 = vmatprep.subr.bf16.mxu0 0
    %2951 = vmatpush1.bf16.msra.mxu0 %v2605
    %2952 = vmatprep.subr.bf16.mxu0 0
    %2953 = vmatpush1.bf16.msra.mxu0 %v2606
    %2954 = vmatprep.mubr.bf16.mxu0 %v1759
    %2955 = vmatmul.mubr.bf16.gmra.mrb[0].mxu0 %v1758
    %v2956 = vpop.f32.mrb[0].mxu0
    %v2957 = vadd.f32 %v2916, %v2956
    %v2958 = vpop.f32.mrb[0].mxu0
    %v2959 = vpop.f32.mrb[0].mxu0
    %v2960 = vadd.f32 %v2919, %v2959
    %v2961 = vpop.f32.mrb[0].mxu0
    %2962 = vdwg.mxu0
    %2963 = vmatprep.subr.bf16.mxu0 0
    %2964 = vmatpush1.bf16.msra.mxu0 %v2607
    %2965 = vmatprep.subr.bf16.mxu0 0
    %2966 = vmatpush1.bf16.msra.mxu0 %v2608
    %2967 = vmatprep.subr.bf16.mxu0 0
    %2968 = vmatpush1.bf16.msra.mxu0 %v2609
    %2969 = vmatprep.subr.bf16.mxu0 0
    %2970 = vmatpush1.bf16.msra.mxu0 %v2610
    %2971 = vmatprep.subr.bf16.mxu0 0
    %2972 = vmatpush1.bf16.msra.mxu0 %v2611
    %2973 = vmatprep.subr.bf16.mxu0 0
    %2974 = vmatpush1.bf16.msra.mxu0 %v2612
    %2975 = vmatprep.subr.bf16.mxu0 0
    %2976 = vmatpush1.bf16.msra.mxu0 %v2613
    %2977 = vmatprep.subr.bf16.mxu0 0
    %2978 = vmatpush1.bf16.msra.mxu0 %v2614
    %2979 = vmatprep.subr.bf16.mxu0 0
    %2980 = vmatpush1.bf16.msra.mxu0 %v2615
    %2981 = vmatprep.subr.bf16.mxu0 0
    %2982 = vmatpush1.bf16.msra.mxu0 %v2616
    %2983 = vmatprep.subr.bf16.mxu0 0
    %2984 = vmatpush1.bf16.msra.mxu0 %v2617
    %2985 = vmatprep.subr.bf16.mxu0 0
    %2986 = vmatpush1.bf16.msra.mxu0 %v2618
    %2987 = vmatprep.subr.bf16.mxu0 0
    %2988 = vmatpush1.bf16.msra.mxu0 %v2619
    %2989 = vmatprep.subr.bf16.mxu0 0
    %2990 = vmatpush1.bf16.msra.mxu0 %v2620
    %2991 = vmatprep.subr.bf16.mxu0 0
    %2992 = vmatpush1.bf16.msra.mxu0 %v2621
    %2993 = vmatprep.subr.bf16.mxu0 0
    %2994 = vmatpush1.bf16.msra.mxu0 %v2622
    %2995 = vmatprep.mubr.bf16.mxu0 %v1761
    %2996 = vmatmul.mubr.bf16.gmra.mrb[0].mxu0 %v1760
    %v2997 = vpop.f32.mrb[0].mxu0
    %v2998 = vadd.f32 %v2957, %v2997
    %v2999 = vpop.f32.mrb[0].mxu0
    %v3000 = vpop.f32.mrb[0].mxu0
    %v3001 = vadd.f32 %v2960, %v3000
    %v3002 = vpop.f32.mrb[0].mxu0
    %3003 = vdwg.mxu0
    %3004 = vmatprep.subr.bf16.mxu0 0
    %3005 = vmatpush1.bf16.msra.mxu0 %v2623
    %3006 = vmatprep.subr.bf16.mxu0 0
    %3007 = vmatpush1.bf16.msra.mxu0 %v2624
    %3008 = vmatprep.subr.bf16.mxu0 0
    %3009 = vmatpush1.bf16.msra.mxu0 %v2625
    %3010 = vmatprep.subr.bf16.mxu0 0
    %3011 = vmatpush1.bf16.msra.mxu0 %v2626
    %3012 = vmatprep.subr.bf16.mxu0 0
    %3013 = vmatpush1.bf16.msra.mxu0 %v2627
    %3014 = vmatprep.subr.bf16.mxu0 0
    %3015 = vmatpush1.bf16.msra.mxu0 %v2628
    %3016 = vmatprep.subr.bf16.mxu0 0
    %3017 = vmatpush1.bf16.msra.mxu0 %v2629
    %3018 = vmatprep.subr.bf16.mxu0 0
    %3019 = vmatpush1.bf16.msra.mxu0 %v2630
    %3020 = vmatprep.subr.bf16.mxu0 0
    %3021 = vmatpush1.bf16.msra.mxu0 %v2631
    %3022 = vmatprep.subr.bf16.mxu0 0
    %3023 = vmatpush1.bf16.msra.mxu0 %v2632
    %3024 = vmatprep.subr.bf16.mxu0 0
    %3025 = vmatpush1.bf16.msra.mxu0 %v2633
    %3026 = vmatprep.subr.bf16.mxu0 0
    %3027 = vmatpush1.bf16.msra.mxu0 %v2634
    %3028 = vmatprep.subr.bf16.mxu0 0
    %3029 = vmatpush1.bf16.msra.mxu0 %v2635
    %3030 = vmatprep.subr.bf16.mxu0 0
    %3031 = vmatpush1.bf16.msra.mxu0 %v2636
    %3032 = vmatprep.subr.bf16.mxu0 0
    %3033 = vmatpush1.bf16.msra.mxu0 %v2637
    %3034 = vmatprep.subr.bf16.mxu0 0
    %3035 = vmatpush1.bf16.msra.mxu0 %v2638
    %3036 = vmatprep.mubr.bf16.mxu0 %v1763
    %3037 = vmatmul.mubr.bf16.gmra.mrb[0].mxu0 %v1762
    %v3038 = vpop.f32.mrb[0].mxu0
    %v3039 = vadd.f32 %v2998, %v3038
    %v3040 = vpop.f32.mrb[0].mxu0
    %v3041 = vpop.f32.mrb[0].mxu0
    %v3042 = vadd.f32 %v3001, %v3041
    %v3043 = vpop.f32.mrb[0].mxu0
    %3044 = vdwg.mxu0
    %3045 = vmatprep.subr.bf16.mxu0 0
    %3046 = vmatpush1.bf16.msra.mxu0 %v2639
    %3047 = vmatprep.subr.bf16.mxu0 0
    %3048 = vmatpush1.bf16.msra.mxu0 %v2640
    %3049 = vmatprep.subr.bf16.mxu0 0
    %3050 = vmatpush1.bf16.msra.mxu0 %v2641
    %3051 = vmatprep.subr.bf16.mxu0 0
    %3052 = vmatpush1.bf16.msra.mxu0 %v2642
    %3053 = vmatprep.subr.bf16.mxu0 0
    %3054 = vmatpush1.bf16.msra.mxu0 %v2643
    %3055 = vmatprep.subr.bf16.mxu0 0
    %3056 = vmatpush1.bf16.msra.mxu0 %v2644
    %3057 = vmatprep.subr.bf16.mxu0 0
    %3058 = vmatpush1.bf16.msra.mxu0 %v2645
    %3059 = vmatprep.subr.bf16.mxu0 0
    %3060 = vmatpush1.bf16.msra.mxu0 %v2646
    %3061 = vmatprep.subr.bf16.mxu0 0
    %3062 = vmatpush1.bf16.msra.mxu0 %v2647
    %3063 = vmatprep.subr.bf16.mxu0 0
    %3064 = vmatpush1.bf16.msra.mxu0 %v2648
    %3065 = vmatprep.subr.bf16.mxu0 0
    %3066 = vmatpush1.bf16.msra.mxu0 %v2649
    %3067 = vmatprep.subr.bf16.mxu0 0
    %3068 = vmatpush1.bf16.msra.mxu0 %v2650
    %3069 = vmatprep.subr.bf16.mxu0 0
    %3070 = vmatpush1.bf16.msra.mxu0 %v2651
    %3071 = vmatprep.subr.bf16.mxu0 0
    %3072 = vmatpush1.bf16.msra.mxu0 %v2652
    %3073 = vmatprep.subr.bf16.mxu0 0
    %3074 = vmatpush1.bf16.msra.mxu0 %v2653
    %3075 = vmatprep.subr.bf16.mxu0 0
    %3076 = vmatpush1.bf16.msra.mxu0 %v2654
    %3077 = vmatprep.mubr.bf16.mxu0 %v1765
    %3078 = vmatmul.mubr.bf16.gmra.mrb[0].mxu0 %v1764
    %v3079 = vpop.f32.mrb[0].mxu0
    %v3080 = vadd.f32 %v3039, %v3079
    %v3081 = vpop.f32.mrb[0].mxu0
    %v3082 = vpop.f32.mrb[0].mxu0
    %v3083 = vadd.f32 %v3042, %v3082
    %v3084 = vpop.f32.mrb[0].mxu0
    %3085 = vdwg.mxu0
    %3086 = vmatprep.subr.bf16.mxu0 0
    %3087 = vmatpush1.bf16.msra.mxu0 %v2655
    %3088 = vmatprep.subr.bf16.mxu0 0
    %3089 = vmatpush1.bf16.msra.mxu0 %v2656
    %3090 = vmatprep.subr.bf16.mxu0 0
    %3091 = vmatpush1.bf16.msra.mxu0 %v2657
    %3092 = vmatprep.subr.bf16.mxu0 0
    %3093 = vmatpush1.bf16.msra.mxu0 %v2658
    %3094 = vmatprep.subr.bf16.mxu0 0
    %3095 = vmatpush1.bf16.msra.mxu0 %v2659
    %3096 = vmatprep.subr.bf16.mxu0 0
    %3097 = vmatpush1.bf16.msra.mxu0 %v2660
    %3098 = vmatprep.subr.bf16.mxu0 0
    %3099 = vmatpush1.bf16.msra.mxu0 %v2661
    %3100 = vmatprep.subr.bf16.mxu0 0
    %3101 = vmatpush1.bf16.msra.mxu0 %v2662
    %3102 = vmatprep.subr.bf16.mxu0 0
    %3103 = vmatpush1.bf16.msra.mxu0 %v2663
    %3104 = vmatprep.subr.bf16.mxu0 0
    %3105 = vmatpush1.bf16.msra.mxu0 %v2664
    %3106 = vmatprep.subr.bf16.mxu0 0
    %3107 = vmatpush1.bf16.msra.mxu0 %v2665
    %3108 = vmatprep.subr.bf16.mxu0 0
    %3109 = vmatpush1.bf16.msra.mxu0 %v2666
    %3110 = vmatprep.subr.bf16.mxu0 0
    %3111 = vmatpush1.bf16.msra.mxu0 %v2667
    %3112 = vmatprep.subr.bf16.mxu0 0
    %3113 = vmatpush1.bf16.msra.mxu0 %v2668
    %3114 = vmatprep.subr.bf16.mxu0 0
    %3115 = vmatpush1.bf16.msra.mxu0 %v2669
    %3116 = vmatprep.subr.bf16.mxu0 0
    %3117 = vmatpush1.bf16.msra.mxu0 %v2670
    %3118 = vmatprep.mubr.bf16.mxu0 %v1767
    %3119 = vmatmul.mubr.bf16.gmra.mrb[0].mxu0 %v1766
    %v3120 = vpop.f32.mrb[0].mxu0
    %v3121 = vadd.f32 %v3080, %v3120
    %v3122 = vpop.f32.mrb[0].mxu0
    %v3123 = vpop.f32.mrb[0].mxu0
    %v3124 = vadd.f32 %v3083, %v3123
    %v3125 = vpop.f32.mrb[0].mxu0
    %3126 = vdwg.mxu0
    %v3127 = vadd.f32 %v1094, %v3121
    %v3128 = vadd.f32 %v1095, %v3124
    %v3129 = vld [vmem:[%s13] sm:$0x1]
    %v3130 = vld [vmem:[%s14] sm:$0x1]
    %v3131 = vsel %vm89, %v3127, 0.0
    %3132 = vadd.xlane.f32.xlu0 %v3131
    %v3133 = vpop.xlane.xlu0 %3132
    %v3134 = vsel %vm89, %v3128, 0.0
    %3135 = vadd.xlane.f32.xlu0 %v3134
    %v3136 = vpop.xlane.xlu0 %3135
    %v3137 = vmul.f32 %v3133, %v1059
    %v3138 = vmul.f32 %v3136, %v1059
    %v3139 = vsub.f32 %v3127, %v3137
    %v3140 = vsub.f32 %v3128, %v3138
    %v3141 = vmul.f32 %v3139, %v3139
    %v3142 = vmul.f32 %v3140, %v3140
    %v3143 = vsel %vm89, %v3141, 0.0
    %3144 = vadd.xlane.f32.xlu0 %v3143
    %v3145 = vpop.xlane.xlu0 %3144
    %v3146 = vsel %vm89, %v3142, 0.0
    %3147 = vadd.xlane.f32.xlu0 %v3146
    %v3148 = vpop.xlane.xlu0 %3147
    %v3149 = vmul.f32 %v3145, %v1059
    %v3150 = vmul.f32 %v3148, %v1059
    %v3151 = vadd.f32 %v3149, 1e-05
    %v3152 = vadd.f32 %v3150, 1e-05
    %v3153 = vrsqrt.pop %v3151
    %v3154 = vrsqrt.pop %v3152
    %v3155 = vmul.f32 %v3139, %v3153
    %v3156 = vmul.f32 %v3140, %v3154
    %v3158 = vlaneseq
    %v3159 = vshrl.u32 %v3158, 7
    %v3160 = vsub.s32 0, %v3159
    %v3161 = vrot.slane %v3129, %v3160
    %v3163 = vmul.f32 %v3155, %v3161
    %v3164 = vmul.f32 %v3156, %v3161
    %v3166 = vlaneseq
    %v3167 = vshrl.u32 %v3166, 7
    %v3168 = vsub.s32 0, %v3167
    %v3169 = vrot.slane %v3130, %v3168
    %v3171 = vadd.f32 %v3163, %v3169
    %v3172 = vadd.f32 %v3164, %v3169
    %v3173 = vpack.c.bf16 %v3172, %v3171
    %s3174 = scalar_lea.vmem %s3, 16
    %v3175 = vld [vmem:[%s3174] sm:$0xf]
    %v3176 = vld [vmem:[%s3174 + $0x4] sm:$0xf]
    %v3177 = vld [vmem:[%s3174 + $0x8] sm:$0xf]
    %v3178 = vld [vmem:[%s3174 + $0xc] sm:$0xf]
    %s3179 = scalar_lea.vmem %s4, 1
    %v3180 = vld [vmem:[%s3179] sm:$0x1]
    %v3182 = vlaneseq
    %v3183 = vshrl.u32 %v3182, 7
    %v3184 = vsub.s32 0, %v3183
    %v3185 = vrot.slane %v3180, %v3184
    %v3191 = vunpack.c.l.b16 %v3175
    %v3192 = vunpack.c.l.b16 %v3176
    %v3193 = vunpack.c.l.b16 %v3177
    %v3194 = vunpack.c.l.b16 %v3178
    %v3195 = vpack.c.b16 %v3192, %v3191
    %v3196 = vpack.c.b16 %v3194, %v3193
    %v3200 = vsel %vm89, %v3173, 0
    %3202 = vmatprep.subr.bf16.mxu0 0
    %3203 = vmatpush1.bf16.msra.mxu0 %v3195
    %3204 = vmatprep.subr.bf16.mxu0 0
    %3205 = vmatpush1.bf16.msra.mxu0 %v3196
    %3206 = vmatprep.subr.bf16.mxu0 0
    %3207 = vmatpush1.bf16.msra.mxu0 0
    %3208 = vmatprep.subr.bf16.mxu0 0
    %3209 = vmatpush1.bf16.msra.mxu0 0
    %3210 = vmatprep.subr.bf16.mxu0 0
    %3211 = vmatpush1.bf16.msra.mxu0 0
    %3212 = vmatprep.subr.bf16.mxu0 0
    %3213 = vmatpush1.bf16.msra.mxu0 0
    %3214 = vmatprep.subr.bf16.mxu0 0
    %3215 = vmatpush1.bf16.msra.mxu0 0
    %3216 = vmatprep.subr.bf16.mxu0 0
    %3217 = vmatpush1.bf16.msra.mxu0 0
    %3218 = vmatprep.subr.bf16.mxu0 0
    %3219 = vmatpush1.bf16.msra.mxu0 0
    %3220 = vmatprep.subr.bf16.mxu0 0
    %3221 = vmatpush1.bf16.msra.mxu0 0
    %3222 = vmatprep.subr.bf16.mxu0 0
    %3223 = vmatpush1.bf16.msra.mxu0 0
    %3224 = vmatprep.subr.bf16.mxu0 0
    %3225 = vmatpush1.bf16.msra.mxu0 0
    %3226 = vmatprep.subr.bf16.mxu0 0
    %3227 = vmatpush1.bf16.msra.mxu0 0
    %3228 = vmatprep.subr.bf16.mxu0 0
    %3229 = vmatpush1.bf16.msra.mxu0 0
    %3230 = vmatprep.subr.bf16.mxu0 0
    %3231 = vmatpush1.bf16.msra.mxu0 0
    %3232 = vmatprep.subr.bf16.mxu0 0
    %3233 = vmatpush1.bf16.msra.mxu0 0
    %3234 = vmatprep.mubr.bf16.mxu0 0
    %3235 = vmatmul.mubr.bf16.gmra.mrb[0].mxu0 %v3200
    %v3236 = vpop.f32.mrb[0].mxu0
    %v3237 = vadd.f32 %v3185, %v3236
    %v3238 = vpop.f32.mrb[0].mxu0
    %v3239 = vpop.f32.mrb[0].mxu0
    %v3240 = vadd.f32 %v3185, %v3239
    %v3241 = vpop.f32.mrb[0].mxu0
    %3242 = vdwg.mxu0
    %3245 = vrot.lane.b32.xlu0 %v3237, 96
    %v3246 = vpop.permute.xlu0 %3245
    %3247 = vrot.lane.b32.xlu0 %v3240, 96
    %v3248 = vpop.permute.xlu0 %3247
    %v3249 = vsel %vm140, %v3237, 0
    %v3251 = vsel %vm140, %v3240, 0
    %v3253 = vsel %vm140, %v3246, 0
    %v3255 = vsel %vm140, %v3248, 0
    %3257 = vmatprep.subr.mxu0 0.0
    %3258 = vmatpush1.xpose.msra.mxu0 %v3253
    %3259 = vmatprep.subr.mxu0 0.0
    %3260 = vmatpush1.xpose.msra.mxu0 %v3255
    %3261 = vmatprep.subr.mxu0 0.0
    %3262 = vmatpush1.xpose.msra.mxu0 0.0
    %3263 = vmatprep.subr.mxu0 0.0
    %3264 = vmatpush1.xpose.msra.mxu0 0.0
    %3265 = vmatprep.subr.mxu0 0.0
    %3266 = vmatpush1.xpose.msra.mxu0 0.0
    %3267 = vmatprep.subr.mxu0 0.0
    %3268 = vmatpush1.xpose.msra.mxu0 0.0
    %3269 = vmatprep.subr.mxu0 0.0
    %3270 = vmatpush1.xpose.msra.mxu0 0.0
    %3271 = vmatprep.subr.mxu0 0.0
    %3272 = vmatpush1.xpose.msra.mxu0 0.0
    %3273 = vmatprep.subr.mxu0 0.0
    %3274 = vmatpush1.xpose.msra.mxu0 0.0
    %3275 = vmatprep.subr.mxu0 0.0
    %3276 = vmatpush1.xpose.msra.mxu0 0.0
    %3277 = vmatprep.subr.mxu0 0.0
    %3278 = vmatpush1.xpose.msra.mxu0 0.0
    %3279 = vmatprep.subr.mxu0 0.0
    %3280 = vmatpush1.xpose.msra.mxu0 0.0
    %3281 = vmatprep.subr.mxu0 0.0
    %3282 = vmatpush1.xpose.msra.mxu0 0.0
    %3283 = vmatprep.subr.mxu0 0.0
    %3284 = vmatpush1.xpose.msra.mxu0 0.0
    %3285 = vmatprep.subr.mxu0 0.0
    %3286 = vmatpush1.xpose.msra.mxu0 0.0
    %3287 = vmatprep.subr.mxu0 0.0
    %3288 = vmatpush1.xpose.msra.mxu0 0.0
    %3289 = vmatprep.subr.mxu0 0.0
    %3290 = vmatpush1.xpose.msra.mxu0 0.0
    %3291 = vmatprep.subr.mxu0 0.0
    %3292 = vmatpush1.xpose.msra.mxu0 0.0
    %3293 = vmatprep.subr.mxu0 0.0
    %3294 = vmatpush1.xpose.msra.mxu0 0.0
    %3295 = vmatprep.subr.mxu0 0.0
    %3296 = vmatpush1.xpose.msra.mxu0 0.0
    %3297 = vmatprep.subr.mxu0 0.0
    %3298 = vmatpush1.xpose.msra.mxu0 0.0
    %3299 = vmatprep.subr.mxu0 0.0
    %3300 = vmatpush1.xpose.msra.mxu0 0.0
    %3301 = vmatprep.subr.mxu0 0.0
    %3302 = vmatpush1.xpose.msra.mxu0 0.0
    %3303 = vmatprep.subr.mxu0 0.0
    %3304 = vmatpush1.xpose.msra.mxu0 0.0
    %3305 = vmatprep.subr.mxu0 0.0
    %3306 = vmatpush1.xpose.msra.mxu0 0.0
    %3307 = vmatprep.subr.mxu0 0.0
    %3308 = vmatpush1.xpose.msra.mxu0 0.0
    %3309 = vmatprep.subr.mxu0 0.0
    %3310 = vmatpush1.xpose.msra.mxu0 0.0
    %3311 = vmatprep.subr.mxu0 0.0
    %3312 = vmatpush1.xpose.msra.mxu0 0.0
    %3313 = vmatprep.subr.mxu0 0.0
    %3314 = vmatpush1.xpose.msra.mxu0 0.0
    %3315 = vmatprep.subr.mxu0 0.0
    %3316 = vmatpush1.xpose.msra.mxu0 0.0
    %3317 = vmatprep.subr.mxu0 0.0
    %3318 = vmatpush1.xpose.msra.mxu0 0.0
    %3319 = vmatprep.subr.mxu0 0.0
    %3320 = vmatpush1.xpose.msra.mxu0 0.0
    %3321 = vmatprep.mubr.f32.mxu0 0.0
    %3322 = vmatmul.mubr.f32.gmra.mrb[0].mxu0 %v3249
    %v3323 = vpop.f32.mrb[0].mxu0
    %v3324 = vadd.f32 0.0, %v3323
    %v3325 = vpop.f32.mrb[0].mxu0
    %3326 = vmatprep.mubr.f32.mxu0 0.0
    %3327 = vmatmul.mubr.f32.gmra.mrb[0].mxu0 %v3251
    %v3328 = vpop.f32.mrb[0].mxu0
    %v3329 = vadd.f32 0.0, %v3328
    %v3330 = vpop.f32.mrb[0].mxu0
    %3331 = vdwg.mxu0
    %v3332 = vmul.f32 %v3324, 0.35355338
    %v3333 = vmul.f32 %v3329, 0.35355338
    %v3334 = vadd.f32 %v3332, %v63
    %v3335 = vadd.f32 %v3333, %v64
    %v3336 = vsel %vm228, %v3334, -inf
    %3337 = vmax.xlane.f32.xlu0 %v3336
    %v3338 = vpop.xlane.xlu0 %3337
    %v3339 = vsel %vm228, %v3335, -inf
    %3340 = vmax.xlane.f32.xlu0 %v3339
    %v3341 = vpop.xlane.xlu0 %3340
    %v3342 = vsub.f32 %v3334, %v3338
    %v3343 = vsub.f32 %v3335, %v3341
    %v3344 = vmul.f32 %v3342, 1.442695
    %v3345 = vpow.pop %v3344
    %v3346 = vmul.f32 %v3343, 1.442695
    %v3347 = vpow.pop %v3346
    %v3348 = vsel %vm228, %v3345, 0.0
    %3349 = vadd.xlane.f32.xlu0 %v3348
    %v3350 = vpop.xlane.xlu0 %3349
    %v3351 = vsel %vm228, %v3347, 0.0
    %3352 = vadd.xlane.f32.xlu0 %v3351
    %v3353 = vpop.xlane.xlu0 %3352
    %v3354 = vrcp.pop %v3350
    %v3355 = vmul.f32 %v3345, %v3354
    %v3356 = vrcp.pop %v3353
    %v3357 = vmul.f32 %v3347, %v3356
    %3358 = vrot.lane.b32.xlu0 %v3237, 64
    %v3359 = vpop.permute.xlu0 %3358
    %3360 = vrot.lane.b32.xlu0 %v3240, 64
    %v3361 = vpop.permute.xlu0 %3360
    %v3365 = vsel %vm228, %v3355, 0
    %v3368 = vsel %vm228, %v3357, 0
    %3370 = vmatprep.subr.mxu0 0.0
    %3371 = vmatpush1.msra.mxu0 %v3359
    %3372 = vmatprep.subr.mxu0 0.0
    %3373 = vmatpush1.msra.mxu0 %v3361
    %3374 = vmatprep.subr.mxu0 0.0
    %3375 = vmatpush1.msra.mxu0 0.0
    %3376 = vmatprep.subr.mxu0 0.0
    %3377 = vmatpush1.msra.mxu0 0.0
    %3378 = vmatprep.subr.mxu0 0.0
    %3379 = vmatpush1.msra.mxu0 0.0
    %3380 = vmatprep.subr.mxu0 0.0
    %3381 = vmatpush1.msra.mxu0 0.0
    %3382 = vmatprep.subr.mxu0 0.0
    %3383 = vmatpush1.msra.mxu0 0.0
    %3384 = vmatprep.subr.mxu0 0.0
    %3385 = vmatpush1.msra.mxu0 0.0
    %3386 = vmatprep.subr.mxu0 0.0
    %3387 = vmatpush1.msra.mxu0 0.0
    %3388 = vmatprep.subr.mxu0 0.0
    %3389 = vmatpush1.msra.mxu0 0.0
    %3390 = vmatprep.subr.mxu0 0.0
    %3391 = vmatpush1.msra.mxu0 0.0
    %3392 = vmatprep.subr.mxu0 0.0
    %3393 = vmatpush1.msra.mxu0 0.0
    %3394 = vmatprep.subr.mxu0 0.0
    %3395 = vmatpush1.msra.mxu0 0.0
    %3396 = vmatprep.subr.mxu0 0.0
    %3397 = vmatpush1.msra.mxu0 0.0
    %3398 = vmatprep.subr.mxu0 0.0
    %3399 = vmatpush1.msra.mxu0 0.0
    %3400 = vmatprep.subr.mxu0 0.0
    %3401 = vmatpush1.msra.mxu0 0.0
    %3402 = vmatprep.subr.mxu0 0.0
    %3403 = vmatpush1.msra.mxu0 0.0
    %3404 = vmatprep.subr.mxu0 0.0
    %3405 = vmatpush1.msra.mxu0 0.0
    %3406 = vmatprep.subr.mxu0 0.0
    %3407 = vmatpush1.msra.mxu0 0.0
    %3408 = vmatprep.subr.mxu0 0.0
    %3409 = vmatpush1.msra.mxu0 0.0
    %3410 = vmatprep.subr.mxu0 0.0
    %3411 = vmatpush1.msra.mxu0 0.0
    %3412 = vmatprep.subr.mxu0 0.0
    %3413 = vmatpush1.msra.mxu0 0.0
    %3414 = vmatprep.subr.mxu0 0.0
    %3415 = vmatpush1.msra.mxu0 0.0
    %3416 = vmatprep.subr.mxu0 0.0
    %3417 = vmatpush1.msra.mxu0 0.0
    %3418 = vmatprep.subr.mxu0 0.0
    %3419 = vmatpush1.msra.mxu0 0.0
    %3420 = vmatprep.subr.mxu0 0.0
    %3421 = vmatpush1.msra.mxu0 0.0
    %3422 = vmatprep.subr.mxu0 0.0
    %3423 = vmatpush1.msra.mxu0 0.0
    %3424 = vmatprep.subr.mxu0 0.0
    %3425 = vmatpush1.msra.mxu0 0.0
    %3426 = vmatprep.subr.mxu0 0.0
    %3427 = vmatpush1.msra.mxu0 0.0
    %3428 = vmatprep.subr.mxu0 0.0
    %3429 = vmatpush1.msra.mxu0 0.0
    %3430 = vmatprep.subr.mxu0 0.0
    %3431 = vmatpush1.msra.mxu0 0.0
    %3432 = vmatprep.subr.mxu0 0.0
    %3433 = vmatpush1.msra.mxu0 0.0
    %3434 = vmatprep.mubr.f32.mxu0 0.0
    %3435 = vmatmul.mubr.f32.gmra.mrb[0].mxu0 %v3365
    %v3436 = vpop.f32.mrb[0].mxu0
    %v3437 = vadd.f32 0.0, %v3436
    %v3438 = vpop.f32.mrb[0].mxu0
    %3439 = vmatprep.mubr.f32.mxu0 0.0
    %3440 = vmatmul.mubr.f32.gmra.mrb[0].mxu0 %v3368
    %v3441 = vpop.f32.mrb[0].mxu0
    %v3442 = vadd.f32 0.0, %v3441
    %v3443 = vpop.f32.mrb[0].mxu0
    %3444 = vdwg.mxu0
    %3445 = vrot.lane.b32.xlu0 %v3237, 120
    %v3446 = vpop.permute.xlu0 %3445
    %3447 = vrot.lane.b32.xlu0 %v3240, 120
    %v3448 = vpop.permute.xlu0 %3447
    %3449 = vrot.lane.b32.xlu0 %v3237, 88
    %v3450 = vpop.permute.xlu0 %3449
    %3451 = vrot.lane.b32.xlu0 %v3240, 88
    %v3452 = vpop.permute.xlu0 %3451
    %v3453 = vsel %vm140, %v3446, 0
    %v3455 = vsel %vm140, %v3448, 0
    %v3457 = vsel %vm140, %v3450, 0
    %v3459 = vsel %vm140, %v3452, 0
    %3461 = vmatprep.subr.mxu0 0.0
    %3462 = vmatpush1.xpose.msra.mxu0 %v3457
    %3463 = vmatprep.subr.mxu0 0.0
    %3464 = vmatpush1.xpose.msra.mxu0 %v3459
    %3465 = vmatprep.subr.mxu0 0.0
    %3466 = vmatpush1.xpose.msra.mxu0 0.0
    %3467 = vmatprep.subr.mxu0 0.0
    %3468 = vmatpush1.xpose.msra.mxu0 0.0
    %3469 = vmatprep.subr.mxu0 0.0
    %3470 = vmatpush1.xpose.msra.mxu0 0.0
    %3471 = vmatprep.subr.mxu0 0.0
    %3472 = vmatpush1.xpose.msra.mxu0 0.0
    %3473 = vmatprep.subr.mxu0 0.0
    %3474 = vmatpush1.xpose.msra.mxu0 0.0
    %3475 = vmatprep.subr.mxu0 0.0
    %3476 = vmatpush1.xpose.msra.mxu0 0.0
    %3477 = vmatprep.subr.mxu0 0.0
    %3478 = vmatpush1.xpose.msra.mxu0 0.0
    %3479 = vmatprep.subr.mxu0 0.0
    %3480 = vmatpush1.xpose.msra.mxu0 0.0
    %3481 = vmatprep.subr.mxu0 0.0
    %3482 = vmatpush1.xpose.msra.mxu0 0.0
    %3483 = vmatprep.subr.mxu0 0.0
    %3484 = vmatpush1.xpose.msra.mxu0 0.0
    %3485 = vmatprep.subr.mxu0 0.0
    %3486 = vmatpush1.xpose.msra.mxu0 0.0
    %3487 = vmatprep.subr.mxu0 0.0
    %3488 = vmatpush1.xpose.msra.mxu0 0.0
    %3489 = vmatprep.subr.mxu0 0.0
    %3490 = vmatpush1.xpose.msra.mxu0 0.0
    %3491 = vmatprep.subr.mxu0 0.0
    %3492 = vmatpush1.xpose.msra.mxu0 0.0
    %3493 = vmatprep.subr.mxu0 0.0
    %3494 = vmatpush1.xpose.msra.mxu0 0.0
    %3495 = vmatprep.subr.mxu0 0.0
    %3496 = vmatpush1.xpose.msra.mxu0 0.0
    %3497 = vmatprep.subr.mxu0 0.0
    %3498 = vmatpush1.xpose.msra.mxu0 0.0
    %3499 = vmatprep.subr.mxu0 0.0
    %3500 = vmatpush1.xpose.msra.mxu0 0.0
    %3501 = vmatprep.subr.mxu0 0.0
    %3502 = vmatpush1.xpose.msra.mxu0 0.0
    %3503 = vmatprep.subr.mxu0 0.0
    %3504 = vmatpush1.xpose.msra.mxu0 0.0
    %3505 = vmatprep.subr.mxu0 0.0
    %3506 = vmatpush1.xpose.msra.mxu0 0.0
    %3507 = vmatprep.subr.mxu0 0.0
    %3508 = vmatpush1.xpose.msra.mxu0 0.0
    %3509 = vmatprep.subr.mxu0 0.0
    %3510 = vmatpush1.xpose.msra.mxu0 0.0
    %3511 = vmatprep.subr.mxu0 0.0
    %3512 = vmatpush1.xpose.msra.mxu0 0.0
    %3513 = vmatprep.subr.mxu0 0.0
    %3514 = vmatpush1.xpose.msra.mxu0 0.0
    %3515 = vmatprep.subr.mxu0 0.0
    %3516 = vmatpush1.xpose.msra.mxu0 0.0
    %3517 = vmatprep.subr.mxu0 0.0
    %3518 = vmatpush1.xpose.msra.mxu0 0.0
    %3519 = vmatprep.subr.mxu0 0.0
    %3520 = vmatpush1.xpose.msra.mxu0 0.0
    %3521 = vmatprep.subr.mxu0 0.0
    %3522 = vmatpush1.xpose.msra.mxu0 0.0
    %3523 = vmatprep.subr.mxu0 0.0
    %3524 = vmatpush1.xpose.msra.mxu0 0.0
    %3525 = vmatprep.mubr.f32.mxu0 0.0
    %3526 = vmatmul.mubr.f32.gmra.mrb[0].mxu0 %v3453
    %v3527 = vpop.f32.mrb[0].mxu0
    %v3528 = vadd.f32 0.0, %v3527
    %v3529 = vpop.f32.mrb[0].mxu0
    %3530 = vmatprep.mubr.f32.mxu0 0.0
    %3531 = vmatmul.mubr.f32.gmra.mrb[0].mxu0 %v3455
    %v3532 = vpop.f32.mrb[0].mxu0
    %v3533 = vadd.f32 0.0, %v3532
    %v3534 = vpop.f32.mrb[0].mxu0
    %3535 = vdwg.mxu0
    %v3536 = vmul.f32 %v3528, 0.35355338
    %v3537 = vmul.f32 %v3533, 0.35355338
    %v3538 = vadd.f32 %v3536, %v63
    %v3539 = vadd.f32 %v3537, %v64
    %v3540 = vsel %vm228, %v3538, -inf
    %3541 = vmax.xlane.f32.xlu0 %v3540
    %v3542 = vpop.xlane.xlu0 %3541
    %v3543 = vsel %vm228, %v3539, -inf
    %3544 = vmax.xlane.f32.xlu0 %v3543
    %v3545 = vpop.xlane.xlu0 %3544
    %v3546 = vsub.f32 %v3538, %v3542
    %v3547 = vsub.f32 %v3539, %v3545
    %v3548 = vmul.f32 %v3546, 1.442695
    %v3549 = vpow.pop %v3548
    %v3550 = vmul.f32 %v3547, 1.442695
    %v3551 = vpow.pop %v3550
    %v3552 = vsel %vm228, %v3549, 0.0
    %3553 = vadd.xlane.f32.xlu0 %v3552
    %v3554 = vpop.xlane.xlu0 %3553
    %v3555 = vsel %vm228, %v3551, 0.0
    %3556 = vadd.xlane.f32.xlu0 %v3555
    %v3557 = vpop.xlane.xlu0 %3556
    %v3558 = vrcp.pop %v3554
    %v3559 = vmul.f32 %v3549, %v3558
    %v3560 = vrcp.pop %v3557
    %v3561 = vmul.f32 %v3551, %v3560
    %3562 = vrot.lane.b32.xlu0 %v3237, 56
    %v3563 = vpop.permute.xlu0 %3562
    %3564 = vrot.lane.b32.xlu0 %v3240, 56
    %v3565 = vpop.permute.xlu0 %3564
    %v3569 = vsel %vm228, %v3559, 0
    %v3572 = vsel %vm228, %v3561, 0
    %3574 = vmatprep.subr.mxu0 0.0
    %3575 = vmatpush1.msra.mxu0 %v3563
    %3576 = vmatprep.subr.mxu0 0.0
    %3577 = vmatpush1.msra.mxu0 %v3565
    %3578 = vmatprep.subr.mxu0 0.0
    %3579 = vmatpush1.msra.mxu0 0.0
    %3580 = vmatprep.subr.mxu0 0.0
    %3581 = vmatpush1.msra.mxu0 0.0
    %3582 = vmatprep.subr.mxu0 0.0
    %3583 = vmatpush1.msra.mxu0 0.0
    %3584 = vmatprep.subr.mxu0 0.0
    %3585 = vmatpush1.msra.mxu0 0.0
    %3586 = vmatprep.subr.mxu0 0.0
    %3587 = vmatpush1.msra.mxu0 0.0
    %3588 = vmatprep.subr.mxu0 0.0
    %3589 = vmatpush1.msra.mxu0 0.0
    %3590 = vmatprep.subr.mxu0 0.0
    %3591 = vmatpush1.msra.mxu0 0.0
    %3592 = vmatprep.subr.mxu0 0.0
    %3593 = vmatpush1.msra.mxu0 0.0
    %3594 = vmatprep.subr.mxu0 0.0
    %3595 = vmatpush1.msra.mxu0 0.0
    %3596 = vmatprep.subr.mxu0 0.0
    %3597 = vmatpush1.msra.mxu0 0.0
    %3598 = vmatprep.subr.mxu0 0.0
    %3599 = vmatpush1.msra.mxu0 0.0
    %3600 = vmatprep.subr.mxu0 0.0
    %3601 = vmatpush1.msra.mxu0 0.0
    %3602 = vmatprep.subr.mxu0 0.0
    %3603 = vmatpush1.msra.mxu0 0.0
    %3604 = vmatprep.subr.mxu0 0.0
    %3605 = vmatpush1.msra.mxu0 0.0
    %3606 = vmatprep.subr.mxu0 0.0
    %3607 = vmatpush1.msra.mxu0 0.0
    %3608 = vmatprep.subr.mxu0 0.0
    %3609 = vmatpush1.msra.mxu0 0.0
    %3610 = vmatprep.subr.mxu0 0.0
    %3611 = vmatpush1.msra.mxu0 0.0
    %3612 = vmatprep.subr.mxu0 0.0
    %3613 = vmatpush1.msra.mxu0 0.0
    %3614 = vmatprep.subr.mxu0 0.0
    %3615 = vmatpush1.msra.mxu0 0.0
    %3616 = vmatprep.subr.mxu0 0.0
    %3617 = vmatpush1.msra.mxu0 0.0
    %3618 = vmatprep.subr.mxu0 0.0
    %3619 = vmatpush1.msra.mxu0 0.0
    %3620 = vmatprep.subr.mxu0 0.0
    %3621 = vmatpush1.msra.mxu0 0.0
    %3622 = vmatprep.subr.mxu0 0.0
    %3623 = vmatpush1.msra.mxu0 0.0
    %3624 = vmatprep.subr.mxu0 0.0
    %3625 = vmatpush1.msra.mxu0 0.0
    %3626 = vmatprep.subr.mxu0 0.0
    %3627 = vmatpush1.msra.mxu0 0.0
    %3628 = vmatprep.subr.mxu0 0.0
    %3629 = vmatpush1.msra.mxu0 0.0
    %3630 = vmatprep.subr.mxu0 0.0
    %3631 = vmatpush1.msra.mxu0 0.0
    %3632 = vmatprep.subr.mxu0 0.0
    %3633 = vmatpush1.msra.mxu0 0.0
    %3634 = vmatprep.subr.mxu0 0.0
    %3635 = vmatpush1.msra.mxu0 0.0
    %3636 = vmatprep.subr.mxu0 0.0
    %3637 = vmatpush1.msra.mxu0 0.0
    %3638 = vmatprep.mubr.f32.mxu0 0.0
    %3639 = vmatmul.mubr.f32.gmra.mrb[0].mxu0 %v3569
    %v3640 = vpop.f32.mrb[0].mxu0
    %v3641 = vadd.f32 0.0, %v3640
    %v3642 = vpop.f32.mrb[0].mxu0
    %3643 = vmatprep.mubr.f32.mxu0 0.0
    %3644 = vmatmul.mubr.f32.gmra.mrb[0].mxu0 %v3572
    %v3645 = vpop.f32.mrb[0].mxu0
    %v3646 = vadd.f32 0.0, %v3645
    %v3647 = vpop.f32.mrb[0].mxu0
    %3648 = vdwg.mxu0
    %3649 = vrot.lane.b32.xlu0 %v3237, 112
    %v3650 = vpop.permute.xlu0 %3649
    %3651 = vrot.lane.b32.xlu0 %v3240, 112
    %v3652 = vpop.permute.xlu0 %3651
    %3653 = vrot.lane.b32.xlu0 %v3237, 80
    %v3654 = vpop.permute.xlu0 %3653
    %3655 = vrot.lane.b32.xlu0 %v3240, 80
    %v3656 = vpop.permute.xlu0 %3655
    %v3657 = vsel %vm140, %v3650, 0
    %v3659 = vsel %vm140, %v3652, 0
    %v3661 = vsel %vm140, %v3654, 0
    %v3663 = vsel %vm140, %v3656, 0
    %3665 = vmatprep.subr.mxu0 0.0
    %3666 = vmatpush1.xpose.msra.mxu0 %v3661
    %3667 = vmatprep.subr.mxu0 0.0
    %3668 = vmatpush1.xpose.msra.mxu0 %v3663
    %3669 = vmatprep.subr.mxu0 0.0
    %3670 = vmatpush1.xpose.msra.mxu0 0.0
    %3671 = vmatprep.subr.mxu0 0.0
    %3672 = vmatpush1.xpose.msra.mxu0 0.0
    %3673 = vmatprep.subr.mxu0 0.0
    %3674 = vmatpush1.xpose.msra.mxu0 0.0
    %3675 = vmatprep.subr.mxu0 0.0
    %3676 = vmatpush1.xpose.msra.mxu0 0.0
    %3677 = vmatprep.subr.mxu0 0.0
    %3678 = vmatpush1.xpose.msra.mxu0 0.0
    %3679 = vmatprep.subr.mxu0 0.0
    %3680 = vmatpush1.xpose.msra.mxu0 0.0
    %3681 = vmatprep.subr.mxu0 0.0
    %3682 = vmatpush1.xpose.msra.mxu0 0.0
    %3683 = vmatprep.subr.mxu0 0.0
    %3684 = vmatpush1.xpose.msra.mxu0 0.0
    %3685 = vmatprep.subr.mxu0 0.0
    %3686 = vmatpush1.xpose.msra.mxu0 0.0
    %3687 = vmatprep.subr.mxu0 0.0
    %3688 = vmatpush1.xpose.msra.mxu0 0.0
    %3689 = vmatprep.subr.mxu0 0.0
    %3690 = vmatpush1.xpose.msra.mxu0 0.0
    %3691 = vmatprep.subr.mxu0 0.0
    %3692 = vmatpush1.xpose.msra.mxu0 0.0
    %3693 = vmatprep.subr.mxu0 0.0
    %3694 = vmatpush1.xpose.msra.mxu0 0.0
    %3695 = vmatprep.subr.mxu0 0.0
    %3696 = vmatpush1.xpose.msra.mxu0 0.0
    %3697 = vmatprep.subr.mxu0 0.0
    %3698 = vmatpush1.xpose.msra.mxu0 0.0
    %3699 = vmatprep.subr.mxu0 0.0
    %3700 = vmatpush1.xpose.msra.mxu0 0.0
    %3701 = vmatprep.subr.mxu0 0.0
    %3702 = vmatpush1.xpose.msra.mxu0 0.0
    %3703 = vmatprep.subr.mxu0 0.0
    %3704 = vmatpush1.xpose.msra.mxu0 0.0
    %3705 = vmatprep.subr.mxu0 0.0
    %3706 = vmatpush1.xpose.msra.mxu0 0.0
    %3707 = vmatprep.subr.mxu0 0.0
    %3708 = vmatpush1.xpose.msra.mxu0 0.0
    %3709 = vmatprep.subr.mxu0 0.0
    %3710 = vmatpush1.xpose.msra.mxu0 0.0
    %3711 = vmatprep.subr.mxu0 0.0
    %3712 = vmatpush1.xpose.msra.mxu0 0.0
    %3713 = vmatprep.subr.mxu0 0.0
    %3714 = vmatpush1.xpose.msra.mxu0 0.0
    %3715 = vmatprep.subr.mxu0 0.0
    %3716 = vmatpush1.xpose.msra.mxu0 0.0
    %3717 = vmatprep.subr.mxu0 0.0
    %3718 = vmatpush1.xpose.msra.mxu0 0.0
    %3719 = vmatprep.subr.mxu0 0.0
    %3720 = vmatpush1.xpose.msra.mxu0 0.0
    %3721 = vmatprep.subr.mxu0 0.0
    %3722 = vmatpush1.xpose.msra.mxu0 0.0
    %3723 = vmatprep.subr.mxu0 0.0
    %3724 = vmatpush1.xpose.msra.mxu0 0.0
    %3725 = vmatprep.subr.mxu0 0.0
    %3726 = vmatpush1.xpose.msra.mxu0 0.0
    %3727 = vmatprep.subr.mxu0 0.0
    %3728 = vmatpush1.xpose.msra.mxu0 0.0
    %3729 = vmatprep.mubr.f32.mxu0 0.0
    %3730 = vmatmul.mubr.f32.gmra.mrb[0].mxu0 %v3657
    %v3731 = vpop.f32.mrb[0].mxu0
    %v3732 = vadd.f32 0.0, %v3731
    %v3733 = vpop.f32.mrb[0].mxu0
    %3734 = vmatprep.mubr.f32.mxu0 0.0
    %3735 = vmatmul.mubr.f32.gmra.mrb[0].mxu0 %v3659
    %v3736 = vpop.f32.mrb[0].mxu0
    %v3737 = vadd.f32 0.0, %v3736
    %v3738 = vpop.f32.mrb[0].mxu0
    %3739 = vdwg.mxu0
    %v3740 = vmul.f32 %v3732, 0.35355338
    %v3741 = vmul.f32 %v3737, 0.35355338
    %v3742 = vadd.f32 %v3740, %v63
    %v3743 = vadd.f32 %v3741, %v64
    %v3744 = vsel %vm228, %v3742, -inf
    %3745 = vmax.xlane.f32.xlu0 %v3744
    %v3746 = vpop.xlane.xlu0 %3745
    %v3747 = vsel %vm228, %v3743, -inf
    %3748 = vmax.xlane.f32.xlu0 %v3747
    %v3749 = vpop.xlane.xlu0 %3748
    %v3750 = vsub.f32 %v3742, %v3746
    %v3751 = vsub.f32 %v3743, %v3749
    %v3752 = vmul.f32 %v3750, 1.442695
    %v3753 = vpow.pop %v3752
    %v3754 = vmul.f32 %v3751, 1.442695
    %v3755 = vpow.pop %v3754
    %v3756 = vsel %vm228, %v3753, 0.0
    %3757 = vadd.xlane.f32.xlu0 %v3756
    %v3758 = vpop.xlane.xlu0 %3757
    %v3759 = vsel %vm228, %v3755, 0.0
    %3760 = vadd.xlane.f32.xlu0 %v3759
    %v3761 = vpop.xlane.xlu0 %3760
    %v3762 = vrcp.pop %v3758
    %v3763 = vmul.f32 %v3753, %v3762
    %v3764 = vrcp.pop %v3761
    %v3765 = vmul.f32 %v3755, %v3764
    %3766 = vrot.lane.b32.xlu0 %v3237, 48
    %v3767 = vpop.permute.xlu0 %3766
    %3768 = vrot.lane.b32.xlu0 %v3240, 48
    %v3769 = vpop.permute.xlu0 %3768
    %v3773 = vsel %vm228, %v3763, 0
    %v3776 = vsel %vm228, %v3765, 0
    %3778 = vmatprep.subr.mxu0 0.0
    %3779 = vmatpush1.msra.mxu0 %v3767
    %3780 = vmatprep.subr.mxu0 0.0
    %3781 = vmatpush1.msra.mxu0 %v3769
    %3782 = vmatprep.subr.mxu0 0.0
    %3783 = vmatpush1.msra.mxu0 0.0
    %3784 = vmatprep.subr.mxu0 0.0
    %3785 = vmatpush1.msra.mxu0 0.0
    %3786 = vmatprep.subr.mxu0 0.0
    %3787 = vmatpush1.msra.mxu0 0.0
    %3788 = vmatprep.subr.mxu0 0.0
    %3789 = vmatpush1.msra.mxu0 0.0
    %3790 = vmatprep.subr.mxu0 0.0
    %3791 = vmatpush1.msra.mxu0 0.0
    %3792 = vmatprep.subr.mxu0 0.0
    %3793 = vmatpush1.msra.mxu0 0.0
    %3794 = vmatprep.subr.mxu0 0.0
    %3795 = vmatpush1.msra.mxu0 0.0
    %3796 = vmatprep.subr.mxu0 0.0
    %3797 = vmatpush1.msra.mxu0 0.0
    %3798 = vmatprep.subr.mxu0 0.0
    %3799 = vmatpush1.msra.mxu0 0.0
    %3800 = vmatprep.subr.mxu0 0.0
    %3801 = vmatpush1.msra.mxu0 0.0
    %3802 = vmatprep.subr.mxu0 0.0
    %3803 = vmatpush1.msra.mxu0 0.0
    %3804 = vmatprep.subr.mxu0 0.0
    %3805 = vmatpush1.msra.mxu0 0.0
    %3806 = vmatprep.subr.mxu0 0.0
    %3807 = vmatpush1.msra.mxu0 0.0
    %3808 = vmatprep.subr.mxu0 0.0
    %3809 = vmatpush1.msra.mxu0 0.0
    %3810 = vmatprep.subr.mxu0 0.0
    %3811 = vmatpush1.msra.mxu0 0.0
    %3812 = vmatprep.subr.mxu0 0.0
    %3813 = vmatpush1.msra.mxu0 0.0
    %3814 = vmatprep.subr.mxu0 0.0
    %3815 = vmatpush1.msra.mxu0 0.0
    %3816 = vmatprep.subr.mxu0 0.0
    %3817 = vmatpush1.msra.mxu0 0.0
    %3818 = vmatprep.subr.mxu0 0.0
    %3819 = vmatpush1.msra.mxu0 0.0
    %3820 = vmatprep.subr.mxu0 0.0
    %3821 = vmatpush1.msra.mxu0 0.0
    %3822 = vmatprep.subr.mxu0 0.0
    %3823 = vmatpush1.msra.mxu0 0.0
    %3824 = vmatprep.subr.mxu0 0.0
    %3825 = vmatpush1.msra.mxu0 0.0
    %3826 = vmatprep.subr.mxu0 0.0
    %3827 = vmatpush1.msra.mxu0 0.0
    %3828 = vmatprep.subr.mxu0 0.0
    %3829 = vmatpush1.msra.mxu0 0.0
    %3830 = vmatprep.subr.mxu0 0.0
    %3831 = vmatpush1.msra.mxu0 0.0
    %3832 = vmatprep.subr.mxu0 0.0
    %3833 = vmatpush1.msra.mxu0 0.0
    %3834 = vmatprep.subr.mxu0 0.0
    %3835 = vmatpush1.msra.mxu0 0.0
    %3836 = vmatprep.subr.mxu0 0.0
    %3837 = vmatpush1.msra.mxu0 0.0
    %3838 = vmatprep.subr.mxu0 0.0
    %3839 = vmatpush1.msra.mxu0 0.0
    %3840 = vmatprep.subr.mxu0 0.0
    %3841 = vmatpush1.msra.mxu0 0.0
    %3842 = vmatprep.mubr.f32.mxu0 0.0
    %3843 = vmatmul.mubr.f32.gmra.mrb[0].mxu0 %v3773
    %v3844 = vpop.f32.mrb[0].mxu0
    %v3845 = vadd.f32 0.0, %v3844
    %v3846 = vpop.f32.mrb[0].mxu0
    %3847 = vmatprep.mubr.f32.mxu0 0.0
    %3848 = vmatmul.mubr.f32.gmra.mrb[0].mxu0 %v3776
    %v3849 = vpop.f32.mrb[0].mxu0
    %v3850 = vadd.f32 0.0, %v3849
    %v3851 = vpop.f32.mrb[0].mxu0
    %3852 = vdwg.mxu0
    %3853 = vrot.lane.b32.xlu0 %v3237, 104
    %v3854 = vpop.permute.xlu0 %3853
    %3855 = vrot.lane.b32.xlu0 %v3240, 104
    %v3856 = vpop.permute.xlu0 %3855
    %3857 = vrot.lane.b32.xlu0 %v3237, 72
    %v3858 = vpop.permute.xlu0 %3857
    %3859 = vrot.lane.b32.xlu0 %v3240, 72
    %v3860 = vpop.permute.xlu0 %3859
    %v3861 = vsel %vm140, %v3854, 0
    %v3863 = vsel %vm140, %v3856, 0
    %v3865 = vsel %vm140, %v3858, 0
    %v3867 = vsel %vm140, %v3860, 0
    %3869 = vmatprep.subr.mxu0 0.0
    %3870 = vmatpush1.xpose.msra.mxu0 %v3865
    %3871 = vmatprep.subr.mxu0 0.0
    %3872 = vmatpush1.xpose.msra.mxu0 %v3867
    %3873 = vmatprep.subr.mxu0 0.0
    %3874 = vmatpush1.xpose.msra.mxu0 0.0
    %3875 = vmatprep.subr.mxu0 0.0
    %3876 = vmatpush1.xpose.msra.mxu0 0.0
    %3877 = vmatprep.subr.mxu0 0.0
    %3878 = vmatpush1.xpose.msra.mxu0 0.0
    %3879 = vmatprep.subr.mxu0 0.0
    %3880 = vmatpush1.xpose.msra.mxu0 0.0
    %3881 = vmatprep.subr.mxu0 0.0
    %3882 = vmatpush1.xpose.msra.mxu0 0.0
    %3883 = vmatprep.subr.mxu0 0.0
    %3884 = vmatpush1.xpose.msra.mxu0 0.0
    %3885 = vmatprep.subr.mxu0 0.0
    %3886 = vmatpush1.xpose.msra.mxu0 0.0
    %3887 = vmatprep.subr.mxu0 0.0
    %3888 = vmatpush1.xpose.msra.mxu0 0.0
    %3889 = vmatprep.subr.mxu0 0.0
    %3890 = vmatpush1.xpose.msra.mxu0 0.0
    %3891 = vmatprep.subr.mxu0 0.0
    %3892 = vmatpush1.xpose.msra.mxu0 0.0
    %3893 = vmatprep.subr.mxu0 0.0
    %3894 = vmatpush1.xpose.msra.mxu0 0.0
    %3895 = vmatprep.subr.mxu0 0.0
    %3896 = vmatpush1.xpose.msra.mxu0 0.0
    %3897 = vmatprep.subr.mxu0 0.0
    %3898 = vmatpush1.xpose.msra.mxu0 0.0
    %3899 = vmatprep.subr.mxu0 0.0
    %3900 = vmatpush1.xpose.msra.mxu0 0.0
    %3901 = vmatprep.subr.mxu0 0.0
    %3902 = vmatpush1.xpose.msra.mxu0 0.0
    %3903 = vmatprep.subr.mxu0 0.0
    %3904 = vmatpush1.xpose.msra.mxu0 0.0
    %3905 = vmatprep.subr.mxu0 0.0
    %3906 = vmatpush1.xpose.msra.mxu0 0.0
    %3907 = vmatprep.subr.mxu0 0.0
    %3908 = vmatpush1.xpose.msra.mxu0 0.0
    %3909 = vmatprep.subr.mxu0 0.0
    %3910 = vmatpush1.xpose.msra.mxu0 0.0
    %3911 = vmatprep.subr.mxu0 0.0
    %3912 = vmatpush1.xpose.msra.mxu0 0.0
    %3913 = vmatprep.subr.mxu0 0.0
    %3914 = vmatpush1.xpose.msra.mxu0 0.0
    %3915 = vmatprep.subr.mxu0 0.0
    %3916 = vmatpush1.xpose.msra.mxu0 0.0
    %3917 = vmatprep.subr.mxu0 0.0
    %3918 = vmatpush1.xpose.msra.mxu0 0.0
    %3919 = vmatprep.subr.mxu0 0.0
    %3920 = vmatpush1.xpose.msra.mxu0 0.0
    %3921 = vmatprep.subr.mxu0 0.0
    %3922 = vmatpush1.xpose.msra.mxu0 0.0
    %3923 = vmatprep.subr.mxu0 0.0
    %3924 = vmatpush1.xpose.msra.mxu0 0.0
    %3925 = vmatprep.subr.mxu0 0.0
    %3926 = vmatpush1.xpose.msra.mxu0 0.0
    %3927 = vmatprep.subr.mxu0 0.0
    %3928 = vmatpush1.xpose.msra.mxu0 0.0
    %3929 = vmatprep.subr.mxu0 0.0
    %3930 = vmatpush1.xpose.msra.mxu0 0.0
    %3931 = vmatprep.subr.mxu0 0.0
    %3932 = vmatpush1.xpose.msra.mxu0 0.0
    %3933 = vmatprep.mubr.f32.mxu0 0.0
    %3934 = vmatmul.mubr.f32.gmra.mrb[0].mxu0 %v3861
    %v3935 = vpop.f32.mrb[0].mxu0
    %v3936 = vadd.f32 0.0, %v3935
    %v3937 = vpop.f32.mrb[0].mxu0
    %3938 = vmatprep.mubr.f32.mxu0 0.0
    %3939 = vmatmul.mubr.f32.gmra.mrb[0].mxu0 %v3863
    %v3940 = vpop.f32.mrb[0].mxu0
    %v3941 = vadd.f32 0.0, %v3940
    %v3942 = vpop.f32.mrb[0].mxu0
    %3943 = vdwg.mxu0
    %v3944 = vmul.f32 %v3936, 0.35355338
    %v3945 = vmul.f32 %v3941, 0.35355338
    %v3946 = vadd.f32 %v3944, %v63
    %v3947 = vadd.f32 %v3945, %v64
    %v3948 = vsel %vm228, %v3946, -inf
    %3949 = vmax.xlane.f32.xlu0 %v3948
    %v3950 = vpop.xlane.xlu0 %3949
    %v3951 = vsel %vm228, %v3947, -inf
    %3952 = vmax.xlane.f32.xlu0 %v3951
    %v3953 = vpop.xlane.xlu0 %3952
    %v3954 = vsub.f32 %v3946, %v3950
    %v3955 = vsub.f32 %v3947, %v3953
    %v3956 = vmul.f32 %v3954, 1.442695
    %v3957 = vpow.pop %v3956
    %v3958 = vmul.f32 %v3955, 1.442695
    %v3959 = vpow.pop %v3958
    %v3960 = vsel %vm228, %v3957, 0.0
    %3961 = vadd.xlane.f32.xlu0 %v3960
    %v3962 = vpop.xlane.xlu0 %3961
    %v3963 = vsel %vm228, %v3959, 0.0
    %3964 = vadd.xlane.f32.xlu0 %v3963
    %v3965 = vpop.xlane.xlu0 %3964
    %v3966 = vrcp.pop %v3962
    %v3967 = vmul.f32 %v3957, %v3966
    %v3968 = vrcp.pop %v3965
    %v3969 = vmul.f32 %v3959, %v3968
    %3970 = vrot.lane.b32.xlu0 %v3237, 40
    %v3971 = vpop.permute.xlu0 %3970
    %3972 = vrot.lane.b32.xlu0 %v3240, 40
    %v3973 = vpop.permute.xlu0 %3972
    %v3977 = vsel %vm228, %v3967, 0
    %v3980 = vsel %vm228, %v3969, 0
    %3982 = vmatprep.subr.mxu0 0.0
    %3983 = vmatpush1.msra.mxu0 %v3971
    %3984 = vmatprep.subr.mxu0 0.0
    %3985 = vmatpush1.msra.mxu0 %v3973
    %3986 = vmatprep.subr.mxu0 0.0
    %3987 = vmatpush1.msra.mxu0 0.0
    %3988 = vmatprep.subr.mxu0 0.0
    %3989 = vmatpush1.msra.mxu0 0.0
    %3990 = vmatprep.subr.mxu0 0.0
    %3991 = vmatpush1.msra.mxu0 0.0
    %3992 = vmatprep.subr.mxu0 0.0
    %3993 = vmatpush1.msra.mxu0 0.0
    %3994 = vmatprep.subr.mxu0 0.0
    %3995 = vmatpush1.msra.mxu0 0.0
    %3996 = vmatprep.subr.mxu0 0.0
    %3997 = vmatpush1.msra.mxu0 0.0
    %3998 = vmatprep.subr.mxu0 0.0
    %3999 = vmatpush1.msra.mxu0 0.0
    %4000 = vmatprep.subr.mxu0 0.0
    %4001 = vmatpush1.msra.mxu0 0.0
    %4002 = vmatprep.subr.mxu0 0.0
    %4003 = vmatpush1.msra.mxu0 0.0
    %4004 = vmatprep.subr.mxu0 0.0
    %4005 = vmatpush1.msra.mxu0 0.0
    %4006 = vmatprep.subr.mxu0 0.0
    %4007 = vmatpush1.msra.mxu0 0.0
    %4008 = vmatprep.subr.mxu0 0.0
    %4009 = vmatpush1.msra.mxu0 0.0
    %4010 = vmatprep.subr.mxu0 0.0
    %4011 = vmatpush1.msra.mxu0 0.0
    %4012 = vmatprep.subr.mxu0 0.0
    %4013 = vmatpush1.msra.mxu0 0.0
    %4014 = vmatprep.subr.mxu0 0.0
    %4015 = vmatpush1.msra.mxu0 0.0
    %4016 = vmatprep.subr.mxu0 0.0
    %4017 = vmatpush1.msra.mxu0 0.0
    %4018 = vmatprep.subr.mxu0 0.0
    %4019 = vmatpush1.msra.mxu0 0.0
    %4020 = vmatprep.subr.mxu0 0.0
    %4021 = vmatpush1.msra.mxu0 0.0
    %4022 = vmatprep.subr.mxu0 0.0
    %4023 = vmatpush1.msra.mxu0 0.0
    %4024 = vmatprep.subr.mxu0 0.0
    %4025 = vmatpush1.msra.mxu0 0.0
    %4026 = vmatprep.subr.mxu0 0.0
    %4027 = vmatpush1.msra.mxu0 0.0
    %4028 = vmatprep.subr.mxu0 0.0
    %4029 = vmatpush1.msra.mxu0 0.0
    %4030 = vmatprep.subr.mxu0 0.0
    %4031 = vmatpush1.msra.mxu0 0.0
    %4032 = vmatprep.subr.mxu0 0.0
    %4033 = vmatpush1.msra.mxu0 0.0
    %4034 = vmatprep.subr.mxu0 0.0
    %4035 = vmatpush1.msra.mxu0 0.0
    %4036 = vmatprep.subr.mxu0 0.0
    %4037 = vmatpush1.msra.mxu0 0.0
    %4038 = vmatprep.subr.mxu0 0.0
    %4039 = vmatpush1.msra.mxu0 0.0
    %4040 = vmatprep.subr.mxu0 0.0
    %4041 = vmatpush1.msra.mxu0 0.0
    %4042 = vmatprep.subr.mxu0 0.0
    %4043 = vmatpush1.msra.mxu0 0.0
    %4044 = vmatprep.subr.mxu0 0.0
    %4045 = vmatpush1.msra.mxu0 0.0
    %4046 = vmatprep.mubr.f32.mxu0 0.0
    %4047 = vmatmul.mubr.f32.gmra.mrb[0].mxu0 %v3977
    %v4048 = vpop.f32.mrb[0].mxu0
    %v4049 = vadd.f32 0.0, %v4048
    %v4050 = vpop.f32.mrb[0].mxu0
    %4051 = vmatprep.mubr.f32.mxu0 0.0
    %4052 = vmatmul.mubr.f32.gmra.mrb[0].mxu0 %v3980
    %v4053 = vpop.f32.mrb[0].mxu0
    %v4054 = vadd.f32 0.0, %v4053
    %v4055 = vpop.f32.mrb[0].mxu0
    %4056 = vdwg.mxu0
    %4059 = vrot.lane.b32.xlu0 %v3641, 8
    %v4060 = vpop.permute.xlu0 %4059
    %4061 = vrot.lane.b32.xlu0 %v3646, 8
    %v4062 = vpop.permute.xlu0 %4061
    %4067 = vrot.lane.b32.xlu0 %v3845, 16
    %v4068 = vpop.permute.xlu0 %4067
    %4069 = vrot.lane.b32.xlu0 %v3850, 16
    %v4070 = vpop.permute.xlu0 %4069
    %4075 = vrot.lane.b32.xlu0 %v4049, 24
    %v4076 = vpop.permute.xlu0 %4075
    %4077 = vrot.lane.b32.xlu0 %v4054, 24
    %v4078 = vpop.permute.xlu0 %4077
    %v4081 = vsel %vm140, %v3437, %v4060
    %v4082 = vsel %vm140, %v3442, %v4062
    %v4083 = vsel %vm228, %v4081, %v4068
    %v4084 = vsel %vm228, %v4082, %v4070
    %v4085 = vsel %vm978, %v4083, %v4076
    %v4086 = vsel %vm978, %v4084, %v4078
    %v4087 = vpack.c.bf16 %v4086, %v4085
    %s4088 = scalar_lea.vmem %s5, 16
    %v4089 = vld [vmem:[%s4088] sm:$0xf]
    %v4090 = vld [vmem:[%s4088 + $0x4] sm:$0xf]
    %v4091 = vld [vmem:[%s4088 + $0x8] sm:$0xf]
    %v4092 = vld [vmem:[%s4088 + $0xc] sm:$0xf]
    %s4093 = scalar_lea.vmem %s6, 1
    %v4094 = vld [vmem:[%s4093] sm:$0x1]
    %v4096 = vlaneseq
    %v4097 = vshrl.u32 %v4096, 7
    %v4098 = vsub.s32 0, %v4097
    %v4099 = vrot.slane %v4094, %v4098
    %v4105 = vunpack.c.l.b16 %v4089
    %v4106 = vunpack.c.l.b16 %v4090
    %v4107 = vunpack.c.l.b16 %v4091
    %v4108 = vunpack.c.l.b16 %v4092
    %v4109 = vpack.c.b16 %v4106, %v4105
    %v4110 = vpack.c.b16 %v4108, %v4107
    %v4114 = vsel %vm89, %v4087, 0
    %4116 = vmatprep.subr.bf16.mxu0 0
    %4117 = vmatpush1.bf16.msra.mxu0 %v4109
    %4118 = vmatprep.subr.bf16.mxu0 0
    %4119 = vmatpush1.bf16.msra.mxu0 %v4110
    %4120 = vmatprep.subr.bf16.mxu0 0
    %4121 = vmatpush1.bf16.msra.mxu0 0
    %4122 = vmatprep.subr.bf16.mxu0 0
    %4123 = vmatpush1.bf16.msra.mxu0 0
    %4124 = vmatprep.subr.bf16.mxu0 0
    %4125 = vmatpush1.bf16.msra.mxu0 0
    %4126 = vmatprep.subr.bf16.mxu0 0
    %4127 = vmatpush1.bf16.msra.mxu0 0
    %4128 = vmatprep.subr.bf16.mxu0 0
    %4129 = vmatpush1.bf16.msra.mxu0 0
    %4130 = vmatprep.subr.bf16.mxu0 0
    %4131 = vmatpush1.bf16.msra.mxu0 0
    %4132 = vmatprep.subr.bf16.mxu0 0
    %4133 = vmatpush1.bf16.msra.mxu0 0
    %4134 = vmatprep.subr.bf16.mxu0 0
    %4135 = vmatpush1.bf16.msra.mxu0 0
    %4136 = vmatprep.subr.bf16.mxu0 0
    %4137 = vmatpush1.bf16.msra.mxu0 0
    %4138 = vmatprep.subr.bf16.mxu0 0
    %4139 = vmatpush1.bf16.msra.mxu0 0
    %4140 = vmatprep.subr.bf16.mxu0 0
    %4141 = vmatpush1.bf16.msra.mxu0 0
    %4142 = vmatprep.subr.bf16.mxu0 0
    %4143 = vmatpush1.bf16.msra.mxu0 0
    %4144 = vmatprep.subr.bf16.mxu0 0
    %4145 = vmatpush1.bf16.msra.mxu0 0
    %4146 = vmatprep.subr.bf16.mxu0 0
    %4147 = vmatpush1.bf16.msra.mxu0 0
    %4148 = vmatprep.mubr.bf16.mxu0 0
    %4149 = vmatmul.mubr.bf16.gmra.mrb[0].mxu0 %v4114
    %v4150 = vpop.f32.mrb[0].mxu0
    %v4151 = vadd.f32 %v4099, %v4150
    %v4152 = vpop.f32.mrb[0].mxu0
    %v4153 = vpop.f32.mrb[0].mxu0
    %v4154 = vadd.f32 %v4099, %v4153
    %v4155 = vpop.f32.mrb[0].mxu0
    %4156 = vdwg.mxu0
    %v4157 = vadd.f32 %v3171, %v4151
    %v4158 = vadd.f32 %v3172, %v4154
    %s4159 = scalar_lea.vmem %s7, 1
    %v4160 = vld [vmem:[%s4159] sm:$0x1]
    %s4161 = scalar_lea.vmem %s8, 1
    %v4162 = vld [vmem:[%s4161] sm:$0x1]
    %v4163 = vsel %vm89, %v4157, 0.0
    %4164 = vadd.xlane.f32.xlu0 %v4163
    %v4165 = vpop.xlane.xlu0 %4164
    %v4166 = vsel %vm89, %v4158, 0.0
    %4167 = vadd.xlane.f32.xlu0 %v4166
    %v4168 = vpop.xlane.xlu0 %4167
    %v4169 = vmul.f32 %v4165, %v1059
    %v4170 = vmul.f32 %v4168, %v1059
    %v4171 = vsub.f32 %v4157, %v4169
    %v4172 = vsub.f32 %v4158, %v4170
    %v4173 = vmul.f32 %v4171, %v4171
    %v4174 = vmul.f32 %v4172, %v4172
    %v4175 = vsel %vm89, %v4173, 0.0
    %4176 = vadd.xlane.f32.xlu0 %v4175
    %v4177 = vpop.xlane.xlu0 %4176
    %v4178 = vsel %vm89, %v4174, 0.0
    %4179 = vadd.xlane.f32.xlu0 %v4178
    %v4180 = vpop.xlane.xlu0 %4179
    %v4181 = vmul.f32 %v4177, %v1059
    %v4182 = vmul.f32 %v4180, %v1059
    %v4183 = vadd.f32 %v4181, 1e-05
    %v4184 = vadd.f32 %v4182, 1e-05
    %v4185 = vrsqrt.pop %v4183
    %v4186 = vrsqrt.pop %v4184
    %v4187 = vmul.f32 %v4171, %v4185
    %v4188 = vmul.f32 %v4172, %v4186
    %v4190 = vlaneseq
    %v4191 = vshrl.u32 %v4190, 7
    %v4192 = vsub.s32 0, %v4191
    %v4193 = vrot.slane %v4160, %v4192
    %v4195 = vmul.f32 %v4187, %v4193
    %v4196 = vmul.f32 %v4188, %v4193
    %v4198 = vlaneseq
    %v4199 = vshrl.u32 %v4198, 7
    %v4200 = vsub.s32 0, %v4199
    %v4201 = vrot.slane %v4162, %v4200
    %v4203 = vadd.f32 %v4195, %v4201
    %v4204 = vadd.f32 %v4196, %v4201
    %v4205 = vpack.c.bf16 %v4204, %v4203
    %s4206 = scalar_lea.vmem %s9, 256
    %v4207 = vld [vmem:[%s4206] sm:$0xff]
    %v4208 = vld [vmem:[%s4206 + $0x8] sm:$0xff]
    %v4209 = vld [vmem:[%s4206 + $0x10] sm:$0xff]
    %v4210 = vld [vmem:[%s4206 + $0x18] sm:$0xff]
    %v4211 = vld [vmem:[%s4206 + $0x20] sm:$0xff]
    %v4212 = vld [vmem:[%s4206 + $0x28] sm:$0xff]
    %v4213 = vld [vmem:[%s4206 + $0x30] sm:$0xff]
    %v4214 = vld [vmem:[%s4206 + $0x38] sm:$0xff]
    %v4215 = vld [vmem:[%s4206 + $0x40] sm:$0xff]
    %v4216 = vld [vmem:[%s4206 + $0x48] sm:$0xff]
    %v4217 = vld [vmem:[%s4206 + $0x50] sm:$0xff]
    %v4218 = vld [vmem:[%s4206 + $0x58] sm:$0xff]
    %v4219 = vld [vmem:[%s4206 + $0x60] sm:$0xff]
    %v4220 = vld [vmem:[%s4206 + $0x68] sm:$0xff]
    %v4221 = vld [vmem:[%s4206 + $0x70] sm:$0xff]
    %v4222 = vld [vmem:[%s4206 + $0x78] sm:$0xff]
    %v4223 = vld [vmem:[%s4206 + $0x80] sm:$0xff]
    %v4224 = vld [vmem:[%s4206 + $0x88] sm:$0xff]
    %v4225 = vld [vmem:[%s4206 + $0x90] sm:$0xff]
    %v4226 = vld [vmem:[%s4206 + $0x98] sm:$0xff]
    %v4227 = vld [vmem:[%s4206 + $0xa0] sm:$0xff]
    %v4228 = vld [vmem:[%s4206 + $0xa8] sm:$0xff]
    %v4229 = vld [vmem:[%s4206 + $0xb0] sm:$0xff]
    %v4230 = vld [vmem:[%s4206 + $0xb8] sm:$0xff]
    %v4231 = vld [vmem:[%s4206 + $0xc0] sm:$0xff]
    %v4232 = vld [vmem:[%s4206 + $0xc8] sm:$0xff]
    %v4233 = vld [vmem:[%s4206 + $0xd0] sm:$0xff]
    %v4234 = vld [vmem:[%s4206 + $0xd8] sm:$0xff]
    %v4235 = vld [vmem:[%s4206 + $0xe0] sm:$0xff]
    %v4236 = vld [vmem:[%s4206 + $0xe8] sm:$0xff]
    %v4237 = vld [vmem:[%s4206 + $0xf0] sm:$0xff]
    %v4238 = vld [vmem:[%s4206 + $0xf8] sm:$0xff]
    %s4239 = scalar_lea.vmem %s10, 16
    %v4240 = vld [vmem:[%s4239] sm:$0xff]
    %v4241 = vld [vmem:[%s4239 + $0x8] sm:$0xff]
    %v4244 = vlaneseq
    %v4245 = vshrl.u32 %v4244, 7
    %v4246 = vsub.s32 0, %v4245
    %v4247 = vrot.slane %v4240, %v4246
    %v4248 = vlaneseq
    %v4249 = vshrl.u32 %v4248, 7
    %v4250 = vsub.s32 1, %v4249
    %v4251 = vrot.slane %v4240, %v4250
    %v4252 = vlaneseq
    %v4253 = vshrl.u32 %v4252, 7
    %v4254 = vsub.s32 2, %v4253
    %v4255 = vrot.slane %v4240, %v4254
    %v4256 = vlaneseq
    %v4257 = vshrl.u32 %v4256, 7
    %v4258 = vsub.s32 3, %v4257
    %v4259 = vrot.slane %v4240, %v4258
    %v4260 = vlaneseq
    %v4261 = vshrl.u32 %v4260, 7
    %v4262 = vsub.s32 4, %v4261
    %v4263 = vrot.slane %v4240, %v4262
    %v4264 = vlaneseq
    %v4265 = vshrl.u32 %v4264, 7
    %v4266 = vsub.s32 5, %v4265
    %v4267 = vrot.slane %v4240, %v4266
    %v4268 = vlaneseq
    %v4269 = vshrl.u32 %v4268, 7
    %v4270 = vsub.s32 6, %v4269
    %v4271 = vrot.slane %v4240, %v4270
    %v4272 = vlaneseq
    %v4273 = vshrl.u32 %v4272, 7
    %v4274 = vsub.s32 7, %v4273
    %v4275 = vrot.slane %v4240, %v4274
    %v4276 = vlaneseq
    %v4277 = vshrl.u32 %v4276, 7
    %v4278 = vsub.s32 0, %v4277
    %v4279 = vrot.slane %v4241, %v4278
    %v4280 = vlaneseq
    %v4281 = vshrl.u32 %v4280, 7
    %v4282 = vsub.s32 1, %v4281
    %v4283 = vrot.slane %v4241, %v4282
    %v4284 = vlaneseq
    %v4285 = vshrl.u32 %v4284, 7
    %v4286 = vsub.s32 2, %v4285
    %v4287 = vrot.slane %v4241, %v4286
    %v4288 = vlaneseq
    %v4289 = vshrl.u32 %v4288, 7
    %v4290 = vsub.s32 3, %v4289
    %v4291 = vrot.slane %v4241, %v4290
    %v4292 = vlaneseq
    %v4293 = vshrl.u32 %v4292, 7
    %v4294 = vsub.s32 4, %v4293
    %v4295 = vrot.slane %v4241, %v4294
    %v4296 = vlaneseq
    %v4297 = vshrl.u32 %v4296, 7
    %v4298 = vsub.s32 5, %v4297
    %v4299 = vrot.slane %v4241, %v4298
    %v4300 = vlaneseq
    %v4301 = vshrl.u32 %v4300, 7
    %v4302 = vsub.s32 6, %v4301
    %v4303 = vrot.slane %v4241, %v4302
    %v4304 = vlaneseq
    %v4305 = vshrl.u32 %v4304, 7
    %v4306 = vsub.s32 7, %v4305
    %v4307 = vrot.slane %v4241, %v4306
    %v4356 = vunpack.c.l.b16 %v4207
    %v4357 = vunpack.c.h.b16 %v4207
    %v4358 = vunpack.c.l.b16 %v4208
    %v4359 = vunpack.c.h.b16 %v4208
    %v4360 = vunpack.c.l.b16 %v4209
    %v4361 = vunpack.c.h.b16 %v4209
    %v4362 = vunpack.c.l.b16 %v4210
    %v4363 = vunpack.c.h.b16 %v4210
    %v4364 = vunpack.c.l.b16 %v4211
    %v4365 = vunpack.c.h.b16 %v4211
    %v4366 = vunpack.c.l.b16 %v4212
    %v4367 = vunpack.c.h.b16 %v4212
    %v4368 = vunpack.c.l.b16 %v4213
    %v4369 = vunpack.c.h.b16 %v4213
    %v4370 = vunpack.c.l.b16 %v4214
    %v4371 = vunpack.c.h.b16 %v4214
    %v4372 = vunpack.c.l.b16 %v4215
    %v4373 = vunpack.c.h.b16 %v4215
    %v4374 = vunpack.c.l.b16 %v4216
    %v4375 = vunpack.c.h.b16 %v4216
    %v4376 = vunpack.c.l.b16 %v4217
    %v4377 = vunpack.c.h.b16 %v4217
    %v4378 = vunpack.c.l.b16 %v4218
    %v4379 = vunpack.c.h.b16 %v4218
    %v4380 = vunpack.c.l.b16 %v4219
    %v4381 = vunpack.c.h.b16 %v4219
    %v4382 = vunpack.c.l.b16 %v4220
    %v4383 = vunpack.c.h.b16 %v4220
    %v4384 = vunpack.c.l.b16 %v4221
    %v4385 = vunpack.c.h.b16 %v4221
    %v4386 = vunpack.c.l.b16 %v4222
    %v4387 = vunpack.c.h.b16 %v4222
    %v4388 = vunpack.c.l.b16 %v4223
    %v4389 = vunpack.c.h.b16 %v4223
    %v4390 = vunpack.c.l.b16 %v4224
    %v4391 = vunpack.c.h.b16 %v4224
    %v4392 = vunpack.c.l.b16 %v4225
    %v4393 = vunpack.c.h.b16 %v4225
    %v4394 = vunpack.c.l.b16 %v4226
    %v4395 = vunpack.c.h.b16 %v4226
    %v4396 = vunpack.c.l.b16 %v4227
    %v4397 = vunpack.c.h.b16 %v4227
    %v4398 = vunpack.c.l.b16 %v4228
    %v4399 = vunpack.c.h.b16 %v4228
    %v4400 = vunpack.c.l.b16 %v4229
    %v4401 = vunpack.c.h.b16 %v4229
    %v4402 = vunpack.c.l.b16 %v4230
    %v4403 = vunpack.c.h.b16 %v4230
    %v4404 = vunpack.c.l.b16 %v4231
    %v4405 = vunpack.c.h.b16 %v4231
    %v4406 = vunpack.c.l.b16 %v4232
    %v4407 = vunpack.c.h.b16 %v4232
    %v4408 = vunpack.c.l.b16 %v4233
    %v4409 = vunpack.c.h.b16 %v4233
    %v4410 = vunpack.c.l.b16 %v4234
    %v4411 = vunpack.c.h.b16 %v4234
    %v4412 = vunpack.c.l.b16 %v4235
    %v4413 = vunpack.c.h.b16 %v4235
    %v4414 = vunpack.c.l.b16 %v4236
    %v4415 = vunpack.c.h.b16 %v4236
    %v4416 = vunpack.c.l.b16 %v4237
    %v4417 = vunpack.c.h.b16 %v4237
    %v4418 = vunpack.c.l.b16 %v4238
    %v4419 = vunpack.c.h.b16 %v4238
    %v4420 = vpack.c.b16 %v4372, %v4356
    %v4421 = vpack.c.b16 %v4373, %v4357
    %v4422 = vpack.c.b16 %v4374, %v4358
    %v4423 = vpack.c.b16 %v4375, %v4359
    %v4424 = vpack.c.b16 %v4376, %v4360
    %v4425 = vpack.c.b16 %v4377, %v4361
    %v4426 = vpack.c.b16 %v4378, %v4362
    %v4427 = vpack.c.b16 %v4379, %v4363
    %v4428 = vpack.c.b16 %v4380, %v4364
    %v4429 = vpack.c.b16 %v4381, %v4365
    %v4430 = vpack.c.b16 %v4382, %v4366
    %v4431 = vpack.c.b16 %v4383, %v4367
    %v4432 = vpack.c.b16 %v4384, %v4368
    %v4433 = vpack.c.b16 %v4385, %v4369
    %v4434 = vpack.c.b16 %v4386, %v4370
    %v4435 = vpack.c.b16 %v4387, %v4371
    %v4436 = vpack.c.b16 %v4404, %v4388
    %v4437 = vpack.c.b16 %v4405, %v4389
    %v4438 = vpack.c.b16 %v4406, %v4390
    %v4439 = vpack.c.b16 %v4407, %v4391
    %v4440 = vpack.c.b16 %v4408, %v4392
    %v4441 = vpack.c.b16 %v4409, %v4393
    %v4442 = vpack.c.b16 %v4410, %v4394
    %v4443 = vpack.c.b16 %v4411, %v4395
    %v4444 = vpack.c.b16 %v4412, %v4396
    %v4445 = vpack.c.b16 %v4413, %v4397
    %v4446 = vpack.c.b16 %v4414, %v4398
    %v4447 = vpack.c.b16 %v4415, %v4399
    %v4448 = vpack.c.b16 %v4416, %v4400
    %v4449 = vpack.c.b16 %v4417, %v4401
    %v4450 = vpack.c.b16 %v4418, %v4402
    %v4451 = vpack.c.b16 %v4419, %v4403
    %v4485 = vsel %vm89, %v4205, 0
    %4487 = vmatprep.subr.bf16.mxu0 %v4421
    %4488 = vmatpush1.bf16.msra.mxu0 %v4420
    %4489 = vmatprep.subr.bf16.mxu0 %v4437
    %4490 = vmatpush1.bf16.msra.mxu0 %v4436
    %4491 = vmatprep.subr.bf16.mxu0 0
    %4492 = vmatpush1.bf16.msra.mxu0 0
    %4493 = vmatprep.subr.bf16.mxu0 0
    %4494 = vmatpush1.bf16.msra.mxu0 0
    %4495 = vmatprep.subr.bf16.mxu0 0
    %4496 = vmatpush1.bf16.msra.mxu0 0
    %4497 = vmatprep.subr.bf16.mxu0 0
    %4498 = vmatpush1.bf16.msra.mxu0 0
    %4499 = vmatprep.subr.bf16.mxu0 0
    %4500 = vmatpush1.bf16.msra.mxu0 0
    %4501 = vmatprep.subr.bf16.mxu0 0
    %4502 = vmatpush1.bf16.msra.mxu0 0
    %4503 = vmatprep.subr.bf16.mxu0 0
    %4504 = vmatpush1.bf16.msra.mxu0 0
    %4505 = vmatprep.subr.bf16.mxu0 0
    %4506 = vmatpush1.bf16.msra.mxu0 0
    %4507 = vmatprep.subr.bf16.mxu0 0
    %4508 = vmatpush1.bf16.msra.mxu0 0
    %4509 = vmatprep.subr.bf16.mxu0 0
    %4510 = vmatpush1.bf16.msra.mxu0 0
    %4511 = vmatprep.subr.bf16.mxu0 0
    %4512 = vmatpush1.bf16.msra.mxu0 0
    %4513 = vmatprep.subr.bf16.mxu0 0
    %4514 = vmatpush1.bf16.msra.mxu0 0
    %4515 = vmatprep.subr.bf16.mxu0 0
    %4516 = vmatpush1.bf16.msra.mxu0 0
    %4517 = vmatprep.subr.bf16.mxu0 0
    %4518 = vmatpush1.bf16.msra.mxu0 0
    %4519 = vmatprep.mubr.bf16.mxu0 0
    %4520 = vmatmul.mubr.bf16.gmra.mrb[0].mxu0 %v4485
    %v4521 = vpop.f32.mrb[0].mxu0
    %v4522 = vadd.f32 %v4247, %v4521
    %v4523 = vpop.f32.mrb[0].mxu0
    %v4524 = vadd.f32 %v4251, %v4523
    %v4525 = vpop.f32.mrb[0].mxu0
    %v4526 = vadd.f32 %v4247, %v4525
    %v4527 = vpop.f32.mrb[0].mxu0
    %v4528 = vadd.f32 %v4251, %v4527
    %4529 = vdwg.mxu0
    %4530 = vmatprep.subr.bf16.mxu0 %v4423
    %4531 = vmatpush1.bf16.msra.mxu0 %v4422
    %4532 = vmatprep.subr.bf16.mxu0 %v4439
    %4533 = vmatpush1.bf16.msra.mxu0 %v4438
    %4534 = vmatprep.subr.bf16.mxu0 0
    %4535 = vmatpush1.bf16.msra.mxu0 0
    %4536 = vmatprep.subr.bf16.mxu0 0
    %4537 = vmatpush1.bf16.msra.mxu0 0
    %4538 = vmatprep.subr.bf16.mxu0 0
    %4539 = vmatpush1.bf16.msra.mxu0 0
    %4540 = vmatprep.subr.bf16.mxu0 0
    %4541 = vmatpush1.bf16.msra.mxu0 0
    %4542 = vmatprep.subr.bf16.mxu0 0
    %4543 = vmatpush1.bf16.msra.mxu0 0
    %4544 = vmatprep.subr.bf16.mxu0 0
    %4545 = vmatpush1.bf16.msra.mxu0 0
    %4546 = vmatprep.subr.bf16.mxu0 0
    %4547 = vmatpush1.bf16.msra.mxu0 0
    %4548 = vmatprep.subr.bf16.mxu0 0
    %4549 = vmatpush1.bf16.msra.mxu0 0
    %4550 = vmatprep.subr.bf16.mxu0 0
    %4551 = vmatpush1.bf16.msra.mxu0 0
    %4552 = vmatprep.subr.bf16.mxu0 0
    %4553 = vmatpush1.bf16.msra.mxu0 0
    %4554 = vmatprep.subr.bf16.mxu0 0
    %4555 = vmatpush1.bf16.msra.mxu0 0
    %4556 = vmatprep.subr.bf16.mxu0 0
    %4557 = vmatpush1.bf16.msra.mxu0 0
    %4558 = vmatprep.subr.bf16.mxu0 0
    %4559 = vmatpush1.bf16.msra.mxu0 0
    %4560 = vmatprep.subr.bf16.mxu0 0
    %4561 = vmatpush1.bf16.msra.mxu0 0
    %4562 = vmatprep.mubr.bf16.mxu0 0
    %4563 = vmatmul.mubr.bf16.gmra.mrb[0].mxu0 %v4485
    %v4564 = vpop.f32.mrb[0].mxu0
    %v4565 = vadd.f32 %v4255, %v4564
    %v4566 = vpop.f32.mrb[0].mxu0
    %v4567 = vadd.f32 %v4259, %v4566
    %v4568 = vpop.f32.mrb[0].mxu0
    %v4569 = vadd.f32 %v4255, %v4568
    %v4570 = vpop.f32.mrb[0].mxu0
    %v4571 = vadd.f32 %v4259, %v4570
    %4572 = vdwg.mxu0
    %4573 = vmatprep.subr.bf16.mxu0 %v4425
    %4574 = vmatpush1.bf16.msra.mxu0 %v4424
    %4575 = vmatprep.subr.bf16.mxu0 %v4441
    %4576 = vmatpush1.bf16.msra.mxu0 %v4440
    %4577 = vmatprep.subr.bf16.mxu0 0
    %4578 = vmatpush1.bf16.msra.mxu0 0
    %4579 = vmatprep.subr.bf16.mxu0 0
    %4580 = vmatpush1.bf16.msra.mxu0 0
    %4581 = vmatprep.subr.bf16.mxu0 0
    %4582 = vmatpush1.bf16.msra.mxu0 0
    %4583 = vmatprep.subr.bf16.mxu0 0
    %4584 = vmatpush1.bf16.msra.mxu0 0
    %4585 = vmatprep.subr.bf16.mxu0 0
    %4586 = vmatpush1.bf16.msra.mxu0 0
    %4587 = vmatprep.subr.bf16.mxu0 0
    %4588 = vmatpush1.bf16.msra.mxu0 0
    %4589 = vmatprep.subr.bf16.mxu0 0
    %4590 = vmatpush1.bf16.msra.mxu0 0
    %4591 = vmatprep.subr.bf16.mxu0 0
    %4592 = vmatpush1.bf16.msra.mxu0 0
    %4593 = vmatprep.subr.bf16.mxu0 0
    %4594 = vmatpush1.bf16.msra.mxu0 0
    %4595 = vmatprep.subr.bf16.mxu0 0
    %4596 = vmatpush1.bf16.msra.mxu0 0
    %4597 = vmatprep.subr.bf16.mxu0 0
    %4598 = vmatpush1.bf16.msra.mxu0 0
    %4599 = vmatprep.subr.bf16.mxu0 0
    %4600 = vmatpush1.bf16.msra.mxu0 0
    %4601 = vmatprep.subr.bf16.mxu0 0
    %4602 = vmatpush1.bf16.msra.mxu0 0
    %4603 = vmatprep.subr.bf16.mxu0 0
    %4604 = vmatpush1.bf16.msra.mxu0 0
    %4605 = vmatprep.mubr.bf16.mxu0 0
    %4606 = vmatmul.mubr.bf16.gmra.mrb[0].mxu0 %v4485
    %v4607 = vpop.f32.mrb[0].mxu0
    %v4608 = vadd.f32 %v4263, %v4607
    %v4609 = vpop.f32.mrb[0].mxu0
    %v4610 = vadd.f32 %v4267, %v4609
    %v4611 = vpop.f32.mrb[0].mxu0
    %v4612 = vadd.f32 %v4263, %v4611
    %v4613 = vpop.f32.mrb[0].mxu0
    %v4614 = vadd.f32 %v4267, %v4613
    %4615 = vdwg.mxu0
    %4616 = vmatprep.subr.bf16.mxu0 %v4427
    %4617 = vmatpush1.bf16.msra.mxu0 %v4426
    %4618 = vmatprep.subr.bf16.mxu0 %v4443
    %4619 = vmatpush1.bf16.msra.mxu0 %v4442
    %4620 = vmatprep.subr.bf16.mxu0 0
    %4621 = vmatpush1.bf16.msra.mxu0 0
    %4622 = vmatprep.subr.bf16.mxu0 0
    %4623 = vmatpush1.bf16.msra.mxu0 0
    %4624 = vmatprep.subr.bf16.mxu0 0
    %4625 = vmatpush1.bf16.msra.mxu0 0
    %4626 = vmatprep.subr.bf16.mxu0 0
    %4627 = vmatpush1.bf16.msra.mxu0 0
    %4628 = vmatprep.subr.bf16.mxu0 0
    %4629 = vmatpush1.bf16.msra.mxu0 0
    %4630 = vmatprep.subr.bf16.mxu0 0
    %4631 = vmatpush1.bf16.msra.mxu0 0
    %4632 = vmatprep.subr.bf16.mxu0 0
    %4633 = vmatpush1.bf16.msra.mxu0 0
    %4634 = vmatprep.subr.bf16.mxu0 0
    %4635 = vmatpush1.bf16.msra.mxu0 0
    %4636 = vmatprep.subr.bf16.mxu0 0
    %4637 = vmatpush1.bf16.msra.mxu0 0
    %4638 = vmatprep.subr.bf16.mxu0 0
    %4639 = vmatpush1.bf16.msra.mxu0 0
    %4640 = vmatprep.subr.bf16.mxu0 0
    %4641 = vmatpush1.bf16.msra.mxu0 0
    %4642 = vmatprep.subr.bf16.mxu0 0
    %4643 = vmatpush1.bf16.msra.mxu0 0
    %4644 = vmatprep.subr.bf16.mxu0 0
    %4645 = vmatpush1.bf16.msra.mxu0 0
    %4646 = vmatprep.subr.bf16.mxu0 0
    %4647 = vmatpush1.bf16.msra.mxu0 0
    %4648 = vmatprep.mubr.bf16.mxu0 0
    %4649 = vmatmul.mubr.bf16.gmra.mrb[0].mxu0 %v4485
    %v4650 = vpop.f32.mrb[0].mxu0
    %v4651 = vadd.f32 %v4271, %v4650
    %v4652 = vpop.f32.mrb[0].mxu0
    %v4653 = vadd.f32 %v4275, %v4652
    %v4654 = vpop.f32.mrb[0].mxu0
    %v4655 = vadd.f32 %v4271, %v4654
    %v4656 = vpop.f32.mrb[0].mxu0
    %v4657 = vadd.f32 %v4275, %v4656
    %4658 = vdwg.mxu0
    %4659 = vmatprep.subr.bf16.mxu0 %v4429
    %4660 = vmatpush1.bf16.msra.mxu0 %v4428
    %4661 = vmatprep.subr.bf16.mxu0 %v4445
    %4662 = vmatpush1.bf16.msra.mxu0 %v4444
    %4663 = vmatprep.subr.bf16.mxu0 0
    %4664 = vmatpush1.bf16.msra.mxu0 0
    %4665 = vmatprep.subr.bf16.mxu0 0
    %4666 = vmatpush1.bf16.msra.mxu0 0
    %4667 = vmatprep.subr.bf16.mxu0 0
    %4668 = vmatpush1.bf16.msra.mxu0 0
    %4669 = vmatprep.subr.bf16.mxu0 0
    %4670 = vmatpush1.bf16.msra.mxu0 0
    %4671 = vmatprep.subr.bf16.mxu0 0
    %4672 = vmatpush1.bf16.msra.mxu0 0
    %4673 = vmatprep.subr.bf16.mxu0 0
    %4674 = vmatpush1.bf16.msra.mxu0 0
    %4675 = vmatprep.subr.bf16.mxu0 0
    %4676 = vmatpush1.bf16.msra.mxu0 0
    %4677 = vmatprep.subr.bf16.mxu0 0
    %4678 = vmatpush1.bf16.msra.mxu0 0
    %4679 = vmatprep.subr.bf16.mxu0 0
    %4680 = vmatpush1.bf16.msra.mxu0 0
    %4681 = vmatprep.subr.bf16.mxu0 0
    %4682 = vmatpush1.bf16.msra.mxu0 0
    %4683 = vmatprep.subr.bf16.mxu0 0
    %4684 = vmatpush1.bf16.msra.mxu0 0
    %4685 = vmatprep.subr.bf16.mxu0 0
    %4686 = vmatpush1.bf16.msra.mxu0 0
    %4687 = vmatprep.subr.bf16.mxu0 0
    %4688 = vmatpush1.bf16.msra.mxu0 0
    %4689 = vmatprep.subr.bf16.mxu0 0
    %4690 = vmatpush1.bf16.msra.mxu0 0
    %4691 = vmatprep.mubr.bf16.mxu0 0
    %4692 = vmatmul.mubr.bf16.gmra.mrb[0].mxu0 %v4485
    %v4693 = vpop.f32.mrb[0].mxu0
    %v4694 = vadd.f32 %v4279, %v4693
    %v4695 = vpop.f32.mrb[0].mxu0
    %v4696 = vadd.f32 %v4283, %v4695
    %v4697 = vpop.f32.mrb[0].mxu0
    %v4698 = vadd.f32 %v4279, %v4697
    %v4699 = vpop.f32.mrb[0].mxu0
    %v4700 = vadd.f32 %v4283, %v4699
    %4701 = vdwg.mxu0
    %4702 = vmatprep.subr.bf16.mxu0 %v4431
    %4703 = vmatpush1.bf16.msra.mxu0 %v4430
    %4704 = vmatprep.subr.bf16.mxu0 %v4447
    %4705 = vmatpush1.bf16.msra.mxu0 %v4446
    %4706 = vmatprep.subr.bf16.mxu0 0
    %4707 = vmatpush1.bf16.msra.mxu0 0
    %4708 = vmatprep.subr.bf16.mxu0 0
    %4709 = vmatpush1.bf16.msra.mxu0 0
    %4710 = vmatprep.subr.bf16.mxu0 0
    %4711 = vmatpush1.bf16.msra.mxu0 0
    %4712 = vmatprep.subr.bf16.mxu0 0
    %4713 = vmatpush1.bf16.msra.mxu0 0
    %4714 = vmatprep.subr.bf16.mxu0 0
    %4715 = vmatpush1.bf16.msra.mxu0 0
    %4716 = vmatprep.subr.bf16.mxu0 0
    %4717 = vmatpush1.bf16.msra.mxu0 0
    %4718 = vmatprep.subr.bf16.mxu0 0
    %4719 = vmatpush1.bf16.msra.mxu0 0
    %4720 = vmatprep.subr.bf16.mxu0 0
    %4721 = vmatpush1.bf16.msra.mxu0 0
    %4722 = vmatprep.subr.bf16.mxu0 0
    %4723 = vmatpush1.bf16.msra.mxu0 0
    %4724 = vmatprep.subr.bf16.mxu0 0
    %4725 = vmatpush1.bf16.msra.mxu0 0
    %4726 = vmatprep.subr.bf16.mxu0 0
    %4727 = vmatpush1.bf16.msra.mxu0 0
    %4728 = vmatprep.subr.bf16.mxu0 0
    %4729 = vmatpush1.bf16.msra.mxu0 0
    %4730 = vmatprep.subr.bf16.mxu0 0
    %4731 = vmatpush1.bf16.msra.mxu0 0
    %4732 = vmatprep.subr.bf16.mxu0 0
    %4733 = vmatpush1.bf16.msra.mxu0 0
    %4734 = vmatprep.mubr.bf16.mxu0 0
    %4735 = vmatmul.mubr.bf16.gmra.mrb[0].mxu0 %v4485
    %v4736 = vpop.f32.mrb[0].mxu0
    %v4737 = vadd.f32 %v4287, %v4736
    %v4738 = vpop.f32.mrb[0].mxu0
    %v4739 = vadd.f32 %v4291, %v4738
    %v4740 = vpop.f32.mrb[0].mxu0
    %v4741 = vadd.f32 %v4287, %v4740
    %v4742 = vpop.f32.mrb[0].mxu0
    %v4743 = vadd.f32 %v4291, %v4742
    %4744 = vdwg.mxu0
    %4745 = vmatprep.subr.bf16.mxu0 %v4433
    %4746 = vmatpush1.bf16.msra.mxu0 %v4432
    %4747 = vmatprep.subr.bf16.mxu0 %v4449
    %4748 = vmatpush1.bf16.msra.mxu0 %v4448
    %4749 = vmatprep.subr.bf16.mxu0 0
    %4750 = vmatpush1.bf16.msra.mxu0 0
    %4751 = vmatprep.subr.bf16.mxu0 0
    %4752 = vmatpush1.bf16.msra.mxu0 0
    %4753 = vmatprep.subr.bf16.mxu0 0
    %4754 = vmatpush1.bf16.msra.mxu0 0
    %4755 = vmatprep.subr.bf16.mxu0 0
    %4756 = vmatpush1.bf16.msra.mxu0 0
    %4757 = vmatprep.subr.bf16.mxu0 0
    %4758 = vmatpush1.bf16.msra.mxu0 0
    %4759 = vmatprep.subr.bf16.mxu0 0
    %4760 = vmatpush1.bf16.msra.mxu0 0
    %4761 = vmatprep.subr.bf16.mxu0 0
    %4762 = vmatpush1.bf16.msra.mxu0 0
    %4763 = vmatprep.subr.bf16.mxu0 0
    %4764 = vmatpush1.bf16.msra.mxu0 0
    %4765 = vmatprep.subr.bf16.mxu0 0
    %4766 = vmatpush1.bf16.msra.mxu0 0
    %4767 = vmatprep.subr.bf16.mxu0 0
    %4768 = vmatpush1.bf16.msra.mxu0 0
    %4769 = vmatprep.subr.bf16.mxu0 0
    %4770 = vmatpush1.bf16.msra.mxu0 0
    %4771 = vmatprep.subr.bf16.mxu0 0
    %4772 = vmatpush1.bf16.msra.mxu0 0
    %4773 = vmatprep.subr.bf16.mxu0 0
    %4774 = vmatpush1.bf16.msra.mxu0 0
    %4775 = vmatprep.subr.bf16.mxu0 0
    %4776 = vmatpush1.bf16.msra.mxu0 0
    %4777 = vmatprep.mubr.bf16.mxu0 0
    %4778 = vmatmul.mubr.bf16.gmra.mrb[0].mxu0 %v4485
    %v4779 = vpop.f32.mrb[0].mxu0
    %v4780 = vadd.f32 %v4295, %v4779
    %v4781 = vpop.f32.mrb[0].mxu0
    %v4782 = vadd.f32 %v4299, %v4781
    %v4783 = vpop.f32.mrb[0].mxu0
    %v4784 = vadd.f32 %v4295, %v4783
    %v4785 = vpop.f32.mrb[0].mxu0
    %v4786 = vadd.f32 %v4299, %v4785
    %4787 = vdwg.mxu0
    %4788 = vmatprep.subr.bf16.mxu0 %v4435
    %4789 = vmatpush1.bf16.msra.mxu0 %v4434
    %4790 = vmatprep.subr.bf16.mxu0 %v4451
    %4791 = vmatpush1.bf16.msra.mxu0 %v4450
    %4792 = vmatprep.subr.bf16.mxu0 0
    %4793 = vmatpush1.bf16.msra.mxu0 0
    %4794 = vmatprep.subr.bf16.mxu0 0
    %4795 = vmatpush1.bf16.msra.mxu0 0
    %4796 = vmatprep.subr.bf16.mxu0 0
    %4797 = vmatpush1.bf16.msra.mxu0 0
    %4798 = vmatprep.subr.bf16.mxu0 0
    %4799 = vmatpush1.bf16.msra.mxu0 0
    %4800 = vmatprep.subr.bf16.mxu0 0
    %4801 = vmatpush1.bf16.msra.mxu0 0
    %4802 = vmatprep.subr.bf16.mxu0 0
    %4803 = vmatpush1.bf16.msra.mxu0 0
    %4804 = vmatprep.subr.bf16.mxu0 0
    %4805 = vmatpush1.bf16.msra.mxu0 0
    %4806 = vmatprep.subr.bf16.mxu0 0
    %4807 = vmatpush1.bf16.msra.mxu0 0
    %4808 = vmatprep.subr.bf16.mxu0 0
    %4809 = vmatpush1.bf16.msra.mxu0 0
    %4810 = vmatprep.subr.bf16.mxu0 0
    %4811 = vmatpush1.bf16.msra.mxu0 0
    %4812 = vmatprep.subr.bf16.mxu0 0
    %4813 = vmatpush1.bf16.msra.mxu0 0
    %4814 = vmatprep.subr.bf16.mxu0 0
    %4815 = vmatpush1.bf16.msra.mxu0 0
    %4816 = vmatprep.subr.bf16.mxu0 0
    %4817 = vmatpush1.bf16.msra.mxu0 0
    %4818 = vmatprep.subr.bf16.mxu0 0
    %4819 = vmatpush1.bf16.msra.mxu0 0
    %4820 = vmatprep.mubr.bf16.mxu0 0
    %4821 = vmatmul.mubr.bf16.gmra.mrb[0].mxu0 %v4485
    %v4822 = vpop.f32.mrb[0].mxu0
    %v4823 = vadd.f32 %v4303, %v4822
    %v4824 = vpop.f32.mrb[0].mxu0
    %v4825 = vadd.f32 %v4307, %v4824
    %v4826 = vpop.f32.mrb[0].mxu0
    %v4827 = vadd.f32 %v4303, %v4826
    %v4828 = vpop.f32.mrb[0].mxu0
    %v4829 = vadd.f32 %v4307, %v4828
    %4830 = vdwg.mxu0
    %v4831 = vmax.f32 %v4522, 0.0
    %v4832 = vmax.f32 %v4524, 0.0
    %v4833 = vmax.f32 %v4565, 0.0
    %v4834 = vmax.f32 %v4567, 0.0
    %v4835 = vmax.f32 %v4608, 0.0
    %v4836 = vmax.f32 %v4610, 0.0
    %v4837 = vmax.f32 %v4651, 0.0
    %v4838 = vmax.f32 %v4653, 0.0
    %v4839 = vmax.f32 %v4694, 0.0
    %v4840 = vmax.f32 %v4696, 0.0
    %v4841 = vmax.f32 %v4737, 0.0
    %v4842 = vmax.f32 %v4739, 0.0
    %v4843 = vmax.f32 %v4780, 0.0
    %v4844 = vmax.f32 %v4782, 0.0
    %v4845 = vmax.f32 %v4823, 0.0
    %v4846 = vmax.f32 %v4825, 0.0
    %v4847 = vmax.f32 %v4526, 0.0
    %v4848 = vmax.f32 %v4528, 0.0
    %v4849 = vmax.f32 %v4569, 0.0
    %v4850 = vmax.f32 %v4571, 0.0
    %v4851 = vmax.f32 %v4612, 0.0
    %v4852 = vmax.f32 %v4614, 0.0
    %v4853 = vmax.f32 %v4655, 0.0
    %v4854 = vmax.f32 %v4657, 0.0
    %v4855 = vmax.f32 %v4698, 0.0
    %v4856 = vmax.f32 %v4700, 0.0
    %v4857 = vmax.f32 %v4741, 0.0
    %v4858 = vmax.f32 %v4743, 0.0
    %v4859 = vmax.f32 %v4784, 0.0
    %v4860 = vmax.f32 %v4786, 0.0
    %v4861 = vmax.f32 %v4827, 0.0
    %v4862 = vmax.f32 %v4829, 0.0
    %v4863 = vpack.c.bf16 %v4847, %v4831
    %v4864 = vpack.c.bf16 %v4848, %v4832
    %v4865 = vpack.c.bf16 %v4849, %v4833
    %v4866 = vpack.c.bf16 %v4850, %v4834
    %v4867 = vpack.c.bf16 %v4851, %v4835
    %v4868 = vpack.c.bf16 %v4852, %v4836
    %v4869 = vpack.c.bf16 %v4853, %v4837
    %v4870 = vpack.c.bf16 %v4854, %v4838
    %v4871 = vpack.c.bf16 %v4855, %v4839
    %v4872 = vpack.c.bf16 %v4856, %v4840
    %v4873 = vpack.c.bf16 %v4857, %v4841
    %v4874 = vpack.c.bf16 %v4858, %v4842
    %v4875 = vpack.c.bf16 %v4859, %v4843
    %v4876 = vpack.c.bf16 %v4860, %v4844
    %v4877 = vpack.c.bf16 %v4861, %v4845
    %v4878 = vpack.c.bf16 %v4862, %v4846
    %s4879 = scalar_lea.vmem %s11, 1024
    %v4880 = vld [vmem:[%s4879] sm:$0xf]
    %v4881 = vld [vmem:[%s4879 + $0x4] sm:$0xf]
    %v4882 = vld [vmem:[%s4879 + $0x8] sm:$0xf]
    %v4883 = vld [vmem:[%s4879 + $0xc] sm:$0xf]
    %v4884 = vld [vmem:[%s4879 + $0x10] sm:$0xf]
    %v4885 = vld [vmem:[%s4879 + $0x14] sm:$0xf]
    %v4886 = vld [vmem:[%s4879 + $0x18] sm:$0xf]
    %v4887 = vld [vmem:[%s4879 + $0x1c] sm:$0xf]
    %v4888 = vld [vmem:[%s4879 + $0x20] sm:$0xf]
    %v4889 = vld [vmem:[%s4879 + $0x24] sm:$0xf]
    %v4890 = vld [vmem:[%s4879 + $0x28] sm:$0xf]
    %v4891 = vld [vmem:[%s4879 + $0x2c] sm:$0xf]
    %v4892 = vld [vmem:[%s4879 + $0x30] sm:$0xf]
    %v4893 = vld [vmem:[%s4879 + $0x34] sm:$0xf]
    %v4894 = vld [vmem:[%s4879 + $0x38] sm:$0xf]
    %v4895 = vld [vmem:[%s4879 + $0x3c] sm:$0xf]
    %v4896 = vld [vmem:[%s4879 + $0x40] sm:$0xf]
    %v4897 = vld [vmem:[%s4879 + $0x44] sm:$0xf]
    %v4898 = vld [vmem:[%s4879 + $0x48] sm:$0xf]
    %v4899 = vld [vmem:[%s4879 + $0x4c] sm:$0xf]
    %v4900 = vld [vmem:[%s4879 + $0x50] sm:$0xf]
    %v4901 = vld [vmem:[%s4879 + $0x54] sm:$0xf]
    %v4902 = vld [vmem:[%s4879 + $0x58] sm:$0xf]
    %v4903 = vld [vmem:[%s4879 + $0x5c] sm:$0xf]
    %v4904 = vld [vmem:[%s4879 + $0x60] sm:$0xf]
    %v4905 = vld [vmem:[%s4879 + $0x64] sm:$0xf]
    %v4906 = vld [vmem:[%s4879 + $0x68] sm:$0xf]
    %v4907 = vld [vmem:[%s4879 + $0x6c] sm:$0xf]
    %v4908 = vld [vmem:[%s4879 + $0x70] sm:$0xf]
    %v4909 = vld [vmem:[%s4879 + $0x74] sm:$0xf]
    %v4910 = vld [vmem:[%s4879 + $0x78] sm:$0xf]
    %v4911 = vld [vmem:[%s4879 + $0x7c] sm:$0xf]
    %v4912 = vld [vmem:[%s4879 + $0x80] sm:$0xf]
    %v4913 = vld [vmem:[%s4879 + $0x84] sm:$0xf]
    %v4914 = vld [vmem:[%s4879 + $0x88] sm:$0xf]
    %v4915 = vld [vmem:[%s4879 + $0x8c] sm:$0xf]
    %v4916 = vld [vmem:[%s4879 + $0x90] sm:$0xf]
    %v4917 = vld [vmem:[%s4879 + $0x94] sm:$0xf]
    %v4918 = vld [vmem:[%s4879 + $0x98] sm:$0xf]
    %v4919 = vld [vmem:[%s4879 + $0x9c] sm:$0xf]
    %v4920 = vld [vmem:[%s4879 + $0xa0] sm:$0xf]
    %v4921 = vld [vmem:[%s4879 + $0xa4] sm:$0xf]
    %v4922 = vld [vmem:[%s4879 + $0xa8] sm:$0xf]
    %v4923 = vld [vmem:[%s4879 + $0xac] sm:$0xf]
    %v4924 = vld [vmem:[%s4879 + $0xb0] sm:$0xf]
    %v4925 = vld [vmem:[%s4879 + $0xb4] sm:$0xf]
    %v4926 = vld [vmem:[%s4879 + $0xb8] sm:$0xf]
    %v4927 = vld [vmem:[%s4879 + $0xbc] sm:$0xf]
    %v4928 = vld [vmem:[%s4879 + $0xc0] sm:$0xf]
    %v4929 = vld [vmem:[%s4879 + $0xc4] sm:$0xf]
    %v4930 = vld [vmem:[%s4879 + $0xc8] sm:$0xf]
    %v4931 = vld [vmem:[%s4879 + $0xcc] sm:$0xf]
    %v4932 = vld [vmem:[%s4879 + $0xd0] sm:$0xf]
    %v4933 = vld [vmem:[%s4879 + $0xd4] sm:$0xf]
    %v4934 = vld [vmem:[%s4879 + $0xd8] sm:$0xf]
    %v4935 = vld [vmem:[%s4879 + $0xdc] sm:$0xf]
    %v4936 = vld [vmem:[%s4879 + $0xe0] sm:$0xf]
    %v4937 = vld [vmem:[%s4879 + $0xe4] sm:$0xf]
    %v4938 = vld [vmem:[%s4879 + $0xe8] sm:$0xf]
    %v4939 = vld [vmem:[%s4879 + $0xec] sm:$0xf]
    %v4940 = vld [vmem:[%s4879 + $0xf0] sm:$0xf]
    %v4941 = vld [vmem:[%s4879 + $0xf4] sm:$0xf]
    %v4942 = vld [vmem:[%s4879 + $0xf8] sm:$0xf]
    %v4943 = vld [vmem:[%s4879 + $0xfc] sm:$0xf]
    %v4944 = vld [vmem:[%s4879 + $0x100] sm:$0xf]
    %v4945 = vld [vmem:[%s4879 + $0x104] sm:$0xf]
    %v4946 = vld [vmem:[%s4879 + $0x108] sm:$0xf]
    %v4947 = vld [vmem:[%s4879 + $0x10c] sm:$0xf]
    %v4948 = vld [vmem:[%s4879 + $0x110] sm:$0xf]
    %v4949 = vld [vmem:[%s4879 + $0x114] sm:$0xf]
    %v4950 = vld [vmem:[%s4879 + $0x118] sm:$0xf]
    %v4951 = vld [vmem:[%s4879 + $0x11c] sm:$0xf]
    %v4952 = vld [vmem:[%s4879 + $0x120] sm:$0xf]
    %v4953 = vld [vmem:[%s4879 + $0x124] sm:$0xf]
    %v4954 = vld [vmem:[%s4879 + $0x128] sm:$0xf]
    %v4955 = vld [vmem:[%s4879 + $0x12c] sm:$0xf]
    %v4956 = vld [vmem:[%s4879 + $0x130] sm:$0xf]
    %v4957 = vld [vmem:[%s4879 + $0x134] sm:$0xf]
    %v4958 = vld [vmem:[%s4879 + $0x138] sm:$0xf]
    %v4959 = vld [vmem:[%s4879 + $0x13c] sm:$0xf]
    %v4960 = vld [vmem:[%s4879 + $0x140] sm:$0xf]
    %v4961 = vld [vmem:[%s4879 + $0x144] sm:$0xf]
    %v4962 = vld [vmem:[%s4879 + $0x148] sm:$0xf]
    %v4963 = vld [vmem:[%s4879 + $0x14c] sm:$0xf]
    %v4964 = vld [vmem:[%s4879 + $0x150] sm:$0xf]
    %v4965 = vld [vmem:[%s4879 + $0x154] sm:$0xf]
    %v4966 = vld [vmem:[%s4879 + $0x158] sm:$0xf]
    %v4967 = vld [vmem:[%s4879 + $0x15c] sm:$0xf]
    %v4968 = vld [vmem:[%s4879 + $0x160] sm:$0xf]
    %v4969 = vld [vmem:[%s4879 + $0x164] sm:$0xf]
    %v4970 = vld [vmem:[%s4879 + $0x168] sm:$0xf]
    %v4971 = vld [vmem:[%s4879 + $0x16c] sm:$0xf]
    %v4972 = vld [vmem:[%s4879 + $0x170] sm:$0xf]
    %v4973 = vld [vmem:[%s4879 + $0x174] sm:$0xf]
    %v4974 = vld [vmem:[%s4879 + $0x178] sm:$0xf]
    %v4975 = vld [vmem:[%s4879 + $0x17c] sm:$0xf]
    %v4976 = vld [vmem:[%s4879 + $0x180] sm:$0xf]
    %v4977 = vld [vmem:[%s4879 + $0x184] sm:$0xf]
    %v4978 = vld [vmem:[%s4879 + $0x188] sm:$0xf]
    %v4979 = vld [vmem:[%s4879 + $0x18c] sm:$0xf]
    %v4980 = vld [vmem:[%s4879 + $0x190] sm:$0xf]
    %v4981 = vld [vmem:[%s4879 + $0x194] sm:$0xf]
    %v4982 = vld [vmem:[%s4879 + $0x198] sm:$0xf]
    %v4983 = vld [vmem:[%s4879 + $0x19c] sm:$0xf]
    %v4984 = vld [vmem:[%s4879 + $0x1a0] sm:$0xf]
    %v4985 = vld [vmem:[%s4879 + $0x1a4] sm:$0xf]
    %v4986 = vld [vmem:[%s4879 + $0x1a8] sm:$0xf]
    %v4987 = vld [vmem:[%s4879 + $0x1ac] sm:$0xf]
    %v4988 = vld [vmem:[%s4879 + $0x1b0] sm:$0xf]
    %v4989 = vld [vmem:[%s4879 + $0x1b4] sm:$0xf]
    %v4990 = vld [vmem:[%s4879 + $0x1b8] sm:$0xf]
    %v4991 = vld [vmem:[%s4879 + $0x1bc] sm:$0xf]
    %v4992 = vld [vmem:[%s4879 + $0x1c0] sm:$0xf]
    %v4993 = vld [vmem:[%s4879 + $0x1c4] sm:$0xf]
    %v4994 = vld [vmem:[%s4879 + $0x1c8] sm:$0xf]
    %v4995 = vld [vmem:[%s4879 + $0x1cc] sm:$0xf]
    %v4996 = vld [vmem:[%s4879 + $0x1d0] sm:$0xf]
    %v4997 = vld [vmem:[%s4879 + $0x1d4] sm:$0xf]
    %v4998 = vld [vmem:[%s4879 + $0x1d8] sm:$0xf]
    %v4999 = vld [vmem:[%s4879 + $0x1dc] sm:$0xf]
    %v5000 = vld [vmem:[%s4879 + $0x1e0] sm:$0xf]
    %v5001 = vld [vmem:[%s4879 + $0x1e4] sm:$0xf]
    %v5002 = vld [vmem:[%s4879 + $0x1e8] sm:$0xf]
    %v5003 = vld [vmem:[%s4879 + $0x1ec] sm:$0xf]
    %v5004 = vld [vmem:[%s4879 + $0x1f0] sm:$0xf]
    %v5005 = vld [vmem:[%s4879 + $0x1f4] sm:$0xf]
    %v5006 = vld [vmem:[%s4879 + $0x1f8] sm:$0xf]
    %v5007 = vld [vmem:[%s4879 + $0x1fc] sm:$0xf]
    %v5008 = vld [vmem:[%s4879 + $0x200] sm:$0xf]
    %v5009 = vld [vmem:[%s4879 + $0x204] sm:$0xf]
    %v5010 = vld [vmem:[%s4879 + $0x208] sm:$0xf]
    %v5011 = vld [vmem:[%s4879 + $0x20c] sm:$0xf]
    %v5012 = vld [vmem:[%s4879 + $0x210] sm:$0xf]
    %v5013 = vld [vmem:[%s4879 + $0x214] sm:$0xf]
    %v5014 = vld [vmem:[%s4879 + $0x218] sm:$0xf]
    %v5015 = vld [vmem:[%s4879 + $0x21c] sm:$0xf]
    %v5016 = vld [vmem:[%s4879 + $0x220] sm:$0xf]
    %v5017 = vld [vmem:[%s4879 + $0x224] sm:$0xf]
    %v5018 = vld [vmem:[%s4879 + $0x228] sm:$0xf]
    %v5019 = vld [vmem:[%s4879 + $0x22c] sm:$0xf]
    %v5020 = vld [vmem:[%s4879 + $0x230] sm:$0xf]
    %v5021 = vld [vmem:[%s4879 + $0x234] sm:$0xf]
    %v5022 = vld [vmem:[%s4879 + $0x238] sm:$0xf]
    %v5023 = vld [vmem:[%s4879 + $0x23c] sm:$0xf]
    %v5024 = vld [vmem:[%s4879 + $0x240] sm:$0xf]
    %v5025 = vld [vmem:[%s4879 + $0x244] sm:$0xf]
    %v5026 = vld [vmem:[%s4879 + $0x248] sm:$0xf]
    %v5027 = vld [vmem:[%s4879 + $0x24c] sm:$0xf]
    %v5028 = vld [vmem:[%s4879 + $0x250] sm:$0xf]
    %v5029 = vld [vmem:[%s4879 + $0x254] sm:$0xf]
    %v5030 = vld [vmem:[%s4879 + $0x258] sm:$0xf]
    %v5031 = vld [vmem:[%s4879 + $0x25c] sm:$0xf]
    %v5032 = vld [vmem:[%s4879 + $0x260] sm:$0xf]
    %v5033 = vld [vmem:[%s4879 + $0x264] sm:$0xf]
    %v5034 = vld [vmem:[%s4879 + $0x268] sm:$0xf]
    %v5035 = vld [vmem:[%s4879 + $0x26c] sm:$0xf]
    %v5036 = vld [vmem:[%s4879 + $0x270] sm:$0xf]
    %v5037 = vld [vmem:[%s4879 + $0x274] sm:$0xf]
    %v5038 = vld [vmem:[%s4879 + $0x278] sm:$0xf]
    %v5039 = vld [vmem:[%s4879 + $0x27c] sm:$0xf]
    %v5040 = vld [vmem:[%s4879 + $0x280] sm:$0xf]
    %v5041 = vld [vmem:[%s4879 + $0x284] sm:$0xf]
    %v5042 = vld [vmem:[%s4879 + $0x288] sm:$0xf]
    %v5043 = vld [vmem:[%s4879 + $0x28c] sm:$0xf]
    %v5044 = vld [vmem:[%s4879 + $0x290] sm:$0xf]
    %v5045 = vld [vmem:[%s4879 + $0x294] sm:$0xf]
    %v5046 = vld [vmem:[%s4879 + $0x298] sm:$0xf]
    %v5047 = vld [vmem:[%s4879 + $0x29c] sm:$0xf]
    %v5048 = vld [vmem:[%s4879 + $0x2a0] sm:$0xf]
    %v5049 = vld [vmem:[%s4879 + $0x2a4] sm:$0xf]
    %v5050 = vld [vmem:[%s4879 + $0x2a8] sm:$0xf]
    %v5051 = vld [vmem:[%s4879 + $0x2ac] sm:$0xf]
    %v5052 = vld [vmem:[%s4879 + $0x2b0] sm:$0xf]
    %v5053 = vld [vmem:[%s4879 + $0x2b4] sm:$0xf]
    %v5054 = vld [vmem:[%s4879 + $0x2b8] sm:$0xf]
    %v5055 = vld [vmem:[%s4879 + $0x2bc] sm:$0xf]
    %v5056 = vld [vmem:[%s4879 + $0x2c0] sm:$0xf]
    %v5057 = vld [vmem:[%s4879 + $0x2c4] sm:$0xf]
    %v5058 = vld [vmem:[%s4879 + $0x2c8] sm:$0xf]
    %v5059 = vld [vmem:[%s4879 + $0x2cc] sm:$0xf]
    %v5060 = vld [vmem:[%s4879 + $0x2d0] sm:$0xf]
    %v5061 = vld [vmem:[%s4879 + $0x2d4] sm:$0xf]
    %v5062 = vld [vmem:[%s4879 + $0x2d8] sm:$0xf]
    %v5063 = vld [vmem:[%s4879 + $0x2dc] sm:$0xf]
    %v5064 = vld [vmem:[%s4879 + $0x2e0] sm:$0xf]
    %v5065 = vld [vmem:[%s4879 + $0x2e4] sm:$0xf]
    %v5066 = vld [vmem:[%s4879 + $0x2e8] sm:$0xf]
    %v5067 = vld [vmem:[%s4879 + $0x2ec] sm:$0xf]
    %v5068 = vld [vmem:[%s4879 + $0x2f0] sm:$0xf]
    %v5069 = vld [vmem:[%s4879 + $0x2f4] sm:$0xf]
    %v5070 = vld [vmem:[%s4879 + $0x2f8] sm:$0xf]
    %v5071 = vld [vmem:[%s4879 + $0x2fc] sm:$0xf]
    %v5072 = vld [vmem:[%s4879 + $0x300] sm:$0xf]
    %v5073 = vld [vmem:[%s4879 + $0x304] sm:$0xf]
    %v5074 = vld [vmem:[%s4879 + $0x308] sm:$0xf]
    %v5075 = vld [vmem:[%s4879 + $0x30c] sm:$0xf]
    %v5076 = vld [vmem:[%s4879 + $0x310] sm:$0xf]
    %v5077 = vld [vmem:[%s4879 + $0x314] sm:$0xf]
    %v5078 = vld [vmem:[%s4879 + $0x318] sm:$0xf]
    %v5079 = vld [vmem:[%s4879 + $0x31c] sm:$0xf]
    %v5080 = vld [vmem:[%s4879 + $0x320] sm:$0xf]
    %v5081 = vld [vmem:[%s4879 + $0x324] sm:$0xf]
    %v5082 = vld [vmem:[%s4879 + $0x328] sm:$0xf]
    %v5083 = vld [vmem:[%s4879 + $0x32c] sm:$0xf]
    %v5084 = vld [vmem:[%s4879 + $0x330] sm:$0xf]
    %v5085 = vld [vmem:[%s4879 + $0x334] sm:$0xf]
    %v5086 = vld [vmem:[%s4879 + $0x338] sm:$0xf]
    %v5087 = vld [vmem:[%s4879 + $0x33c] sm:$0xf]
    %v5088 = vld [vmem:[%s4879 + $0x340] sm:$0xf]
    %v5089 = vld [vmem:[%s4879 + $0x344] sm:$0xf]
    %v5090 = vld [vmem:[%s4879 + $0x348] sm:$0xf]
    %v5091 = vld [vmem:[%s4879 + $0x34c] sm:$0xf]
    %v5092 = vld [vmem:[%s4879 + $0x350] sm:$0xf]
    %v5093 = vld [vmem:[%s4879 + $0x354] sm:$0xf]
    %v5094 = vld [vmem:[%s4879 + $0x358] sm:$0xf]
    %v5095 = vld [vmem:[%s4879 + $0x35c] sm:$0xf]
    %v5096 = vld [vmem:[%s4879 + $0x360] sm:$0xf]
    %v5097 = vld [vmem:[%s4879 + $0x364] sm:$0xf]
    %v5098 = vld [vmem:[%s4879 + $0x368] sm:$0xf]
    %v5099 = vld [vmem:[%s4879 + $0x36c] sm:$0xf]
    %v5100 = vld [vmem:[%s4879 + $0x370] sm:$0xf]
    %v5101 = vld [vmem:[%s4879 + $0x374] sm:$0xf]
    %v5102 = vld [vmem:[%s4879 + $0x378] sm:$0xf]
    %v5103 = vld [vmem:[%s4879 + $0x37c] sm:$0xf]
    %v5104 = vld [vmem:[%s4879 + $0x380] sm:$0xf]
    %v5105 = vld [vmem:[%s4879 + $0x384] sm:$0xf]
    %v5106 = vld [vmem:[%s4879 + $0x388] sm:$0xf]
    %v5107 = vld [vmem:[%s4879 + $0x38c] sm:$0xf]
    %v5108 = vld [vmem:[%s4879 + $0x390] sm:$0xf]
    %v5109 = vld [vmem:[%s4879 + $0x394] sm:$0xf]
    %v5110 = vld [vmem:[%s4879 + $0x398] sm:$0xf]
    %v5111 = vld [vmem:[%s4879 + $0x39c] sm:$0xf]
    %v5112 = vld [vmem:[%s4879 + $0x3a0] sm:$0xf]
    %v5113 = vld [vmem:[%s4879 + $0x3a4] sm:$0xf]
    %v5114 = vld [vmem:[%s4879 + $0x3a8] sm:$0xf]
    %v5115 = vld [vmem:[%s4879 + $0x3ac] sm:$0xf]
    %v5116 = vld [vmem:[%s4879 + $0x3b0] sm:$0xf]
    %v5117 = vld [vmem:[%s4879 + $0x3b4] sm:$0xf]
    %v5118 = vld [vmem:[%s4879 + $0x3b8] sm:$0xf]
    %v5119 = vld [vmem:[%s4879 + $0x3bc] sm:$0xf]
    %v5120 = vld [vmem:[%s4879 + $0x3c0] sm:$0xf]
    %v5121 = vld [vmem:[%s4879 + $0x3c4] sm:$0xf]
    %v5122 = vld [vmem:[%s4879 + $0x3c8] sm:$0xf]
    %v5123 = vld [vmem:[%s4879 + $0x3cc] sm:$0xf]
    %v5124 = vld [vmem:[%s4879 + $0x3d0] sm:$0xf]
    %v5125 = vld [vmem:[%s4879 + $0x3d4] sm:$0xf]
    %v5126 = vld [vmem:[%s4879 + $0x3d8] sm:$0xf]
    %v5127 = vld [vmem:[%s4879 + $0x3dc] sm:$0xf]
    %v5128 = vld [vmem:[%s4879 + $0x3e0] sm:$0xf]
    %v5129 = vld [vmem:[%s4879 + $0x3e4] sm:$0xf]
    %v5130 = vld [vmem:[%s4879 + $0x3e8] sm:$0xf]
    %v5131 = vld [vmem:[%s4879 + $0x3ec] sm:$0xf]
    %v5132 = vld [vmem:[%s4879 + $0x3f0] sm:$0xf]
    %v5133 = vld [vmem:[%s4879 + $0x3f4] sm:$0xf]
    %v5134 = vld [vmem:[%s4879 + $0x3f8] sm:$0xf]
    %v5135 = vld [vmem:[%s4879 + $0x3fc] sm:$0xf]
    %s5136 = scalar_lea.vmem %s12, 1
    %v5137 = vld [vmem:[%s5136] sm:$0x1]
    %v5139 = vlaneseq
    %v5140 = vshrl.u32 %v5139, 7
    %v5141 = vsub.s32 0, %v5140
    %v5142 = vrot.slane %v5137, %v5141
    %v5400 = vunpack.c.l.b16 %v4880
    %v5401 = vunpack.c.l.b16 %v4881
    %v5402 = vunpack.c.l.b16 %v4882
    %v5403 = vunpack.c.l.b16 %v4883
    %v5404 = vunpack.c.l.b16 %v4884
    %v5405 = vunpack.c.l.b16 %v4885
    %v5406 = vunpack.c.l.b16 %v4886
    %v5407 = vunpack.c.l.b16 %v4887
    %v5408 = vunpack.c.l.b16 %v4888
    %v5409 = vunpack.c.l.b16 %v4889
    %v5410 = vunpack.c.l.b16 %v4890
    %v5411 = vunpack.c.l.b16 %v4891
    %v5412 = vunpack.c.l.b16 %v4892
    %v5413 = vunpack.c.l.b16 %v4893
    %v5414 = vunpack.c.l.b16 %v4894
    %v5415 = vunpack.c.l.b16 %v4895
    %v5416 = vunpack.c.l.b16 %v4896
    %v5417 = vunpack.c.l.b16 %v4897
    %v5418 = vunpack.c.l.b16 %v4898
    %v5419 = vunpack.c.l.b16 %v4899
    %v5420 = vunpack.c.l.b16 %v4900
    %v5421 = vunpack.c.l.b16 %v4901
    %v5422 = vunpack.c.l.b16 %v4902
    %v5423 = vunpack.c.l.b16 %v4903
    %v5424 = vunpack.c.l.b16 %v4904
    %v5425 = vunpack.c.l.b16 %v4905
    %v5426 = vunpack.c.l.b16 %v4906
    %v5427 = vunpack.c.l.b16 %v4907
    %v5428 = vunpack.c.l.b16 %v4908
    %v5429 = vunpack.c.l.b16 %v4909
    %v5430 = vunpack.c.l.b16 %v4910
    %v5431 = vunpack.c.l.b16 %v4911
    %v5432 = vunpack.c.l.b16 %v4912
    %v5433 = vunpack.c.l.b16 %v4913
    %v5434 = vunpack.c.l.b16 %v4914
    %v5435 = vunpack.c.l.b16 %v4915
    %v5436 = vunpack.c.l.b16 %v4916
    %v5437 = vunpack.c.l.b16 %v4917
    %v5438 = vunpack.c.l.b16 %v4918
    %v5439 = vunpack.c.l.b16 %v4919
    %v5440 = vunpack.c.l.b16 %v4920
    %v5441 = vunpack.c.l.b16 %v4921
    %v5442 = vunpack.c.l.b16 %v4922
    %v5443 = vunpack.c.l.b16 %v4923
    %v5444 = vunpack.c.l.b16 %v4924
    %v5445 = vunpack.c.l.b16 %v4925
    %v5446 = vunpack.c.l.b16 %v4926
    %v5447 = vunpack.c.l.b16 %v4927
    %v5448 = vunpack.c.l.b16 %v4928
    %v5449 = vunpack.c.l.b16 %v4929
    %v5450 = vunpack.c.l.b16 %v4930
    %v5451 = vunpack.c.l.b16 %v4931
    %v5452 = vunpack.c.l.b16 %v4932
    %v5453 = vunpack.c.l.b16 %v4933
    %v5454 = vunpack.c.l.b16 %v4934
    %v5455 = vunpack.c.l.b16 %v4935
    %v5456 = vunpack.c.l.b16 %v4936
    %v5457 = vunpack.c.l.b16 %v4937
    %v5458 = vunpack.c.l.b16 %v4938
    %v5459 = vunpack.c.l.b16 %v4939
    %v5460 = vunpack.c.l.b16 %v4940
    %v5461 = vunpack.c.l.b16 %v4941
    %v5462 = vunpack.c.l.b16 %v4942
    %v5463 = vunpack.c.l.b16 %v4943
    %v5464 = vunpack.c.l.b16 %v4944
    %v5465 = vunpack.c.l.b16 %v4945
    %v5466 = vunpack.c.l.b16 %v4946
    %v5467 = vunpack.c.l.b16 %v4947
    %v5468 = vunpack.c.l.b16 %v4948
    %v5469 = vunpack.c.l.b16 %v4949
    %v5470 = vunpack.c.l.b16 %v4950
    %v5471 = vunpack.c.l.b16 %v4951
    %v5472 = vunpack.c.l.b16 %v4952
    %v5473 = vunpack.c.l.b16 %v4953
    %v5474 = vunpack.c.l.b16 %v4954
    %v5475 = vunpack.c.l.b16 %v4955
    %v5476 = vunpack.c.l.b16 %v4956
    %v5477 = vunpack.c.l.b16 %v4957
    %v5478 = vunpack.c.l.b16 %v4958
    %v5479 = vunpack.c.l.b16 %v4959
    %v5480 = vunpack.c.l.b16 %v4960
    %v5481 = vunpack.c.l.b16 %v4961
    %v5482 = vunpack.c.l.b16 %v4962
    %v5483 = vunpack.c.l.b16 %v4963
    %v5484 = vunpack.c.l.b16 %v4964
    %v5485 = vunpack.c.l.b16 %v4965
    %v5486 = vunpack.c.l.b16 %v4966
    %v5487 = vunpack.c.l.b16 %v4967
    %v5488 = vunpack.c.l.b16 %v4968
    %v5489 = vunpack.c.l.b16 %v4969
    %v5490 = vunpack.c.l.b16 %v4970
    %v5491 = vunpack.c.l.b16 %v4971
    %v5492 = vunpack.c.l.b16 %v4972
    %v5493 = vunpack.c.l.b16 %v4973
    %v5494 = vunpack.c.l.b16 %v4974
    %v5495 = vunpack.c.l.b16 %v4975
    %v5496 = vunpack.c.l.b16 %v4976
    %v5497 = vunpack.c.l.b16 %v4977
    %v5498 = vunpack.c.l.b16 %v4978
    %v5499 = vunpack.c.l.b16 %v4979
    %v5500 = vunpack.c.l.b16 %v4980
    %v5501 = vunpack.c.l.b16 %v4981
    %v5502 = vunpack.c.l.b16 %v4982
    %v5503 = vunpack.c.l.b16 %v4983
    %v5504 = vunpack.c.l.b16 %v4984
    %v5505 = vunpack.c.l.b16 %v4985
    %v5506 = vunpack.c.l.b16 %v4986
    %v5507 = vunpack.c.l.b16 %v4987
    %v5508 = vunpack.c.l.b16 %v4988
    %v5509 = vunpack.c.l.b16 %v4989
    %v5510 = vunpack.c.l.b16 %v4990
    %v5511 = vunpack.c.l.b16 %v4991
    %v5512 = vunpack.c.l.b16 %v4992
    %v5513 = vunpack.c.l.b16 %v4993
    %v5514 = vunpack.c.l.b16 %v4994
    %v5515 = vunpack.c.l.b16 %v4995
    %v5516 = vunpack.c.l.b16 %v4996
    %v5517 = vunpack.c.l.b16 %v4997
    %v5518 = vunpack.c.l.b16 %v4998
    %v5519 = vunpack.c.l.b16 %v4999
    %v5520 = vunpack.c.l.b16 %v5000
    %v5521 = vunpack.c.l.b16 %v5001
    %v5522 = vunpack.c.l.b16 %v5002
    %v5523 = vunpack.c.l.b16 %v5003
    %v5524 = vunpack.c.l.b16 %v5004
    %v5525 = vunpack.c.l.b16 %v5005
    %v5526 = vunpack.c.l.b16 %v5006
    %v5527 = vunpack.c.l.b16 %v5007
    %v5528 = vunpack.c.l.b16 %v5008
    %v5529 = vunpack.c.l.b16 %v5009
    %v5530 = vunpack.c.l.b16 %v5010
    %v5531 = vunpack.c.l.b16 %v5011
    %v5532 = vunpack.c.l.b16 %v5012
    %v5533 = vunpack.c.l.b16 %v5013
    %v5534 = vunpack.c.l.b16 %v5014
    %v5535 = vunpack.c.l.b16 %v5015
    %v5536 = vunpack.c.l.b16 %v5016
    %v5537 = vunpack.c.l.b16 %v5017
    %v5538 = vunpack.c.l.b16 %v5018
    %v5539 = vunpack.c.l.b16 %v5019
    %v5540 = vunpack.c.l.b16 %v5020
    %v5541 = vunpack.c.l.b16 %v5021
    %v5542 = vunpack.c.l.b16 %v5022
    %v5543 = vunpack.c.l.b16 %v5023
    %v5544 = vunpack.c.l.b16 %v5024
    %v5545 = vunpack.c.l.b16 %v5025
    %v5546 = vunpack.c.l.b16 %v5026
    %v5547 = vunpack.c.l.b16 %v5027
    %v5548 = vunpack.c.l.b16 %v5028
    %v5549 = vunpack.c.l.b16 %v5029
    %v5550 = vunpack.c.l.b16 %v5030
    %v5551 = vunpack.c.l.b16 %v5031
    %v5552 = vunpack.c.l.b16 %v5032
    %v5553 = vunpack.c.l.b16 %v5033
    %v5554 = vunpack.c.l.b16 %v5034
    %v5555 = vunpack.c.l.b16 %v5035
    %v5556 = vunpack.c.l.b16 %v5036
    %v5557 = vunpack.c.l.b16 %v5037
    %v5558 = vunpack.c.l.b16 %v5038
    %v5559 = vunpack.c.l.b16 %v5039
    %v5560 = vunpack.c.l.b16 %v5040
    %v5561 = vunpack.c.l.b16 %v5041
    %v5562 = vunpack.c.l.b16 %v5042
    %v5563 = vunpack.c.l.b16 %v5043
    %v5564 = vunpack.c.l.b16 %v5044
    %v5565 = vunpack.c.l.b16 %v5045
    %v5566 = vunpack.c.l.b16 %v5046
    %v5567 = vunpack.c.l.b16 %v5047
    %v5568 = vunpack.c.l.b16 %v5048
    %v5569 = vunpack.c.l.b16 %v5049
    %v5570 = vunpack.c.l.b16 %v5050
    %v5571 = vunpack.c.l.b16 %v5051
    %v5572 = vunpack.c.l.b16 %v5052
    %v5573 = vunpack.c.l.b16 %v5053
    %v5574 = vunpack.c.l.b16 %v5054
    %v5575 = vunpack.c.l.b16 %v5055
    %v5576 = vunpack.c.l.b16 %v5056
    %v5577 = vunpack.c.l.b16 %v5057
    %v5578 = vunpack.c.l.b16 %v5058
    %v5579 = vunpack.c.l.b16 %v5059
    %v5580 = vunpack.c.l.b16 %v5060
    %v5581 = vunpack.c.l.b16 %v5061
    %v5582 = vunpack.c.l.b16 %v5062
    %v5583 = vunpack.c.l.b16 %v5063
    %v5584 = vunpack.c.l.b16 %v5064
    %v5585 = vunpack.c.l.b16 %v5065
    %v5586 = vunpack.c.l.b16 %v5066
    %v5587 = vunpack.c.l.b16 %v5067
    %v5588 = vunpack.c.l.b16 %v5068
    %v5589 = vunpack.c.l.b16 %v5069
    %v5590 = vunpack.c.l.b16 %v5070
    %v5591 = vunpack.c.l.b16 %v5071
    %v5592 = vunpack.c.l.b16 %v5072
    %v5593 = vunpack.c.l.b16 %v5073
    %v5594 = vunpack.c.l.b16 %v5074
    %v5595 = vunpack.c.l.b16 %v5075
    %v5596 = vunpack.c.l.b16 %v5076
    %v5597 = vunpack.c.l.b16 %v5077
    %v5598 = vunpack.c.l.b16 %v5078
    %v5599 = vunpack.c.l.b16 %v5079
    %v5600 = vunpack.c.l.b16 %v5080
    %v5601 = vunpack.c.l.b16 %v5081
    %v5602 = vunpack.c.l.b16 %v5082
    %v5603 = vunpack.c.l.b16 %v5083
    %v5604 = vunpack.c.l.b16 %v5084
    %v5605 = vunpack.c.l.b16 %v5085
    %v5606 = vunpack.c.l.b16 %v5086
    %v5607 = vunpack.c.l.b16 %v5087
    %v5608 = vunpack.c.l.b16 %v5088
    %v5609 = vunpack.c.l.b16 %v5089
    %v5610 = vunpack.c.l.b16 %v5090
    %v5611 = vunpack.c.l.b16 %v5091
    %v5612 = vunpack.c.l.b16 %v5092
    %v5613 = vunpack.c.l.b16 %v5093
    %v5614 = vunpack.c.l.b16 %v5094
    %v5615 = vunpack.c.l.b16 %v5095
    %v5616 = vunpack.c.l.b16 %v5096
    %v5617 = vunpack.c.l.b16 %v5097
    %v5618 = vunpack.c.l.b16 %v5098
    %v5619 = vunpack.c.l.b16 %v5099
    %v5620 = vunpack.c.l.b16 %v5100
    %v5621 = vunpack.c.l.b16 %v5101
    %v5622 = vunpack.c.l.b16 %v5102
    %v5623 = vunpack.c.l.b16 %v5103
    %v5624 = vunpack.c.l.b16 %v5104
    %v5625 = vunpack.c.l.b16 %v5105
    %v5626 = vunpack.c.l.b16 %v5106
    %v5627 = vunpack.c.l.b16 %v5107
    %v5628 = vunpack.c.l.b16 %v5108
    %v5629 = vunpack.c.l.b16 %v5109
    %v5630 = vunpack.c.l.b16 %v5110
    %v5631 = vunpack.c.l.b16 %v5111
    %v5632 = vunpack.c.l.b16 %v5112
    %v5633 = vunpack.c.l.b16 %v5113
    %v5634 = vunpack.c.l.b16 %v5114
    %v5635 = vunpack.c.l.b16 %v5115
    %v5636 = vunpack.c.l.b16 %v5116
    %v5637 = vunpack.c.l.b16 %v5117
    %v5638 = vunpack.c.l.b16 %v5118
    %v5639 = vunpack.c.l.b16 %v5119
    %v5640 = vunpack.c.l.b16 %v5120
    %v5641 = vunpack.c.l.b16 %v5121
    %v5642 = vunpack.c.l.b16 %v5122
    %v5643 = vunpack.c.l.b16 %v5123
    %v5644 = vunpack.c.l.b16 %v5124
    %v5645 = vunpack.c.l.b16 %v5125
    %v5646 = vunpack.c.l.b16 %v5126
    %v5647 = vunpack.c.l.b16 %v5127
    %v5648 = vunpack.c.l.b16 %v5128
    %v5649 = vunpack.c.l.b16 %v5129
    %v5650 = vunpack.c.l.b16 %v5130
    %v5651 = vunpack.c.l.b16 %v5131
    %v5652 = vunpack.c.l.b16 %v5132
    %v5653 = vunpack.c.l.b16 %v5133
    %v5654 = vunpack.c.l.b16 %v5134
    %v5655 = vunpack.c.l.b16 %v5135
    %v5656 = vpack.c.b16 %v5401, %v5400
    %v5657 = vpack.c.b16 %v5403, %v5402
    %v5658 = vpack.c.b16 %v5405, %v5404
    %v5659 = vpack.c.b16 %v5407, %v5406
    %v5660 = vpack.c.b16 %v5409, %v5408
    %v5661 = vpack.c.b16 %v5411, %v5410
    %v5662 = vpack.c.b16 %v5413, %v5412
    %v5663 = vpack.c.b16 %v5415, %v5414
    %v5664 = vpack.c.b16 %v5417, %v5416
    %v5665 = vpack.c.b16 %v5419, %v5418
    %v5666 = vpack.c.b16 %v5421, %v5420
    %v5667 = vpack.c.b16 %v5423, %v5422
    %v5668 = vpack.c.b16 %v5425, %v5424
    %v5669 = vpack.c.b16 %v5427, %v5426
    %v5670 = vpack.c.b16 %v5429, %v5428
    %v5671 = vpack.c.b16 %v5431, %v5430
    %v5672 = vpack.c.b16 %v5433, %v5432
    %v5673 = vpack.c.b16 %v5435, %v5434
    %v5674 = vpack.c.b16 %v5437, %v5436
    %v5675 = vpack.c.b16 %v5439, %v5438
    %v5676 = vpack.c.b16 %v5441, %v5440
    %v5677 = vpack.c.b16 %v5443, %v5442
    %v5678 = vpack.c.b16 %v5445, %v5444
    %v5679 = vpack.c.b16 %v5447, %v5446
    %v5680 = vpack.c.b16 %v5449, %v5448
    %v5681 = vpack.c.b16 %v5451, %v5450
    %v5682 = vpack.c.b16 %v5453, %v5452
    %v5683 = vpack.c.b16 %v5455, %v5454
    %v5684 = vpack.c.b16 %v5457, %v5456
    %v5685 = vpack.c.b16 %v5459, %v5458
    %v5686 = vpack.c.b16 %v5461, %v5460
    %v5687 = vpack.c.b16 %v5463, %v5462
    %v5688 = vpack.c.b16 %v5465, %v5464
    %v5689 = vpack.c.b16 %v5467, %v5466
    %v5690 = vpack.c.b16 %v5469, %v5468
    %v5691 = vpack.c.b16 %v5471, %v5470
    %v5692 = vpack.c.b16 %v5473, %v5472
    %v5693 = vpack.c.b16 %v5475, %v5474
    %v5694 = vpack.c.b16 %v5477, %v5476
    %v5695 = vpack.c.b16 %v5479, %v5478
    %v5696 = vpack.c.b16 %v5481, %v5480
    %v5697 = vpack.c.b16 %v5483, %v5482
    %v5698 = vpack.c.b16 %v5485, %v5484
    %v5699 = vpack.c.b16 %v5487, %v5486
    %v5700 = vpack.c.b16 %v5489, %v5488
    %v5701 = vpack.c.b16 %v5491, %v5490
    %v5702 = vpack.c.b16 %v5493, %v5492
    %v5703 = vpack.c.b16 %v5495, %v5494
    %v5704 = vpack.c.b16 %v5497, %v5496
    %v5705 = vpack.c.b16 %v5499, %v5498
    %v5706 = vpack.c.b16 %v5501, %v5500
    %v5707 = vpack.c.b16 %v5503, %v5502
    %v5708 = vpack.c.b16 %v5505, %v5504
    %v5709 = vpack.c.b16 %v5507, %v5506
    %v5710 = vpack.c.b16 %v5509, %v5508
    %v5711 = vpack.c.b16 %v5511, %v5510
    %v5712 = vpack.c.b16 %v5513, %v5512
    %v5713 = vpack.c.b16 %v5515, %v5514
    %v5714 = vpack.c.b16 %v5517, %v5516
    %v5715 = vpack.c.b16 %v5519, %v5518
    %v5716 = vpack.c.b16 %v5521, %v5520
    %v5717 = vpack.c.b16 %v5523, %v5522
    %v5718 = vpack.c.b16 %v5525, %v5524
    %v5719 = vpack.c.b16 %v5527, %v5526
    %v5720 = vpack.c.b16 %v5529, %v5528
    %v5721 = vpack.c.b16 %v5531, %v5530
    %v5722 = vpack.c.b16 %v5533, %v5532
    %v5723 = vpack.c.b16 %v5535, %v5534
    %v5724 = vpack.c.b16 %v5537, %v5536
    %v5725 = vpack.c.b16 %v5539, %v5538
    %v5726 = vpack.c.b16 %v5541, %v5540
    %v5727 = vpack.c.b16 %v5543, %v5542
    %v5728 = vpack.c.b16 %v5545, %v5544
    %v5729 = vpack.c.b16 %v5547, %v5546
    %v5730 = vpack.c.b16 %v5549, %v5548
    %v5731 = vpack.c.b16 %v5551, %v5550
    %v5732 = vpack.c.b16 %v5553, %v5552
    %v5733 = vpack.c.b16 %v5555, %v5554
    %v5734 = vpack.c.b16 %v5557, %v5556
    %v5735 = vpack.c.b16 %v5559, %v5558
    %v5736 = vpack.c.b16 %v5561, %v5560
    %v5737 = vpack.c.b16 %v5563, %v5562
    %v5738 = vpack.c.b16 %v5565, %v5564
    %v5739 = vpack.c.b16 %v5567, %v5566
    %v5740 = vpack.c.b16 %v5569, %v5568
    %v5741 = vpack.c.b16 %v5571, %v5570
    %v5742 = vpack.c.b16 %v5573, %v5572
    %v5743 = vpack.c.b16 %v5575, %v5574
    %v5744 = vpack.c.b16 %v5577, %v5576
    %v5745 = vpack.c.b16 %v5579, %v5578
    %v5746 = vpack.c.b16 %v5581, %v5580
    %v5747 = vpack.c.b16 %v5583, %v5582
    %v5748 = vpack.c.b16 %v5585, %v5584
    %v5749 = vpack.c.b16 %v5587, %v5586
    %v5750 = vpack.c.b16 %v5589, %v5588
    %v5751 = vpack.c.b16 %v5591, %v5590
    %v5752 = vpack.c.b16 %v5593, %v5592
    %v5753 = vpack.c.b16 %v5595, %v5594
    %v5754 = vpack.c.b16 %v5597, %v5596
    %v5755 = vpack.c.b16 %v5599, %v5598
    %v5756 = vpack.c.b16 %v5601, %v5600
    %v5757 = vpack.c.b16 %v5603, %v5602
    %v5758 = vpack.c.b16 %v5605, %v5604
    %v5759 = vpack.c.b16 %v5607, %v5606
    %v5760 = vpack.c.b16 %v5609, %v5608
    %v5761 = vpack.c.b16 %v5611, %v5610
    %v5762 = vpack.c.b16 %v5613, %v5612
    %v5763 = vpack.c.b16 %v5615, %v5614
    %v5764 = vpack.c.b16 %v5617, %v5616
    %v5765 = vpack.c.b16 %v5619, %v5618
    %v5766 = vpack.c.b16 %v5621, %v5620
    %v5767 = vpack.c.b16 %v5623, %v5622
    %v5768 = vpack.c.b16 %v5625, %v5624
    %v5769 = vpack.c.b16 %v5627, %v5626
    %v5770 = vpack.c.b16 %v5629, %v5628
    %v5771 = vpack.c.b16 %v5631, %v5630
    %v5772 = vpack.c.b16 %v5633, %v5632
    %v5773 = vpack.c.b16 %v5635, %v5634
    %v5774 = vpack.c.b16 %v5637, %v5636
    %v5775 = vpack.c.b16 %v5639, %v5638
    %v5776 = vpack.c.b16 %v5641, %v5640
    %v5777 = vpack.c.b16 %v5643, %v5642
    %v5778 = vpack.c.b16 %v5645, %v5644
    %v5779 = vpack.c.b16 %v5647, %v5646
    %v5780 = vpack.c.b16 %v5649, %v5648
    %v5781 = vpack.c.b16 %v5651, %v5650
    %v5782 = vpack.c.b16 %v5653, %v5652
    %v5783 = vpack.c.b16 %v5655, %v5654
    %5912 = vmatprep.subr.bf16.mxu0 0
    %5913 = vmatpush1.bf16.msra.mxu0 %v5656
    %5914 = vmatprep.subr.bf16.mxu0 0
    %5915 = vmatpush1.bf16.msra.mxu0 %v5657
    %5916 = vmatprep.subr.bf16.mxu0 0
    %5917 = vmatpush1.bf16.msra.mxu0 %v5658
    %5918 = vmatprep.subr.bf16.mxu0 0
    %5919 = vmatpush1.bf16.msra.mxu0 %v5659
    %5920 = vmatprep.subr.bf16.mxu0 0
    %5921 = vmatpush1.bf16.msra.mxu0 %v5660
    %5922 = vmatprep.subr.bf16.mxu0 0
    %5923 = vmatpush1.bf16.msra.mxu0 %v5661
    %5924 = vmatprep.subr.bf16.mxu0 0
    %5925 = vmatpush1.bf16.msra.mxu0 %v5662
    %5926 = vmatprep.subr.bf16.mxu0 0
    %5927 = vmatpush1.bf16.msra.mxu0 %v5663
    %5928 = vmatprep.subr.bf16.mxu0 0
    %5929 = vmatpush1.bf16.msra.mxu0 %v5664
    %5930 = vmatprep.subr.bf16.mxu0 0
    %5931 = vmatpush1.bf16.msra.mxu0 %v5665
    %5932 = vmatprep.subr.bf16.mxu0 0
    %5933 = vmatpush1.bf16.msra.mxu0 %v5666
    %5934 = vmatprep.subr.bf16.mxu0 0
    %5935 = vmatpush1.bf16.msra.mxu0 %v5667
    %5936 = vmatprep.subr.bf16.mxu0 0
    %5937 = vmatpush1.bf16.msra.mxu0 %v5668
    %5938 = vmatprep.subr.bf16.mxu0 0
    %5939 = vmatpush1.bf16.msra.mxu0 %v5669
    %5940 = vmatprep.subr.bf16.mxu0 0
    %5941 = vmatpush1.bf16.msra.mxu0 %v5670
    %5942 = vmatprep.subr.bf16.mxu0 0
    %5943 = vmatpush1.bf16.msra.mxu0 %v5671
    %5944 = vmatprep.mubr.bf16.mxu0 %v4864
    %5945 = vmatmul.mubr.bf16.gmra.mrb[0].mxu0 %v4863
    %v5946 = vpop.f32.mrb[0].mxu0
    %v5947 = vadd.f32 %v5142, %v5946
    %v5948 = vpop.f32.mrb[0].mxu0
    %v5949 = vpop.f32.mrb[0].mxu0
    %v5950 = vadd.f32 %v5142, %v5949
    %v5951 = vpop.f32.mrb[0].mxu0
    %5952 = vdwg.mxu0
    %5953 = vmatprep.subr.bf16.mxu0 0
    %5954 = vmatpush1.bf16.msra.mxu0 %v5672
    %5955 = vmatprep.subr.bf16.mxu0 0
    %5956 = vmatpush1.bf16.msra.mxu0 %v5673
    %5957 = vmatprep.subr.bf16.mxu0 0
    %5958 = vmatpush1.bf16.msra.mxu0 %v5674
    %5959 = vmatprep.subr.bf16.mxu0 0
    %5960 = vmatpush1.bf16.msra.mxu0 %v5675
    %5961 = vmatprep.subr.bf16.mxu0 0
    %5962 = vmatpush1.bf16.msra.mxu0 %v5676
    %5963 = vmatprep.subr.bf16.mxu0 0
    %5964 = vmatpush1.bf16.msra.mxu0 %v5677
    %5965 = vmatprep.subr.bf16.mxu0 0
    %5966 = vmatpush1.bf16.msra.mxu0 %v5678
    %5967 = vmatprep.subr.bf16.mxu0 0
    %5968 = vmatpush1.bf16.msra.mxu0 %v5679
    %5969 = vmatprep.subr.bf16.mxu0 0
    %5970 = vmatpush1.bf16.msra.mxu0 %v5680
    %5971 = vmatprep.subr.bf16.mxu0 0
    %5972 = vmatpush1.bf16.msra.mxu0 %v5681
    %5973 = vmatprep.subr.bf16.mxu0 0
    %5974 = vmatpush1.bf16.msra.mxu0 %v5682
    %5975 = vmatprep.subr.bf16.mxu0 0
    %5976 = vmatpush1.bf16.msra.mxu0 %v5683
    %5977 = vmatprep.subr.bf16.mxu0 0
    %5978 = vmatpush1.bf16.msra.mxu0 %v5684
    %5979 = vmatprep.subr.bf16.mxu0 0
    %5980 = vmatpush1.bf16.msra.mxu0 %v5685
    %5981 = vmatprep.subr.bf16.mxu0 0
    %5982 = vmatpush1.bf16.msra.mxu0 %v5686
    %5983 = vmatprep.subr.bf16.mxu0 0
    %5984 = vmatpush1.bf16.msra.mxu0 %v5687
    %5985 = vmatprep.mubr.bf16.mxu0 %v4866
    %5986 = vmatmul.mubr.bf16.gmra.mrb[0].mxu0 %v4865
    %v5987 = vpop.f32.mrb[0].mxu0
    %v5988 = vadd.f32 %v5947, %v5987
    %v5989 = vpop.f32.mrb[0].mxu0
    %v5990 = vpop.f32.mrb[0].mxu0
    %v5991 = vadd.f32 %v5950, %v5990
    %v5992 = vpop.f32.mrb[0].mxu0
    %5993 = vdwg.mxu0
    %5994 = vmatprep.subr.bf16.mxu0 0
    %5995 = vmatpush1.bf16.msra.mxu0 %v5688
    %5996 = vmatprep.subr.bf16.mxu0 0
    %5997 = vmatpush1.bf16.msra.mxu0 %v5689
    %5998 = vmatprep.subr.bf16.mxu0 0
    %5999 = vmatpush1.bf16.msra.mxu0 %v5690
    %6000 = vmatprep.subr.bf16.mxu0 0
    %6001 = vmatpush1.bf16.msra.mxu0 %v5691
    %6002 = vmatprep.subr.bf16.mxu0 0
    %6003 = vmatpush1.bf16.msra.mxu0 %v5692
    %6004 = vmatprep.subr.bf16.mxu0 0
    %6005 = vmatpush1.bf16.msra.mxu0 %v5693
    %6006 = vmatprep.subr.bf16.mxu0 0
    %6007 = vmatpush1.bf16.msra.mxu0 %v5694
    %6008 = vmatprep.subr.bf16.mxu0 0
    %6009 = vmatpush1.bf16.msra.mxu0 %v5695
    %6010 = vmatprep.subr.bf16.mxu0 0
    %6011 = vmatpush1.bf16.msra.mxu0 %v5696
    %6012 = vmatprep.subr.bf16.mxu0 0
    %6013 = vmatpush1.bf16.msra.mxu0 %v5697
    %6014 = vmatprep.subr.bf16.mxu0 0
    %6015 = vmatpush1.bf16.msra.mxu0 %v5698
    %6016 = vmatprep.subr.bf16.mxu0 0
    %6017 = vmatpush1.bf16.msra.mxu0 %v5699
    %6018 = vmatprep.subr.bf16.mxu0 0
    %6019 = vmatpush1.bf16.msra.mxu0 %v5700
    %6020 = vmatprep.subr.bf16.mxu0 0
    %6021 = vmatpush1.bf16.msra.mxu0 %v5701
    %6022 = vmatprep.subr.bf16.mxu0 0
    %6023 = vmatpush1.bf16.msra.mxu0 %v5702
    %6024 = vmatprep.subr.bf16.mxu0 0
    %6025 = vmatpush1.bf16.msra.mxu0 %v5703
    %6026 = vmatprep.mubr.bf16.mxu0 %v4868
    %6027 = vmatmul.mubr.bf16.gmra.mrb[0].mxu0 %v4867
    %v6028 = vpop.f32.mrb[0].mxu0
    %v6029 = vadd.f32 %v5988, %v6028
    %v6030 = vpop.f32.mrb[0].mxu0
    %v6031 = vpop.f32.mrb[0].mxu0
    %v6032 = vadd.f32 %v5991, %v6031
    %v6033 = vpop.f32.mrb[0].mxu0
    %6034 = vdwg.mxu0
    %6035 = vmatprep.subr.bf16.mxu0 0
    %6036 = vmatpush1.bf16.msra.mxu0 %v5704
    %6037 = vmatprep.subr.bf16.mxu0 0
    %6038 = vmatpush1.bf16.msra.mxu0 %v5705
    %6039 = vmatprep.subr.bf16.mxu0 0
    %6040 = vmatpush1.bf16.msra.mxu0 %v5706
    %6041 = vmatprep.subr.bf16.mxu0 0
    %6042 = vmatpush1.bf16.msra.mxu0 %v5707
    %6043 = vmatprep.subr.bf16.mxu0 0
    %6044 = vmatpush1.bf16.msra.mxu0 %v5708
    %6045 = vmatprep.subr.bf16.mxu0 0
    %6046 = vmatpush1.bf16.msra.mxu0 %v5709
    %6047 = vmatprep.subr.bf16.mxu0 0
    %6048 = vmatpush1.bf16.msra.mxu0 %v5710
    %6049 = vmatprep.subr.bf16.mxu0 0
    %6050 = vmatpush1.bf16.msra.mxu0 %v5711
    %6051 = vmatprep.subr.bf16.mxu0 0
    %6052 = vmatpush1.bf16.msra.mxu0 %v5712
    %6053 = vmatprep.subr.bf16.mxu0 0
    %6054 = vmatpush1.bf16.msra.mxu0 %v5713
    %6055 = vmatprep.subr.bf16.mxu0 0
    %6056 = vmatpush1.bf16.msra.mxu0 %v5714
    %6057 = vmatprep.subr.bf16.mxu0 0
    %6058 = vmatpush1.bf16.msra.mxu0 %v5715
    %6059 = vmatprep.subr.bf16.mxu0 0
    %6060 = vmatpush1.bf16.msra.mxu0 %v5716
    %6061 = vmatprep.subr.bf16.mxu0 0
    %6062 = vmatpush1.bf16.msra.mxu0 %v5717
    %6063 = vmatprep.subr.bf16.mxu0 0
    %6064 = vmatpush1.bf16.msra.mxu0 %v5718
    %6065 = vmatprep.subr.bf16.mxu0 0
    %6066 = vmatpush1.bf16.msra.mxu0 %v5719
    %6067 = vmatprep.mubr.bf16.mxu0 %v4870
    %6068 = vmatmul.mubr.bf16.gmra.mrb[0].mxu0 %v4869
    %v6069 = vpop.f32.mrb[0].mxu0
    %v6070 = vadd.f32 %v6029, %v6069
    %v6071 = vpop.f32.mrb[0].mxu0
    %v6072 = vpop.f32.mrb[0].mxu0
    %v6073 = vadd.f32 %v6032, %v6072
    %v6074 = vpop.f32.mrb[0].mxu0
    %6075 = vdwg.mxu0
    %6076 = vmatprep.subr.bf16.mxu0 0
    %6077 = vmatpush1.bf16.msra.mxu0 %v5720
    %6078 = vmatprep.subr.bf16.mxu0 0
    %6079 = vmatpush1.bf16.msra.mxu0 %v5721
    %6080 = vmatprep.subr.bf16.mxu0 0
    %6081 = vmatpush1.bf16.msra.mxu0 %v5722
    %6082 = vmatprep.subr.bf16.mxu0 0
    %6083 = vmatpush1.bf16.msra.mxu0 %v5723
    %6084 = vmatprep.subr.bf16.mxu0 0
    %6085 = vmatpush1.bf16.msra.mxu0 %v5724
    %6086 = vmatprep.subr.bf16.mxu0 0
    %6087 = vmatpush1.bf16.msra.mxu0 %v5725
    %6088 = vmatprep.subr.bf16.mxu0 0
    %6089 = vmatpush1.bf16.msra.mxu0 %v5726
    %6090 = vmatprep.subr.bf16.mxu0 0
    %6091 = vmatpush1.bf16.msra.mxu0 %v5727
    %6092 = vmatprep.subr.bf16.mxu0 0
    %6093 = vmatpush1.bf16.msra.mxu0 %v5728
    %6094 = vmatprep.subr.bf16.mxu0 0
    %6095 = vmatpush1.bf16.msra.mxu0 %v5729
    %6096 = vmatprep.subr.bf16.mxu0 0
    %6097 = vmatpush1.bf16.msra.mxu0 %v5730
    %6098 = vmatprep.subr.bf16.mxu0 0
    %6099 = vmatpush1.bf16.msra.mxu0 %v5731
    %6100 = vmatprep.subr.bf16.mxu0 0
    %6101 = vmatpush1.bf16.msra.mxu0 %v5732
    %6102 = vmatprep.subr.bf16.mxu0 0
    %6103 = vmatpush1.bf16.msra.mxu0 %v5733
    %6104 = vmatprep.subr.bf16.mxu0 0
    %6105 = vmatpush1.bf16.msra.mxu0 %v5734
    %6106 = vmatprep.subr.bf16.mxu0 0
    %6107 = vmatpush1.bf16.msra.mxu0 %v5735
    %6108 = vmatprep.mubr.bf16.mxu0 %v4872
    %6109 = vmatmul.mubr.bf16.gmra.mrb[0].mxu0 %v4871
    %v6110 = vpop.f32.mrb[0].mxu0
    %v6111 = vadd.f32 %v6070, %v6110
    %v6112 = vpop.f32.mrb[0].mxu0
    %v6113 = vpop.f32.mrb[0].mxu0
    %v6114 = vadd.f32 %v6073, %v6113
    %v6115 = vpop.f32.mrb[0].mxu0
    %6116 = vdwg.mxu0
    %6117 = vmatprep.subr.bf16.mxu0 0
    %6118 = vmatpush1.bf16.msra.mxu0 %v5736
    %6119 = vmatprep.subr.bf16.mxu0 0
    %6120 = vmatpush1.bf16.msra.mxu0 %v5737
    %6121 = vmatprep.subr.bf16.mxu0 0
    %6122 = vmatpush1.bf16.msra.mxu0 %v5738
    %6123 = vmatprep.subr.bf16.mxu0 0
    %6124 = vmatpush1.bf16.msra.mxu0 %v5739
    %6125 = vmatprep.subr.bf16.mxu0 0
    %6126 = vmatpush1.bf16.msra.mxu0 %v5740
    %6127 = vmatprep.subr.bf16.mxu0 0
    %6128 = vmatpush1.bf16.msra.mxu0 %v5741
    %6129 = vmatprep.subr.bf16.mxu0 0
    %6130 = vmatpush1.bf16.msra.mxu0 %v5742
    %6131 = vmatprep.subr.bf16.mxu0 0
    %6132 = vmatpush1.bf16.msra.mxu0 %v5743
    %6133 = vmatprep.subr.bf16.mxu0 0
    %6134 = vmatpush1.bf16.msra.mxu0 %v5744
    %6135 = vmatprep.subr.bf16.mxu0 0
    %6136 = vmatpush1.bf16.msra.mxu0 %v5745
    %6137 = vmatprep.subr.bf16.mxu0 0
    %6138 = vmatpush1.bf16.msra.mxu0 %v5746
    %6139 = vmatprep.subr.bf16.mxu0 0
    %6140 = vmatpush1.bf16.msra.mxu0 %v5747
    %6141 = vmatprep.subr.bf16.mxu0 0
    %6142 = vmatpush1.bf16.msra.mxu0 %v5748
    %6143 = vmatprep.subr.bf16.mxu0 0
    %6144 = vmatpush1.bf16.msra.mxu0 %v5749
    %6145 = vmatprep.subr.bf16.mxu0 0
    %6146 = vmatpush1.bf16.msra.mxu0 %v5750
    %6147 = vmatprep.subr.bf16.mxu0 0
    %6148 = vmatpush1.bf16.msra.mxu0 %v5751
    %6149 = vmatprep.mubr.bf16.mxu0 %v4874
    %6150 = vmatmul.mubr.bf16.gmra.mrb[0].mxu0 %v4873
    %v6151 = vpop.f32.mrb[0].mxu0
    %v6152 = vadd.f32 %v6111, %v6151
    %v6153 = vpop.f32.mrb[0].mxu0
    %v6154 = vpop.f32.mrb[0].mxu0
    %v6155 = vadd.f32 %v6114, %v6154
    %v6156 = vpop.f32.mrb[0].mxu0
    %6157 = vdwg.mxu0
    %6158 = vmatprep.subr.bf16.mxu0 0
    %6159 = vmatpush1.bf16.msra.mxu0 %v5752
    %6160 = vmatprep.subr.bf16.mxu0 0
    %6161 = vmatpush1.bf16.msra.mxu0 %v5753
    %6162 = vmatprep.subr.bf16.mxu0 0
    %6163 = vmatpush1.bf16.msra.mxu0 %v5754
    %6164 = vmatprep.subr.bf16.mxu0 0
    %6165 = vmatpush1.bf16.msra.mxu0 %v5755
    %6166 = vmatprep.subr.bf16.mxu0 0
    %6167 = vmatpush1.bf16.msra.mxu0 %v5756
    %6168 = vmatprep.subr.bf16.mxu0 0
    %6169 = vmatpush1.bf16.msra.mxu0 %v5757
    %6170 = vmatprep.subr.bf16.mxu0 0
    %6171 = vmatpush1.bf16.msra.mxu0 %v5758
    %6172 = vmatprep.subr.bf16.mxu0 0
    %6173 = vmatpush1.bf16.msra.mxu0 %v5759
    %6174 = vmatprep.subr.bf16.mxu0 0
    %6175 = vmatpush1.bf16.msra.mxu0 %v5760
    %6176 = vmatprep.subr.bf16.mxu0 0
    %6177 = vmatpush1.bf16.msra.mxu0 %v5761
    %6178 = vmatprep.subr.bf16.mxu0 0
    %6179 = vmatpush1.bf16.msra.mxu0 %v5762
    %6180 = vmatprep.subr.bf16.mxu0 0
    %6181 = vmatpush1.bf16.msra.mxu0 %v5763
    %6182 = vmatprep.subr.bf16.mxu0 0
    %6183 = vmatpush1.bf16.msra.mxu0 %v5764
    %6184 = vmatprep.subr.bf16.mxu0 0
    %6185 = vmatpush1.bf16.msra.mxu0 %v5765
    %6186 = vmatprep.subr.bf16.mxu0 0
    %6187 = vmatpush1.bf16.msra.mxu0 %v5766
    %6188 = vmatprep.subr.bf16.mxu0 0
    %6189 = vmatpush1.bf16.msra.mxu0 %v5767
    %6190 = vmatprep.mubr.bf16.mxu0 %v4876
    %6191 = vmatmul.mubr.bf16.gmra.mrb[0].mxu0 %v4875
    %v6192 = vpop.f32.mrb[0].mxu0
    %v6193 = vadd.f32 %v6152, %v6192
    %v6194 = vpop.f32.mrb[0].mxu0
    %v6195 = vpop.f32.mrb[0].mxu0
    %v6196 = vadd.f32 %v6155, %v6195
    %v6197 = vpop.f32.mrb[0].mxu0
    %6198 = vdwg.mxu0
    %6199 = vmatprep.subr.bf16.mxu0 0
    %6200 = vmatpush1.bf16.msra.mxu0 %v5768
    %6201 = vmatprep.subr.bf16.mxu0 0
    %6202 = vmatpush1.bf16.msra.mxu0 %v5769
    %6203 = vmatprep.subr.bf16.mxu0 0
    %6204 = vmatpush1.bf16.msra.mxu0 %v5770
    %6205 = vmatprep.subr.bf16.mxu0 0
    %6206 = vmatpush1.bf16.msra.mxu0 %v5771
    %6207 = vmatprep.subr.bf16.mxu0 0
    %6208 = vmatpush1.bf16.msra.mxu0 %v5772
    %6209 = vmatprep.subr.bf16.mxu0 0
    %6210 = vmatpush1.bf16.msra.mxu0 %v5773
    %6211 = vmatprep.subr.bf16.mxu0 0
    %6212 = vmatpush1.bf16.msra.mxu0 %v5774
    %6213 = vmatprep.subr.bf16.mxu0 0
    %6214 = vmatpush1.bf16.msra.mxu0 %v5775
    %6215 = vmatprep.subr.bf16.mxu0 0
    %6216 = vmatpush1.bf16.msra.mxu0 %v5776
    %6217 = vmatprep.subr.bf16.mxu0 0
    %6218 = vmatpush1.bf16.msra.mxu0 %v5777
    %6219 = vmatprep.subr.bf16.mxu0 0
    %6220 = vmatpush1.bf16.msra.mxu0 %v5778
    %6221 = vmatprep.subr.bf16.mxu0 0
    %6222 = vmatpush1.bf16.msra.mxu0 %v5779
    %6223 = vmatprep.subr.bf16.mxu0 0
    %6224 = vmatpush1.bf16.msra.mxu0 %v5780
    %6225 = vmatprep.subr.bf16.mxu0 0
    %6226 = vmatpush1.bf16.msra.mxu0 %v5781
    %6227 = vmatprep.subr.bf16.mxu0 0
    %6228 = vmatpush1.bf16.msra.mxu0 %v5782
    %6229 = vmatprep.subr.bf16.mxu0 0
    %6230 = vmatpush1.bf16.msra.mxu0 %v5783
    %6231 = vmatprep.mubr.bf16.mxu0 %v4878
    %6232 = vmatmul.mubr.bf16.gmra.mrb[0].mxu0 %v4877
    %v6233 = vpop.f32.mrb[0].mxu0
    %v6234 = vadd.f32 %v6193, %v6233
    %v6235 = vpop.f32.mrb[0].mxu0
    %v6236 = vpop.f32.mrb[0].mxu0
    %v6237 = vadd.f32 %v6196, %v6236
    %v6238 = vpop.f32.mrb[0].mxu0
    %6239 = vdwg.mxu0
    %v6240 = vadd.f32 %v4203, %v6234
    %v6241 = vadd.f32 %v4204, %v6237
    %s6242 = scalar_lea.vmem %s13, 1
    %v6243 = vld [vmem:[%s6242] sm:$0x1]
    %s6244 = scalar_lea.vmem %s14, 1
    %v6245 = vld [vmem:[%s6244] sm:$0x1]
    %v6246 = vsel %vm89, %v6240, 0.0
    %6247 = vadd.xlane.f32.xlu0 %v6246
    %v6248 = vpop.xlane.xlu0 %6247
    %v6249 = vsel %vm89, %v6241, 0.0
    %6250 = vadd.xlane.f32.xlu0 %v6249
    %v6251 = vpop.xlane.xlu0 %6250
    %v6252 = vmul.f32 %v6248, %v1059
    %v6253 = vmul.f32 %v6251, %v1059
    %v6254 = vsub.f32 %v6240, %v6252
    %v6255 = vsub.f32 %v6241, %v6253
    %v6256 = vmul.f32 %v6254, %v6254
    %v6257 = vmul.f32 %v6255, %v6255
    %v6258 = vsel %vm89, %v6256, 0.0
    %6259 = vadd.xlane.f32.xlu0 %v6258
    %v6260 = vpop.xlane.xlu0 %6259
    %v6261 = vsel %vm89, %v6257, 0.0
    %6262 = vadd.xlane.f32.xlu0 %v6261
    %v6263 = vpop.xlane.xlu0 %6262
    %v6264 = vmul.f32 %v6260, %v1059
    %v6265 = vmul.f32 %v6263, %v1059
    %v6266 = vadd.f32 %v6264, 1e-05
    %v6267 = vadd.f32 %v6265, 1e-05
    %v6268 = vrsqrt.pop %v6266
    %v6269 = vrsqrt.pop %v6267
    %v6270 = vmul.f32 %v6254, %v6268
    %v6271 = vmul.f32 %v6255, %v6269
    %v6273 = vlaneseq
    %v6274 = vshrl.u32 %v6273, 7
    %v6275 = vsub.s32 0, %v6274
    %v6276 = vrot.slane %v6243, %v6275
    %v6278 = vmul.f32 %v6270, %v6276
    %v6279 = vmul.f32 %v6271, %v6276
    %v6281 = vlaneseq
    %v6282 = vshrl.u32 %v6281, 7
    %v6283 = vsub.s32 0, %v6282
    %v6284 = vrot.slane %v6245, %v6283
    %v6286 = vadd.f32 %v6278, %v6284
    %v6287 = vadd.f32 %v6279, %v6284
    %6288 = vst.msk [vmem:[#allocation4] sm:$0xff] %vm89, %v6286
    %6289 = vst.msk [vmem:[#allocation4 + $0x8] sm:$0xff] %vm89, %v6287
    %v6290 = vld [vmem:[%s2] sm:$0x3]
    %v6292 = vsel %vm228, %v6290, 0
    %6294 = vmatprep.subr.mxu0 0.0
    %6295 = vmatpush1.msra.mxu0 %v6286
    %6296 = vmatprep.subr.mxu0 0.0
    %6297 = vmatpush1.msra.mxu0 %v6287
    %6298 = vmatprep.subr.mxu0 0.0
    %6299 = vmatpush1.msra.mxu0 0.0
    %6300 = vmatprep.subr.mxu0 0.0
    %6301 = vmatpush1.msra.mxu0 0.0
    %6302 = vmatprep.subr.mxu0 0.0
    %6303 = vmatpush1.msra.mxu0 0.0
    %6304 = vmatprep.subr.mxu0 0.0
    %6305 = vmatpush1.msra.mxu0 0.0
    %6306 = vmatprep.subr.mxu0 0.0
    %6307 = vmatpush1.msra.mxu0 0.0
    %6308 = vmatprep.subr.mxu0 0.0
    %6309 = vmatpush1.msra.mxu0 0.0
    %6310 = vmatprep.subr.mxu0 0.0
    %6311 = vmatpush1.msra.mxu0 0.0
    %6312 = vmatprep.subr.mxu0 0.0
    %6313 = vmatpush1.msra.mxu0 0.0
    %6314 = vmatprep.subr.mxu0 0.0
    %6315 = vmatpush1.msra.mxu0 0.0
    %6316 = vmatprep.subr.mxu0 0.0
    %6317 = vmatpush1.msra.mxu0 0.0
    %6318 = vmatprep.subr.mxu0 0.0
    %6319 = vmatpush1.msra.mxu0 0.0
    %6320 = vmatprep.subr.mxu0 0.0
    %6321 = vmatpush1.msra.mxu0 0.0
    %6322 = vmatprep.subr.mxu0 0.0
    %6323 = vmatpush1.msra.mxu0 0.0
    %6324 = vmatprep.subr.mxu0 0.0
    %6325 = vmatpush1.msra.mxu0 0.0
    %6326 = vmatprep.subr.mxu0 0.0
    %6327 = vmatpush1.msra.mxu0 0.0
    %6328 = vmatprep.subr.mxu0 0.0
    %6329 = vmatpush1.msra.mxu0 0.0
    %6330 = vmatprep.subr.mxu0 0.0
    %6331 = vmatpush1.msra.mxu0 0.0
    %6332 = vmatprep.subr.mxu0 0.0
    %6333 = vmatpush1.msra.mxu0 0.0
    %6334 = vmatprep.subr.mxu0 0.0
    %6335 = vmatpush1.msra.mxu0 0.0
    %6336 = vmatprep.subr.mxu0 0.0
    %6337 = vmatpush1.msra.mxu0 0.0
    %6338 = vmatprep.subr.mxu0 0.0
    %6339 = vmatpush1.msra.mxu0 0.0
    %6340 = vmatprep.subr.mxu0 0.0
    %6341 = vmatpush1.msra.mxu0 0.0
    %6342 = vmatprep.subr.mxu0 0.0
    %6343 = vmatpush1.msra.mxu0 0.0
    %6344 = vmatprep.subr.mxu0 0.0
    %6345 = vmatpush1.msra.mxu0 0.0
    %6346 = vmatprep.subr.mxu0 0.0
    %6347 = vmatpush1.msra.mxu0 0.0
    %6348 = vmatprep.subr.mxu0 0.0
    %6349 = vmatpush1.msra.mxu0 0.0
    %6350 = vmatprep.subr.mxu0 0.0
    %6351 = vmatpush1.msra.mxu0 0.0
    %6352 = vmatprep.subr.mxu0 0.0
    %6353 = vmatpush1.msra.mxu0 0.0
    %6354 = vmatprep.subr.mxu0 0.0
    %6355 = vmatpush1.msra.mxu0 0.0
    %6356 = vmatprep.subr.mxu0 0.0
    %6357 = vmatpush1.msra.mxu0 0.0
    %6358 = vmatprep.mubr.f32.mxu0 0.0
    %6359 = vmatmul.mubr.f32.gmra.mrb[0].mxu0 %v6292
    %v6360 = vpop.f32.mrb[0].mxu0
    %v6361 = vadd.f32 0.0, %v6360
    %v6362 = vpop.f32.mrb[0].mxu0
    %6363 = vdwg.mxu0
    %v6364 = vpack.c.bf16 %v6361, %v6361
    %v6365 = vld [vmem:[%s15] sm:$0xf]
    %v6366 = vld [vmem:[%s15 + $0x4] sm:$0xf]
    %v6367 = vld [vmem:[%s15 + $0x8] sm:$0xf]
    %v6368 = vld [vmem:[%s15 + $0xc] sm:$0xf]
    %v6369 = vld [vmem:[%s16] sm:$0x1]
    %v6371 = vlaneseq
    %v6372 = vshrl.u32 %v6371, 7
    %v6373 = vsub.s32 0, %v6372
    %v6374 = vrot.slane %v6369, %v6373
    %v6380 = vunpack.c.l.b16 %v6365
    %v6381 = vunpack.c.l.b16 %v6366
    %v6382 = vunpack.c.l.b16 %v6367
    %v6383 = vunpack.c.l.b16 %v6368
    %v6384 = vpack.c.b16 %v6381, %v6380
    %v6385 = vpack.c.b16 %v6383, %v6382
    %v6389 = vsel %vm89, %v6364, 0
    %6391 = vmatprep.subr.bf16.mxu0 0
    %6392 = vmatpush1.bf16.msra.mxu0 %v6384
    %6393 = vmatprep.subr.bf16.mxu0 0
    %6394 = vmatpush1.bf16.msra.mxu0 %v6385
    %6395 = vmatprep.subr.bf16.mxu0 0
    %6396 = vmatpush1.bf16.msra.mxu0 0
    %6397 = vmatprep.subr.bf16.mxu0 0
    %6398 = vmatpush1.bf16.msra.mxu0 0
    %6399 = vmatprep.subr.bf16.mxu0 0
    %6400 = vmatpush1.bf16.msra.mxu0 0
    %6401 = vmatprep.subr.bf16.mxu0 0
    %6402 = vmatpush1.bf16.msra.mxu0 0
    %6403 = vmatprep.subr.bf16.mxu0 0
    %6404 = vmatpush1.bf16.msra.mxu0 0
    %6405 = vmatprep.subr.bf16.mxu0 0
    %6406 = vmatpush1.bf16.msra.mxu0 0
    %6407 = vmatprep.subr.bf16.mxu0 0
    %6408 = vmatpush1.bf16.msra.mxu0 0
    %6409 = vmatprep.subr.bf16.mxu0 0
    %6410 = vmatpush1.bf16.msra.mxu0 0
    %6411 = vmatprep.subr.bf16.mxu0 0
    %6412 = vmatpush1.bf16.msra.mxu0 0
    %6413 = vmatprep.subr.bf16.mxu0 0
    %6414 = vmatpush1.bf16.msra.mxu0 0
    %6415 = vmatprep.subr.bf16.mxu0 0
    %6416 = vmatpush1.bf16.msra.mxu0 0
    %6417 = vmatprep.subr.bf16.mxu0 0
    %6418 = vmatpush1.bf16.msra.mxu0 0
    %6419 = vmatprep.subr.bf16.mxu0 0
    %6420 = vmatpush1.bf16.msra.mxu0 0
    %6421 = vmatprep.subr.bf16.mxu0 0
    %6422 = vmatpush1.bf16.msra.mxu0 0
    %6423 = vmatprep.mubr.bf16.mxu0 0
    %6424 = vmatmul.mubr.bf16.gmra.mrb[0].mxu0 %v6389
    %v6425 = vpop.f32.mrb[0].mxu0
    %v6426 = vadd.f32 %v6374, %v6425
    %v6427 = vpop.f32.mrb[0].mxu0
    %v6428 = vpop.f32.mrb[0].mxu0
    %v6429 = vpop.f32.mrb[0].mxu0
    %6430 = vdwg.mxu0
    %vm6431 = vcmask 123904
    %6432 = vst.msk [vmem:[#allocation2] sm:$0x3] %vm6431, %v6426
    // Predicated region
    $region70: #{image_encoder_forward.1} parent=1 // pred_check
      _
    $region71: #{image_encoder_forward.1} parent=1 // pred_check_branch
      %6434 = sbr.rel (0) target = $region73
    $region72: #{image_encoder_forward.1} parent=1 // pred_region
      %s6436 = ssub.s32 32, 32
      %6437 = vsyncadd [#allocation3], %s6436
      %s6439 = sshll.u32 [#allocation2], 4
      %s6440 = int_to_ptr.vmem [resolvable:$true] %s6439
      %6442 = dma.vmem_to_hbm [thread:$0]  %s6440, 32, %s17, [#allocation3]
    $region73: #{image_encoder_forward.1} parent=1 // pred_fallthru
      _
    // Predicated region
    $region74: #{image_encoder_forward.1} parent=1 // pred_check
      _
    $region75: #{image_encoder_forward.1} parent=1 // pred_check_branch
      %6444 = sbr.rel (0) target = $region77
    $region76: #{image_encoder_forward.1} parent=1 // pred_region
      %s6446 = ssub.s32 256, 256
      %6447 = vsyncadd [#allocation5], %s6446
      %s6448 = sshll.u32 [#allocation4], 4
      %s6449 = int_to_ptr.vmem [resolvable:$true] %s6448
      %6454 = dma.vmem_to_hbm [thread:$0]  %s6449, 256, %s18, [#allocation5], 128, 128, 8
    $region77: #{image_encoder_forward.1} parent=1 // pred_fallthru
      _
    // Predicated region
    $region78: #{image_encoder_forward.1} parent=1 // pred_check
      _
    $region79: #{image_encoder_forward.1} parent=1 // pred_check_branch
      %6456 = sbr.rel (0) target = $region81
    $region80: #{image_encoder_forward.1} parent=1 // pred_region
      %6457 = dma.done [#allocation3], 32
    $region81: #{image_encoder_forward.1} parent=1 // pred_fallthru
      _
    // Predicated region
    $region82: #{image_encoder_forward.1} parent=1 // pred_check
      _
    $region83: #{image_encoder_forward.1} parent=1 // pred_check_branch
      %6459 = sbr.rel (0) target = $region85
    $region84: #{image_encoder_forward.1} parent=1 // pred_region
      %6460 = dma.done [#allocation5], 256
    $region85: #{image_encoder_forward.1} parent=1 // pred_fallthru
      _
    %6461 = vsyncpa [#allocation3], 1
    %6462 = vsyncpa [#allocation5], 1

</llo_original>
